<compile_context>
chip_gen: v7x
topology: tpu7x:2x2x1
jax: 0.10.0
libtpu: 0.0.40
codegen_flags: <defaults>
</compile_context>

<pallas_src>
import numpy as np
import jax
import jax.numpy as jnp
from jax.experimental import pallas as pl
from jax.experimental.pallas import tpu as pltpu

ATOM_FEA_LEN = 64      # hard-coded by the asserts in ConvLayer.forward
NBR_FEA_LEN = 41       # hard-coded by the asserts in ConvLayer.forward
H_FEA_LEN = 128
N_CONV = 3
N_H = 1
BN_EPS = 1e-5

MATMUL_DTYPE = jnp.float32   # flip to jnp.bfloat16 on v6e/v7x for more MXU throughput


def _mm(a, b):
    return jnp.dot(a.astype(MATMUL_DTYPE), b.astype(MATMUL_DTYPE),
                   preferred_element_type=jnp.float32)


def _softplus(x):
    # torch.nn.Softplus(beta=1), numerically stable form
    return jnp.maximum(x, 0.0) + jnp.log1p(jnp.exp(-jnp.abs(x)))


def _sigmoid(x):
    # exact, numerically stable clamped form (matches torch.sigmoid closely)
    e = jnp.exp(-jnp.abs(x))            # in (0, 1]
    r = 1.0 / (1.0 + e)
    return jnp.where(x >= 0, r, e * r)


def _full_spec(shape):
    nd = len(shape)
    return pl.BlockSpec(shape, lambda *_: (0,) * nd)


# ----------------------------- fused Pallas kernel -----------------------------

def _cgcnn_kernel(atom0_ref, lhs2_ref, bond_aug_ref, pool_ref,
                  embed_w_ref, w_sn_ref, w_bond_cat_ref,
                  bn_ref, fc1_w_ref, out_w_ref, small_ref,
                  o_ref):
    n = atom0_ref.shape[0]          # N atoms
    mn = lhs2_ref.shape[0]          # M*N neighbor-expanded rows
    m = mn // n
    f = ATOM_FEA_LEN
    f2 = 2 * f
    n_layers = w_sn_ref.shape[0]
    out_dim = o_ref.shape[1]

    ones_mn = jnp.ones((1, mn), jnp.float32)
    ones_n = jnp.ones((1, n), jnp.float32)
    inv_mn = 1.0 / float(mn)
    inv_n = 1.0 / float(n)

    def bn(z, ones_row, inv_cnt, g, be):
        # BatchNorm1d (batch statistics, biased variance) as two INDEPENDENT
        # ones-row reductions (MXU) + a single fused scale/shift (VPU).
        mu = _mm(ones_row, z) * inv_cnt                  # (1, C)
        ex2 = _mm(ones_row, z * z) * inv_cnt             # (1, C), independent of mu
        var = ex2 - mu * mu
        scale = g * jax.lax.rsqrt(var + BN_EPS)
        shift = be - mu * scale
        return z * scale + shift

    # ---- embedding ----
    atom = _mm(atom0_ref[...], embed_w_ref[...]) + small_ref[0:1, :f]   # (N, 64)

    lhs2 = lhs2_ref[...]            # (M*N, 2N)  [one-hot gather | M-stacked identity]

    # ---- bond + bias contribution for ALL layers, hoisted out of the loop ----
    # bond_aug has a trailing ones column; w_bond_cat has the fc_full bias as
    # its last K-row, so bond_all already includes b_full per layer.
    bond_all = _mm(bond_aug_ref[...], w_bond_cat_ref[...])   # (M*N, n_layers*128)

    # ---- conv layers (unrolled; atom stays VMEM-resident) ----
    for layer in range(n_layers):
        bn_l = bn_ref[layer]                               # (4, 128)

        # merged nbr|self weight matmul: one 256-wide MXU pass
        sn = _mm(atom, w_sn_ref[layer])                    # (N, 256)
        # vertical restack (sublane-aligned: n % 8 == 0) for the fused
        # gather+broadcast matmul
        rhs = jnp.concatenate([sn[:, :f2], sn[:, f2:]], axis=0)    # (2N, 128)
        z = _mm(lhs2, rhs) + bond_all[:, layer * f2:(layer + 1) * f2]  # (M*N, 128)

        z = bn(z, ones_mn, inv_mn, bn_l[0:1, :], bn_l[1:2, :])     # bn1 over M*N rows

        gated = _sigmoid(z[:, :f]) * _softplus(z[:, f:])           # (M*N, 64)

        # sum over the M neighbor slots: pairwise tree (log2 depth)
        parts = [gated[mm * n:(mm + 1) * n, :] for mm in range(m)]
        while len(parts) > 1:
            nxt = [parts[i] + parts[i + 1] for i in range(0, len(parts) - 1, 2)]
            if len(parts) & 1:
                nxt.append(parts[-1])
            parts = nxt
        summed = parts[0]                                          # (N, 64)

        summed = bn(summed, ones_n, inv_n, bn_l[2:3, :f], bn_l[3:4, :f])  # bn2 over N rows
        atom = _softplus(atom + summed)                            # skip connection

    # ---- pooling (per-crystal mean as matmul) + head ----
    crys = _mm(pool_ref[...], atom)                                # (N0, 64)
    h = _softplus(crys)
    h = _mm(h, fc1_w_ref[...]) + small_ref[1:2, :]
    h = _softplus(h)
    # TODO(synk): classification branch (dropout + logsoftmax) not implemented
    # since classification=False; n_h=1 so no extra hidden fcs.
    o_ref[...] = _mm(h, out_w_ref[...]) + small_ref[2:3, 0:out_dim]


# ------------------------------- wrapper ---------------------------------

def crystal_graph_conv_net(params, atom_fea, nbr_fea, nbr_fea_idx, pool_mat):
    n = atom_fea.shape[0]
    _, m, bfl = nbr_fea.shape
    n0 = pool_mat.shape[0]
    out_dim = params['out_w'].shape[1]

    # Layer-invariant glue, computed ONCE (hoisted out of the conv loop):
    #   * bond features grouped by neighbor slot m, with an appended ones
    #     column so the fc_full bias rides the hoisted bond matmul,
    #   * [one-hot gather | M-stacked identity] matrix so per-layer neighbor
    #     gather AND self-feature broadcast are a single in-kernel MXU matmul.
    bond_mn = jnp.transpose(nbr_fea, (1, 0, 2)).reshape(m * n, bfl)        # (M*N, B)
    bond_aug = jnp.concatenate(
        [bond_mn, jnp.ones((m * n, 1), jnp.float32)], axis=1)             # (M*N, B+1)
    idx_mn = jnp.transpose(nbr_fea_idx, (1, 0)).reshape(-1)                # (M*N,)
    gmat = jax.nn.one_hot(idx_mn, n, dtype=jnp.float32)                    # (M*N, N)
    gself = jnp.tile(jnp.eye(n, dtype=jnp.float32), (m, 1))                # (M*N, N)
    lhs2 = jnp.concatenate([gmat, gself], axis=1)                          # (M*N, 2N)

    args = (atom_fea, lhs2, bond_aug, pool_mat,
            params['embed_w'], params['w_sn'], params['w_bond_cat'],
            params['bn'], params['fc1_w'], params['out_w'], params['small'])

    return pl.pallas_call(
        _cgcnn_kernel,
        out_shape=jax.ShapeDtypeStruct((n0, out_dim), jnp.float32),
        grid=(1,),
        in_specs=[_full_spec(a.shape) for a in args],
        out_specs=_full_spec((n0, out_dim)),
        compiler_params=pltpu.CompilerParams(
            dimension_semantics=("arbitrary",)),
    )(*args)


# ------------------------- parameters & pooling ----------------------------

def _linear_init(key, fan_in, fan_out):
    kw, kb = jax.random.split(key)
    bound = 1.0 / float(np.sqrt(fan_in))
    w = jax.random.uniform(kw, (fan_in, fan_out), jnp.float32, -bound, bound)
    b = jax.random.uniform(kb, (1, fan_out), jnp.float32, -bound, bound)
    return w, b


def init_params(key, orig_atom_fea_len):
    keys = jax.random.split(key, 3 + N_CONV)
    params = {}

    embed_w, embed_b = _linear_init(keys[0], orig_atom_fea_len, ATOM_FEA_LEN)
    params['embed_w'] = embed_w

    # fc_full per layer, repacked for the fused kernel:
    #   w_sn      = [W_nbr | W_self]                     (64, 256) per layer
    #   w_bond_cat: K-rows [W_bond; b_full] per layer, stacked along the
    #               OUTPUT axis across layers            (B+1, n_conv*128)
    w_sn, w_bond_aug = [], []
    for i in range(N_CONV):
        w, b = _linear_init(keys[1 + i],
                            2 * ATOM_FEA_LEN + NBR_FEA_LEN, 2 * ATOM_FEA_LEN)
        w_self = w[:ATOM_FEA_LEN]                           # (64, 128)
        w_nbr = w[ATOM_FEA_LEN:2 * ATOM_FEA_LEN]            # (64, 128)
        w_bond = w[2 * ATOM_FEA_LEN:]                       # (41, 128)
        w_sn.append(jnp.concatenate([w_nbr, w_self], axis=1))        # (64, 256)
        w_bond_aug.append(jnp.concatenate([w_bond, b], axis=0))      # (42, 128)
    params['w_sn'] = jnp.stack(w_sn)                                  # (3, 64, 256)
    params['w_bond_cat'] = jnp.concatenate(w_bond_aug, axis=1)        # (42, 3*128)

    # BatchNorm params packed per layer: rows = [g1, be1, g2(pad), be2(pad)]
    bn = jnp.zeros((N_CONV, 4, 2 * ATOM_FEA_LEN), jnp.float32)
    bn = bn.at[:, 0, :].set(1.0)                    # bn1 gamma = 1
    bn = bn.at[:, 2, :ATOM_FEA_LEN].set(1.0)        # bn2 gamma = 1 (betas stay 0)
    params['bn'] = bn

    fc1_w, fc1_b = _linear_init(keys[1 + N_CONV], ATOM_FEA_LEN, H_FEA_LEN)
    out_w, out_b = _linear_init(keys[2 + N_CONV], H_FEA_LEN, 1)
    params['fc1_w'] = fc1_w
    params['out_w'] = out_w

    # Small biases packed into one (8, 128) array: [embed_b, fc1_b, out_b, pad...]
    small = jnp.zeros((8, H_FEA_LEN), jnp.float32)
    small = small.at[0, :ATOM_FEA_LEN].set(embed_b[0])
    small = small.at[1, :].set(fc1_b[0])
    small = small.at[2, :out_w.shape[1]].set(out_b[0])
    params['small'] = small
    return params


def make_pool_matrix(crystal_atom_idx, n_atoms):
    """(N0, N) matrix that computes the per-crystal mean of atom features."""
    n0 = len(crystal_atom_idx)
    mat = np.zeros((n0, n_atoms), np.float32)
    for c, idx in enumerate(crystal_atom_idx):
        idx = np.asarray(idx)
        mat[c, idx] = 1.0 / float(len(idx))
    return jnp.asarray(mat)


# --------------------------------- main ------------------------------------

if __name__ == "__main__":
    key = jax.random.PRNGKey(0)
    k_param, k_atom, k_nbr, k_idx = jax.random.split(key, 4)

    N, M = 32, 12
    ORIG_ATOM_FEA_LEN = 16

    atom_fea = jax.random.normal(k_atom, (N, ORIG_ATOM_FEA_LEN), jnp.float32)
    nbr_fea = jax.random.normal(k_nbr, (N, M, NBR_FEA_LEN), jnp.float32)
    nbr_fea_idx = jax.random.randint(k_idx, (N, M), 0, N)
    crystal_atom_idx = [jnp.arange(0, 12), jnp.arange(12, 32)]       # 2 crystals
    pool_mat = make_pool_matrix(crystal_atom_idx, N)

    params = init_params(k_param, ORIG_ATOM_FEA_LEN)

    fwd = jax.jit(crystal_graph_conv_net)
    out = fwd(params, atom_fea, nbr_fea, nbr_fea_idx, pool_mat)
    out = jax.block_until_ready(out)
    assert out.shape == (2, 1) and out.dtype == jnp.float32
    print("KERNEL_OK")
</pallas_src>

<mosaic_0001>
module attributes {stable_mosaic.version = 11 : i64} {
  func.func @_cgcnn_kernel(%arg0: i32, %arg1: memref<32x16xf32, #tpu.memory_space<vmem>>, %arg2: memref<384x64xf32, #tpu.memory_space<vmem>>, %arg3: memref<384x42xf32, #tpu.memory_space<vmem>>, %arg4: memref<2x32xf32, #tpu.memory_space<vmem>>, %arg5: memref<16x64xf32, #tpu.memory_space<vmem>>, %arg6: memref<3x64x256xf32, #tpu.memory_space<vmem>>, %arg7: memref<42x384xf32, #tpu.memory_space<vmem>>, %arg8: memref<3x4x128xf32, #tpu.memory_space<vmem>>, %arg9: memref<64x128xf32, #tpu.memory_space<vmem>>, %arg10: memref<128x1xf32, #tpu.memory_space<vmem>>, %arg11: memref<8x128xf32, #tpu.memory_space<vmem>>, %arg12: memref<2x1xf32, #tpu.memory_space<vmem>>) attributes {dimension_semantics = [#tpu.dimension_semantics<arbitrary>], iteration_bounds = array<i64: 1>, scalar_prefetch = 0 : i64, scratch_operands = 0 : i64, tpu.core_type = #tpu.core_type<tc>, window_params = [{pipeline_mode = #tpu.pipeline_mode<synchronous>, transform_indices = @transform_0, window_bounds = array<i64: 32, 16>}, {pipeline_mode = #tpu.pipeline_mode<synchronous>, transform_indices = @transform_1, window_bounds = array<i64: 384, 64>}, {pipeline_mode = #tpu.pipeline_mode<synchronous>, transform_indices = @transform_2, window_bounds = array<i64: 384, 42>}, {pipeline_mode = #tpu.pipeline_mode<synchronous>, transform_indices = @transform_3, window_bounds = array<i64: 2, 32>}, {pipeline_mode = #tpu.pipeline_mode<synchronous>, transform_indices = @transform_4, window_bounds = array<i64: 16, 64>}, {pipeline_mode = #tpu.pipeline_mode<synchronous>, transform_indices = @transform_5, window_bounds = array<i64: 3, 64, 256>}, {pipeline_mode = #tpu.pipeline_mode<synchronous>, transform_indices = @transform_6, window_bounds = array<i64: 42, 384>}, {pipeline_mode = #tpu.pipeline_mode<synchronous>, transform_indices = @transform_7, window_bounds = array<i64: 3, 4, 128>}, {pipeline_mode = #tpu.pipeline_mode<synchronous>, transform_indices = @transform_8, window_bounds = array<i64: 64, 128>}, {pipeline_mode = #tpu.pipeline_mode<synchronous>, transform_indices = @transform_9, window_bounds = array<i64: 128, 1>}, {pipeline_mode = #tpu.pipeline_mode<synchronous>, transform_indices = @transform_10, window_bounds = array<i64: 8, 128>}, {pipeline_mode = #tpu.pipeline_mode<synchronous>, transform_indices = @transform_11, window_bounds = array<i64: 2, 1>}]} {
    %cst = arith.constant 1.000000e+00 : f32
    %0 = vector.broadcast %cst : f32 to vector<1x384xf32>
    %cst_0 = arith.constant 1.000000e+00 : f32
    %1 = vector.broadcast %cst_0 : f32 to vector<1x32xf32>
    %c0 = arith.constant 0 : index
    %c0_1 = arith.constant 0 : index
    %2 = vector.load %arg1[%c0, %c0_1] : memref<32x16xf32, #tpu.memory_space<vmem>>, vector<32x16xf32>
    %c0_2 = arith.constant 0 : index
    %c0_3 = arith.constant 0 : index
    %3 = vector.load %arg5[%c0_2, %c0_3] : memref<16x64xf32, #tpu.memory_space<vmem>>, vector<16x64xf32>
    %cst_4 = arith.constant dense<0.000000e+00> : vector<32x64xf32>
    %4 = tpu.matmul %2, %3, %cst_4 {dimension_numbers = #tpu.dot_dimension_numbers<[1], [0], [0], [1], [0, 0, 1, 1], [], []>} : vector<32x16xf32>, vector<16x64xf32>, vector<32x64xf32> -> vector<32x64xf32>
    %c0_5 = arith.constant 0 : index
    %c0_6 = arith.constant 0 : index
    %5 = vector.load %arg11[%c0_5, %c0_6] : memref<8x128xf32, #tpu.memory_space<vmem>>, vector<1x64xf32>
    %6 = vector.broadcast %5 : vector<1x64xf32> to vector<32x64xf32>
    %7 = arith.addf %4, %6 : vector<32x64xf32>
    %c0_7 = arith.constant 0 : index
    %c0_8 = arith.constant 0 : index
    %8 = vector.load %arg2[%c0_7, %c0_8] : memref<384x64xf32, #tpu.memory_space<vmem>>, vector<384x64xf32>
    %c0_9 = arith.constant 0 : index
    %c0_10 = arith.constant 0 : index
    %9 = vector.load %arg3[%c0_9, %c0_10] : memref<384x42xf32, #tpu.memory_space<vmem>>, vector<384x42xf32>
    %c0_11 = arith.constant 0 : index
    %c0_12 = arith.constant 0 : index
    %10 = vector.load %arg7[%c0_11, %c0_12] : memref<42x384xf32, #tpu.memory_space<vmem>>, vector<42x384xf32>
    %cst_13 = arith.constant dense<0.000000e+00> : vector<384x384xf32>
    %11 = tpu.matmul %9, %10, %cst_13 {dimension_numbers = #tpu.dot_dimension_numbers<[1], [0], [0], [1], [0, 0, 1, 1], [], []>} : vector<384x42xf32>, vector<42x384xf32>, vector<384x384xf32> -> vector<384x384xf32>
    %c0_14 = arith.constant 0 : index
    %c0_15 = arith.constant 0 : index
    %c0_16 = arith.constant 0 : index
    %12 = vector.load %arg8[%c0_14, %c0_15, %c0_16] : memref<3x4x128xf32, #tpu.memory_space<vmem>>, vector<1x4x128xf32>
    %13 = vector.shape_cast %12 : vector<1x4x128xf32> to vector<4x128xf32>
    %c0_17 = arith.constant 0 : index
    %c0_18 = arith.constant 0 : index
    %c0_19 = arith.constant 0 : index
    %14 = vector.load %arg6[%c0_17, %c0_18, %c0_19] : memref<3x64x256xf32, #tpu.memory_space<vmem>>, vector<1x64x256xf32>
    %15 = vector.shape_cast %14 : vector<1x64x256xf32> to vector<64x256xf32>
    %cst_20 = arith.constant dense<0.000000e+00> : vector<32x256xf32>
    %16 = tpu.matmul %7, %15, %cst_20 {dimension_numbers = #tpu.dot_dimension_numbers<[1], [0], [0], [1], [0, 0, 1, 1], [], []>} : vector<32x64xf32>, vector<64x256xf32>, vector<32x256xf32> -> vector<32x256xf32>
    %17 = vector.extract_strided_slice %16 {offsets = [0, 0], sizes = [32, 128], strides = [1, 1]} : vector<32x256xf32> to vector<32x128xf32>
    %18 = vector.extract_strided_slice %16 {offsets = [0, 128], sizes = [32, 128], strides = [1, 1]} : vector<32x256xf32> to vector<32x128xf32>
    %19 = tpu.concatenate %17, %18 in 0 : vector<32x128xf32>, vector<32x128xf32> -> vector<64x128xf32>
    %cst_21 = arith.constant dense<0.000000e+00> : vector<384x128xf32>
    %20 = tpu.matmul %8, %19, %cst_21 {dimension_numbers = #tpu.dot_dimension_numbers<[1], [0], [0], [1], [0, 0, 1, 1], [], []>} : vector<384x64xf32>, vector<64x128xf32>, vector<384x128xf32> -> vector<384x128xf32>
    %21 = vector.extract_strided_slice %11 {offsets = [0, 0], sizes = [384, 128], strides = [1, 1]} : vector<384x384xf32> to vector<384x128xf32>
    %22 = arith.addf %20, %21 : vector<384x128xf32>
    %23 = vector.extract_strided_slice %13 {offsets = [0, 0], sizes = [1, 128], strides = [1, 1]} : vector<4x128xf32> to vector<1x128xf32>
    %24 = vector.extract_strided_slice %13 {offsets = [1, 0], sizes = [1, 128], strides = [1, 1]} : vector<4x128xf32> to vector<1x128xf32>
    %cst_22 = arith.constant dense<0.000000e+00> : vector<1x128xf32>
    %25 = tpu.matmul %0, %22, %cst_22 {dimension_numbers = #tpu.dot_dimension_numbers<[1], [0], [0], [1], [0, 0, 1, 1], [], []>} : vector<1x384xf32>, vector<384x128xf32>, vector<1x128xf32> -> vector<1x128xf32>
    %cst_23 = arith.constant 0.00260416674 : f32
    %26 = vector.broadcast %cst_23 : f32 to vector<1x128xf32>
    %27 = arith.mulf %25, %26 : vector<1x128xf32>
    %28 = arith.mulf %22, %22 : vector<384x128xf32>
    %cst_24 = arith.constant dense<0.000000e+00> : vector<1x128xf32>
    %29 = tpu.matmul %0, %28, %cst_24 {dimension_numbers = #tpu.dot_dimension_numbers<[1], [0], [0], [1], [0, 0, 1, 1], [], []>} : vector<1x384xf32>, vector<384x128xf32>, vector<1x128xf32> -> vector<1x128xf32>
    %cst_25 = arith.constant 0.00260416674 : f32
    %30 = vector.broadcast %cst_25 : f32 to vector<1x128xf32>
    %31 = arith.mulf %29, %30 : vector<1x128xf32>
    %32 = arith.mulf %27, %27 : vector<1x128xf32>
    %33 = arith.subf %31, %32 : vector<1x128xf32>
    %cst_26 = arith.constant 9.99999974E-6 : f32
    %34 = vector.broadcast %cst_26 : f32 to vector<1x128xf32>
    %35 = arith.addf %33, %34 : vector<1x128xf32>
    %36 = math.rsqrt %35 : vector<1x128xf32>
    %37 = arith.mulf %23, %36 : vector<1x128xf32>
    %38 = arith.mulf %27, %37 : vector<1x128xf32>
    %39 = arith.subf %24, %38 : vector<1x128xf32>
    %40 = vector.broadcast %37 : vector<1x128xf32> to vector<384x128xf32>
    %41 = arith.mulf %22, %40 : vector<384x128xf32>
    %42 = vector.broadcast %39 : vector<1x128xf32> to vector<384x128xf32>
    %43 = arith.addf %41, %42 : vector<384x128xf32>
    %44 = vector.extract_strided_slice %43 {offsets = [0, 0], sizes = [384, 64], strides = [1, 1]} : vector<384x128xf32> to vector<384x64xf32>
    %45 = math.absf %44 : vector<384x64xf32>
    %cst_27 = arith.constant 0.000000e+00 : f32
    %46 = vector.broadcast %cst_27 : f32 to vector<384x64xf32>
    %47 = arith.subf %46, %45 : vector<384x64xf32>
    %48 = math.exp %47 : vector<384x64xf32>
    %cst_28 = arith.constant 1.000000e+00 : f32
    %49 = vector.broadcast %cst_28 : f32 to vector<384x64xf32>
    %50 = arith.addf %49, %48 : vector<384x64xf32>
    %cst_29 = arith.constant 1.000000e+00 : f32
    %51 = vector.broadcast %cst_29 : f32 to vector<384x64xf32>
    %52 = arith.divf %51, %50 : vector<384x64xf32>
    %cst_30 = arith.constant 0.000000e+00 : f32
    %53 = vector.broadcast %cst_30 : f32 to vector<384x64xf32>
    %54 = arith.cmpf oge, %44, %53 : vector<384x64xf32>
    %55 = arith.mulf %48, %52 : vector<384x64xf32>
    %56 = arith.select %54, %52, %55 : vector<384x64xi1>, vector<384x64xf32>
    %57 = vector.extract_strided_slice %43 {offsets = [0, 64], sizes = [384, 64], strides = [1, 1]} : vector<384x128xf32> to vector<384x64xf32>
    %cst_31 = arith.constant 0.000000e+00 : f32
    %58 = vector.broadcast %cst_31 : f32 to vector<384x64xf32>
    %59 = arith.maximumf %57, %58 : vector<384x64xf32>
    %60 = math.absf %57 : vector<384x64xf32>
    %cst_32 = arith.constant 0.000000e+00 : f32
    %61 = vector.broadcast %cst_32 : f32 to vector<384x64xf32>
    %62 = arith.subf %61, %60 : vector<384x64xf32>
    %63 = math.exp %62 : vector<384x64xf32>
    %64 = math.log1p %63 : vector<384x64xf32>
    %65 = arith.addf %59, %64 : vector<384x64xf32>
    %66 = arith.mulf %56, %65 : vector<384x64xf32>
    %67 = vector.extract_strided_slice %66 {offsets = [0, 0], sizes = [32, 64], strides = [1, 1]} : vector<384x64xf32> to vector<32x64xf32>
    %68 = vector.extract_strided_slice %66 {offsets = [32, 0], sizes = [32, 64], strides = [1, 1]} : vector<384x64xf32> to vector<32x64xf32>
    %69 = vector.extract_strided_slice %66 {offsets = [64, 0], sizes = [32, 64], strides = [1, 1]} : vector<384x64xf32> to vector<32x64xf32>
    %70 = vector.extract_strided_slice %66 {offsets = [96, 0], sizes = [32, 64], strides = [1, 1]} : vector<384x64xf32> to vector<32x64xf32>
    %71 = vector.extract_strided_slice %66 {offsets = [128, 0], sizes = [32, 64], strides = [1, 1]} : vector<384x64xf32> to vector<32x64xf32>
    %72 = vector.extract_strided_slice %66 {offsets = [160, 0], sizes = [32, 64], strides = [1, 1]} : vector<384x64xf32> to vector<32x64xf32>
    %73 = vector.extract_strided_slice %66 {offsets = [192, 0], sizes = [32, 64], strides = [1, 1]} : vector<384x64xf32> to vector<32x64xf32>
    %74 = vector.extract_strided_slice %66 {offsets = [224, 0], sizes = [32, 64], strides = [1, 1]} : vector<384x64xf32> to vector<32x64xf32>
    %75 = vector.extract_strided_slice %66 {offsets = [256, 0], sizes = [32, 64], strides = [1, 1]} : vector<384x64xf32> to vector<32x64xf32>
    %76 = vector.extract_strided_slice %66 {offsets = [288, 0], sizes = [32, 64], strides = [1, 1]} : vector<384x64xf32> to vector<32x64xf32>
    %77 = vector.extract_strided_slice %66 {offsets = [320, 0], sizes = [32, 64], strides = [1, 1]} : vector<384x64xf32> to vector<32x64xf32>
    %78 = vector.extract_strided_slice %66 {offsets = [352, 0], sizes = [32, 64], strides = [1, 1]} : vector<384x64xf32> to vector<32x64xf32>
    %79 = arith.addf %67, %68 : vector<32x64xf32>
    %80 = arith.addf %69, %70 : vector<32x64xf32>
    %81 = arith.addf %71, %72 : vector<32x64xf32>
    %82 = arith.addf %73, %74 : vector<32x64xf32>
    %83 = arith.addf %75, %76 : vector<32x64xf32>
    %84 = arith.addf %77, %78 : vector<32x64xf32>
    %85 = arith.addf %79, %80 : vector<32x64xf32>
    %86 = arith.addf %81, %82 : vector<32x64xf32>
    %87 = arith.addf %83, %84 : vector<32x64xf32>
    %88 = arith.addf %85, %86 : vector<32x64xf32>
    %89 = arith.addf %88, %87 : vector<32x64xf32>
    %90 = vector.extract_strided_slice %13 {offsets = [2, 0], sizes = [1, 64], strides = [1, 1]} : vector<4x128xf32> to vector<1x64xf32>
    %91 = vector.extract_strided_slice %13 {offsets = [3, 0], sizes = [1, 64], strides = [1, 1]} : vector<4x128xf32> to vector<1x64xf32>
    %cst_33 = arith.constant dense<0.000000e+00> : vector<1x64xf32>
    %92 = tpu.matmul %1, %89, %cst_33 {dimension_numbers = #tpu.dot_dimension_numbers<[1], [0], [0], [1], [0, 0, 1, 1], [], []>} : vector<1x32xf32>, vector<32x64xf32>, vector<1x64xf32> -> vector<1x64xf32>
    %cst_34 = arith.constant 3.125000e-02 : f32
    %93 = vector.broadcast %cst_34 : f32 to vector<1x64xf32>
    %94 = arith.mulf %92, %93 : vector<1x64xf32>
    %95 = arith.mulf %89, %89 : vector<32x64xf32>
    %cst_35 = arith.constant dense<0.000000e+00> : vector<1x64xf32>
    %96 = tpu.matmul %1, %95, %cst_35 {dimension_numbers = #tpu.dot_dimension_numbers<[1], [0], [0], [1], [0, 0, 1, 1], [], []>} : vector<1x32xf32>, vector<32x64xf32>, vector<1x64xf32> -> vector<1x64xf32>
    %cst_36 = arith.constant 3.125000e-02 : f32
    %97 = vector.broadcast %cst_36 : f32 to vector<1x64xf32>
    %98 = arith.mulf %96, %97 : vector<1x64xf32>
    %99 = arith.mulf %94, %94 : vector<1x64xf32>
    %100 = arith.subf %98, %99 : vector<1x64xf32>
    %cst_37 = arith.constant 9.99999974E-6 : f32
    %101 = vector.broadcast %cst_37 : f32 to vector<1x64xf32>
    %102 = arith.addf %100, %101 : vector<1x64xf32>
    %103 = math.rsqrt %102 : vector<1x64xf32>
    %104 = arith.mulf %90, %103 : vector<1x64xf32>
    %105 = arith.mulf %94, %104 : vector<1x64xf32>
    %106 = arith.subf %91, %105 : vector<1x64xf32>
    %107 = vector.broadcast %104 : vector<1x64xf32> to vector<32x64xf32>
    %108 = arith.mulf %89, %107 : vector<32x64xf32>
    %109 = vector.broadcast %106 : vector<1x64xf32> to vector<32x64xf32>
    %110 = arith.addf %108, %109 : vector<32x64xf32>
    %111 = arith.addf %7, %110 : vector<32x64xf32>
    %cst_38 = arith.constant 0.000000e+00 : f32
    %112 = vector.broadcast %cst_38 : f32 to vector<32x64xf32>
    %113 = arith.maximumf %111, %112 : vector<32x64xf32>
    %114 = math.absf %111 : vector<32x64xf32>
    %cst_39 = arith.constant 0.000000e+00 : f32
    %115 = vector.broadcast %cst_39 : f32 to vector<32x64xf32>
    %116 = arith.subf %115, %114 : vector<32x64xf32>
    %117 = math.exp %116 : vector<32x64xf32>
    %118 = math.log1p %117 : vector<32x64xf32>
    %119 = arith.addf %113, %118 : vector<32x64xf32>
    %c1 = arith.constant 1 : index
    %c0_40 = arith.constant 0 : index
    %c0_41 = arith.constant 0 : index
    %120 = vector.load %arg8[%c1, %c0_40, %c0_41] : memref<3x4x128xf32, #tpu.memory_space<vmem>>, vector<1x4x128xf32>
    %121 = vector.shape_cast %120 : vector<1x4x128xf32> to vector<4x128xf32>
    %c1_42 = arith.constant 1 : index
    %c0_43 = arith.constant 0 : index
    %c0_44 = arith.constant 0 : index
    %122 = vector.load %arg6[%c1_42, %c0_43, %c0_44] : memref<3x64x256xf32, #tpu.memory_space<vmem>>, vector<1x64x256xf32>
    %123 = vector.shape_cast %122 : vector<1x64x256xf32> to vector<64x256xf32>
    %cst_45 = arith.constant dense<0.000000e+00> : vector<32x256xf32>
    %124 = tpu.matmul %119, %123, %cst_45 {dimension_numbers = #tpu.dot_dimension_numbers<[1], [0], [0], [1], [0, 0, 1, 1], [], []>} : vector<32x64xf32>, vector<64x256xf32>, vector<32x256xf32> -> vector<32x256xf32>
    %125 = vector.extract_strided_slice %124 {offsets = [0, 0], sizes = [32, 128], strides = [1, 1]} : vector<32x256xf32> to vector<32x128xf32>
    %126 = vector.extract_strided_slice %124 {offsets = [0, 128], sizes = [32, 128], strides = [1, 1]} : vector<32x256xf32> to vector<32x128xf32>
    %127 = tpu.concatenate %125, %126 in 0 : vector<32x128xf32>, vector<32x128xf32> -> vector<64x128xf32>
    %cst_46 = arith.constant dense<0.000000e+00> : vector<384x128xf32>
    %128 = tpu.matmul %8, %127, %cst_46 {dimension_numbers = #tpu.dot_dimension_numbers<[1], [0], [0], [1], [0, 0, 1, 1], [], []>} : vector<384x64xf32>, vector<64x128xf32>, vector<384x128xf32> -> vector<384x128xf32>
    %129 = vector.extract_strided_slice %11 {offsets = [0, 128], sizes = [384, 128], strides = [1, 1]} : vector<384x384xf32> to vector<384x128xf32>
    %130 = arith.addf %128, %129 : vector<384x128xf32>
    %131 = vector.extract_strided_slice %121 {offsets = [0, 0], sizes = [1, 128], strides = [1, 1]} : vector<4x128xf32> to vector<1x128xf32>
    %132 = vector.extract_strided_slice %121 {offsets = [1, 0], sizes = [1, 128], strides = [1, 1]} : vector<4x128xf32> to vector<1x128xf32>
    %cst_47 = arith.constant dense<0.000000e+00> : vector<1x128xf32>
    %133 = tpu.matmul %0, %130, %cst_47 {dimension_numbers = #tpu.dot_dimension_numbers<[1], [0], [0], [1], [0, 0, 1, 1], [], []>} : vector<1x384xf32>, vector<384x128xf32>, vector<1x128xf32> -> vector<1x128xf32>
    %cst_48 = arith.constant 0.00260416674 : f32
    %134 = vector.broadcast %cst_48 : f32 to vector<1x128xf32>
    %135 = arith.mulf %133, %134 : vector<1x128xf32>
    %136 = arith.mulf %130, %130 : vector<384x128xf32>
    %cst_49 = arith.constant dense<0.000000e+00> : vector<1x128xf32>
    %137 = tpu.matmul %0, %136, %cst_49 {dimension_numbers = #tpu.dot_dimension_numbers<[1], [0], [0], [1], [0, 0, 1, 1], [], []>} : vector<1x384xf32>, vector<384x128xf32>, vector<1x128xf32> -> vector<1x128xf32>
    %cst_50 = arith.constant 0.00260416674 : f32
    %138 = vector.broadcast %cst_50 : f32 to vector<1x128xf32>
    %139 = arith.mulf %137, %138 : vector<1x128xf32>
    %140 = arith.mulf %135, %135 : vector<1x128xf32>
    %141 = arith.subf %139, %140 : vector<1x128xf32>
    %cst_51 = arith.constant 9.99999974E-6 : f32
    %142 = vector.broadcast %cst_51 : f32 to vector<1x128xf32>
    %143 = arith.addf %141, %142 : vector<1x128xf32>
    %144 = math.rsqrt %143 : vector<1x128xf32>
    %145 = arith.mulf %131, %144 : vector<1x128xf32>
    %146 = arith.mulf %135, %145 : vector<1x128xf32>
    %147 = arith.subf %132, %146 : vector<1x128xf32>
    %148 = vector.broadcast %145 : vector<1x128xf32> to vector<384x128xf32>
    %149 = arith.mulf %130, %148 : vector<384x128xf32>
    %150 = vector.broadcast %147 : vector<1x128xf32> to vector<384x128xf32>
    %151 = arith.addf %149, %150 : vector<384x128xf32>
    %152 = vector.extract_strided_slice %151 {offsets = [0, 0], sizes = [384, 64], strides = [1, 1]} : vector<384x128xf32> to vector<384x64xf32>
    %153 = math.absf %152 : vector<384x64xf32>
    %cst_52 = arith.constant 0.000000e+00 : f32
    %154 = vector.broadcast %cst_52 : f32 to vector<384x64xf32>
    %155 = arith.subf %154, %153 : vector<384x64xf32>
    %156 = math.exp %155 : vector<384x64xf32>
    %cst_53 = arith.constant 1.000000e+00 : f32
    %157 = vector.broadcast %cst_53 : f32 to vector<384x64xf32>
    %158 = arith.addf %157, %156 : vector<384x64xf32>
    %cst_54 = arith.constant 1.000000e+00 : f32
    %159 = vector.broadcast %cst_54 : f32 to vector<384x64xf32>
    %160 = arith.divf %159, %158 : vector<384x64xf32>
    %cst_55 = arith.constant 0.000000e+00 : f32
    %161 = vector.broadcast %cst_55 : f32 to vector<384x64xf32>
    %162 = arith.cmpf oge, %152, %161 : vector<384x64xf32>
    %163 = arith.mulf %156, %160 : vector<384x64xf32>
    %164 = arith.select %162, %160, %163 : vector<384x64xi1>, vector<384x64xf32>
    %165 = vector.extract_strided_slice %151 {offsets = [0, 64], sizes = [384, 64], strides = [1, 1]} : vector<384x128xf32> to vector<384x64xf32>
    %cst_56 = arith.constant 0.000000e+00 : f32
    %166 = vector.broadcast %cst_56 : f32 to vector<384x64xf32>
    %167 = arith.maximumf %165, %166 : vector<384x64xf32>
    %168 = math.absf %165 : vector<384x64xf32>
    %cst_57 = arith.constant 0.000000e+00 : f32
    %169 = vector.broadcast %cst_57 : f32 to vector<384x64xf32>
    %170 = arith.subf %169, %168 : vector<384x64xf32>
    %171 = math.exp %170 : vector<384x64xf32>
    %172 = math.log1p %171 : vector<384x64xf32>
    %173 = arith.addf %167, %172 : vector<384x64xf32>
    %174 = arith.mulf %164, %173 : vector<384x64xf32>
    %175 = vector.extract_strided_slice %174 {offsets = [0, 0], sizes = [32, 64], strides = [1, 1]} : vector<384x64xf32> to vector<32x64xf32>
    %176 = vector.extract_strided_slice %174 {offsets = [32, 0], sizes = [32, 64], strides = [1, 1]} : vector<384x64xf32> to vector<32x64xf32>
    %177 = vector.extract_strided_slice %174 {offsets = [64, 0], sizes = [32, 64], strides = [1, 1]} : vector<384x64xf32> to vector<32x64xf32>
    %178 = vector.extract_strided_slice %174 {offsets = [96, 0], sizes = [32, 64], strides = [1, 1]} : vector<384x64xf32> to vector<32x64xf32>
    %179 = vector.extract_strided_slice %174 {offsets = [128, 0], sizes = [32, 64], strides = [1, 1]} : vector<384x64xf32> to vector<32x64xf32>
    %180 = vector.extract_strided_slice %174 {offsets = [160, 0], sizes = [32, 64], strides = [1, 1]} : vector<384x64xf32> to vector<32x64xf32>
    %181 = vector.extract_strided_slice %174 {offsets = [192, 0], sizes = [32, 64], strides = [1, 1]} : vector<384x64xf32> to vector<32x64xf32>
    %182 = vector.extract_strided_slice %174 {offsets = [224, 0], sizes = [32, 64], strides = [1, 1]} : vector<384x64xf32> to vector<32x64xf32>
    %183 = vector.extract_strided_slice %174 {offsets = [256, 0], sizes = [32, 64], strides = [1, 1]} : vector<384x64xf32> to vector<32x64xf32>
    %184 = vector.extract_strided_slice %174 {offsets = [288, 0], sizes = [32, 64], strides = [1, 1]} : vector<384x64xf32> to vector<32x64xf32>
    %185 = vector.extract_strided_slice %174 {offsets = [320, 0], sizes = [32, 64], strides = [1, 1]} : vector<384x64xf32> to vector<32x64xf32>
    %186 = vector.extract_strided_slice %174 {offsets = [352, 0], sizes = [32, 64], strides = [1, 1]} : vector<384x64xf32> to vector<32x64xf32>
    %187 = arith.addf %175, %176 : vector<32x64xf32>
    %188 = arith.addf %177, %178 : vector<32x64xf32>
    %189 = arith.addf %179, %180 : vector<32x64xf32>
    %190 = arith.addf %181, %182 : vector<32x64xf32>
    %191 = arith.addf %183, %184 : vector<32x64xf32>
    %192 = arith.addf %185, %186 : vector<32x64xf32>
    %193 = arith.addf %187, %188 : vector<32x64xf32>
    %194 = arith.addf %189, %190 : vector<32x64xf32>
    %195 = arith.addf %191, %192 : vector<32x64xf32>
    %196 = arith.addf %193, %194 : vector<32x64xf32>
    %197 = arith.addf %196, %195 : vector<32x64xf32>
    %198 = vector.extract_strided_slice %121 {offsets = [2, 0], sizes = [1, 64], strides = [1, 1]} : vector<4x128xf32> to vector<1x64xf32>
    %199 = vector.extract_strided_slice %121 {offsets = [3, 0], sizes = [1, 64], strides = [1, 1]} : vector<4x128xf32> to vector<1x64xf32>
    %cst_58 = arith.constant dense<0.000000e+00> : vector<1x64xf32>
    %200 = tpu.matmul %1, %197, %cst_58 {dimension_numbers = #tpu.dot_dimension_numbers<[1], [0], [0], [1], [0, 0, 1, 1], [], []>} : vector<1x32xf32>, vector<32x64xf32>, vector<1x64xf32> -> vector<1x64xf32>
    %cst_59 = arith.constant 3.125000e-02 : f32
    %201 = vector.broadcast %cst_59 : f32 to vector<1x64xf32>
    %202 = arith.mulf %200, %201 : vector<1x64xf32>
    %203 = arith.mulf %197, %197 : vector<32x64xf32>
    %cst_60 = arith.constant dense<0.000000e+00> : vector<1x64xf32>
    %204 = tpu.matmul %1, %203, %cst_60 {dimension_numbers = #tpu.dot_dimension_numbers<[1], [0], [0], [1], [0, 0, 1, 1], [], []>} : vector<1x32xf32>, vector<32x64xf32>, vector<1x64xf32> -> vector<1x64xf32>
    %cst_61 = arith.constant 3.125000e-02 : f32
    %205 = vector.broadcast %cst_61 : f32 to vector<1x64xf32>
    %206 = arith.mulf %204, %205 : vector<1x64xf32>
    %207 = arith.mulf %202, %202 : vector<1x64xf32>
    %208 = arith.subf %206, %207 : vector<1x64xf32>
    %cst_62 = arith.constant 9.99999974E-6 : f32
    %209 = vector.broadcast %cst_62 : f32 to vector<1x64xf32>
    %210 = arith.addf %208, %209 : vector<1x64xf32>
    %211 = math.rsqrt %210 : vector<1x64xf32>
    %212 = arith.mulf %198, %211 : vector<1x64xf32>
    %213 = arith.mulf %202, %212 : vector<1x64xf32>
    %214 = arith.subf %199, %213 : vector<1x64xf32>
    %215 = vector.broadcast %212 : vector<1x64xf32> to vector<32x64xf32>
    %216 = arith.mulf %197, %215 : vector<32x64xf32>
    %217 = vector.broadcast %214 : vector<1x64xf32> to vector<32x64xf32>
    %218 = arith.addf %216, %217 : vector<32x64xf32>
    %219 = arith.addf %119, %218 : vector<32x64xf32>
    %cst_63 = arith.constant 0.000000e+00 : f32
    %220 = vector.broadcast %cst_63 : f32 to vector<32x64xf32>
    %221 = arith.maximumf %219, %220 : vector<32x64xf32>
    %222 = math.absf %219 : vector<32x64xf32>
    %cst_64 = arith.constant 0.000000e+00 : f32
    %223 = vector.broadcast %cst_64 : f32 to vector<32x64xf32>
    %224 = arith.subf %223, %222 : vector<32x64xf32>
    %225 = math.exp %224 : vector<32x64xf32>
    %226 = math.log1p %225 : vector<32x64xf32>
    %227 = arith.addf %221, %226 : vector<32x64xf32>
    %c2 = arith.constant 2 : index
    %c0_65 = arith.constant 0 : index
    %c0_66 = arith.constant 0 : index
    %228 = vector.load %arg8[%c2, %c0_65, %c0_66] : memref<3x4x128xf32, #tpu.memory_space<vmem>>, vector<1x4x128xf32>
    %229 = vector.shape_cast %228 : vector<1x4x128xf32> to vector<4x128xf32>
    %c2_67 = arith.constant 2 : index
    %c0_68 = arith.constant 0 : index
    %c0_69 = arith.constant 0 : index
    %230 = vector.load %arg6[%c2_67, %c0_68, %c0_69] : memref<3x64x256xf32, #tpu.memory_space<vmem>>, vector<1x64x256xf32>
    %231 = vector.shape_cast %230 : vector<1x64x256xf32> to vector<64x256xf32>
    %cst_70 = arith.constant dense<0.000000e+00> : vector<32x256xf32>
    %232 = tpu.matmul %227, %231, %cst_70 {dimension_numbers = #tpu.dot_dimension_numbers<[1], [0], [0], [1], [0, 0, 1, 1], [], []>} : vector<32x64xf32>, vector<64x256xf32>, vector<32x256xf32> -> vector<32x256xf32>
    %233 = vector.extract_strided_slice %232 {offsets = [0, 0], sizes = [32, 128], strides = [1, 1]} : vector<32x256xf32> to vector<32x128xf32>
    %234 = vector.extract_strided_slice %232 {offsets = [0, 128], sizes = [32, 128], strides = [1, 1]} : vector<32x256xf32> to vector<32x128xf32>
    %235 = tpu.concatenate %233, %234 in 0 : vector<32x128xf32>, vector<32x128xf32> -> vector<64x128xf32>
    %cst_71 = arith.constant dense<0.000000e+00> : vector<384x128xf32>
    %236 = tpu.matmul %8, %235, %cst_71 {dimension_numbers = #tpu.dot_dimension_numbers<[1], [0], [0], [1], [0, 0, 1, 1], [], []>} : vector<384x64xf32>, vector<64x128xf32>, vector<384x128xf32> -> vector<384x128xf32>
    %237 = vector.extract_strided_slice %11 {offsets = [0, 256], sizes = [384, 128], strides = [1, 1]} : vector<384x384xf32> to vector<384x128xf32>
    %238 = arith.addf %236, %237 : vector<384x128xf32>
    %239 = vector.extract_strided_slice %229 {offsets = [0, 0], sizes = [1, 128], strides = [1, 1]} : vector<4x128xf32> to vector<1x128xf32>
    %240 = vector.extract_strided_slice %229 {offsets = [1, 0], sizes = [1, 128], strides = [1, 1]} : vector<4x128xf32> to vector<1x128xf32>
    %cst_72 = arith.constant dense<0.000000e+00> : vector<1x128xf32>
    %241 = tpu.matmul %0, %238, %cst_72 {dimension_numbers = #tpu.dot_dimension_numbers<[1], [0], [0], [1], [0, 0, 1, 1], [], []>} : vector<1x384xf32>, vector<384x128xf32>, vector<1x128xf32> -> vector<1x128xf32>
    %cst_73 = arith.constant 0.00260416674 : f32
    %242 = vector.broadcast %cst_73 : f32 to vector<1x128xf32>
    %243 = arith.mulf %241, %242 : vector<1x128xf32>
    %244 = arith.mulf %238, %238 : vector<384x128xf32>
    %cst_74 = arith.constant dense<0.000000e+00> : vector<1x128xf32>
    %245 = tpu.matmul %0, %244, %cst_74 {dimension_numbers = #tpu.dot_dimension_numbers<[1], [0], [0], [1], [0, 0, 1, 1], [], []>} : vector<1x384xf32>, vector<384x128xf32>, vector<1x128xf32> -> vector<1x128xf32>
    %cst_75 = arith.constant 0.00260416674 : f32
    %246 = vector.broadcast %cst_75 : f32 to vector<1x128xf32>
    %247 = arith.mulf %245, %246 : vector<1x128xf32>
    %248 = arith.mulf %243, %243 : vector<1x128xf32>
    %249 = arith.subf %247, %248 : vector<1x128xf32>
    %cst_76 = arith.constant 9.99999974E-6 : f32
    %250 = vector.broadcast %cst_76 : f32 to vector<1x128xf32>
    %251 = arith.addf %249, %250 : vector<1x128xf32>
    %252 = math.rsqrt %251 : vector<1x128xf32>
    %253 = arith.mulf %239, %252 : vector<1x128xf32>
    %254 = arith.mulf %243, %253 : vector<1x128xf32>
    %255 = arith.subf %240, %254 : vector<1x128xf32>
    %256 = vector.broadcast %253 : vector<1x128xf32> to vector<384x128xf32>
    %257 = arith.mulf %238, %256 : vector<384x128xf32>
    %258 = vector.broadcast %255 : vector<1x128xf32> to vector<384x128xf32>
    %259 = arith.addf %257, %258 : vector<384x128xf32>
    %260 = vector.extract_strided_slice %259 {offsets = [0, 0], sizes = [384, 64], strides = [1, 1]} : vector<384x128xf32> to vector<384x64xf32>
    %261 = math.absf %260 : vector<384x64xf32>
    %cst_77 = arith.constant 0.000000e+00 : f32
    %262 = vector.broadcast %cst_77 : f32 to vector<384x64xf32>
    %263 = arith.subf %262, %261 : vector<384x64xf32>
    %264 = math.exp %263 : vector<384x64xf32>
    %cst_78 = arith.constant 1.000000e+00 : f32
    %265 = vector.broadcast %cst_78 : f32 to vector<384x64xf32>
    %266 = arith.addf %265, %264 : vector<384x64xf32>
    %cst_79 = arith.constant 1.000000e+00 : f32
    %267 = vector.broadcast %cst_79 : f32 to vector<384x64xf32>
    %268 = arith.divf %267, %266 : vector<384x64xf32>
    %cst_80 = arith.constant 0.000000e+00 : f32
    %269 = vector.broadcast %cst_80 : f32 to vector<384x64xf32>
    %270 = arith.cmpf oge, %260, %269 : vector<384x64xf32>
    %271 = arith.mulf %264, %268 : vector<384x64xf32>
    %272 = arith.select %270, %268, %271 : vector<384x64xi1>, vector<384x64xf32>
    %273 = vector.extract_strided_slice %259 {offsets = [0, 64], sizes = [384, 64], strides = [1, 1]} : vector<384x128xf32> to vector<384x64xf32>
    %cst_81 = arith.constant 0.000000e+00 : f32
    %274 = vector.broadcast %cst_81 : f32 to vector<384x64xf32>
    %275 = arith.maximumf %273, %274 : vector<384x64xf32>
    %276 = math.absf %273 : vector<384x64xf32>
    %cst_82 = arith.constant 0.000000e+00 : f32
    %277 = vector.broadcast %cst_82 : f32 to vector<384x64xf32>
    %278 = arith.subf %277, %276 : vector<384x64xf32>
    %279 = math.exp %278 : vector<384x64xf32>
    %280 = math.log1p %279 : vector<384x64xf32>
    %281 = arith.addf %275, %280 : vector<384x64xf32>
    %282 = arith.mulf %272, %281 : vector<384x64xf32>
    %283 = vector.extract_strided_slice %282 {offsets = [0, 0], sizes = [32, 64], strides = [1, 1]} : vector<384x64xf32> to vector<32x64xf32>
    %284 = vector.extract_strided_slice %282 {offsets = [32, 0], sizes = [32, 64], strides = [1, 1]} : vector<384x64xf32> to vector<32x64xf32>
    %285 = vector.extract_strided_slice %282 {offsets = [64, 0], sizes = [32, 64], strides = [1, 1]} : vector<384x64xf32> to vector<32x64xf32>
    %286 = vector.extract_strided_slice %282 {offsets = [96, 0], sizes = [32, 64], strides = [1, 1]} : vector<384x64xf32> to vector<32x64xf32>
    %287 = vector.extract_strided_slice %282 {offsets = [128, 0], sizes = [32, 64], strides = [1, 1]} : vector<384x64xf32> to vector<32x64xf32>
    %288 = vector.extract_strided_slice %282 {offsets = [160, 0], sizes = [32, 64], strides = [1, 1]} : vector<384x64xf32> to vector<32x64xf32>
    %289 = vector.extract_strided_slice %282 {offsets = [192, 0], sizes = [32, 64], strides = [1, 1]} : vector<384x64xf32> to vector<32x64xf32>
    %290 = vector.extract_strided_slice %282 {offsets = [224, 0], sizes = [32, 64], strides = [1, 1]} : vector<384x64xf32> to vector<32x64xf32>
    %291 = vector.extract_strided_slice %282 {offsets = [256, 0], sizes = [32, 64], strides = [1, 1]} : vector<384x64xf32> to vector<32x64xf32>
    %292 = vector.extract_strided_slice %282 {offsets = [288, 0], sizes = [32, 64], strides = [1, 1]} : vector<384x64xf32> to vector<32x64xf32>
    %293 = vector.extract_strided_slice %282 {offsets = [320, 0], sizes = [32, 64], strides = [1, 1]} : vector<384x64xf32> to vector<32x64xf32>
    %294 = vector.extract_strided_slice %282 {offsets = [352, 0], sizes = [32, 64], strides = [1, 1]} : vector<384x64xf32> to vector<32x64xf32>
    %295 = arith.addf %283, %284 : vector<32x64xf32>
    %296 = arith.addf %285, %286 : vector<32x64xf32>
    %297 = arith.addf %287, %288 : vector<32x64xf32>
    %298 = arith.addf %289, %290 : vector<32x64xf32>
    %299 = arith.addf %291, %292 : vector<32x64xf32>
    %300 = arith.addf %293, %294 : vector<32x64xf32>
    %301 = arith.addf %295, %296 : vector<32x64xf32>
    %302 = arith.addf %297, %298 : vector<32x64xf32>
    %303 = arith.addf %299, %300 : vector<32x64xf32>
    %304 = arith.addf %301, %302 : vector<32x64xf32>
    %305 = arith.addf %304, %303 : vector<32x64xf32>
    %306 = vector.extract_strided_slice %229 {offsets = [2, 0], sizes = [1, 64], strides = [1, 1]} : vector<4x128xf32> to vector<1x64xf32>
    %307 = vector.extract_strided_slice %229 {offsets = [3, 0], sizes = [1, 64], strides = [1, 1]} : vector<4x128xf32> to vector<1x64xf32>
    %cst_83 = arith.constant dense<0.000000e+00> : vector<1x64xf32>
    %308 = tpu.matmul %1, %305, %cst_83 {dimension_numbers = #tpu.dot_dimension_numbers<[1], [0], [0], [1], [0, 0, 1, 1], [], []>} : vector<1x32xf32>, vector<32x64xf32>, vector<1x64xf32> -> vector<1x64xf32>
    %cst_84 = arith.constant 3.125000e-02 : f32
    %309 = vector.broadcast %cst_84 : f32 to vector<1x64xf32>
    %310 = arith.mulf %308, %309 : vector<1x64xf32>
    %311 = arith.mulf %305, %305 : vector<32x64xf32>
    %cst_85 = arith.constant dense<0.000000e+00> : vector<1x64xf32>
    %312 = tpu.matmul %1, %311, %cst_85 {dimension_numbers = #tpu.dot_dimension_numbers<[1], [0], [0], [1], [0, 0, 1, 1], [], []>} : vector<1x32xf32>, vector<32x64xf32>, vector<1x64xf32> -> vector<1x64xf32>
    %cst_86 = arith.constant 3.125000e-02 : f32
    %313 = vector.broadcast %cst_86 : f32 to vector<1x64xf32>
    %314 = arith.mulf %312, %313 : vector<1x64xf32>
    %315 = arith.mulf %310, %310 : vector<1x64xf32>
    %316 = arith.subf %314, %315 : vector<1x64xf32>
    %cst_87 = arith.constant 9.99999974E-6 : f32
    %317 = vector.broadcast %cst_87 : f32 to vector<1x64xf32>
    %318 = arith.addf %316, %317 : vector<1x64xf32>
    %319 = math.rsqrt %318 : vector<1x64xf32>
    %320 = arith.mulf %306, %319 : vector<1x64xf32>
    %321 = arith.mulf %310, %320 : vector<1x64xf32>
    %322 = arith.subf %307, %321 : vector<1x64xf32>
    %323 = vector.broadcast %320 : vector<1x64xf32> to vector<32x64xf32>
    %324 = arith.mulf %305, %323 : vector<32x64xf32>
    %325 = vector.broadcast %322 : vector<1x64xf32> to vector<32x64xf32>
    %326 = arith.addf %324, %325 : vector<32x64xf32>
    %327 = arith.addf %227, %326 : vector<32x64xf32>
    %cst_88 = arith.constant 0.000000e+00 : f32
    %328 = vector.broadcast %cst_88 : f32 to vector<32x64xf32>
    %329 = arith.maximumf %327, %328 : vector<32x64xf32>
    %330 = math.absf %327 : vector<32x64xf32>
    %cst_89 = arith.constant 0.000000e+00 : f32
    %331 = vector.broadcast %cst_89 : f32 to vector<32x64xf32>
    %332 = arith.subf %331, %330 : vector<32x64xf32>
    %333 = math.exp %332 : vector<32x64xf32>
    %334 = math.log1p %333 : vector<32x64xf32>
    %335 = arith.addf %329, %334 : vector<32x64xf32>
    %c0_90 = arith.constant 0 : index
    %c0_91 = arith.constant 0 : index
    %336 = vector.load %arg4[%c0_90, %c0_91] : memref<2x32xf32, #tpu.memory_space<vmem>>, vector<2x32xf32>
    %cst_92 = arith.constant dense<0.000000e+00> : vector<2x64xf32>
    %337 = tpu.matmul %336, %335, %cst_92 {dimension_numbers = #tpu.dot_dimension_numbers<[1], [0], [0], [1], [0, 0, 1, 1], [], []>} : vector<2x32xf32>, vector<32x64xf32>, vector<2x64xf32> -> vector<2x64xf32>
    %cst_93 = arith.constant 0.000000e+00 : f32
    %338 = vector.broadcast %cst_93 : f32 to vector<2x64xf32>
    %339 = arith.maximumf %337, %338 : vector<2x64xf32>
    %340 = math.absf %337 : vector<2x64xf32>
    %cst_94 = arith.constant 0.000000e+00 : f32
    %341 = vector.broadcast %cst_94 : f32 to vector<2x64xf32>
    %342 = arith.subf %341, %340 : vector<2x64xf32>
    %343 = math.exp %342 : vector<2x64xf32>
    %344 = math.log1p %343 : vector<2x64xf32>
    %345 = arith.addf %339, %344 : vector<2x64xf32>
    %c0_95 = arith.constant 0 : index
    %c0_96 = arith.constant 0 : index
    %346 = vector.load %arg9[%c0_95, %c0_96] : memref<64x128xf32, #tpu.memory_space<vmem>>, vector<64x128xf32>
    %cst_97 = arith.constant dense<0.000000e+00> : vector<2x128xf32>
    %347 = tpu.matmul %345, %346, %cst_97 {dimension_numbers = #tpu.dot_dimension_numbers<[1], [0], [0], [1], [0, 0, 1, 1], [], []>} : vector<2x64xf32>, vector<64x128xf32>, vector<2x128xf32> -> vector<2x128xf32>
    %c1_98 = arith.constant 1 : index
    %c0_99 = arith.constant 0 : index
    %348 = vector.load %arg11[%c1_98, %c0_99] : memref<8x128xf32, #tpu.memory_space<vmem>>, vector<1x128xf32>
    %349 = vector.broadcast %348 : vector<1x128xf32> to vector<2x128xf32>
    %350 = arith.addf %347, %349 : vector<2x128xf32>
    %cst_100 = arith.constant 0.000000e+00 : f32
    %351 = vector.broadcast %cst_100 : f32 to vector<2x128xf32>
    %352 = arith.maximumf %350, %351 : vector<2x128xf32>
    %353 = math.absf %350 : vector<2x128xf32>
    %cst_101 = arith.constant 0.000000e+00 : f32
    %354 = vector.broadcast %cst_101 : f32 to vector<2x128xf32>
    %355 = arith.subf %354, %353 : vector<2x128xf32>
    %356 = math.exp %355 : vector<2x128xf32>
    %357 = math.log1p %356 : vector<2x128xf32>
    %358 = arith.addf %352, %357 : vector<2x128xf32>
    %c0_102 = arith.constant 0 : index
    %c0_103 = arith.constant 0 : index
    %359 = vector.load %arg10[%c0_102, %c0_103] : memref<128x1xf32, #tpu.memory_space<vmem>>, vector<128x1xf32>
    %cst_104 = arith.constant dense<0.000000e+00> : vector<2x1xf32>
    %360 = tpu.matmul %358, %359, %cst_104 {dimension_numbers = #tpu.dot_dimension_numbers<[1], [0], [0], [1], [0, 0, 1, 1], [], []>} : vector<2x128xf32>, vector<128x1xf32>, vector<2x1xf32> -> vector<2x1xf32>
    %c2_105 = arith.constant 2 : index
    %c0_106 = arith.constant 0 : index
    %361 = vector.load %arg11[%c2_105, %c0_106] : memref<8x128xf32, #tpu.memory_space<vmem>>, vector<1x1xf32>
    %362 = vector.broadcast %361 : vector<1x1xf32> to vector<2x1xf32>
    %363 = arith.addf %360, %362 : vector<2x1xf32>
    %c0_107 = arith.constant 0 : index
    %c0_108 = arith.constant 0 : index
    %364 = vector.load %arg12[%c0_107, %c0_108] : memref<2x1xf32, #tpu.memory_space<vmem>>, vector<2x1xf32>
    tpu.vector_store %arg12[%c0_107, %c0_108], %363 {strides = array<i32>} : memref<2x1xf32, #tpu.memory_space<vmem>>, vector<2x1xf32>,
    return
  }
  func.func @transform_0(%arg0: i32) -> (i32, i32) {
    %c0_i32 = arith.constant 0 : i32
    %c0_i32_0 = arith.constant 0 : i32
    %c0_i32_1 = arith.constant 0 : i32
    return %c0_i32, %c0_i32_0 : i32, i32
  }
  func.func @transform_1(%arg0: i32) -> (i32, i32) {
    %c0_i32 = arith.constant 0 : i32
    %c0_i32_0 = arith.constant 0 : i32
    %c0_i32_1 = arith.constant 0 : i32
    return %c0_i32, %c0_i32_0 : i32, i32
  }
  func.func @transform_2(%arg0: i32) -> (i32, i32) {
    %c0_i32 = arith.constant 0 : i32
    %c0_i32_0 = arith.constant 0 : i32
    %c0_i32_1 = arith.constant 0 : i32
    return %c0_i32, %c0_i32_0 : i32, i32
  }
  func.func @transform_3(%arg0: i32) -> (i32, i32) {
    %c0_i32 = arith.constant 0 : i32
    %c0_i32_0 = arith.constant 0 : i32
    %c0_i32_1 = arith.constant 0 : i32
    return %c0_i32, %c0_i32_0 : i32, i32
  }
  func.func @transform_4(%arg0: i32) -> (i32, i32) {
    %c0_i32 = arith.constant 0 : i32
    %c0_i32_0 = arith.constant 0 : i32
    %c0_i32_1 = arith.constant 0 : i32
    return %c0_i32, %c0_i32_0 : i32, i32
  }
  func.func @transform_5(%arg0: i32) -> (i32, i32, i32) {
    %c0_i32 = arith.constant 0 : i32
    %c0_i32_0 = arith.constant 0 : i32
    %c0_i32_1 = arith.constant 0 : i32
    %c0_i32_2 = arith.constant 0 : i32
    return %c0_i32, %c0_i32_0, %c0_i32_1 : i32, i32, i32
  }
  func.func @transform_6(%arg0: i32) -> (i32, i32) {
    %c0_i32 = arith.constant 0 : i32
    %c0_i32_0 = arith.constant 0 : i32
    %c0_i32_1 = arith.constant 0 : i32
    return %c0_i32, %c0_i32_0 : i32, i32
  }
  func.func @transform_7(%arg0: i32) -> (i32, i32, i32) {
    %c0_i32 = arith.constant 0 : i32
    %c0_i32_0 = arith.constant 0 : i32
    %c0_i32_1 = arith.constant 0 : i32
    %c0_i32_2 = arith.constant 0 : i32
    return %c0_i32, %c0_i32_0, %c0_i32_1 : i32, i32, i32
  }
  func.func @transform_8(%arg0: i32) -> (i32, i32) {
    %c0_i32 = arith.constant 0 : i32
    %c0_i32_0 = arith.constant 0 : i32
    %c0_i32_1 = arith.constant 0 : i32
    return %c0_i32, %c0_i32_0 : i32, i32
  }
  func.func @transform_9(%arg0: i32) -> (i32, i32) {
    %c0_i32 = arith.constant 0 : i32
    %c0_i32_0 = arith.constant 0 : i32
    %c0_i32_1 = arith.constant 0 : i32
    return %c0_i32, %c0_i32_0 : i32, i32
  }
  func.func @transform_10(%arg0: i32) -> (i32, i32) {
    %c0_i32 = arith.constant 0 : i32
    %c0_i32_0 = arith.constant 0 : i32
    %c0_i32_1 = arith.constant 0 : i32
    return %c0_i32, %c0_i32_0 : i32, i32
  }
  func.func @transform_11(%arg0: i32) -> (i32, i32) {
    %c0_i32 = arith.constant 0 : i32
    %c0_i32_0 = arith.constant 0 : i32
    %c0_i32_1 = arith.constant 0 : i32
    return %c0_i32, %c0_i32_0 : i32, i32
  }
}

</mosaic_0001>

<llo_original>
// kernel: eq.1
$region0: #{eq.1}
  %s0 = inlined_call_operand.vmem [shape: s32[12,32], index: 0, kind: input, shape index: {}]
  %s1 = inlined_call_operand.vmem [shape: s32[384], index: 1, kind: output, shape index: {}]
  $region1: #{eq.1} parent=0
    #allocation0 [shape = 'u8[4096]{0}', space=vmem, size = 0x1000, scoped, tag = 'scoped mem for output reshape']
    %v2 = vld [vmem:[%s0] ss:$4 sm:$0x7]
    %vm3 = vcmask 261120
    %4 = vst.msk [vmem:[#allocation0] sm:$0x7] %vm3, %v2
    %s5 = scalar_lea.vmem %s0, 3
    %v6 = vld [vmem:[%s5] ss:$4 sm:$0x7]
    %7 = vrot.lane.b32.xlu0 %v6, 96
    %v8 = vpop.permute.xlu0 %7
    %vm9 = vcmask 1048320
    %10 = vst.msk [vmem:[#allocation0] sm:$0x7] %vm9, %v8
    %s11 = scalar_lea.vmem %s0, 2
    %v12 = vld [vmem:[%s11] ss:$4 sm:$0x7]
    %13 = vrot.lane.b32.xlu0 %v12, 64
    %v14 = vpop.permute.xlu0 %13
    %vm15 = vcmask 785920
    %16 = vst.msk [vmem:[#allocation0] sm:$0x7] %vm15, %v14
    %s17 = scalar_lea.vmem %s0, 1
    %v18 = vld [vmem:[%s17] ss:$4 sm:$0x7]
    %19 = vrot.lane.b32.xlu0 %v18, 32
    %v20 = vpop.permute.xlu0 %19
    %vm21 = vcmask 523520
    %22 = vst.msk [vmem:[#allocation0] sm:$0x7] %vm21, %v20
    %s24 = sshllo.u32 0, 4
    %v26 = vld [vmem:[#allocation0] sm:%s24]
    %s27 = sshllo.u32 0, 4
    %28 = vst [vmem:[%s1] sm:%s27] %v26

// kernel: crystal_graph_conv_net.1
$region0: #{crystal_graph_conv_net.1}
  #allocation0 [shape = 'u32[]', space=smem, size = 0x4, offset = 0x4, fixed_abs, tag = 'smem constant byte address 0x4 - core index']
  #allocation1 [shape = 'u32[144,128]{1,0:T(1,128)}', space=vmem, size = 0x12000, scoped, tag = 'internal scratch']
  %s0 = inlined_call_operand.vmem [shape: f32[32,16], index: 0, kind: input, shape index: {}]
  %s1 = inlined_call_operand.vmem [shape: f32[384,64], index: 1, kind: input, shape index: {}]
  %s2 = inlined_call_operand.vmem [shape: f32[384,42], index: 2, kind: input, shape index: {}]
  %s3 = inlined_call_operand.vmem [shape: f32[2,32], index: 3, kind: input, shape index: {}]
  %s4 = inlined_call_operand.vmem [shape: f32[16,64], index: 4, kind: input, shape index: {}]
  %s5 = inlined_call_operand.vmem [shape: f32[3,64,256], index: 5, kind: input, shape index: {}]
  %s6 = inlined_call_operand.vmem [shape: f32[42,384], index: 6, kind: input, shape index: {}]
  %s7 = inlined_call_operand.vmem [shape: f32[3,4,128], index: 7, kind: input, shape index: {}]
  %s8 = inlined_call_operand.vmem [shape: f32[64,128], index: 8, kind: input, shape index: {}]
  %s9 = inlined_call_operand.vmem [shape: f32[128,1], index: 9, kind: input, shape index: {}]
  %s10 = inlined_call_operand.vmem [shape: f32[8,128], index: 10, kind: input, shape index: {}]
  %s11 = inlined_call_operand.vmem [shape: f32[2,1], index: 11, kind: output, shape index: {}]
  %s12 = sld [smem:[#allocation0]]
  $region54: #{crystal_graph_conv_net.1} parent=0
    _
  %s14 = ssub.s32 1, %s12
  %s15 = scalar_select 0, %s14, %s12
  // Predicated region
  $region2: #{crystal_graph_conv_net.1} parent=0 // pred_check
    _
  $region3: #{crystal_graph_conv_net.1} parent=0 // pred_check_branch
    %17 = sbr.rel (0) target = $region5
  $region4: #{crystal_graph_conv_net.1} parent=0 // pred_region
    _
  $region5: #{crystal_graph_conv_net.1} parent=0 // pred_fallthru
    _
  // Predicated region
  $region6: #{crystal_graph_conv_net.1} parent=0 // pred_check
    _
  $region7: #{crystal_graph_conv_net.1} parent=0 // pred_check_branch
    %19 = sbr.rel (0) target = $region9
  $region8: #{crystal_graph_conv_net.1} parent=0 // pred_region
    _
  $region9: #{crystal_graph_conv_net.1} parent=0 // pred_fallthru
    _
  // Predicated region
  $region10: #{crystal_graph_conv_net.1} parent=0 // pred_check
    _
  $region11: #{crystal_graph_conv_net.1} parent=0 // pred_check_branch
    %21 = sbr.rel (0) target = $region13
  $region12: #{crystal_graph_conv_net.1} parent=0 // pred_region
    _
  $region13: #{crystal_graph_conv_net.1} parent=0 // pred_fallthru
    _
  // Predicated region
  $region14: #{crystal_graph_conv_net.1} parent=0 // pred_check
    _
  $region15: #{crystal_graph_conv_net.1} parent=0 // pred_check_branch
    %23 = sbr.rel (0) target = $region17
  $region16: #{crystal_graph_conv_net.1} parent=0 // pred_region
    _
  $region17: #{crystal_graph_conv_net.1} parent=0 // pred_fallthru
    _
  // Predicated region
  $region18: #{crystal_graph_conv_net.1} parent=0 // pred_check
    _
  $region19: #{crystal_graph_conv_net.1} parent=0 // pred_check_branch
    %25 = sbr.rel (0) target = $region21
  $region20: #{crystal_graph_conv_net.1} parent=0 // pred_region
    _
  $region21: #{crystal_graph_conv_net.1} parent=0 // pred_fallthru
    _
  // Predicated region
  $region22: #{crystal_graph_conv_net.1} parent=0 // pred_check
    _
  $region23: #{crystal_graph_conv_net.1} parent=0 // pred_check_branch
    %27 = sbr.rel (0) target = $region25
  $region24: #{crystal_graph_conv_net.1} parent=0 // pred_region
    _
  $region25: #{crystal_graph_conv_net.1} parent=0 // pred_fallthru
    _
  // Predicated region
  $region26: #{crystal_graph_conv_net.1} parent=0 // pred_check
    _
  $region27: #{crystal_graph_conv_net.1} parent=0 // pred_check_branch
    %29 = sbr.rel (0) target = $region29
  $region28: #{crystal_graph_conv_net.1} parent=0 // pred_region
    _
  $region29: #{crystal_graph_conv_net.1} parent=0 // pred_fallthru
    _
  // Predicated region
  $region30: #{crystal_graph_conv_net.1} parent=0 // pred_check
    _
  $region31: #{crystal_graph_conv_net.1} parent=0 // pred_check_branch
    %31 = sbr.rel (0) target = $region33
  $region32: #{crystal_graph_conv_net.1} parent=0 // pred_region
    _
  $region33: #{crystal_graph_conv_net.1} parent=0 // pred_fallthru
    _
  // Predicated region
  $region34: #{crystal_graph_conv_net.1} parent=0 // pred_check
    _
  $region35: #{crystal_graph_conv_net.1} parent=0 // pred_check_branch
    %33 = sbr.rel (0) target = $region37
  $region36: #{crystal_graph_conv_net.1} parent=0 // pred_region
    _
  $region37: #{crystal_graph_conv_net.1} parent=0 // pred_fallthru
    _
  // Predicated region
  $region38: #{crystal_graph_conv_net.1} parent=0 // pred_check
    _
  $region39: #{crystal_graph_conv_net.1} parent=0 // pred_check_branch
    %35 = sbr.rel (0) target = $region41
  $region40: #{crystal_graph_conv_net.1} parent=0 // pred_region
    _
  $region41: #{crystal_graph_conv_net.1} parent=0 // pred_fallthru
    _
  // Predicated region
  $region42: #{crystal_graph_conv_net.1} parent=0 // pred_check
    _
  $region43: #{crystal_graph_conv_net.1} parent=0 // pred_check_branch
    %37 = sbr.rel (0) target = $region45
  $region44: #{crystal_graph_conv_net.1} parent=0 // pred_region
    _
  $region45: #{crystal_graph_conv_net.1} parent=0 // pred_fallthru
    _
  %v38 = vld [vmem:[%s0] sm:$0xff]
  %v39 = vld [vmem:[%s0 + $0x8] sm:$0xff]
  %v40 = vld [vmem:[%s0 + $0x10] sm:$0xff]
  %v41 = vld [vmem:[%s0 + $0x18] sm:$0xff]
  %v42 = vld [vmem:[%s4] sm:$0xff]
  %v43 = vld [vmem:[%s4 + $0x8] sm:$0xff]
  %v44 = vld [vmem:[%s10] sm:$0x1]
  %v45 = vlaneseq
  %v46 = vshrl.u32 %v45, 7
  %v47 = vsub.s32 0, %v46
  %v48 = vrot.slane %v44, %v47
  %vm49 = vcmask 130048
  %v51 = vsel %vm49, %v38, 0
  %v54 = vsel %vm49, %v39, 0
  %v57 = vsel %vm49, %v40, 0
  %v60 = vsel %vm49, %v41, 0
  %62 = vmatprep.subr.mxu0 0.0
  %63 = vmatpush1.msra.mxu0 %v42
  %64 = vmatprep.subr.mxu0 0.0
  %65 = vmatpush1.msra.mxu0 %v43
  %66 = vmatprep.subr.mxu0 0.0
  %67 = vmatpush1.msra.mxu0 0.0
  %68 = vmatprep.subr.mxu0 0.0
  %69 = vmatpush1.msra.mxu0 0.0
  %70 = vmatprep.subr.mxu0 0.0
  %71 = vmatpush1.msra.mxu0 0.0
  %72 = vmatprep.subr.mxu0 0.0
  %73 = vmatpush1.msra.mxu0 0.0
  %74 = vmatprep.subr.mxu0 0.0
  %75 = vmatpush1.msra.mxu0 0.0
  %76 = vmatprep.subr.mxu0 0.0
  %77 = vmatpush1.msra.mxu0 0.0
  %78 = vmatprep.subr.mxu0 0.0
  %79 = vmatpush1.msra.mxu0 0.0
  %80 = vmatprep.subr.mxu0 0.0
  %81 = vmatpush1.msra.mxu0 0.0
  %82 = vmatprep.subr.mxu0 0.0
  %83 = vmatpush1.msra.mxu0 0.0
  %84 = vmatprep.subr.mxu0 0.0
  %85 = vmatpush1.msra.mxu0 0.0
  %86 = vmatprep.subr.mxu0 0.0
  %87 = vmatpush1.msra.mxu0 0.0
  %88 = vmatprep.subr.mxu0 0.0
  %89 = vmatpush1.msra.mxu0 0.0
  %90 = vmatprep.subr.mxu0 0.0
  %91 = vmatpush1.msra.mxu0 0.0
  %92 = vmatprep.subr.mxu0 0.0
  %93 = vmatpush1.msra.mxu0 0.0
  %94 = vmatprep.subr.mxu0 0.0
  %95 = vmatpush1.msra.mxu0 0.0
  %96 = vmatprep.subr.mxu0 0.0
  %97 = vmatpush1.msra.mxu0 0.0
  %98 = vmatprep.subr.mxu0 0.0
  %99 = vmatpush1.msra.mxu0 0.0
  %100 = vmatprep.subr.mxu0 0.0
  %101 = vmatpush1.msra.mxu0 0.0
  %102 = vmatprep.subr.mxu0 0.0
  %103 = vmatpush1.msra.mxu0 0.0
  %104 = vmatprep.subr.mxu0 0.0
  %105 = vmatpush1.msra.mxu0 0.0
  %106 = vmatprep.subr.mxu0 0.0
  %107 = vmatpush1.msra.mxu0 0.0
  %108 = vmatprep.subr.mxu0 0.0
  %109 = vmatpush1.msra.mxu0 0.0
  %110 = vmatprep.subr.mxu0 0.0
  %111 = vmatpush1.msra.mxu0 0.0
  %112 = vmatprep.subr.mxu0 0.0
  %113 = vmatpush1.msra.mxu0 0.0
  %114 = vmatprep.subr.mxu0 0.0
  %115 = vmatpush1.msra.mxu0 0.0
  %116 = vmatprep.subr.mxu0 0.0
  %117 = vmatpush1.msra.mxu0 0.0
  %118 = vmatprep.subr.mxu0 0.0
  %119 = vmatpush1.msra.mxu0 0.0
  %120 = vmatprep.subr.mxu0 0.0
  %121 = vmatpush1.msra.mxu0 0.0
  %122 = vmatprep.subr.mxu0 0.0
  %123 = vmatpush1.msra.mxu0 0.0
  %124 = vmatprep.subr.mxu0 0.0
  %125 = vmatpush1.msra.mxu0 0.0
  %126 = vmatprep.mubr.f32.mxu0 0.0
  %127 = vmatmul.mubr.f32.gmra.mrb[0].mxu0 %v51
  %v128 = vpop.f32.mrb[0].mxu0
  %v129 = vadd.f32 %v48, %v128
  %v130 = vpop.f32.mrb[0].mxu0
  %131 = vmatprep.mubr.f32.mxu0 0.0
  %132 = vmatmul.mubr.f32.gmra.mrb[0].mxu0 %v54
  %v133 = vpop.f32.mrb[0].mxu0
  %v134 = vadd.f32 %v48, %v133
  %v135 = vpop.f32.mrb[0].mxu0
  %136 = vmatprep.mubr.f32.mxu0 0.0
  %137 = vmatmul.mubr.f32.gmra.mrb[0].mxu0 %v57
  %v138 = vpop.f32.mrb[0].mxu0
  %v139 = vadd.f32 %v48, %v138
  %v140 = vpop.f32.mrb[0].mxu0
  %141 = vmatprep.mubr.f32.mxu0 0.0
  %142 = vmatmul.mubr.f32.gmra.mrb[0].mxu0 %v60
  %v143 = vpop.f32.mrb[0].mxu0
  %v144 = vadd.f32 %v48, %v143
  %v145 = vpop.f32.mrb[0].mxu0
  %146 = vdwg.mxu0
  %v147 = vld [vmem:[%s1] sm:$0xff]
  %v148 = vld [vmem:[%s1 + $0x8] sm:$0xff]
  %v149 = vld [vmem:[%s1 + $0x10] sm:$0xff]
  %v150 = vld [vmem:[%s1 + $0x18] sm:$0xff]
  %v151 = vld [vmem:[%s1 + $0x20] sm:$0xff]
  %v152 = vld [vmem:[%s1 + $0x28] sm:$0xff]
  %v153 = vld [vmem:[%s1 + $0x30] sm:$0xff]
  %v154 = vld [vmem:[%s1 + $0x38] sm:$0xff]
  %v155 = vld [vmem:[%s1 + $0x40] sm:$0xff]
  %v156 = vld [vmem:[%s1 + $0x48] sm:$0xff]
  %v157 = vld [vmem:[%s1 + $0x50] sm:$0xff]
  %v158 = vld [vmem:[%s1 + $0x58] sm:$0xff]
  %v159 = vld [vmem:[%s1 + $0x60] sm:$0xff]
  %v160 = vld [vmem:[%s1 + $0x68] sm:$0xff]
  %v161 = vld [vmem:[%s1 + $0x70] sm:$0xff]
  %v162 = vld [vmem:[%s1 + $0x78] sm:$0xff]
  %v163 = vld [vmem:[%s1 + $0x80] sm:$0xff]
  %v164 = vld [vmem:[%s1 + $0x88] sm:$0xff]
  %v165 = vld [vmem:[%s1 + $0x90] sm:$0xff]
  %v166 = vld [vmem:[%s1 + $0x98] sm:$0xff]
  %v167 = vld [vmem:[%s1 + $0xa0] sm:$0xff]
  %v168 = vld [vmem:[%s1 + $0xa8] sm:$0xff]
  %v169 = vld [vmem:[%s1 + $0xb0] sm:$0xff]
  %v170 = vld [vmem:[%s1 + $0xb8] sm:$0xff]
  %v171 = vld [vmem:[%s1 + $0xc0] sm:$0xff]
  %v172 = vld [vmem:[%s1 + $0xc8] sm:$0xff]
  %v173 = vld [vmem:[%s1 + $0xd0] sm:$0xff]
  %v174 = vld [vmem:[%s1 + $0xd8] sm:$0xff]
  %v175 = vld [vmem:[%s1 + $0xe0] sm:$0xff]
  %v176 = vld [vmem:[%s1 + $0xe8] sm:$0xff]
  %v177 = vld [vmem:[%s1 + $0xf0] sm:$0xff]
  %v178 = vld [vmem:[%s1 + $0xf8] sm:$0xff]
  %v179 = vld [vmem:[%s1 + $0x100] sm:$0xff]
  %v180 = vld [vmem:[%s1 + $0x108] sm:$0xff]
  %v181 = vld [vmem:[%s1 + $0x110] sm:$0xff]
  %v182 = vld [vmem:[%s1 + $0x118] sm:$0xff]
  %v183 = vld [vmem:[%s1 + $0x120] sm:$0xff]
  %v184 = vld [vmem:[%s1 + $0x128] sm:$0xff]
  %v185 = vld [vmem:[%s1 + $0x130] sm:$0xff]
  %v186 = vld [vmem:[%s1 + $0x138] sm:$0xff]
  %v187 = vld [vmem:[%s1 + $0x140] sm:$0xff]
  %v188 = vld [vmem:[%s1 + $0x148] sm:$0xff]
  %v189 = vld [vmem:[%s1 + $0x150] sm:$0xff]
  %v190 = vld [vmem:[%s1 + $0x158] sm:$0xff]
  %v191 = vld [vmem:[%s1 + $0x160] sm:$0xff]
  %v192 = vld [vmem:[%s1 + $0x168] sm:$0xff]
  %v193 = vld [vmem:[%s1 + $0x170] sm:$0xff]
  %v194 = vld [vmem:[%s1 + $0x178] sm:$0xff]
  %v195 = vld [vmem:[%s2] sm:$0xff]
  %v196 = vld [vmem:[%s2 + $0x8] sm:$0xff]
  %v197 = vld [vmem:[%s2 + $0x10] sm:$0xff]
  %v198 = vld [vmem:[%s2 + $0x18] sm:$0xff]
  %v199 = vld [vmem:[%s2 + $0x20] sm:$0xff]
  %v200 = vld [vmem:[%s2 + $0x28] sm:$0xff]
  %v201 = vld [vmem:[%s2 + $0x30] sm:$0xff]
  %v202 = vld [vmem:[%s2 + $0x38] sm:$0xff]
  %v203 = vld [vmem:[%s2 + $0x40] sm:$0xff]
  %v204 = vld [vmem:[%s2 + $0x48] sm:$0xff]
  %v205 = vld [vmem:[%s2 + $0x50] sm:$0xff]
  %v206 = vld [vmem:[%s2 + $0x58] sm:$0xff]
  %v207 = vld [vmem:[%s2 + $0x60] sm:$0xff]
  %v208 = vld [vmem:[%s2 + $0x68] sm:$0xff]
  %v209 = vld [vmem:[%s2 + $0x70] sm:$0xff]
  %v210 = vld [vmem:[%s2 + $0x78] sm:$0xff]
  %v211 = vld [vmem:[%s2 + $0x80] sm:$0xff]
  %v212 = vld [vmem:[%s2 + $0x88] sm:$0xff]
  %v213 = vld [vmem:[%s2 + $0x90] sm:$0xff]
  %v214 = vld [vmem:[%s2 + $0x98] sm:$0xff]
  %v215 = vld [vmem:[%s2 + $0xa0] sm:$0xff]
  %v216 = vld [vmem:[%s2 + $0xa8] sm:$0xff]
  %v217 = vld [vmem:[%s2 + $0xb0] sm:$0xff]
  %v218 = vld [vmem:[%s2 + $0xb8] sm:$0xff]
  %v219 = vld [vmem:[%s2 + $0xc0] sm:$0xff]
  %v220 = vld [vmem:[%s2 + $0xc8] sm:$0xff]
  %v221 = vld [vmem:[%s2 + $0xd0] sm:$0xff]
  %v222 = vld [vmem:[%s2 + $0xd8] sm:$0xff]
  %v223 = vld [vmem:[%s2 + $0xe0] sm:$0xff]
  %v224 = vld [vmem:[%s2 + $0xe8] sm:$0xff]
  %v225 = vld [vmem:[%s2 + $0xf0] sm:$0xff]
  %v226 = vld [vmem:[%s2 + $0xf8] sm:$0xff]
  %v227 = vld [vmem:[%s2 + $0x100] sm:$0xff]
  %v228 = vld [vmem:[%s2 + $0x108] sm:$0xff]
  %v229 = vld [vmem:[%s2 + $0x110] sm:$0xff]
  %v230 = vld [vmem:[%s2 + $0x118] sm:$0xff]
  %v231 = vld [vmem:[%s2 + $0x120] sm:$0xff]
  %v232 = vld [vmem:[%s2 + $0x128] sm:$0xff]
  %v233 = vld [vmem:[%s2 + $0x130] sm:$0xff]
  %v234 = vld [vmem:[%s2 + $0x138] sm:$0xff]
  %v235 = vld [vmem:[%s2 + $0x140] sm:$0xff]
  %v236 = vld [vmem:[%s2 + $0x148] sm:$0xff]
  %v237 = vld [vmem:[%s2 + $0x150] sm:$0xff]
  %v238 = vld [vmem:[%s2 + $0x158] sm:$0xff]
  %v239 = vld [vmem:[%s2 + $0x160] sm:$0xff]
  %v240 = vld [vmem:[%s2 + $0x168] sm:$0xff]
  %v241 = vld [vmem:[%s2 + $0x170] sm:$0xff]
  %v242 = vld [vmem:[%s2 + $0x178] sm:$0xff]
  %v243 = vld [vmem:[%s6] sm:$0xff]
  %v244 = vld [vmem:[%s6 + $0x8] sm:$0xff]
  %v245 = vld [vmem:[%s6 + $0x10] sm:$0xff]
  %v246 = vld [vmem:[%s6 + $0x18] sm:$0xff]
  %v247 = vld [vmem:[%s6 + $0x20] sm:$0xff]
  %v248 = vld [vmem:[%s6 + $0x28] sm:$0xff]
  %v249 = vld [vmem:[%s6 + $0x30] sm:$0xff]
  %v250 = vld [vmem:[%s6 + $0x38] sm:$0xff]
  %v251 = vld [vmem:[%s6 + $0x40] sm:$0xff]
  %v252 = vld [vmem:[%s6 + $0x48] sm:$0xff]
  %v253 = vld [vmem:[%s6 + $0x50] sm:$0xff]
  %v254 = vld [vmem:[%s6 + $0x58] sm:$0xff]
  %v255 = vld [vmem:[%s6 + $0x60] sm:$0xff]
  %v256 = vld [vmem:[%s6 + $0x68] sm:$0xff]
  %v257 = vld [vmem:[%s6 + $0x70] sm:$0xff]
  %v258 = vld [vmem:[%s6 + $0x78] sm:$0x3]
  %v259 = vld [vmem:[%s6 + $0x80] sm:$0x3]
  %v260 = vld [vmem:[%s6 + $0x88] sm:$0x3]
  %vm261 = vcmask 343040
  %v263 = vsel %vm261, %v195, 0
  %v266 = vsel %vm261, %v196, 0
  %v269 = vsel %vm261, %v197, 0
  %v272 = vsel %vm261, %v198, 0
  %v275 = vsel %vm261, %v199, 0
  %v278 = vsel %vm261, %v200, 0
  %v281 = vsel %vm261, %v201, 0
  %v284 = vsel %vm261, %v202, 0
  %v287 = vsel %vm261, %v203, 0
  %v290 = vsel %vm261, %v204, 0
  %v293 = vsel %vm261, %v205, 0
  %v296 = vsel %vm261, %v206, 0
  %v299 = vsel %vm261, %v207, 0
  %v302 = vsel %vm261, %v208, 0
  %v305 = vsel %vm261, %v209, 0
  %v308 = vsel %vm261, %v210, 0
  %v311 = vsel %vm261, %v211, 0
  %v314 = vsel %vm261, %v212, 0
  %v317 = vsel %vm261, %v213, 0
  %v320 = vsel %vm261, %v214, 0
  %v323 = vsel %vm261, %v215, 0
  %v326 = vsel %vm261, %v216, 0
  %v329 = vsel %vm261, %v217, 0
  %v332 = vsel %vm261, %v218, 0
  %v335 = vsel %vm261, %v219, 0
  %v338 = vsel %vm261, %v220, 0
  %v341 = vsel %vm261, %v221, 0
  %v344 = vsel %vm261, %v222, 0
  %v347 = vsel %vm261, %v223, 0
  %v350 = vsel %vm261, %v224, 0
  %v353 = vsel %vm261, %v225, 0
  %v356 = vsel %vm261, %v226, 0
  %v359 = vsel %vm261, %v227, 0
  %v362 = vsel %vm261, %v228, 0
  %v365 = vsel %vm261, %v229, 0
  %v368 = vsel %vm261, %v230, 0
  %v371 = vsel %vm261, %v231, 0
  %v374 = vsel %vm261, %v232, 0
  %v377 = vsel %vm261, %v233, 0
  %v380 = vsel %vm261, %v234, 0
  %v383 = vsel %vm261, %v235, 0
  %v386 = vsel %vm261, %v236, 0
  %v389 = vsel %vm261, %v237, 0
  %v392 = vsel %vm261, %v238, 0
  %v395 = vsel %vm261, %v239, 0
  %v398 = vsel %vm261, %v240, 0
  %v401 = vsel %vm261, %v241, 0
  %v404 = vsel %vm261, %v242, 0
  %vm406 = vcmask 1041408
  %v408 = vsel %vm406, %v258, 0
  %v411 = vsel %vm406, %v259, 0
  %v414 = vsel %vm406, %v260, 0
  %416 = vmatprep.subr.mxu0 %v244
  %417 = vmatpush1.msra.mxu0 %v243
  %418 = vmatprep.subr.mxu0 %v247
  %419 = vmatpush1.msra.mxu0 %v246
  %420 = vmatprep.subr.mxu0 %v250
  %421 = vmatpush1.msra.mxu0 %v249
  %422 = vmatprep.subr.mxu0 %v253
  %423 = vmatpush1.msra.mxu0 %v252
  %424 = vmatprep.subr.mxu0 %v256
  %425 = vmatpush1.msra.mxu0 %v255
  %426 = vmatprep.subr.mxu0 %v411
  %427 = vmatpush1.msra.mxu0 %v408
  %428 = vmatprep.subr.mxu0 0.0
  %429 = vmatpush1.msra.mxu0 0.0
  %430 = vmatprep.subr.mxu0 0.0
  %431 = vmatpush1.msra.mxu0 0.0
  %432 = vmatprep.subr.mxu0 0.0
  %433 = vmatpush1.msra.mxu0 0.0
  %434 = vmatprep.subr.mxu0 0.0
  %435 = vmatpush1.msra.mxu0 0.0
  %436 = vmatprep.subr.mxu0 0.0
  %437 = vmatpush1.msra.mxu0 0.0
  %438 = vmatprep.subr.mxu0 0.0
  %439 = vmatpush1.msra.mxu0 0.0
  %440 = vmatprep.subr.mxu0 0.0
  %441 = vmatpush1.msra.mxu0 0.0
  %442 = vmatprep.subr.mxu0 0.0
  %443 = vmatpush1.msra.mxu0 0.0
  %444 = vmatprep.subr.mxu0 0.0
  %445 = vmatpush1.msra.mxu0 0.0
  %446 = vmatprep.subr.mxu0 0.0
  %447 = vmatpush1.msra.mxu0 0.0
  %448 = vmatprep.subr.mxu0 0.0
  %449 = vmatpush1.msra.mxu0 0.0
  %450 = vmatprep.subr.mxu0 0.0
  %451 = vmatpush1.msra.mxu0 0.0
  %452 = vmatprep.subr.mxu0 0.0
  %453 = vmatpush1.msra.mxu0 0.0
  %454 = vmatprep.subr.mxu0 0.0
  %455 = vmatpush1.msra.mxu0 0.0
  %456 = vmatprep.subr.mxu0 0.0
  %457 = vmatpush1.msra.mxu0 0.0
  %458 = vmatprep.subr.mxu0 0.0
  %459 = vmatpush1.msra.mxu0 0.0
  %460 = vmatprep.subr.mxu0 0.0
  %461 = vmatpush1.msra.mxu0 0.0
  %462 = vmatprep.subr.mxu0 0.0
  %463 = vmatpush1.msra.mxu0 0.0
  %464 = vmatprep.subr.mxu0 0.0
  %465 = vmatpush1.msra.mxu0 0.0
  %466 = vmatprep.subr.mxu0 0.0
  %467 = vmatpush1.msra.mxu0 0.0
  %468 = vmatprep.subr.mxu0 0.0
  %469 = vmatpush1.msra.mxu0 0.0
  %470 = vmatprep.subr.mxu0 0.0
  %471 = vmatpush1.msra.mxu0 0.0
  %472 = vmatprep.subr.mxu0 0.0
  %473 = vmatpush1.msra.mxu0 0.0
  %474 = vmatprep.subr.mxu0 0.0
  %475 = vmatpush1.msra.mxu0 0.0
  %476 = vmatprep.subr.mxu0 0.0
  %477 = vmatpush1.msra.mxu0 0.0
  %478 = vmatprep.subr.mxu0 0.0
  %479 = vmatpush1.msra.mxu0 0.0
  %480 = vmatprep.mubr.f32.mxu0 0.0
  %481 = vmatmul.mubr.f32.gmra.mrb[0].mxu0 %v263
  %v482 = vpop.f32.mrb[0].mxu0
  %v483 = vadd.f32 0.0, %v482
  %v484 = vpop.f32.mrb[0].mxu0
  %v485 = vadd.f32 0.0, %v484
  %486 = vmatprep.mubr.f32.mxu0 0.0
  %487 = vmatmul.mubr.f32.gmra.mrb[0].mxu0 %v266
  %v488 = vpop.f32.mrb[0].mxu0
  %v489 = vadd.f32 0.0, %v488
  %v490 = vpop.f32.mrb[0].mxu0
  %v491 = vadd.f32 0.0, %v490
  %492 = vmatprep.mubr.f32.mxu0 0.0
  %493 = vmatmul.mubr.f32.gmra.mrb[0].mxu0 %v269
  %v494 = vpop.f32.mrb[0].mxu0
  %v495 = vadd.f32 0.0, %v494
  %v496 = vpop.f32.mrb[0].mxu0
  %v497 = vadd.f32 0.0, %v496
  %498 = vmatprep.mubr.f32.mxu0 0.0
  %499 = vmatmul.mubr.f32.gmra.mrb[0].mxu0 %v272
  %v500 = vpop.f32.mrb[0].mxu0
  %v501 = vadd.f32 0.0, %v500
  %v502 = vpop.f32.mrb[0].mxu0
  %v503 = vadd.f32 0.0, %v502
  %504 = vmatprep.mubr.f32.mxu0 0.0
  %505 = vmatmul.mubr.f32.gmra.mrb[0].mxu0 %v275
  %v506 = vpop.f32.mrb[0].mxu0
  %v507 = vadd.f32 0.0, %v506
  %v508 = vpop.f32.mrb[0].mxu0
  %v509 = vadd.f32 0.0, %v508
  %510 = vmatprep.mubr.f32.mxu0 0.0
  %511 = vmatmul.mubr.f32.gmra.mrb[0].mxu0 %v278
  %v512 = vpop.f32.mrb[0].mxu0
  %v513 = vadd.f32 0.0, %v512
  %v514 = vpop.f32.mrb[0].mxu0
  %v515 = vadd.f32 0.0, %v514
  %516 = vmatprep.mubr.f32.mxu0 0.0
  %517 = vmatmul.mubr.f32.gmra.mrb[0].mxu0 %v281
  %v518 = vpop.f32.mrb[0].mxu0
  %v519 = vadd.f32 0.0, %v518
  %v520 = vpop.f32.mrb[0].mxu0
  %v521 = vadd.f32 0.0, %v520
  %522 = vmatprep.mubr.f32.mxu0 0.0
  %523 = vmatmul.mubr.f32.gmra.mrb[0].mxu0 %v284
  %v524 = vpop.f32.mrb[0].mxu0
  %v525 = vadd.f32 0.0, %v524
  %v526 = vpop.f32.mrb[0].mxu0
  %v527 = vadd.f32 0.0, %v526
  %528 = vmatprep.mubr.f32.mxu0 0.0
  %529 = vmatmul.mubr.f32.gmra.mrb[0].mxu0 %v287
  %v530 = vpop.f32.mrb[0].mxu0
  %v531 = vadd.f32 0.0, %v530
  %v532 = vpop.f32.mrb[0].mxu0
  %v533 = vadd.f32 0.0, %v532
  %534 = vmatprep.mubr.f32.mxu0 0.0
  %535 = vmatmul.mubr.f32.gmra.mrb[0].mxu0 %v290
  %v536 = vpop.f32.mrb[0].mxu0
  %v537 = vadd.f32 0.0, %v536
  %v538 = vpop.f32.mrb[0].mxu0
  %v539 = vadd.f32 0.0, %v538
  %540 = vmatprep.mubr.f32.mxu0 0.0
  %541 = vmatmul.mubr.f32.gmra.mrb[0].mxu0 %v293
  %v542 = vpop.f32.mrb[0].mxu0
  %v543 = vadd.f32 0.0, %v542
  %v544 = vpop.f32.mrb[0].mxu0
  %v545 = vadd.f32 0.0, %v544
  %546 = vmatprep.mubr.f32.mxu0 0.0
  %547 = vmatmul.mubr.f32.gmra.mrb[0].mxu0 %v296
  %v548 = vpop.f32.mrb[0].mxu0
  %v549 = vadd.f32 0.0, %v548
  %v550 = vpop.f32.mrb[0].mxu0
  %v551 = vadd.f32 0.0, %v550
  %552 = vmatprep.mubr.f32.mxu0 0.0
  %553 = vmatmul.mubr.f32.gmra.mrb[0].mxu0 %v299
  %v554 = vpop.f32.mrb[0].mxu0
  %v555 = vadd.f32 0.0, %v554
  %v556 = vpop.f32.mrb[0].mxu0
  %v557 = vadd.f32 0.0, %v556
  %558 = vmatprep.mubr.f32.mxu0 0.0
  %559 = vmatmul.mubr.f32.gmra.mrb[0].mxu0 %v302
  %v560 = vpop.f32.mrb[0].mxu0
  %v561 = vadd.f32 0.0, %v560
  %v562 = vpop.f32.mrb[0].mxu0
  %v563 = vadd.f32 0.0, %v562
  %564 = vmatprep.mubr.f32.mxu0 0.0
  %565 = vmatmul.mubr.f32.gmra.mrb[0].mxu0 %v305
  %v566 = vpop.f32.mrb[0].mxu0
  %v567 = vadd.f32 0.0, %v566
  %v568 = vpop.f32.mrb[0].mxu0
  %v569 = vadd.f32 0.0, %v568
  %570 = vmatprep.mubr.f32.mxu0 0.0
  %571 = vmatmul.mubr.f32.gmra.mrb[0].mxu0 %v308
  %v572 = vpop.f32.mrb[0].mxu0
  %v573 = vadd.f32 0.0, %v572
  %v574 = vpop.f32.mrb[0].mxu0
  %v575 = vadd.f32 0.0, %v574
  %576 = vmatprep.mubr.f32.mxu0 0.0
  %577 = vmatmul.mubr.f32.gmra.mrb[0].mxu0 %v311
  %v578 = vpop.f32.mrb[0].mxu0
  %v579 = vadd.f32 0.0, %v578
  %v580 = vpop.f32.mrb[0].mxu0
  %v581 = vadd.f32 0.0, %v580
  %582 = vmatprep.mubr.f32.mxu0 0.0
  %583 = vmatmul.mubr.f32.gmra.mrb[0].mxu0 %v314
  %v584 = vpop.f32.mrb[0].mxu0
  %v585 = vadd.f32 0.0, %v584
  %v586 = vpop.f32.mrb[0].mxu0
  %v587 = vadd.f32 0.0, %v586
  %588 = vmatprep.mubr.f32.mxu0 0.0
  %589 = vmatmul.mubr.f32.gmra.mrb[0].mxu0 %v317
  %v590 = vpop.f32.mrb[0].mxu0
  %v591 = vadd.f32 0.0, %v590
  %v592 = vpop.f32.mrb[0].mxu0
  %v593 = vadd.f32 0.0, %v592
  %594 = vmatprep.mubr.f32.mxu0 0.0
  %595 = vmatmul.mubr.f32.gmra.mrb[0].mxu0 %v320
  %v596 = vpop.f32.mrb[0].mxu0
  %v597 = vadd.f32 0.0, %v596
  %v598 = vpop.f32.mrb[0].mxu0
  %v599 = vadd.f32 0.0, %v598
  %600 = vmatprep.mubr.f32.mxu0 0.0
  %601 = vmatmul.mubr.f32.gmra.mrb[0].mxu0 %v323
  %v602 = vpop.f32.mrb[0].mxu0
  %v603 = vadd.f32 0.0, %v602
  %v604 = vpop.f32.mrb[0].mxu0
  %v605 = vadd.f32 0.0, %v604
  %606 = vmatprep.mubr.f32.mxu0 0.0
  %607 = vmatmul.mubr.f32.gmra.mrb[0].mxu0 %v326
  %v608 = vpop.f32.mrb[0].mxu0
  %v609 = vadd.f32 0.0, %v608
  %v610 = vpop.f32.mrb[0].mxu0
  %v611 = vadd.f32 0.0, %v610
  %612 = vmatprep.mubr.f32.mxu0 0.0
  %613 = vmatmul.mubr.f32.gmra.mrb[0].mxu0 %v329
  %v614 = vpop.f32.mrb[0].mxu0
  %v615 = vadd.f32 0.0, %v614
  %v616 = vpop.f32.mrb[0].mxu0
  %v617 = vadd.f32 0.0, %v616
  %618 = vmatprep.mubr.f32.mxu0 0.0
  %619 = vmatmul.mubr.f32.gmra.mrb[0].mxu0 %v332
  %v620 = vpop.f32.mrb[0].mxu0
  %v621 = vadd.f32 0.0, %v620
  %v622 = vpop.f32.mrb[0].mxu0
  %v623 = vadd.f32 0.0, %v622
  %624 = vmatprep.mubr.f32.mxu0 0.0
  %625 = vmatmul.mubr.f32.gmra.mrb[0].mxu0 %v335
  %v626 = vpop.f32.mrb[0].mxu0
  %v627 = vadd.f32 0.0, %v626
  %v628 = vpop.f32.mrb[0].mxu0
  %v629 = vadd.f32 0.0, %v628
  %630 = vmatprep.mubr.f32.mxu0 0.0
  %631 = vmatmul.mubr.f32.gmra.mrb[0].mxu0 %v338
  %v632 = vpop.f32.mrb[0].mxu0
  %v633 = vadd.f32 0.0, %v632
  %v634 = vpop.f32.mrb[0].mxu0
  %v635 = vadd.f32 0.0, %v634
  %636 = vmatprep.mubr.f32.mxu0 0.0
  %637 = vmatmul.mubr.f32.gmra.mrb[0].mxu0 %v341
  %v638 = vpop.f32.mrb[0].mxu0
  %v639 = vadd.f32 0.0, %v638
  %v640 = vpop.f32.mrb[0].mxu0
  %v641 = vadd.f32 0.0, %v640
  %642 = vmatprep.mubr.f32.mxu0 0.0
  %643 = vmatmul.mubr.f32.gmra.mrb[0].mxu0 %v344
  %v644 = vpop.f32.mrb[0].mxu0
  %v645 = vadd.f32 0.0, %v644
  %v646 = vpop.f32.mrb[0].mxu0
  %v647 = vadd.f32 0.0, %v646
  %648 = vmatprep.mubr.f32.mxu0 0.0
  %649 = vmatmul.mubr.f32.gmra.mrb[0].mxu0 %v347
  %v650 = vpop.f32.mrb[0].mxu0
  %v651 = vadd.f32 0.0, %v650
  %v652 = vpop.f32.mrb[0].mxu0
  %v653 = vadd.f32 0.0, %v652
  %654 = vmatprep.mubr.f32.mxu0 0.0
  %655 = vmatmul.mubr.f32.gmra.mrb[0].mxu0 %v350
  %v656 = vpop.f32.mrb[0].mxu0
  %v657 = vadd.f32 0.0, %v656
  %v658 = vpop.f32.mrb[0].mxu0
  %v659 = vadd.f32 0.0, %v658
  %660 = vmatprep.mubr.f32.mxu0 0.0
  %661 = vmatmul.mubr.f32.gmra.mrb[0].mxu0 %v353
  %v662 = vpop.f32.mrb[0].mxu0
  %v663 = vadd.f32 0.0, %v662
  %v664 = vpop.f32.mrb[0].mxu0
  %v665 = vadd.f32 0.0, %v664
  %666 = vmatprep.mubr.f32.mxu0 0.0
  %667 = vmatmul.mubr.f32.gmra.mrb[0].mxu0 %v356
  %v668 = vpop.f32.mrb[0].mxu0
  %v669 = vadd.f32 0.0, %v668
  %v670 = vpop.f32.mrb[0].mxu0
  %v671 = vadd.f32 0.0, %v670
  %672 = vmatprep.mubr.f32.mxu0 0.0
  %673 = vmatmul.mubr.f32.gmra.mrb[0].mxu0 %v359
  %v674 = vpop.f32.mrb[0].mxu0
  %v675 = vadd.f32 0.0, %v674
  %v676 = vpop.f32.mrb[0].mxu0
  %v677 = vadd.f32 0.0, %v676
  %678 = vmatprep.mubr.f32.mxu0 0.0
  %679 = vmatmul.mubr.f32.gmra.mrb[0].mxu0 %v362
  %v680 = vpop.f32.mrb[0].mxu0
  %v681 = vadd.f32 0.0, %v680
  %v682 = vpop.f32.mrb[0].mxu0
  %v683 = vadd.f32 0.0, %v682
  %684 = vmatprep.mubr.f32.mxu0 0.0
  %685 = vmatmul.mubr.f32.gmra.mrb[0].mxu0 %v365
  %v686 = vpop.f32.mrb[0].mxu0
  %v687 = vadd.f32 0.0, %v686
  %v688 = vpop.f32.mrb[0].mxu0
  %v689 = vadd.f32 0.0, %v688
  %690 = vmatprep.mubr.f32.mxu0 0.0
  %691 = vmatmul.mubr.f32.gmra.mrb[0].mxu0 %v368
  %v692 = vpop.f32.mrb[0].mxu0
  %v693 = vadd.f32 0.0, %v692
  %v694 = vpop.f32.mrb[0].mxu0
  %v695 = vadd.f32 0.0, %v694
  %696 = vmatprep.mubr.f32.mxu0 0.0
  %697 = vmatmul.mubr.f32.gmra.mrb[0].mxu0 %v371
  %v698 = vpop.f32.mrb[0].mxu0
  %v699 = vadd.f32 0.0, %v698
  %v700 = vpop.f32.mrb[0].mxu0
  %v701 = vadd.f32 0.0, %v700
  %702 = vmatprep.mubr.f32.mxu0 0.0
  %703 = vmatmul.mubr.f32.gmra.mrb[0].mxu0 %v374
  %v704 = vpop.f32.mrb[0].mxu0
  %v705 = vadd.f32 0.0, %v704
  %v706 = vpop.f32.mrb[0].mxu0
  %v707 = vadd.f32 0.0, %v706
  %708 = vmatprep.mubr.f32.mxu0 0.0
  %709 = vmatmul.mubr.f32.gmra.mrb[0].mxu0 %v377
  %v710 = vpop.f32.mrb[0].mxu0
  %v711 = vadd.f32 0.0, %v710
  %v712 = vpop.f32.mrb[0].mxu0
  %v713 = vadd.f32 0.0, %v712
  %714 = vmatprep.mubr.f32.mxu0 0.0
  %715 = vmatmul.mubr.f32.gmra.mrb[0].mxu0 %v380
  %v716 = vpop.f32.mrb[0].mxu0
  %v717 = vadd.f32 0.0, %v716
  %v718 = vpop.f32.mrb[0].mxu0
  %v719 = vadd.f32 0.0, %v718
  %720 = vmatprep.mubr.f32.mxu0 0.0
  %721 = vmatmul.mubr.f32.gmra.mrb[0].mxu0 %v383
  %v722 = vpop.f32.mrb[0].mxu0
  %v723 = vadd.f32 0.0, %v722
  %v724 = vpop.f32.mrb[0].mxu0
  %v725 = vadd.f32 0.0, %v724
  %726 = vmatprep.mubr.f32.mxu0 0.0
  %727 = vmatmul.mubr.f32.gmra.mrb[0].mxu0 %v386
  %v728 = vpop.f32.mrb[0].mxu0
  %v729 = vadd.f32 0.0, %v728
  %v730 = vpop.f32.mrb[0].mxu0
  %v731 = vadd.f32 0.0, %v730
  %732 = vmatprep.mubr.f32.mxu0 0.0
  %733 = vmatmul.mubr.f32.gmra.mrb[0].mxu0 %v389
  %v734 = vpop.f32.mrb[0].mxu0
  %v735 = vadd.f32 0.0, %v734
  %v736 = vpop.f32.mrb[0].mxu0
  %v737 = vadd.f32 0.0, %v736
  %738 = vmatprep.mubr.f32.mxu0 0.0
  %739 = vmatmul.mubr.f32.gmra.mrb[0].mxu0 %v392
  %v740 = vpop.f32.mrb[0].mxu0
  %v741 = vadd.f32 0.0, %v740
  %v742 = vpop.f32.mrb[0].mxu0
  %v743 = vadd.f32 0.0, %v742
  %744 = vmatprep.mubr.f32.mxu0 0.0
  %745 = vmatmul.mubr.f32.gmra.mrb[0].mxu0 %v395
  %v746 = vpop.f32.mrb[0].mxu0
  %v747 = vadd.f32 0.0, %v746
  %v748 = vpop.f32.mrb[0].mxu0
  %v749 = vadd.f32 0.0, %v748
  %750 = vmatprep.mubr.f32.mxu0 0.0
  %751 = vmatmul.mubr.f32.gmra.mrb[0].mxu0 %v398
  %v752 = vpop.f32.mrb[0].mxu0
  %v753 = vadd.f32 0.0, %v752
  %v754 = vpop.f32.mrb[0].mxu0
  %v755 = vadd.f32 0.0, %v754
  %756 = vmatprep.mubr.f32.mxu0 0.0
  %757 = vmatmul.mubr.f32.gmra.mrb[0].mxu0 %v401
  %v758 = vpop.f32.mrb[0].mxu0
  %v759 = vadd.f32 0.0, %v758
  %v760 = vpop.f32.mrb[0].mxu0
  %v761 = vadd.f32 0.0, %v760
  %762 = vmatprep.mubr.f32.mxu0 0.0
  %763 = vmatmul.mubr.f32.gmra.mrb[0].mxu0 %v404
  %v764 = vpop.f32.mrb[0].mxu0
  %v765 = vadd.f32 0.0, %v764
  %v766 = vpop.f32.mrb[0].mxu0
  %v767 = vadd.f32 0.0, %v766
  %768 = vdwg.mxu0
  %769 = vmatprep.subr.mxu0 0.0
  %770 = vmatpush1.msra.mxu0 %v245
  %771 = vmatprep.subr.mxu0 0.0
  %772 = vmatpush1.msra.mxu0 %v248
  %773 = vmatprep.subr.mxu0 0.0
  %774 = vmatpush1.msra.mxu0 %v251
  %775 = vmatprep.subr.mxu0 0.0
  %776 = vmatpush1.msra.mxu0 %v254
  %777 = vmatprep.subr.mxu0 0.0
  %778 = vmatpush1.msra.mxu0 %v257
  %779 = vmatprep.subr.mxu0 0.0
  %780 = vmatpush1.msra.mxu0 %v414
  %781 = vmatprep.subr.mxu0 0.0
  %782 = vmatpush1.msra.mxu0 0.0
  %783 = vmatprep.subr.mxu0 0.0
  %784 = vmatpush1.msra.mxu0 0.0
  %785 = vmatprep.subr.mxu0 0.0
  %786 = vmatpush1.msra.mxu0 0.0
  %787 = vmatprep.subr.mxu0 0.0
  %788 = vmatpush1.msra.mxu0 0.0
  %789 = vmatprep.subr.mxu0 0.0
  %790 = vmatpush1.msra.mxu0 0.0
  %791 = vmatprep.subr.mxu0 0.0
  %792 = vmatpush1.msra.mxu0 0.0
  %793 = vmatprep.subr.mxu0 0.0
  %794 = vmatpush1.msra.mxu0 0.0
  %795 = vmatprep.subr.mxu0 0.0
  %796 = vmatpush1.msra.mxu0 0.0
  %797 = vmatprep.subr.mxu0 0.0
  %798 = vmatpush1.msra.mxu0 0.0
  %799 = vmatprep.subr.mxu0 0.0
  %800 = vmatpush1.msra.mxu0 0.0
  %801 = vmatprep.subr.mxu0 0.0
  %802 = vmatpush1.msra.mxu0 0.0
  %803 = vmatprep.subr.mxu0 0.0
  %804 = vmatpush1.msra.mxu0 0.0
  %805 = vmatprep.subr.mxu0 0.0
  %806 = vmatpush1.msra.mxu0 0.0
  %807 = vmatprep.subr.mxu0 0.0
  %808 = vmatpush1.msra.mxu0 0.0
  %809 = vmatprep.subr.mxu0 0.0
  %810 = vmatpush1.msra.mxu0 0.0
  %811 = vmatprep.subr.mxu0 0.0
  %812 = vmatpush1.msra.mxu0 0.0
  %813 = vmatprep.subr.mxu0 0.0
  %814 = vmatpush1.msra.mxu0 0.0
  %815 = vmatprep.subr.mxu0 0.0
  %816 = vmatpush1.msra.mxu0 0.0
  %817 = vmatprep.subr.mxu0 0.0
  %818 = vmatpush1.msra.mxu0 0.0
  %819 = vmatprep.subr.mxu0 0.0
  %820 = vmatpush1.msra.mxu0 0.0
  %821 = vmatprep.subr.mxu0 0.0
  %822 = vmatpush1.msra.mxu0 0.0
  %823 = vmatprep.subr.mxu0 0.0
  %824 = vmatpush1.msra.mxu0 0.0
  %825 = vmatprep.subr.mxu0 0.0
  %826 = vmatpush1.msra.mxu0 0.0
  %827 = vmatprep.subr.mxu0 0.0
  %828 = vmatpush1.msra.mxu0 0.0
  %829 = vmatprep.subr.mxu0 0.0
  %830 = vmatpush1.msra.mxu0 0.0
  %831 = vmatprep.subr.mxu0 0.0
  %832 = vmatpush1.msra.mxu0 0.0
  %833 = vmatprep.mubr.f32.mxu0 0.0
  %834 = vmatmul.mubr.f32.gmra.mrb[0].mxu0 %v263
  %v835 = vpop.f32.mrb[0].mxu0
  %v836 = vadd.f32 0.0, %v835
  %v837 = vpop.f32.mrb[0].mxu0
  %838 = vmatprep.mubr.f32.mxu0 0.0
  %839 = vmatmul.mubr.f32.gmra.mrb[0].mxu0 %v266
  %v840 = vpop.f32.mrb[0].mxu0
  %v841 = vadd.f32 0.0, %v840
  %v842 = vpop.f32.mrb[0].mxu0
  %843 = vmatprep.mubr.f32.mxu0 0.0
  %844 = vmatmul.mubr.f32.gmra.mrb[0].mxu0 %v269
  %v845 = vpop.f32.mrb[0].mxu0
  %v846 = vadd.f32 0.0, %v845
  %v847 = vpop.f32.mrb[0].mxu0
  %848 = vmatprep.mubr.f32.mxu0 0.0
  %849 = vmatmul.mubr.f32.gmra.mrb[0].mxu0 %v272
  %v850 = vpop.f32.mrb[0].mxu0
  %v851 = vadd.f32 0.0, %v850
  %v852 = vpop.f32.mrb[0].mxu0
  %853 = vmatprep.mubr.f32.mxu0 0.0
  %854 = vmatmul.mubr.f32.gmra.mrb[0].mxu0 %v275
  %v855 = vpop.f32.mrb[0].mxu0
  %v856 = vadd.f32 0.0, %v855
  %v857 = vpop.f32.mrb[0].mxu0
  %858 = vmatprep.mubr.f32.mxu0 0.0
  %859 = vmatmul.mubr.f32.gmra.mrb[0].mxu0 %v278
  %v860 = vpop.f32.mrb[0].mxu0
  %v861 = vadd.f32 0.0, %v860
  %v862 = vpop.f32.mrb[0].mxu0
  %863 = vmatprep.mubr.f32.mxu0 0.0
  %864 = vmatmul.mubr.f32.gmra.mrb[0].mxu0 %v281
  %v865 = vpop.f32.mrb[0].mxu0
  %v866 = vadd.f32 0.0, %v865
  %v867 = vpop.f32.mrb[0].mxu0
  %868 = vmatprep.mubr.f32.mxu0 0.0
  %869 = vmatmul.mubr.f32.gmra.mrb[0].mxu0 %v284
  %v870 = vpop.f32.mrb[0].mxu0
  %v871 = vadd.f32 0.0, %v870
  %v872 = vpop.f32.mrb[0].mxu0
  %873 = vmatprep.mubr.f32.mxu0 0.0
  %874 = vmatmul.mubr.f32.gmra.mrb[0].mxu0 %v287
  %v875 = vpop.f32.mrb[0].mxu0
  %v876 = vadd.f32 0.0, %v875
  %v877 = vpop.f32.mrb[0].mxu0
  %878 = vmatprep.mubr.f32.mxu0 0.0
  %879 = vmatmul.mubr.f32.gmra.mrb[0].mxu0 %v290
  %v880 = vpop.f32.mrb[0].mxu0
  %v881 = vadd.f32 0.0, %v880
  %v882 = vpop.f32.mrb[0].mxu0
  %883 = vmatprep.mubr.f32.mxu0 0.0
  %884 = vmatmul.mubr.f32.gmra.mrb[0].mxu0 %v293
  %v885 = vpop.f32.mrb[0].mxu0
  %v886 = vadd.f32 0.0, %v885
  %v887 = vpop.f32.mrb[0].mxu0
  %888 = vmatprep.mubr.f32.mxu0 0.0
  %889 = vmatmul.mubr.f32.gmra.mrb[0].mxu0 %v296
  %v890 = vpop.f32.mrb[0].mxu0
  %v891 = vadd.f32 0.0, %v890
  %v892 = vpop.f32.mrb[0].mxu0
  %893 = vmatprep.mubr.f32.mxu0 0.0
  %894 = vmatmul.mubr.f32.gmra.mrb[0].mxu0 %v299
  %v895 = vpop.f32.mrb[0].mxu0
  %v896 = vadd.f32 0.0, %v895
  %v897 = vpop.f32.mrb[0].mxu0
  %898 = vmatprep.mubr.f32.mxu0 0.0
  %899 = vmatmul.mubr.f32.gmra.mrb[0].mxu0 %v302
  %v900 = vpop.f32.mrb[0].mxu0
  %v901 = vadd.f32 0.0, %v900
  %v902 = vpop.f32.mrb[0].mxu0
  %903 = vmatprep.mubr.f32.mxu0 0.0
  %904 = vmatmul.mubr.f32.gmra.mrb[0].mxu0 %v305
  %v905 = vpop.f32.mrb[0].mxu0
  %v906 = vadd.f32 0.0, %v905
  %v907 = vpop.f32.mrb[0].mxu0
  %908 = vmatprep.mubr.f32.mxu0 0.0
  %909 = vmatmul.mubr.f32.gmra.mrb[0].mxu0 %v308
  %v910 = vpop.f32.mrb[0].mxu0
  %v911 = vadd.f32 0.0, %v910
  %v912 = vpop.f32.mrb[0].mxu0
  %913 = vmatprep.mubr.f32.mxu0 0.0
  %914 = vmatmul.mubr.f32.gmra.mrb[0].mxu0 %v311
  %v915 = vpop.f32.mrb[0].mxu0
  %v916 = vadd.f32 0.0, %v915
  %v917 = vpop.f32.mrb[0].mxu0
  %918 = vmatprep.mubr.f32.mxu0 0.0
  %919 = vmatmul.mubr.f32.gmra.mrb[0].mxu0 %v314
  %v920 = vpop.f32.mrb[0].mxu0
  %v921 = vadd.f32 0.0, %v920
  %v922 = vpop.f32.mrb[0].mxu0
  %923 = vmatprep.mubr.f32.mxu0 0.0
  %924 = vmatmul.mubr.f32.gmra.mrb[0].mxu0 %v317
  %v925 = vpop.f32.mrb[0].mxu0
  %v926 = vadd.f32 0.0, %v925
  %v927 = vpop.f32.mrb[0].mxu0
  %928 = vmatprep.mubr.f32.mxu0 0.0
  %929 = vmatmul.mubr.f32.gmra.mrb[0].mxu0 %v320
  %v930 = vpop.f32.mrb[0].mxu0
  %v931 = vadd.f32 0.0, %v930
  %v932 = vpop.f32.mrb[0].mxu0
  %933 = vmatprep.mubr.f32.mxu0 0.0
  %934 = vmatmul.mubr.f32.gmra.mrb[0].mxu0 %v323
  %v935 = vpop.f32.mrb[0].mxu0
  %v936 = vadd.f32 0.0, %v935
  %v937 = vpop.f32.mrb[0].mxu0
  %938 = vmatprep.mubr.f32.mxu0 0.0
  %939 = vmatmul.mubr.f32.gmra.mrb[0].mxu0 %v326
  %v940 = vpop.f32.mrb[0].mxu0
  %v941 = vadd.f32 0.0, %v940
  %v942 = vpop.f32.mrb[0].mxu0
  %943 = vmatprep.mubr.f32.mxu0 0.0
  %944 = vmatmul.mubr.f32.gmra.mrb[0].mxu0 %v329
  %v945 = vpop.f32.mrb[0].mxu0
  %v946 = vadd.f32 0.0, %v945
  %v947 = vpop.f32.mrb[0].mxu0
  %948 = vmatprep.mubr.f32.mxu0 0.0
  %949 = vmatmul.mubr.f32.gmra.mrb[0].mxu0 %v332
  %v950 = vpop.f32.mrb[0].mxu0
  %v951 = vadd.f32 0.0, %v950
  %v952 = vpop.f32.mrb[0].mxu0
  %953 = vmatprep.mubr.f32.mxu0 0.0
  %954 = vmatmul.mubr.f32.gmra.mrb[0].mxu0 %v335
  %v955 = vpop.f32.mrb[0].mxu0
  %v956 = vadd.f32 0.0, %v955
  %v957 = vpop.f32.mrb[0].mxu0
  %958 = vmatprep.mubr.f32.mxu0 0.0
  %959 = vmatmul.mubr.f32.gmra.mrb[0].mxu0 %v338
  %v960 = vpop.f32.mrb[0].mxu0
  %v961 = vadd.f32 0.0, %v960
  %v962 = vpop.f32.mrb[0].mxu0
  %963 = vmatprep.mubr.f32.mxu0 0.0
  %964 = vmatmul.mubr.f32.gmra.mrb[0].mxu0 %v341
  %v965 = vpop.f32.mrb[0].mxu0
  %v966 = vadd.f32 0.0, %v965
  %v967 = vpop.f32.mrb[0].mxu0
  %968 = vmatprep.mubr.f32.mxu0 0.0
  %969 = vmatmul.mubr.f32.gmra.mrb[0].mxu0 %v344
  %v970 = vpop.f32.mrb[0].mxu0
  %v971 = vadd.f32 0.0, %v970
  %v972 = vpop.f32.mrb[0].mxu0
  %973 = vmatprep.mubr.f32.mxu0 0.0
  %974 = vmatmul.mubr.f32.gmra.mrb[0].mxu0 %v347
  %v975 = vpop.f32.mrb[0].mxu0
  %v976 = vadd.f32 0.0, %v975
  %v977 = vpop.f32.mrb[0].mxu0
  %978 = vmatprep.mubr.f32.mxu0 0.0
  %979 = vmatmul.mubr.f32.gmra.mrb[0].mxu0 %v350
  %v980 = vpop.f32.mrb[0].mxu0
  %v981 = vadd.f32 0.0, %v980
  %v982 = vpop.f32.mrb[0].mxu0
  %983 = vmatprep.mubr.f32.mxu0 0.0
  %984 = vmatmul.mubr.f32.gmra.mrb[0].mxu0 %v353
  %v985 = vpop.f32.mrb[0].mxu0
  %v986 = vadd.f32 0.0, %v985
  %v987 = vpop.f32.mrb[0].mxu0
  %988 = vmatprep.mubr.f32.mxu0 0.0
  %989 = vmatmul.mubr.f32.gmra.mrb[0].mxu0 %v356
  %v990 = vpop.f32.mrb[0].mxu0
  %v991 = vadd.f32 0.0, %v990
  %v992 = vpop.f32.mrb[0].mxu0
  %993 = vmatprep.mubr.f32.mxu0 0.0
  %994 = vmatmul.mubr.f32.gmra.mrb[0].mxu0 %v359
  %v995 = vpop.f32.mrb[0].mxu0
  %v996 = vadd.f32 0.0, %v995
  %v997 = vpop.f32.mrb[0].mxu0
  %998 = vmatprep.mubr.f32.mxu0 0.0
  %999 = vmatmul.mubr.f32.gmra.mrb[0].mxu0 %v362
  %v1000 = vpop.f32.mrb[0].mxu0
  %v1001 = vadd.f32 0.0, %v1000
  %v1002 = vpop.f32.mrb[0].mxu0
  %1003 = vmatprep.mubr.f32.mxu0 0.0
  %1004 = vmatmul.mubr.f32.gmra.mrb[0].mxu0 %v365
  %v1005 = vpop.f32.mrb[0].mxu0
  %v1006 = vadd.f32 0.0, %v1005
  %v1007 = vpop.f32.mrb[0].mxu0
  %1008 = vmatprep.mubr.f32.mxu0 0.0
  %1009 = vmatmul.mubr.f32.gmra.mrb[0].mxu0 %v368
  %v1010 = vpop.f32.mrb[0].mxu0
  %v1011 = vadd.f32 0.0, %v1010
  %v1012 = vpop.f32.mrb[0].mxu0
  %1013 = vmatprep.mubr.f32.mxu0 0.0
  %1014 = vmatmul.mubr.f32.gmra.mrb[0].mxu0 %v371
  %v1015 = vpop.f32.mrb[0].mxu0
  %v1016 = vadd.f32 0.0, %v1015
  %v1017 = vpop.f32.mrb[0].mxu0
  %1018 = vmatprep.mubr.f32.mxu0 0.0
  %1019 = vmatmul.mubr.f32.gmra.mrb[0].mxu0 %v374
  %v1020 = vpop.f32.mrb[0].mxu0
  %v1021 = vadd.f32 0.0, %v1020
  %v1022 = vpop.f32.mrb[0].mxu0
  %1023 = vmatprep.mubr.f32.mxu0 0.0
  %1024 = vmatmul.mubr.f32.gmra.mrb[0].mxu0 %v377
  %v1025 = vpop.f32.mrb[0].mxu0
  %v1026 = vadd.f32 0.0, %v1025
  %v1027 = vpop.f32.mrb[0].mxu0
  %1028 = vmatprep.mubr.f32.mxu0 0.0
  %1029 = vmatmul.mubr.f32.gmra.mrb[0].mxu0 %v380
  %v1030 = vpop.f32.mrb[0].mxu0
  %v1031 = vadd.f32 0.0, %v1030
  %v1032 = vpop.f32.mrb[0].mxu0
  %1033 = vmatprep.mubr.f32.mxu0 0.0
  %1034 = vmatmul.mubr.f32.gmra.mrb[0].mxu0 %v383
  %v1035 = vpop.f32.mrb[0].mxu0
  %v1036 = vadd.f32 0.0, %v1035
  %v1037 = vpop.f32.mrb[0].mxu0
  %1038 = vmatprep.mubr.f32.mxu0 0.0
  %1039 = vmatmul.mubr.f32.gmra.mrb[0].mxu0 %v386
  %v1040 = vpop.f32.mrb[0].mxu0
  %v1041 = vadd.f32 0.0, %v1040
  %v1042 = vpop.f32.mrb[0].mxu0
  %1043 = vmatprep.mubr.f32.mxu0 0.0
  %1044 = vmatmul.mubr.f32.gmra.mrb[0].mxu0 %v389
  %v1045 = vpop.f32.mrb[0].mxu0
  %v1046 = vadd.f32 0.0, %v1045
  %v1047 = vpop.f32.mrb[0].mxu0
  %1048 = vmatprep.mubr.f32.mxu0 0.0
  %1049 = vmatmul.mubr.f32.gmra.mrb[0].mxu0 %v392
  %v1050 = vpop.f32.mrb[0].mxu0
  %v1051 = vadd.f32 0.0, %v1050
  %v1052 = vpop.f32.mrb[0].mxu0
  %1053 = vmatprep.mubr.f32.mxu0 0.0
  %1054 = vmatmul.mubr.f32.gmra.mrb[0].mxu0 %v395
  %v1055 = vpop.f32.mrb[0].mxu0
  %v1056 = vadd.f32 0.0, %v1055
  %v1057 = vpop.f32.mrb[0].mxu0
  %1058 = vmatprep.mubr.f32.mxu0 0.0
  %1059 = vmatmul.mubr.f32.gmra.mrb[0].mxu0 %v398
  %v1060 = vpop.f32.mrb[0].mxu0
  %v1061 = vadd.f32 0.0, %v1060
  %v1062 = vpop.f32.mrb[0].mxu0
  %1063 = vmatprep.mubr.f32.mxu0 0.0
  %1064 = vmatmul.mubr.f32.gmra.mrb[0].mxu0 %v401
  %v1065 = vpop.f32.mrb[0].mxu0
  %v1066 = vadd.f32 0.0, %v1065
  %v1067 = vpop.f32.mrb[0].mxu0
  %1068 = vmatprep.mubr.f32.mxu0 0.0
  %1069 = vmatmul.mubr.f32.gmra.mrb[0].mxu0 %v404
  %v1070 = vpop.f32.mrb[0].mxu0
  %v1071 = vadd.f32 0.0, %v1070
  %v1072 = vpop.f32.mrb[0].mxu0
  %1073 = vdwg.mxu0
  %v1074 = vld [vmem:[%s7] sm:$0xf]
  %v1075 = vld [vmem:[%s5] sm:$0xff]
  %v1076 = vld [vmem:[%s5 + $0x8] sm:$0xff]
  %v1077 = vld [vmem:[%s5 + $0x10] sm:$0xff]
  %v1078 = vld [vmem:[%s5 + $0x18] sm:$0xff]
  %v1079 = vld [vmem:[%s5 + $0x20] sm:$0xff]
  %v1080 = vld [vmem:[%s5 + $0x28] sm:$0xff]
  %v1081 = vld [vmem:[%s5 + $0x30] sm:$0xff]
  %v1082 = vld [vmem:[%s5 + $0x38] sm:$0xff]
  %v1083 = vld [vmem:[%s5 + $0x40] sm:$0xff]
  %v1084 = vld [vmem:[%s5 + $0x48] sm:$0xff]
  %v1085 = vld [vmem:[%s5 + $0x50] sm:$0xff]
  %v1086 = vld [vmem:[%s5 + $0x58] sm:$0xff]
  %v1087 = vld [vmem:[%s5 + $0x60] sm:$0xff]
  %v1088 = vld [vmem:[%s5 + $0x68] sm:$0xff]
  %v1089 = vld [vmem:[%s5 + $0x70] sm:$0xff]
  %v1090 = vld [vmem:[%s5 + $0x78] sm:$0xff]
  %vm1091 = vcmask 523264
  %v1093 = vsel %vm1091, %v129, 0
  %v1096 = vsel %vm1091, %v134, 0
  %v1099 = vsel %vm1091, %v139, 0
  %v1102 = vsel %vm1091, %v144, 0
  %1104 = vmatprep.subr.mxu0 %v1076
  %1105 = vmatpush1.msra.mxu0 %v1075
  %1106 = vmatprep.subr.mxu0 %v1078
  %1107 = vmatpush1.msra.mxu0 %v1077
  %1108 = vmatprep.subr.mxu0 %v1080
  %1109 = vmatpush1.msra.mxu0 %v1079
  %1110 = vmatprep.subr.mxu0 %v1082
  %1111 = vmatpush1.msra.mxu0 %v1081
  %1112 = vmatprep.subr.mxu0 %v1084
  %1113 = vmatpush1.msra.mxu0 %v1083
  %1114 = vmatprep.subr.mxu0 %v1086
  %1115 = vmatpush1.msra.mxu0 %v1085
  %1116 = vmatprep.subr.mxu0 %v1088
  %1117 = vmatpush1.msra.mxu0 %v1087
  %1118 = vmatprep.subr.mxu0 %v1090
  %1119 = vmatpush1.msra.mxu0 %v1089
  %1120 = vmatprep.subr.mxu0 0.0
  %1121 = vmatpush1.msra.mxu0 0.0
  %1122 = vmatprep.subr.mxu0 0.0
  %1123 = vmatpush1.msra.mxu0 0.0
  %1124 = vmatprep.subr.mxu0 0.0
  %1125 = vmatpush1.msra.mxu0 0.0
  %1126 = vmatprep.subr.mxu0 0.0
  %1127 = vmatpush1.msra.mxu0 0.0
  %1128 = vmatprep.subr.mxu0 0.0
  %1129 = vmatpush1.msra.mxu0 0.0
  %1130 = vmatprep.subr.mxu0 0.0
  %1131 = vmatpush1.msra.mxu0 0.0
  %1132 = vmatprep.subr.mxu0 0.0
  %1133 = vmatpush1.msra.mxu0 0.0
  %1134 = vmatprep.subr.mxu0 0.0
  %1135 = vmatpush1.msra.mxu0 0.0
  %1136 = vmatprep.subr.mxu0 0.0
  %1137 = vmatpush1.msra.mxu0 0.0
  %1138 = vmatprep.subr.mxu0 0.0
  %1139 = vmatpush1.msra.mxu0 0.0
  %1140 = vmatprep.subr.mxu0 0.0
  %1141 = vmatpush1.msra.mxu0 0.0
  %1142 = vmatprep.subr.mxu0 0.0
  %1143 = vmatpush1.msra.mxu0 0.0
  %1144 = vmatprep.subr.mxu0 0.0
  %1145 = vmatpush1.msra.mxu0 0.0
  %1146 = vmatprep.subr.mxu0 0.0
  %1147 = vmatpush1.msra.mxu0 0.0
  %1148 = vmatprep.subr.mxu0 0.0
  %1149 = vmatpush1.msra.mxu0 0.0
  %1150 = vmatprep.subr.mxu0 0.0
  %1151 = vmatpush1.msra.mxu0 0.0
  %1152 = vmatprep.subr.mxu0 0.0
  %1153 = vmatpush1.msra.mxu0 0.0
  %1154 = vmatprep.subr.mxu0 0.0
  %1155 = vmatpush1.msra.mxu0 0.0
  %1156 = vmatprep.subr.mxu0 0.0
  %1157 = vmatpush1.msra.mxu0 0.0
  %1158 = vmatprep.subr.mxu0 0.0
  %1159 = vmatpush1.msra.mxu0 0.0
  %1160 = vmatprep.subr.mxu0 0.0
  %1161 = vmatpush1.msra.mxu0 0.0
  %1162 = vmatprep.subr.mxu0 0.0
  %1163 = vmatpush1.msra.mxu0 0.0
  %1164 = vmatprep.subr.mxu0 0.0
  %1165 = vmatpush1.msra.mxu0 0.0
  %1166 = vmatprep.subr.mxu0 0.0
  %1167 = vmatpush1.msra.mxu0 0.0
  %1168 = vmatprep.mubr.f32.mxu0 0.0
  %1169 = vmatmul.mubr.f32.gmra.mrb[0].mxu0 %v1093
  %v1170 = vpop.f32.mrb[0].mxu0
  %v1171 = vadd.f32 0.0, %v1170
  %v1172 = vpop.f32.mrb[0].mxu0
  %v1173 = vadd.f32 0.0, %v1172
  %1174 = vmatprep.mubr.f32.mxu0 0.0
  %1175 = vmatmul.mubr.f32.gmra.mrb[0].mxu0 %v1096
  %v1176 = vpop.f32.mrb[0].mxu0
  %v1177 = vadd.f32 0.0, %v1176
  %v1178 = vpop.f32.mrb[0].mxu0
  %v1179 = vadd.f32 0.0, %v1178
  %1180 = vmatprep.mubr.f32.mxu0 0.0
  %1181 = vmatmul.mubr.f32.gmra.mrb[0].mxu0 %v1099
  %v1182 = vpop.f32.mrb[0].mxu0
  %v1183 = vadd.f32 0.0, %v1182
  %v1184 = vpop.f32.mrb[0].mxu0
  %v1185 = vadd.f32 0.0, %v1184
  %1186 = vmatprep.mubr.f32.mxu0 0.0
  %1187 = vmatmul.mubr.f32.gmra.mrb[0].mxu0 %v1102
  %v1188 = vpop.f32.mrb[0].mxu0
  %v1189 = vadd.f32 0.0, %v1188
  %v1190 = vpop.f32.mrb[0].mxu0
  %v1191 = vadd.f32 0.0, %v1190
  %1192 = vdwg.mxu0
  %v1194 = vsel %vm1091, %v147, 0
  %v1197 = vsel %vm1091, %v148, 0
  %v1200 = vsel %vm1091, %v149, 0
  %v1203 = vsel %vm1091, %v150, 0
  %v1206 = vsel %vm1091, %v151, 0
  %v1209 = vsel %vm1091, %v152, 0
  %v1212 = vsel %vm1091, %v153, 0
  %v1215 = vsel %vm1091, %v154, 0
  %v1218 = vsel %vm1091, %v155, 0
  %v1221 = vsel %vm1091, %v156, 0
  %v1224 = vsel %vm1091, %v157, 0
  %v1227 = vsel %vm1091, %v158, 0
  %v1230 = vsel %vm1091, %v159, 0
  %v1233 = vsel %vm1091, %v160, 0
  %v1236 = vsel %vm1091, %v161, 0
  %v1239 = vsel %vm1091, %v162, 0
  %v1242 = vsel %vm1091, %v163, 0
  %v1245 = vsel %vm1091, %v164, 0
  %v1248 = vsel %vm1091, %v165, 0
  %v1251 = vsel %vm1091, %v166, 0
  %v1254 = vsel %vm1091, %v167, 0
  %v1257 = vsel %vm1091, %v168, 0
  %v1260 = vsel %vm1091, %v169, 0
  %v1263 = vsel %vm1091, %v170, 0
  %v1266 = vsel %vm1091, %v171, 0
  %v1269 = vsel %vm1091, %v172, 0
  %v1272 = vsel %vm1091, %v173, 0
  %v1275 = vsel %vm1091, %v174, 0
  %v1278 = vsel %vm1091, %v175, 0
  %v1281 = vsel %vm1091, %v176, 0
  %v1284 = vsel %vm1091, %v177, 0
  %v1287 = vsel %vm1091, %v178, 0
  %v1290 = vsel %vm1091, %v179, 0
  %v1293 = vsel %vm1091, %v180, 0
  %v1296 = vsel %vm1091, %v181, 0
  %v1299 = vsel %vm1091, %v182, 0
  %v1302 = vsel %vm1091, %v183, 0
  %v1305 = vsel %vm1091, %v184, 0
  %v1308 = vsel %vm1091, %v185, 0
  %v1311 = vsel %vm1091, %v186, 0
  %v1314 = vsel %vm1091, %v187, 0
  %v1317 = vsel %vm1091, %v188, 0
  %v1320 = vsel %vm1091, %v189, 0
  %v1323 = vsel %vm1091, %v190, 0
  %v1326 = vsel %vm1091, %v191, 0
  %v1329 = vsel %vm1091, %v192, 0
  %v1332 = vsel %vm1091, %v193, 0
  %v1335 = vsel %vm1091, %v194, 0
  %1337 = vmatprep.subr.mxu0 0.0
  %1338 = vmatpush1.msra.mxu0 %v1171
  %1339 = vmatprep.subr.mxu0 0.0
  %1340 = vmatpush1.msra.mxu0 %v1177
  %1341 = vmatprep.subr.mxu0 0.0
  %1342 = vmatpush1.msra.mxu0 %v1183
  %1343 = vmatprep.subr.mxu0 0.0
  %1344 = vmatpush1.msra.mxu0 %v1189
  %1345 = vmatprep.subr.mxu0 0.0
  %1346 = vmatpush1.msra.mxu0 %v1173
  %1347 = vmatprep.subr.mxu0 0.0
  %1348 = vmatpush1.msra.mxu0 %v1179
  %1349 = vmatprep.subr.mxu0 0.0
  %1350 = vmatpush1.msra.mxu0 %v1185
  %1351 = vmatprep.subr.mxu0 0.0
  %1352 = vmatpush1.msra.mxu0 %v1191
  %1353 = vmatprep.subr.mxu0 0.0
  %1354 = vmatpush1.msra.mxu0 0.0
  %1355 = vmatprep.subr.mxu0 0.0
  %1356 = vmatpush1.msra.mxu0 0.0
  %1357 = vmatprep.subr.mxu0 0.0
  %1358 = vmatpush1.msra.mxu0 0.0
  %1359 = vmatprep.subr.mxu0 0.0
  %1360 = vmatpush1.msra.mxu0 0.0
  %1361 = vmatprep.subr.mxu0 0.0
  %1362 = vmatpush1.msra.mxu0 0.0
  %1363 = vmatprep.subr.mxu0 0.0
  %1364 = vmatpush1.msra.mxu0 0.0
  %1365 = vmatprep.subr.mxu0 0.0
  %1366 = vmatpush1.msra.mxu0 0.0
  %1367 = vmatprep.subr.mxu0 0.0
  %1368 = vmatpush1.msra.mxu0 0.0
  %1369 = vmatprep.subr.mxu0 0.0
  %1370 = vmatpush1.msra.mxu0 0.0
  %1371 = vmatprep.subr.mxu0 0.0
  %1372 = vmatpush1.msra.mxu0 0.0
  %1373 = vmatprep.subr.mxu0 0.0
  %1374 = vmatpush1.msra.mxu0 0.0
  %1375 = vmatprep.subr.mxu0 0.0
  %1376 = vmatpush1.msra.mxu0 0.0
  %1377 = vmatprep.subr.mxu0 0.0
  %1378 = vmatpush1.msra.mxu0 0.0
  %1379 = vmatprep.subr.mxu0 0.0
  %1380 = vmatpush1.msra.mxu0 0.0
  %1381 = vmatprep.subr.mxu0 0.0
  %1382 = vmatpush1.msra.mxu0 0.0
  %1383 = vmatprep.subr.mxu0 0.0
  %1384 = vmatpush1.msra.mxu0 0.0
  %1385 = vmatprep.subr.mxu0 0.0
  %1386 = vmatpush1.msra.mxu0 0.0
  %1387 = vmatprep.subr.mxu0 0.0
  %1388 = vmatpush1.msra.mxu0 0.0
  %1389 = vmatprep.subr.mxu0 0.0
  %1390 = vmatpush1.msra.mxu0 0.0
  %1391 = vmatprep.subr.mxu0 0.0
  %1392 = vmatpush1.msra.mxu0 0.0
  %1393 = vmatprep.subr.mxu0 0.0
  %1394 = vmatpush1.msra.mxu0 0.0
  %1395 = vmatprep.subr.mxu0 0.0
  %1396 = vmatpush1.msra.mxu0 0.0
  %1397 = vmatprep.subr.mxu0 0.0
  %1398 = vmatpush1.msra.mxu0 0.0
  %1399 = vmatprep.subr.mxu0 0.0
  %1400 = vmatpush1.msra.mxu0 0.0
  %1401 = vmatprep.mubr.f32.mxu0 0.0
  %1402 = vmatmul.mubr.f32.gmra.mrb[0].mxu0 %v1194
  %v1403 = vpop.f32.mrb[0].mxu0
  %v1404 = vadd.f32 %v483, %v1403
  %v1405 = vpop.f32.mrb[0].mxu0
  %1406 = vmatprep.mubr.f32.mxu0 0.0
  %1407 = vmatmul.mubr.f32.gmra.mrb[0].mxu0 %v1197
  %v1408 = vpop.f32.mrb[0].mxu0
  %v1409 = vadd.f32 %v489, %v1408
  %v1410 = vpop.f32.mrb[0].mxu0
  %1411 = vmatprep.mubr.f32.mxu0 0.0
  %1412 = vmatmul.mubr.f32.gmra.mrb[0].mxu0 %v1200
  %v1413 = vpop.f32.mrb[0].mxu0
  %v1414 = vadd.f32 %v495, %v1413
  %v1415 = vpop.f32.mrb[0].mxu0
  %1416 = vmatprep.mubr.f32.mxu0 0.0
  %1417 = vmatmul.mubr.f32.gmra.mrb[0].mxu0 %v1203
  %v1418 = vpop.f32.mrb[0].mxu0
  %v1419 = vadd.f32 %v501, %v1418
  %v1420 = vpop.f32.mrb[0].mxu0
  %1421 = vmatprep.mubr.f32.mxu0 0.0
  %1422 = vmatmul.mubr.f32.gmra.mrb[0].mxu0 %v1206
  %v1423 = vpop.f32.mrb[0].mxu0
  %v1424 = vadd.f32 %v507, %v1423
  %v1425 = vpop.f32.mrb[0].mxu0
  %1426 = vmatprep.mubr.f32.mxu0 0.0
  %1427 = vmatmul.mubr.f32.gmra.mrb[0].mxu0 %v1209
  %v1428 = vpop.f32.mrb[0].mxu0
  %v1429 = vadd.f32 %v513, %v1428
  %v1430 = vpop.f32.mrb[0].mxu0
  %1431 = vmatprep.mubr.f32.mxu0 0.0
  %1432 = vmatmul.mubr.f32.gmra.mrb[0].mxu0 %v1212
  %v1433 = vpop.f32.mrb[0].mxu0
  %v1434 = vadd.f32 %v519, %v1433
  %v1435 = vpop.f32.mrb[0].mxu0
  %1436 = vmatprep.mubr.f32.mxu0 0.0
  %1437 = vmatmul.mubr.f32.gmra.mrb[0].mxu0 %v1215
  %v1438 = vpop.f32.mrb[0].mxu0
  %v1439 = vadd.f32 %v525, %v1438
  %v1440 = vpop.f32.mrb[0].mxu0
  %1441 = vmatprep.mubr.f32.mxu0 0.0
  %1442 = vmatmul.mubr.f32.gmra.mrb[0].mxu0 %v1218
  %v1443 = vpop.f32.mrb[0].mxu0
  %v1444 = vadd.f32 %v531, %v1443
  %v1445 = vpop.f32.mrb[0].mxu0
  %1446 = vmatprep.mubr.f32.mxu0 0.0
  %1447 = vmatmul.mubr.f32.gmra.mrb[0].mxu0 %v1221
  %v1448 = vpop.f32.mrb[0].mxu0
  %v1449 = vadd.f32 %v537, %v1448
  %v1450 = vpop.f32.mrb[0].mxu0
  %1451 = vmatprep.mubr.f32.mxu0 0.0
  %1452 = vmatmul.mubr.f32.gmra.mrb[0].mxu0 %v1224
  %v1453 = vpop.f32.mrb[0].mxu0
  %v1454 = vadd.f32 %v543, %v1453
  %v1455 = vpop.f32.mrb[0].mxu0
  %1456 = vmatprep.mubr.f32.mxu0 0.0
  %1457 = vmatmul.mubr.f32.gmra.mrb[0].mxu0 %v1227
  %v1458 = vpop.f32.mrb[0].mxu0
  %v1459 = vadd.f32 %v549, %v1458
  %v1460 = vpop.f32.mrb[0].mxu0
  %1461 = vmatprep.mubr.f32.mxu0 0.0
  %1462 = vmatmul.mubr.f32.gmra.mrb[0].mxu0 %v1230
  %v1463 = vpop.f32.mrb[0].mxu0
  %v1464 = vadd.f32 %v555, %v1463
  %v1465 = vpop.f32.mrb[0].mxu0
  %1466 = vmatprep.mubr.f32.mxu0 0.0
  %1467 = vmatmul.mubr.f32.gmra.mrb[0].mxu0 %v1233
  %v1468 = vpop.f32.mrb[0].mxu0
  %v1469 = vadd.f32 %v561, %v1468
  %v1470 = vpop.f32.mrb[0].mxu0
  %1471 = vmatprep.mubr.f32.mxu0 0.0
  %1472 = vmatmul.mubr.f32.gmra.mrb[0].mxu0 %v1236
  %v1473 = vpop.f32.mrb[0].mxu0
  %v1474 = vadd.f32 %v567, %v1473
  %v1475 = vpop.f32.mrb[0].mxu0
  %1476 = vmatprep.mubr.f32.mxu0 0.0
  %1477 = vmatmul.mubr.f32.gmra.mrb[0].mxu0 %v1239
  %v1478 = vpop.f32.mrb[0].mxu0
  %v1479 = vadd.f32 %v573, %v1478
  %v1480 = vpop.f32.mrb[0].mxu0
  %1481 = vmatprep.mubr.f32.mxu0 0.0
  %1482 = vmatmul.mubr.f32.gmra.mrb[0].mxu0 %v1242
  %v1483 = vpop.f32.mrb[0].mxu0
  %v1484 = vadd.f32 %v579, %v1483
  %v1485 = vpop.f32.mrb[0].mxu0
  %1486 = vmatprep.mubr.f32.mxu0 0.0
  %1487 = vmatmul.mubr.f32.gmra.mrb[0].mxu0 %v1245
  %v1488 = vpop.f32.mrb[0].mxu0
  %v1489 = vadd.f32 %v585, %v1488
  %v1490 = vpop.f32.mrb[0].mxu0
  %1491 = vmatprep.mubr.f32.mxu0 0.0
  %1492 = vmatmul.mubr.f32.gmra.mrb[0].mxu0 %v1248
  %v1493 = vpop.f32.mrb[0].mxu0
  %v1494 = vadd.f32 %v591, %v1493
  %v1495 = vpop.f32.mrb[0].mxu0
  %1496 = vmatprep.mubr.f32.mxu0 0.0
  %1497 = vmatmul.mubr.f32.gmra.mrb[0].mxu0 %v1251
  %v1498 = vpop.f32.mrb[0].mxu0
  %v1499 = vadd.f32 %v597, %v1498
  %v1500 = vpop.f32.mrb[0].mxu0
  %1501 = vmatprep.mubr.f32.mxu0 0.0
  %1502 = vmatmul.mubr.f32.gmra.mrb[0].mxu0 %v1254
  %v1503 = vpop.f32.mrb[0].mxu0
  %v1504 = vadd.f32 %v603, %v1503
  %v1505 = vpop.f32.mrb[0].mxu0
  %1506 = vmatprep.mubr.f32.mxu0 0.0
  %1507 = vmatmul.mubr.f32.gmra.mrb[0].mxu0 %v1257
  %v1508 = vpop.f32.mrb[0].mxu0
  %v1509 = vadd.f32 %v609, %v1508
  %v1510 = vpop.f32.mrb[0].mxu0
  %1511 = vmatprep.mubr.f32.mxu0 0.0
  %1512 = vmatmul.mubr.f32.gmra.mrb[0].mxu0 %v1260
  %v1513 = vpop.f32.mrb[0].mxu0
  %v1514 = vadd.f32 %v615, %v1513
  %v1515 = vpop.f32.mrb[0].mxu0
  %1516 = vmatprep.mubr.f32.mxu0 0.0
  %1517 = vmatmul.mubr.f32.gmra.mrb[0].mxu0 %v1263
  %v1518 = vpop.f32.mrb[0].mxu0
  %v1519 = vadd.f32 %v621, %v1518
  %v1520 = vpop.f32.mrb[0].mxu0
  %1521 = vmatprep.mubr.f32.mxu0 0.0
  %1522 = vmatmul.mubr.f32.gmra.mrb[0].mxu0 %v1266
  %v1523 = vpop.f32.mrb[0].mxu0
  %v1524 = vadd.f32 %v627, %v1523
  %v1525 = vpop.f32.mrb[0].mxu0
  %1526 = vmatprep.mubr.f32.mxu0 0.0
  %1527 = vmatmul.mubr.f32.gmra.mrb[0].mxu0 %v1269
  %v1528 = vpop.f32.mrb[0].mxu0
  %v1529 = vadd.f32 %v633, %v1528
  %v1530 = vpop.f32.mrb[0].mxu0
  %1531 = vmatprep.mubr.f32.mxu0 0.0
  %1532 = vmatmul.mubr.f32.gmra.mrb[0].mxu0 %v1272
  %v1533 = vpop.f32.mrb[0].mxu0
  %v1534 = vadd.f32 %v639, %v1533
  %v1535 = vpop.f32.mrb[0].mxu0
  %1536 = vmatprep.mubr.f32.mxu0 0.0
  %1537 = vmatmul.mubr.f32.gmra.mrb[0].mxu0 %v1275
  %v1538 = vpop.f32.mrb[0].mxu0
  %v1539 = vadd.f32 %v645, %v1538
  %v1540 = vpop.f32.mrb[0].mxu0
  %1541 = vmatprep.mubr.f32.mxu0 0.0
  %1542 = vmatmul.mubr.f32.gmra.mrb[0].mxu0 %v1278
  %v1543 = vpop.f32.mrb[0].mxu0
  %v1544 = vadd.f32 %v651, %v1543
  %v1545 = vpop.f32.mrb[0].mxu0
  %1546 = vmatprep.mubr.f32.mxu0 0.0
  %1547 = vmatmul.mubr.f32.gmra.mrb[0].mxu0 %v1281
  %v1548 = vpop.f32.mrb[0].mxu0
  %v1549 = vadd.f32 %v657, %v1548
  %v1550 = vpop.f32.mrb[0].mxu0
  %1551 = vmatprep.mubr.f32.mxu0 0.0
  %1552 = vmatmul.mubr.f32.gmra.mrb[0].mxu0 %v1284
  %v1553 = vpop.f32.mrb[0].mxu0
  %v1554 = vadd.f32 %v663, %v1553
  %v1555 = vpop.f32.mrb[0].mxu0
  %1556 = vmatprep.mubr.f32.mxu0 0.0
  %1557 = vmatmul.mubr.f32.gmra.mrb[0].mxu0 %v1287
  %v1558 = vpop.f32.mrb[0].mxu0
  %v1559 = vadd.f32 %v669, %v1558
  %v1560 = vpop.f32.mrb[0].mxu0
  %1561 = vmatprep.mubr.f32.mxu0 0.0
  %1562 = vmatmul.mubr.f32.gmra.mrb[0].mxu0 %v1290
  %v1563 = vpop.f32.mrb[0].mxu0
  %v1564 = vadd.f32 %v675, %v1563
  %v1565 = vpop.f32.mrb[0].mxu0
  %1566 = vmatprep.mubr.f32.mxu0 0.0
  %1567 = vmatmul.mubr.f32.gmra.mrb[0].mxu0 %v1293
  %v1568 = vpop.f32.mrb[0].mxu0
  %v1569 = vadd.f32 %v681, %v1568
  %v1570 = vpop.f32.mrb[0].mxu0
  %1571 = vmatprep.mubr.f32.mxu0 0.0
  %1572 = vmatmul.mubr.f32.gmra.mrb[0].mxu0 %v1296
  %v1573 = vpop.f32.mrb[0].mxu0
  %v1574 = vadd.f32 %v687, %v1573
  %v1575 = vpop.f32.mrb[0].mxu0
  %1576 = vmatprep.mubr.f32.mxu0 0.0
  %1577 = vmatmul.mubr.f32.gmra.mrb[0].mxu0 %v1299
  %v1578 = vpop.f32.mrb[0].mxu0
  %v1579 = vadd.f32 %v693, %v1578
  %v1580 = vpop.f32.mrb[0].mxu0
  %1581 = vmatprep.mubr.f32.mxu0 0.0
  %1582 = vmatmul.mubr.f32.gmra.mrb[0].mxu0 %v1302
  %v1583 = vpop.f32.mrb[0].mxu0
  %v1584 = vadd.f32 %v699, %v1583
  %v1585 = vpop.f32.mrb[0].mxu0
  %1586 = vmatprep.mubr.f32.mxu0 0.0
  %1587 = vmatmul.mubr.f32.gmra.mrb[0].mxu0 %v1305
  %v1588 = vpop.f32.mrb[0].mxu0
  %v1589 = vadd.f32 %v705, %v1588
  %v1590 = vpop.f32.mrb[0].mxu0
  %1591 = vmatprep.mubr.f32.mxu0 0.0
  %1592 = vmatmul.mubr.f32.gmra.mrb[0].mxu0 %v1308
  %v1593 = vpop.f32.mrb[0].mxu0
  %v1594 = vadd.f32 %v711, %v1593
  %v1595 = vpop.f32.mrb[0].mxu0
  %1596 = vmatprep.mubr.f32.mxu0 0.0
  %1597 = vmatmul.mubr.f32.gmra.mrb[0].mxu0 %v1311
  %v1598 = vpop.f32.mrb[0].mxu0
  %v1599 = vadd.f32 %v717, %v1598
  %v1600 = vpop.f32.mrb[0].mxu0
  %1601 = vmatprep.mubr.f32.mxu0 0.0
  %1602 = vmatmul.mubr.f32.gmra.mrb[0].mxu0 %v1314
  %v1603 = vpop.f32.mrb[0].mxu0
  %v1604 = vadd.f32 %v723, %v1603
  %v1605 = vpop.f32.mrb[0].mxu0
  %1606 = vmatprep.mubr.f32.mxu0 0.0
  %1607 = vmatmul.mubr.f32.gmra.mrb[0].mxu0 %v1317
  %v1608 = vpop.f32.mrb[0].mxu0
  %v1609 = vadd.f32 %v729, %v1608
  %v1610 = vpop.f32.mrb[0].mxu0
  %1611 = vmatprep.mubr.f32.mxu0 0.0
  %1612 = vmatmul.mubr.f32.gmra.mrb[0].mxu0 %v1320
  %v1613 = vpop.f32.mrb[0].mxu0
  %v1614 = vadd.f32 %v735, %v1613
  %v1615 = vpop.f32.mrb[0].mxu0
  %1616 = vmatprep.mubr.f32.mxu0 0.0
  %1617 = vmatmul.mubr.f32.gmra.mrb[0].mxu0 %v1323
  %v1618 = vpop.f32.mrb[0].mxu0
  %v1619 = vadd.f32 %v741, %v1618
  %v1620 = vpop.f32.mrb[0].mxu0
  %1621 = vmatprep.mubr.f32.mxu0 0.0
  %1622 = vmatmul.mubr.f32.gmra.mrb[0].mxu0 %v1326
  %v1623 = vpop.f32.mrb[0].mxu0
  %v1624 = vadd.f32 %v747, %v1623
  %v1625 = vpop.f32.mrb[0].mxu0
  %1626 = vmatprep.mubr.f32.mxu0 0.0
  %1627 = vmatmul.mubr.f32.gmra.mrb[0].mxu0 %v1329
  %v1628 = vpop.f32.mrb[0].mxu0
  %v1629 = vadd.f32 %v753, %v1628
  %v1630 = vpop.f32.mrb[0].mxu0
  %1631 = vmatprep.mubr.f32.mxu0 0.0
  %1632 = vmatmul.mubr.f32.gmra.mrb[0].mxu0 %v1332
  %v1633 = vpop.f32.mrb[0].mxu0
  %v1634 = vadd.f32 %v759, %v1633
  %v1635 = vpop.f32.mrb[0].mxu0
  %1636 = vmatprep.mubr.f32.mxu0 0.0
  %1637 = vmatmul.mubr.f32.gmra.mrb[0].mxu0 %v1335
  %v1638 = vpop.f32.mrb[0].mxu0
  %v1639 = vadd.f32 %v765, %v1638
  %v1640 = vpop.f32.mrb[0].mxu0
  %1641 = vdwg.mxu0
  %1642 = vmatprep.subr.mxu0 0.0
  %1643 = vmatpush1.msra.mxu0 %v1404
  %1644 = vmatprep.subr.mxu0 0.0
  %1645 = vmatpush1.msra.mxu0 %v1409
  %1646 = vmatprep.subr.mxu0 0.0
  %1647 = vmatpush1.msra.mxu0 %v1414
  %1648 = vmatprep.subr.mxu0 0.0
  %1649 = vmatpush1.msra.mxu0 %v1419
  %1650 = vmatprep.subr.mxu0 0.0
  %1651 = vmatpush1.msra.mxu0 %v1424
  %1652 = vmatprep.subr.mxu0 0.0
  %1653 = vmatpush1.msra.mxu0 %v1429
  %1654 = vmatprep.subr.mxu0 0.0
  %1655 = vmatpush1.msra.mxu0 %v1434
  %1656 = vmatprep.subr.mxu0 0.0
  %1657 = vmatpush1.msra.mxu0 %v1439
  %1658 = vmatprep.subr.mxu0 0.0
  %1659 = vmatpush1.msra.mxu0 %v1444
  %1660 = vmatprep.subr.mxu0 0.0
  %1661 = vmatpush1.msra.mxu0 %v1449
  %1662 = vmatprep.subr.mxu0 0.0
  %1663 = vmatpush1.msra.mxu0 %v1454
  %1664 = vmatprep.subr.mxu0 0.0
  %1665 = vmatpush1.msra.mxu0 %v1459
  %1666 = vmatprep.subr.mxu0 0.0
  %1667 = vmatpush1.msra.mxu0 %v1464
  %1668 = vmatprep.subr.mxu0 0.0
  %1669 = vmatpush1.msra.mxu0 %v1469
  %1670 = vmatprep.subr.mxu0 0.0
  %1671 = vmatpush1.msra.mxu0 %v1474
  %1672 = vmatprep.subr.mxu0 0.0
  %1673 = vmatpush1.msra.mxu0 %v1479
  %1674 = vmatprep.subr.mxu0 0.0
  %1675 = vmatpush1.msra.mxu0 %v1484
  %1676 = vmatprep.subr.mxu0 0.0
  %1677 = vmatpush1.msra.mxu0 %v1489
  %1678 = vmatprep.subr.mxu0 0.0
  %1679 = vmatpush1.msra.mxu0 %v1494
  %1680 = vmatprep.subr.mxu0 0.0
  %1681 = vmatpush1.msra.mxu0 %v1499
  %1682 = vmatprep.subr.mxu0 0.0
  %1683 = vmatpush1.msra.mxu0 %v1504
  %1684 = vmatprep.subr.mxu0 0.0
  %1685 = vmatpush1.msra.mxu0 %v1509
  %1686 = vmatprep.subr.mxu0 0.0
  %1687 = vmatpush1.msra.mxu0 %v1514
  %1688 = vmatprep.subr.mxu0 0.0
  %1689 = vmatpush1.msra.mxu0 %v1519
  %1690 = vmatprep.subr.mxu0 0.0
  %1691 = vmatpush1.msra.mxu0 %v1524
  %1692 = vmatprep.subr.mxu0 0.0
  %1693 = vmatpush1.msra.mxu0 %v1529
  %1694 = vmatprep.subr.mxu0 0.0
  %1695 = vmatpush1.msra.mxu0 %v1534
  %1696 = vmatprep.subr.mxu0 0.0
  %1697 = vmatpush1.msra.mxu0 %v1539
  %1698 = vmatprep.subr.mxu0 0.0
  %1699 = vmatpush1.msra.mxu0 %v1544
  %1700 = vmatprep.subr.mxu0 0.0
  %1701 = vmatpush1.msra.mxu0 %v1549
  %1702 = vmatprep.subr.mxu0 0.0
  %1703 = vmatpush1.msra.mxu0 %v1554
  %1704 = vmatprep.subr.mxu0 0.0
  %1705 = vmatpush1.msra.mxu0 %v1559
  %1706 = vmatprep.mubr.f32.mxu0 1.0
  %1707 = vmatmul.mubr.f32.gmra.mrb[0].mxu0 1.0
  %v1708 = vpop.f32.mrb[0].mxu0
  %v1709 = vadd.f32 0.0, %v1708
  %v1710 = vpop.f32.mrb[0].mxu0
  %1711 = vdwg.mxu0
  %1712 = vmatprep.subr.mxu0 0.0
  %1713 = vmatpush1.msra.mxu0 %v1564
  %1714 = vmatprep.subr.mxu0 0.0
  %1715 = vmatpush1.msra.mxu0 %v1569
  %1716 = vmatprep.subr.mxu0 0.0
  %1717 = vmatpush1.msra.mxu0 %v1574
  %1718 = vmatprep.subr.mxu0 0.0
  %1719 = vmatpush1.msra.mxu0 %v1579
  %1720 = vmatprep.subr.mxu0 0.0
  %1721 = vmatpush1.msra.mxu0 %v1584
  %1722 = vmatprep.subr.mxu0 0.0
  %1723 = vmatpush1.msra.mxu0 %v1589
  %1724 = vmatprep.subr.mxu0 0.0
  %1725 = vmatpush1.msra.mxu0 %v1594
  %1726 = vmatprep.subr.mxu0 0.0
  %1727 = vmatpush1.msra.mxu0 %v1599
  %1728 = vmatprep.subr.mxu0 0.0
  %1729 = vmatpush1.msra.mxu0 %v1604
  %1730 = vmatprep.subr.mxu0 0.0
  %1731 = vmatpush1.msra.mxu0 %v1609
  %1732 = vmatprep.subr.mxu0 0.0
  %1733 = vmatpush1.msra.mxu0 %v1614
  %1734 = vmatprep.subr.mxu0 0.0
  %1735 = vmatpush1.msra.mxu0 %v1619
  %1736 = vmatprep.subr.mxu0 0.0
  %1737 = vmatpush1.msra.mxu0 %v1624
  %1738 = vmatprep.subr.mxu0 0.0
  %1739 = vmatpush1.msra.mxu0 %v1629
  %1740 = vmatprep.subr.mxu0 0.0
  %1741 = vmatpush1.msra.mxu0 %v1634
  %1742 = vmatprep.subr.mxu0 0.0
  %1743 = vmatpush1.msra.mxu0 %v1639
  %1744 = vmatprep.subr.mxu0 0.0
  %1745 = vmatpush1.msra.mxu0 0.0
  %1746 = vmatprep.subr.mxu0 0.0
  %1747 = vmatpush1.msra.mxu0 0.0
  %1748 = vmatprep.subr.mxu0 0.0
  %1749 = vmatpush1.msra.mxu0 0.0
  %1750 = vmatprep.subr.mxu0 0.0
  %1751 = vmatpush1.msra.mxu0 0.0
  %1752 = vmatprep.subr.mxu0 0.0
  %1753 = vmatpush1.msra.mxu0 0.0
  %1754 = vmatprep.subr.mxu0 0.0
  %1755 = vmatpush1.msra.mxu0 0.0
  %1756 = vmatprep.subr.mxu0 0.0
  %1757 = vmatpush1.msra.mxu0 0.0
  %1758 = vmatprep.subr.mxu0 0.0
  %1759 = vmatpush1.msra.mxu0 0.0
  %1760 = vmatprep.subr.mxu0 0.0
  %1761 = vmatpush1.msra.mxu0 0.0
  %1762 = vmatprep.subr.mxu0 0.0
  %1763 = vmatpush1.msra.mxu0 0.0
  %1764 = vmatprep.subr.mxu0 0.0
  %1765 = vmatpush1.msra.mxu0 0.0
  %1766 = vmatprep.subr.mxu0 0.0
  %1767 = vmatpush1.msra.mxu0 0.0
  %1768 = vmatprep.subr.mxu0 0.0
  %1769 = vmatpush1.msra.mxu0 0.0
  %1770 = vmatprep.subr.mxu0 0.0
  %1771 = vmatpush1.msra.mxu0 0.0
  %1772 = vmatprep.subr.mxu0 0.0
  %1773 = vmatpush1.msra.mxu0 0.0
  %1774 = vmatprep.subr.mxu0 0.0
  %1775 = vmatpush1.msra.mxu0 0.0
  %1776 = vmatprep.mubr.f32.mxu0 0.0
  %1777 = vmatmul.mubr.f32.gmra.mrb[0].mxu0 1.0
  %v1778 = vpop.f32.mrb[0].mxu0
  %v1779 = vadd.f32 %v1709, %v1778
  %v1780 = vpop.f32.mrb[0].mxu0
  %1781 = vdwg.mxu0
  %v1782 = vmul.f32 %v1779, 0.0026041667
  %v1783 = vmul.f32 %v1404, %v1404
  %v1784 = vmul.f32 %v1409, %v1409
  %v1785 = vmul.f32 %v1414, %v1414
  %v1786 = vmul.f32 %v1419, %v1419
  %v1787 = vmul.f32 %v1424, %v1424
  %v1788 = vmul.f32 %v1429, %v1429
  %v1789 = vmul.f32 %v1434, %v1434
  %v1790 = vmul.f32 %v1439, %v1439
  %v1791 = vmul.f32 %v1444, %v1444
  %v1792 = vmul.f32 %v1449, %v1449
  %v1793 = vmul.f32 %v1454, %v1454
  %v1794 = vmul.f32 %v1459, %v1459
  %v1795 = vmul.f32 %v1464, %v1464
  %v1796 = vmul.f32 %v1469, %v1469
  %v1797 = vmul.f32 %v1474, %v1474
  %v1798 = vmul.f32 %v1479, %v1479
  %v1799 = vmul.f32 %v1484, %v1484
  %v1800 = vmul.f32 %v1489, %v1489
  %v1801 = vmul.f32 %v1494, %v1494
  %v1802 = vmul.f32 %v1499, %v1499
  %v1803 = vmul.f32 %v1504, %v1504
  %v1804 = vmul.f32 %v1509, %v1509
  %v1805 = vmul.f32 %v1514, %v1514
  %v1806 = vmul.f32 %v1519, %v1519
  %v1807 = vmul.f32 %v1524, %v1524
  %v1808 = vmul.f32 %v1529, %v1529
  %v1809 = vmul.f32 %v1534, %v1534
  %v1810 = vmul.f32 %v1539, %v1539
  %v1811 = vmul.f32 %v1544, %v1544
  %v1812 = vmul.f32 %v1549, %v1549
  %v1813 = vmul.f32 %v1554, %v1554
  %v1814 = vmul.f32 %v1559, %v1559
  %v1815 = vmul.f32 %v1564, %v1564
  %v1816 = vmul.f32 %v1569, %v1569
  %v1817 = vmul.f32 %v1574, %v1574
  %v1818 = vmul.f32 %v1579, %v1579
  %v1819 = vmul.f32 %v1584, %v1584
  %v1820 = vmul.f32 %v1589, %v1589
  %v1821 = vmul.f32 %v1594, %v1594
  %v1822 = vmul.f32 %v1599, %v1599
  %v1823 = vmul.f32 %v1604, %v1604
  %v1824 = vmul.f32 %v1609, %v1609
  %v1825 = vmul.f32 %v1614, %v1614
  %v1826 = vmul.f32 %v1619, %v1619
  %v1827 = vmul.f32 %v1624, %v1624
  %v1828 = vmul.f32 %v1629, %v1629
  %v1829 = vmul.f32 %v1634, %v1634
  %v1830 = vmul.f32 %v1639, %v1639
  %1831 = vmatprep.subr.mxu0 0.0
  %1832 = vmatpush1.msra.mxu0 %v1783
  %1833 = vmatprep.subr.mxu0 0.0
  %1834 = vmatpush1.msra.mxu0 %v1784
  %1835 = vmatprep.subr.mxu0 0.0
  %1836 = vmatpush1.msra.mxu0 %v1785
  %1837 = vmatprep.subr.mxu0 0.0
  %1838 = vmatpush1.msra.mxu0 %v1786
  %1839 = vmatprep.subr.mxu0 0.0
  %1840 = vmatpush1.msra.mxu0 %v1787
  %1841 = vmatprep.subr.mxu0 0.0
  %1842 = vmatpush1.msra.mxu0 %v1788
  %1843 = vmatprep.subr.mxu0 0.0
  %1844 = vmatpush1.msra.mxu0 %v1789
  %1845 = vmatprep.subr.mxu0 0.0
  %1846 = vmatpush1.msra.mxu0 %v1790
  %1847 = vmatprep.subr.mxu0 0.0
  %1848 = vmatpush1.msra.mxu0 %v1791
  %1849 = vmatprep.subr.mxu0 0.0
  %1850 = vmatpush1.msra.mxu0 %v1792
  %1851 = vmatprep.subr.mxu0 0.0
  %1852 = vmatpush1.msra.mxu0 %v1793
  %1853 = vmatprep.subr.mxu0 0.0
  %1854 = vmatpush1.msra.mxu0 %v1794
  %1855 = vmatprep.subr.mxu0 0.0
  %1856 = vmatpush1.msra.mxu0 %v1795
  %1857 = vmatprep.subr.mxu0 0.0
  %1858 = vmatpush1.msra.mxu0 %v1796
  %1859 = vmatprep.subr.mxu0 0.0
  %1860 = vmatpush1.msra.mxu0 %v1797
  %1861 = vmatprep.subr.mxu0 0.0
  %1862 = vmatpush1.msra.mxu0 %v1798
  %1863 = vmatprep.subr.mxu0 0.0
  %1864 = vmatpush1.msra.mxu0 %v1799
  %1865 = vmatprep.subr.mxu0 0.0
  %1866 = vmatpush1.msra.mxu0 %v1800
  %1867 = vmatprep.subr.mxu0 0.0
  %1868 = vmatpush1.msra.mxu0 %v1801
  %1869 = vmatprep.subr.mxu0 0.0
  %1870 = vmatpush1.msra.mxu0 %v1802
  %1871 = vmatprep.subr.mxu0 0.0
  %1872 = vmatpush1.msra.mxu0 %v1803
  %1873 = vmatprep.subr.mxu0 0.0
  %1874 = vmatpush1.msra.mxu0 %v1804
  %1875 = vmatprep.subr.mxu0 0.0
  %1876 = vmatpush1.msra.mxu0 %v1805
  %1877 = vmatprep.subr.mxu0 0.0
  %1878 = vmatpush1.msra.mxu0 %v1806
  %1879 = vmatprep.subr.mxu0 0.0
  %1880 = vmatpush1.msra.mxu0 %v1807
  %1881 = vmatprep.subr.mxu0 0.0
  %1882 = vmatpush1.msra.mxu0 %v1808
  %1883 = vmatprep.subr.mxu0 0.0
  %1884 = vmatpush1.msra.mxu0 %v1809
  %1885 = vmatprep.subr.mxu0 0.0
  %1886 = vmatpush1.msra.mxu0 %v1810
  %1887 = vmatprep.subr.mxu0 0.0
  %1888 = vmatpush1.msra.mxu0 %v1811
  %1889 = vmatprep.subr.mxu0 0.0
  %1890 = vmatpush1.msra.mxu0 %v1812
  %1891 = vmatprep.subr.mxu0 0.0
  %1892 = vmatpush1.msra.mxu0 %v1813
  %1893 = vmatprep.subr.mxu0 0.0
  %1894 = vmatpush1.msra.mxu0 %v1814
  %1895 = vmatprep.mubr.f32.mxu0 1.0
  %1896 = vmatmul.mubr.f32.gmra.mrb[0].mxu0 1.0
  %v1897 = vpop.f32.mrb[0].mxu0
  %v1898 = vadd.f32 0.0, %v1897
  %v1899 = vpop.f32.mrb[0].mxu0
  %1900 = vdwg.mxu0
  %1901 = vmatprep.subr.mxu0 0.0
  %1902 = vmatpush1.msra.mxu0 %v1815
  %1903 = vmatprep.subr.mxu0 0.0
  %1904 = vmatpush1.msra.mxu0 %v1816
  %1905 = vmatprep.subr.mxu0 0.0
  %1906 = vmatpush1.msra.mxu0 %v1817
  %1907 = vmatprep.subr.mxu0 0.0
  %1908 = vmatpush1.msra.mxu0 %v1818
  %1909 = vmatprep.subr.mxu0 0.0
  %1910 = vmatpush1.msra.mxu0 %v1819
  %1911 = vmatprep.subr.mxu0 0.0
  %1912 = vmatpush1.msra.mxu0 %v1820
  %1913 = vmatprep.subr.mxu0 0.0
  %1914 = vmatpush1.msra.mxu0 %v1821
  %1915 = vmatprep.subr.mxu0 0.0
  %1916 = vmatpush1.msra.mxu0 %v1822
  %1917 = vmatprep.subr.mxu0 0.0
  %1918 = vmatpush1.msra.mxu0 %v1823
  %1919 = vmatprep.subr.mxu0 0.0
  %1920 = vmatpush1.msra.mxu0 %v1824
  %1921 = vmatprep.subr.mxu0 0.0
  %1922 = vmatpush1.msra.mxu0 %v1825
  %1923 = vmatprep.subr.mxu0 0.0
  %1924 = vmatpush1.msra.mxu0 %v1826
  %1925 = vmatprep.subr.mxu0 0.0
  %1926 = vmatpush1.msra.mxu0 %v1827
  %1927 = vmatprep.subr.mxu0 0.0
  %1928 = vmatpush1.msra.mxu0 %v1828
  %1929 = vmatprep.subr.mxu0 0.0
  %1930 = vmatpush1.msra.mxu0 %v1829
  %1931 = vmatprep.subr.mxu0 0.0
  %1932 = vmatpush1.msra.mxu0 %v1830
  %1933 = vmatprep.subr.mxu0 0.0
  %1934 = vmatpush1.msra.mxu0 0.0
  %1935 = vmatprep.subr.mxu0 0.0
  %1936 = vmatpush1.msra.mxu0 0.0
  %1937 = vmatprep.subr.mxu0 0.0
  %1938 = vmatpush1.msra.mxu0 0.0
  %1939 = vmatprep.subr.mxu0 0.0
  %1940 = vmatpush1.msra.mxu0 0.0
  %1941 = vmatprep.subr.mxu0 0.0
  %1942 = vmatpush1.msra.mxu0 0.0
  %1943 = vmatprep.subr.mxu0 0.0
  %1944 = vmatpush1.msra.mxu0 0.0
  %1945 = vmatprep.subr.mxu0 0.0
  %1946 = vmatpush1.msra.mxu0 0.0
  %1947 = vmatprep.subr.mxu0 0.0
  %1948 = vmatpush1.msra.mxu0 0.0
  %1949 = vmatprep.subr.mxu0 0.0
  %1950 = vmatpush1.msra.mxu0 0.0
  %1951 = vmatprep.subr.mxu0 0.0
  %1952 = vmatpush1.msra.mxu0 0.0
  %1953 = vmatprep.subr.mxu0 0.0
  %1954 = vmatpush1.msra.mxu0 0.0
  %1955 = vmatprep.subr.mxu0 0.0
  %1956 = vmatpush1.msra.mxu0 0.0
  %1957 = vmatprep.subr.mxu0 0.0
  %1958 = vmatpush1.msra.mxu0 0.0
  %1959 = vmatprep.subr.mxu0 0.0
  %1960 = vmatpush1.msra.mxu0 0.0
  %1961 = vmatprep.subr.mxu0 0.0
  %1962 = vmatpush1.msra.mxu0 0.0
  %1963 = vmatprep.subr.mxu0 0.0
  %1964 = vmatpush1.msra.mxu0 0.0
  %1965 = vmatprep.mubr.f32.mxu0 0.0
  %1966 = vmatmul.mubr.f32.gmra.mrb[0].mxu0 1.0
  %v1967 = vpop.f32.mrb[0].mxu0
  %v1968 = vadd.f32 %v1898, %v1967
  %v1969 = vpop.f32.mrb[0].mxu0
  %1970 = vdwg.mxu0
  %v1971 = vmul.f32 %v1968, 0.0026041667
  %v1972 = vmul.f32 %v1782, %v1782
  %v1973 = vsub.f32 %v1971, %v1972
  %v1974 = vadd.f32 %v1973, 1e-05
  %v1975 = vrsqrt.pop %v1974
  %v1976 = vmul.f32 %v1074, %v1975
  %v1977 = vmul.f32 %v1782, %v1976
  %v1979 = vrot.slane %v1977, 7
  %v1981 = vsub.f32 %v1074, %v1979
  %v1982 = vlaneseq
  %v1983 = vshrl.u32 %v1982, 7
  %v1984 = vsub.s32 0, %v1983
  %v1985 = vrot.slane %v1976, %v1984
  %v1986 = vmul.f32 %v1404, %v1985
  %v1987 = vmul.f32 %v1409, %v1985
  %v1988 = vmul.f32 %v1414, %v1985
  %v1989 = vmul.f32 %v1419, %v1985
  %v1990 = vmul.f32 %v1424, %v1985
  %v1991 = vmul.f32 %v1429, %v1985
  %v1992 = vmul.f32 %v1434, %v1985
  %v1993 = vmul.f32 %v1439, %v1985
  %v1994 = vmul.f32 %v1444, %v1985
  %v1995 = vmul.f32 %v1449, %v1985
  %v1996 = vmul.f32 %v1454, %v1985
  %v1997 = vmul.f32 %v1459, %v1985
  %v1998 = vmul.f32 %v1464, %v1985
  %v1999 = vmul.f32 %v1469, %v1985
  %v2000 = vmul.f32 %v1474, %v1985
  %v2001 = vmul.f32 %v1479, %v1985
  %v2002 = vmul.f32 %v1484, %v1985
  %v2003 = vmul.f32 %v1489, %v1985
  %v2004 = vmul.f32 %v1494, %v1985
  %v2005 = vmul.f32 %v1499, %v1985
  %v2006 = vmul.f32 %v1504, %v1985
  %v2007 = vmul.f32 %v1509, %v1985
  %v2008 = vmul.f32 %v1514, %v1985
  %v2009 = vmul.f32 %v1519, %v1985
  %v2010 = vmul.f32 %v1524, %v1985
  %v2011 = vmul.f32 %v1529, %v1985
  %v2012 = vmul.f32 %v1534, %v1985
  %v2013 = vmul.f32 %v1539, %v1985
  %v2014 = vmul.f32 %v1544, %v1985
  %v2015 = vmul.f32 %v1549, %v1985
  %v2016 = vmul.f32 %v1554, %v1985
  %v2017 = vmul.f32 %v1559, %v1985
  %v2018 = vmul.f32 %v1564, %v1985
  %v2019 = vmul.f32 %v1569, %v1985
  %v2020 = vmul.f32 %v1574, %v1985
  %v2021 = vmul.f32 %v1579, %v1985
  %v2022 = vmul.f32 %v1584, %v1985
  %v2023 = vmul.f32 %v1589, %v1985
  %v2024 = vmul.f32 %v1594, %v1985
  %v2025 = vmul.f32 %v1599, %v1985
  %v2026 = vmul.f32 %v1604, %v1985
  %v2027 = vmul.f32 %v1609, %v1985
  %v2028 = vmul.f32 %v1614, %v1985
  %v2029 = vmul.f32 %v1619, %v1985
  %v2030 = vmul.f32 %v1624, %v1985
  %v2031 = vmul.f32 %v1629, %v1985
  %v2032 = vmul.f32 %v1634, %v1985
  %v2033 = vmul.f32 %v1639, %v1985
  %v2034 = vlaneseq
  %v2035 = vshrl.u32 %v2034, 7
  %v2036 = vsub.s32 1, %v2035
  %v2037 = vrot.slane %v1981, %v2036
  %v2038 = vadd.f32 %v1986, %v2037
  %v2039 = vadd.f32 %v1987, %v2037
  %v2040 = vadd.f32 %v1988, %v2037
  %v2041 = vadd.f32 %v1989, %v2037
  %v2042 = vadd.f32 %v1990, %v2037
  %v2043 = vadd.f32 %v1991, %v2037
  %v2044 = vadd.f32 %v1992, %v2037
  %v2045 = vadd.f32 %v1993, %v2037
  %v2046 = vadd.f32 %v1994, %v2037
  %v2047 = vadd.f32 %v1995, %v2037
  %v2048 = vadd.f32 %v1996, %v2037
  %v2049 = vadd.f32 %v1997, %v2037
  %v2050 = vadd.f32 %v1998, %v2037
  %v2051 = vadd.f32 %v1999, %v2037
  %v2052 = vadd.f32 %v2000, %v2037
  %v2053 = vadd.f32 %v2001, %v2037
  %v2054 = vadd.f32 %v2002, %v2037
  %v2055 = vadd.f32 %v2003, %v2037
  %v2056 = vadd.f32 %v2004, %v2037
  %v2057 = vadd.f32 %v2005, %v2037
  %v2058 = vadd.f32 %v2006, %v2037
  %v2059 = vadd.f32 %v2007, %v2037
  %v2060 = vadd.f32 %v2008, %v2037
  %v2061 = vadd.f32 %v2009, %v2037
  %v2062 = vadd.f32 %v2010, %v2037
  %v2063 = vadd.f32 %v2011, %v2037
  %v2064 = vadd.f32 %v2012, %v2037
  %v2065 = vadd.f32 %v2013, %v2037
  %v2066 = vadd.f32 %v2014, %v2037
  %v2067 = vadd.f32 %v2015, %v2037
  %v2068 = vadd.f32 %v2016, %v2037
  %v2069 = vadd.f32 %v2017, %v2037
  %v2070 = vadd.f32 %v2018, %v2037
  %v2071 = vadd.f32 %v2019, %v2037
  %v2072 = vadd.f32 %v2020, %v2037
  %v2073 = vadd.f32 %v2021, %v2037
  %v2074 = vadd.f32 %v2022, %v2037
  %v2075 = vadd.f32 %v2023, %v2037
  %v2076 = vadd.f32 %v2024, %v2037
  %v2077 = vadd.f32 %v2025, %v2037
  %v2078 = vadd.f32 %v2026, %v2037
  %v2079 = vadd.f32 %v2027, %v2037
  %v2080 = vadd.f32 %v2028, %v2037
  %v2081 = vadd.f32 %v2029, %v2037
  %v2082 = vadd.f32 %v2030, %v2037
  %v2083 = vadd.f32 %v2031, %v2037
  %v2084 = vadd.f32 %v2032, %v2037
  %v2085 = vadd.f32 %v2033, %v2037
  %v2086 = vand.u32 2147483647, %v2038
  %v2087 = vand.u32 2147483647, %v2039
  %v2088 = vand.u32 2147483647, %v2040
  %v2089 = vand.u32 2147483647, %v2041
  %v2090 = vand.u32 2147483647, %v2042
  %v2091 = vand.u32 2147483647, %v2043
  %v2092 = vand.u32 2147483647, %v2044
  %v2093 = vand.u32 2147483647, %v2045
  %v2094 = vand.u32 2147483647, %v2046
  %v2095 = vand.u32 2147483647, %v2047
  %v2096 = vand.u32 2147483647, %v2048
  %v2097 = vand.u32 2147483647, %v2049
  %v2098 = vand.u32 2147483647, %v2050
  %v2099 = vand.u32 2147483647, %v2051
  %v2100 = vand.u32 2147483647, %v2052
  %v2101 = vand.u32 2147483647, %v2053
  %v2102 = vand.u32 2147483647, %v2054
  %v2103 = vand.u32 2147483647, %v2055
  %v2104 = vand.u32 2147483647, %v2056
  %v2105 = vand.u32 2147483647, %v2057
  %v2106 = vand.u32 2147483647, %v2058
  %v2107 = vand.u32 2147483647, %v2059
  %v2108 = vand.u32 2147483647, %v2060
  %v2109 = vand.u32 2147483647, %v2061
  %v2110 = vand.u32 2147483647, %v2062
  %v2111 = vand.u32 2147483647, %v2063
  %v2112 = vand.u32 2147483647, %v2064
  %v2113 = vand.u32 2147483647, %v2065
  %v2114 = vand.u32 2147483647, %v2066
  %v2115 = vand.u32 2147483647, %v2067
  %v2116 = vand.u32 2147483647, %v2068
  %v2117 = vand.u32 2147483647, %v2069
  %v2118 = vand.u32 2147483647, %v2070
  %v2119 = vand.u32 2147483647, %v2071
  %v2120 = vand.u32 2147483647, %v2072
  %v2121 = vand.u32 2147483647, %v2073
  %v2122 = vand.u32 2147483647, %v2074
  %v2123 = vand.u32 2147483647, %v2075
  %v2124 = vand.u32 2147483647, %v2076
  %v2125 = vand.u32 2147483647, %v2077
  %v2126 = vand.u32 2147483647, %v2078
  %v2127 = vand.u32 2147483647, %v2079
  %v2128 = vand.u32 2147483647, %v2080
  %v2129 = vand.u32 2147483647, %v2081
  %v2130 = vand.u32 2147483647, %v2082
  %v2131 = vand.u32 2147483647, %v2083
  %v2132 = vand.u32 2147483647, %v2084
  %v2133 = vand.u32 2147483647, %v2085
  %v2134 = vsub.f32 0.0, %v2086
  %v2135 = vsub.f32 0.0, %v2087
  %v2136 = vsub.f32 0.0, %v2088
  %v2137 = vsub.f32 0.0, %v2089
  %v2138 = vsub.f32 0.0, %v2090
  %v2139 = vsub.f32 0.0, %v2091
  %v2140 = vsub.f32 0.0, %v2092
  %v2141 = vsub.f32 0.0, %v2093
  %v2142 = vsub.f32 0.0, %v2094
  %v2143 = vsub.f32 0.0, %v2095
  %v2144 = vsub.f32 0.0, %v2096
  %v2145 = vsub.f32 0.0, %v2097
  %v2146 = vsub.f32 0.0, %v2098
  %v2147 = vsub.f32 0.0, %v2099
  %v2148 = vsub.f32 0.0, %v2100
  %v2149 = vsub.f32 0.0, %v2101
  %v2150 = vsub.f32 0.0, %v2102
  %v2151 = vsub.f32 0.0, %v2103
  %v2152 = vsub.f32 0.0, %v2104
  %v2153 = vsub.f32 0.0, %v2105
  %v2154 = vsub.f32 0.0, %v2106
  %v2155 = vsub.f32 0.0, %v2107
  %v2156 = vsub.f32 0.0, %v2108
  %v2157 = vsub.f32 0.0, %v2109
  %v2158 = vsub.f32 0.0, %v2110
  %v2159 = vsub.f32 0.0, %v2111
  %v2160 = vsub.f32 0.0, %v2112
  %v2161 = vsub.f32 0.0, %v2113
  %v2162 = vsub.f32 0.0, %v2114
  %v2163 = vsub.f32 0.0, %v2115
  %v2164 = vsub.f32 0.0, %v2116
  %v2165 = vsub.f32 0.0, %v2117
  %v2166 = vsub.f32 0.0, %v2118
  %v2167 = vsub.f32 0.0, %v2119
  %v2168 = vsub.f32 0.0, %v2120
  %v2169 = vsub.f32 0.0, %v2121
  %v2170 = vsub.f32 0.0, %v2122
  %v2171 = vsub.f32 0.0, %v2123
  %v2172 = vsub.f32 0.0, %v2124
  %v2173 = vsub.f32 0.0, %v2125
  %v2174 = vsub.f32 0.0, %v2126
  %v2175 = vsub.f32 0.0, %v2127
  %v2176 = vsub.f32 0.0, %v2128
  %v2177 = vsub.f32 0.0, %v2129
  %v2178 = vsub.f32 0.0, %v2130
  %v2179 = vsub.f32 0.0, %v2131
  %v2180 = vsub.f32 0.0, %v2132
  %v2181 = vsub.f32 0.0, %v2133
  %v2182 = vmul.f32 %v2134, 1.442695
  %v2183 = vpow.pop %v2182
  %v2184 = vmul.f32 %v2135, 1.442695
  %v2185 = vpow.pop %v2184
  %v2186 = vmul.f32 %v2136, 1.442695
  %v2187 = vpow.pop %v2186
  %v2188 = vmul.f32 %v2137, 1.442695
  %v2189 = vpow.pop %v2188
  %v2190 = vmul.f32 %v2138, 1.442695
  %v2191 = vpow.pop %v2190
  %v2192 = vmul.f32 %v2139, 1.442695
  %v2193 = vpow.pop %v2192
  %v2194 = vmul.f32 %v2140, 1.442695
  %v2195 = vpow.pop %v2194
  %v2196 = vmul.f32 %v2141, 1.442695
  %v2197 = vpow.pop %v2196
  %v2198 = vmul.f32 %v2142, 1.442695
  %v2199 = vpow.pop %v2198
  %v2200 = vmul.f32 %v2143, 1.442695
  %v2201 = vpow.pop %v2200
  %v2202 = vmul.f32 %v2144, 1.442695
  %v2203 = vpow.pop %v2202
  %v2204 = vmul.f32 %v2145, 1.442695
  %v2205 = vpow.pop %v2204
  %v2206 = vmul.f32 %v2146, 1.442695
  %v2207 = vpow.pop %v2206
  %v2208 = vmul.f32 %v2147, 1.442695
  %v2209 = vpow.pop %v2208
  %v2210 = vmul.f32 %v2148, 1.442695
  %v2211 = vpow.pop %v2210
  %v2212 = vmul.f32 %v2149, 1.442695
  %v2213 = vpow.pop %v2212
  %v2214 = vmul.f32 %v2150, 1.442695
  %v2215 = vpow.pop %v2214
  %v2216 = vmul.f32 %v2151, 1.442695
  %v2217 = vpow.pop %v2216
  %v2218 = vmul.f32 %v2152, 1.442695
  %v2219 = vpow.pop %v2218
  %v2220 = vmul.f32 %v2153, 1.442695
  %v2221 = vpow.pop %v2220
  %v2222 = vmul.f32 %v2154, 1.442695
  %v2223 = vpow.pop %v2222
  %v2224 = vmul.f32 %v2155, 1.442695
  %v2225 = vpow.pop %v2224
  %v2226 = vmul.f32 %v2156, 1.442695
  %v2227 = vpow.pop %v2226
  %v2228 = vmul.f32 %v2157, 1.442695
  %v2229 = vpow.pop %v2228
  %v2230 = vmul.f32 %v2158, 1.442695
  %v2231 = vpow.pop %v2230
  %v2232 = vmul.f32 %v2159, 1.442695
  %v2233 = vpow.pop %v2232
  %v2234 = vmul.f32 %v2160, 1.442695
  %v2235 = vpow.pop %v2234
  %v2236 = vmul.f32 %v2161, 1.442695
  %v2237 = vpow.pop %v2236
  %v2238 = vmul.f32 %v2162, 1.442695
  %v2239 = vpow.pop %v2238
  %v2240 = vmul.f32 %v2163, 1.442695
  %v2241 = vpow.pop %v2240
  %v2242 = vmul.f32 %v2164, 1.442695
  %v2243 = vpow.pop %v2242
  %v2244 = vmul.f32 %v2165, 1.442695
  %v2245 = vpow.pop %v2244
  %v2246 = vmul.f32 %v2166, 1.442695
  %v2247 = vpow.pop %v2246
  %v2248 = vmul.f32 %v2167, 1.442695
  %v2249 = vpow.pop %v2248
  %v2250 = vmul.f32 %v2168, 1.442695
  %v2251 = vpow.pop %v2250
  %v2252 = vmul.f32 %v2169, 1.442695
  %v2253 = vpow.pop %v2252
  %v2254 = vmul.f32 %v2170, 1.442695
  %v2255 = vpow.pop %v2254
  %v2256 = vmul.f32 %v2171, 1.442695
  %v2257 = vpow.pop %v2256
  %v2258 = vmul.f32 %v2172, 1.442695
  %v2259 = vpow.pop %v2258
  %v2260 = vmul.f32 %v2173, 1.442695
  %v2261 = vpow.pop %v2260
  %v2262 = vmul.f32 %v2174, 1.442695
  %v2263 = vpow.pop %v2262
  %v2264 = vmul.f32 %v2175, 1.442695
  %v2265 = vpow.pop %v2264
  %v2266 = vmul.f32 %v2176, 1.442695
  %v2267 = vpow.pop %v2266
  %v2268 = vmul.f32 %v2177, 1.442695
  %v2269 = vpow.pop %v2268
  %v2270 = vmul.f32 %v2178, 1.442695
  %v2271 = vpow.pop %v2270
  %v2272 = vmul.f32 %v2179, 1.442695
  %v2273 = vpow.pop %v2272
  %v2274 = vmul.f32 %v2180, 1.442695
  %v2275 = vpow.pop %v2274
  %v2276 = vmul.f32 %v2181, 1.442695
  %v2277 = vpow.pop %v2276
  %v2278 = vadd.f32 %v2183, 1.0
  %v2279 = vadd.f32 %v2185, 1.0
  %v2280 = vadd.f32 %v2187, 1.0
  %v2281 = vadd.f32 %v2189, 1.0
  %v2282 = vadd.f32 %v2191, 1.0
  %v2283 = vadd.f32 %v2193, 1.0
  %v2284 = vadd.f32 %v2195, 1.0
  %v2285 = vadd.f32 %v2197, 1.0
  %v2286 = vadd.f32 %v2199, 1.0
  %v2287 = vadd.f32 %v2201, 1.0
  %v2288 = vadd.f32 %v2203, 1.0
  %v2289 = vadd.f32 %v2205, 1.0
  %v2290 = vadd.f32 %v2207, 1.0
  %v2291 = vadd.f32 %v2209, 1.0
  %v2292 = vadd.f32 %v2211, 1.0
  %v2293 = vadd.f32 %v2213, 1.0
  %v2294 = vadd.f32 %v2215, 1.0
  %v2295 = vadd.f32 %v2217, 1.0
  %v2296 = vadd.f32 %v2219, 1.0
  %v2297 = vadd.f32 %v2221, 1.0
  %v2298 = vadd.f32 %v2223, 1.0
  %v2299 = vadd.f32 %v2225, 1.0
  %v2300 = vadd.f32 %v2227, 1.0
  %v2301 = vadd.f32 %v2229, 1.0
  %v2302 = vadd.f32 %v2231, 1.0
  %v2303 = vadd.f32 %v2233, 1.0
  %v2304 = vadd.f32 %v2235, 1.0
  %v2305 = vadd.f32 %v2237, 1.0
  %v2306 = vadd.f32 %v2239, 1.0
  %v2307 = vadd.f32 %v2241, 1.0
  %v2308 = vadd.f32 %v2243, 1.0
  %v2309 = vadd.f32 %v2245, 1.0
  %v2310 = vadd.f32 %v2247, 1.0
  %v2311 = vadd.f32 %v2249, 1.0
  %v2312 = vadd.f32 %v2251, 1.0
  %v2313 = vadd.f32 %v2253, 1.0
  %v2314 = vadd.f32 %v2255, 1.0
  %v2315 = vadd.f32 %v2257, 1.0
  %v2316 = vadd.f32 %v2259, 1.0
  %v2317 = vadd.f32 %v2261, 1.0
  %v2318 = vadd.f32 %v2263, 1.0
  %v2319 = vadd.f32 %v2265, 1.0
  %v2320 = vadd.f32 %v2267, 1.0
  %v2321 = vadd.f32 %v2269, 1.0
  %v2322 = vadd.f32 %v2271, 1.0
  %v2323 = vadd.f32 %v2273, 1.0
  %v2324 = vadd.f32 %v2275, 1.0
  %v2325 = vadd.f32 %v2277, 1.0
  %v2326 = vrcp.pop %v2278
  %v2327 = vmul.f32 1.0, %v2326
  %v2328 = vrcp.pop %v2279
  %v2329 = vmul.f32 1.0, %v2328
  %v2330 = vrcp.pop %v2280
  %v2331 = vmul.f32 1.0, %v2330
  %v2332 = vrcp.pop %v2281
  %v2333 = vmul.f32 1.0, %v2332
  %v2334 = vrcp.pop %v2282
  %v2335 = vmul.f32 1.0, %v2334
  %v2336 = vrcp.pop %v2283
  %v2337 = vmul.f32 1.0, %v2336
  %v2338 = vrcp.pop %v2284
  %v2339 = vmul.f32 1.0, %v2338
  %v2340 = vrcp.pop %v2285
  %v2341 = vmul.f32 1.0, %v2340
  %v2342 = vrcp.pop %v2286
  %v2343 = vmul.f32 1.0, %v2342
  %v2344 = vrcp.pop %v2287
  %v2345 = vmul.f32 1.0, %v2344
  %v2346 = vrcp.pop %v2288
  %v2347 = vmul.f32 1.0, %v2346
  %v2348 = vrcp.pop %v2289
  %v2349 = vmul.f32 1.0, %v2348
  %v2350 = vrcp.pop %v2290
  %v2351 = vmul.f32 1.0, %v2350
  %v2352 = vrcp.pop %v2291
  %v2353 = vmul.f32 1.0, %v2352
  %v2354 = vrcp.pop %v2292
  %v2355 = vmul.f32 1.0, %v2354
  %v2356 = vrcp.pop %v2293
  %v2357 = vmul.f32 1.0, %v2356
  %v2358 = vrcp.pop %v2294
  %v2359 = vmul.f32 1.0, %v2358
  %v2360 = vrcp.pop %v2295
  %v2361 = vmul.f32 1.0, %v2360
  %v2362 = vrcp.pop %v2296
  %v2363 = vmul.f32 1.0, %v2362
  %v2364 = vrcp.pop %v2297
  %v2365 = vmul.f32 1.0, %v2364
  %v2366 = vrcp.pop %v2298
  %v2367 = vmul.f32 1.0, %v2366
  %v2368 = vrcp.pop %v2299
  %v2369 = vmul.f32 1.0, %v2368
  %v2370 = vrcp.pop %v2300
  %v2371 = vmul.f32 1.0, %v2370
  %v2372 = vrcp.pop %v2301
  %v2373 = vmul.f32 1.0, %v2372
  %v2374 = vrcp.pop %v2302
  %v2375 = vmul.f32 1.0, %v2374
  %v2376 = vrcp.pop %v2303
  %v2377 = vmul.f32 1.0, %v2376
  %v2378 = vrcp.pop %v2304
  %v2379 = vmul.f32 1.0, %v2378
  %v2380 = vrcp.pop %v2305
  %v2381 = vmul.f32 1.0, %v2380
  %v2382 = vrcp.pop %v2306
  %v2383 = vmul.f32 1.0, %v2382
  %v2384 = vrcp.pop %v2307
  %v2385 = vmul.f32 1.0, %v2384
  %v2386 = vrcp.pop %v2308
  %v2387 = vmul.f32 1.0, %v2386
  %v2388 = vrcp.pop %v2309
  %v2389 = vmul.f32 1.0, %v2388
  %v2390 = vrcp.pop %v2310
  %v2391 = vmul.f32 1.0, %v2390
  %v2392 = vrcp.pop %v2311
  %v2393 = vmul.f32 1.0, %v2392
  %v2394 = vrcp.pop %v2312
  %v2395 = vmul.f32 1.0, %v2394
  %v2396 = vrcp.pop %v2313
  %v2397 = vmul.f32 1.0, %v2396
  %v2398 = vrcp.pop %v2314
  %v2399 = vmul.f32 1.0, %v2398
  %v2400 = vrcp.pop %v2315
  %v2401 = vmul.f32 1.0, %v2400
  %v2402 = vrcp.pop %v2316
  %v2403 = vmul.f32 1.0, %v2402
  %v2404 = vrcp.pop %v2317
  %v2405 = vmul.f32 1.0, %v2404
  %v2406 = vrcp.pop %v2318
  %v2407 = vmul.f32 1.0, %v2406
  %v2408 = vrcp.pop %v2319
  %v2409 = vmul.f32 1.0, %v2408
  %v2410 = vrcp.pop %v2320
  %v2411 = vmul.f32 1.0, %v2410
  %v2412 = vrcp.pop %v2321
  %v2413 = vmul.f32 1.0, %v2412
  %v2414 = vrcp.pop %v2322
  %v2415 = vmul.f32 1.0, %v2414
  %v2416 = vrcp.pop %v2323
  %v2417 = vmul.f32 1.0, %v2416
  %v2418 = vrcp.pop %v2324
  %v2419 = vmul.f32 1.0, %v2418
  %v2420 = vrcp.pop %v2325
  %v2421 = vmul.f32 1.0, %v2420
  %vm2422 = vcmp.ge.f32.partialorder %v2038, 0.0
  %vm2423 = vcmp.ge.f32.partialorder %v2039, 0.0
  %vm2424 = vcmp.ge.f32.partialorder %v2040, 0.0
  %vm2425 = vcmp.ge.f32.partialorder %v2041, 0.0
  %vm2426 = vcmp.ge.f32.partialorder %v2042, 0.0
  %vm2427 = vcmp.ge.f32.partialorder %v2043, 0.0
  %vm2428 = vcmp.ge.f32.partialorder %v2044, 0.0
  %vm2429 = vcmp.ge.f32.partialorder %v2045, 0.0
  %vm2430 = vcmp.ge.f32.partialorder %v2046, 0.0
  %vm2431 = vcmp.ge.f32.partialorder %v2047, 0.0
  %vm2432 = vcmp.ge.f32.partialorder %v2048, 0.0
  %vm2433 = vcmp.ge.f32.partialorder %v2049, 0.0
  %vm2434 = vcmp.ge.f32.partialorder %v2050, 0.0
  %vm2435 = vcmp.ge.f32.partialorder %v2051, 0.0
  %vm2436 = vcmp.ge.f32.partialorder %v2052, 0.0
  %vm2437 = vcmp.ge.f32.partialorder %v2053, 0.0
  %vm2438 = vcmp.ge.f32.partialorder %v2054, 0.0
  %vm2439 = vcmp.ge.f32.partialorder %v2055, 0.0
  %vm2440 = vcmp.ge.f32.partialorder %v2056, 0.0
  %vm2441 = vcmp.ge.f32.partialorder %v2057, 0.0
  %vm2442 = vcmp.ge.f32.partialorder %v2058, 0.0
  %vm2443 = vcmp.ge.f32.partialorder %v2059, 0.0
  %vm2444 = vcmp.ge.f32.partialorder %v2060, 0.0
  %vm2445 = vcmp.ge.f32.partialorder %v2061, 0.0
  %vm2446 = vcmp.ge.f32.partialorder %v2062, 0.0
  %vm2447 = vcmp.ge.f32.partialorder %v2063, 0.0
  %vm2448 = vcmp.ge.f32.partialorder %v2064, 0.0
  %vm2449 = vcmp.ge.f32.partialorder %v2065, 0.0
  %vm2450 = vcmp.ge.f32.partialorder %v2066, 0.0
  %vm2451 = vcmp.ge.f32.partialorder %v2067, 0.0
  %vm2452 = vcmp.ge.f32.partialorder %v2068, 0.0
  %vm2453 = vcmp.ge.f32.partialorder %v2069, 0.0
  %vm2454 = vcmp.ge.f32.partialorder %v2070, 0.0
  %vm2455 = vcmp.ge.f32.partialorder %v2071, 0.0
  %vm2456 = vcmp.ge.f32.partialorder %v2072, 0.0
  %vm2457 = vcmp.ge.f32.partialorder %v2073, 0.0
  %vm2458 = vcmp.ge.f32.partialorder %v2074, 0.0
  %vm2459 = vcmp.ge.f32.partialorder %v2075, 0.0
  %vm2460 = vcmp.ge.f32.partialorder %v2076, 0.0
  %vm2461 = vcmp.ge.f32.partialorder %v2077, 0.0
  %vm2462 = vcmp.ge.f32.partialorder %v2078, 0.0
  %vm2463 = vcmp.ge.f32.partialorder %v2079, 0.0
  %vm2464 = vcmp.ge.f32.partialorder %v2080, 0.0
  %vm2465 = vcmp.ge.f32.partialorder %v2081, 0.0
  %vm2466 = vcmp.ge.f32.partialorder %v2082, 0.0
  %vm2467 = vcmp.ge.f32.partialorder %v2083, 0.0
  %vm2468 = vcmp.ge.f32.partialorder %v2084, 0.0
  %vm2469 = vcmp.ge.f32.partialorder %v2085, 0.0
  %v2470 = vmul.f32 %v2183, %v2327
  %v2471 = vmul.f32 %v2185, %v2329
  %v2472 = vmul.f32 %v2187, %v2331
  %v2473 = vmul.f32 %v2189, %v2333
  %v2474 = vmul.f32 %v2191, %v2335
  %v2475 = vmul.f32 %v2193, %v2337
  %v2476 = vmul.f32 %v2195, %v2339
  %v2477 = vmul.f32 %v2197, %v2341
  %v2478 = vmul.f32 %v2199, %v2343
  %v2479 = vmul.f32 %v2201, %v2345
  %v2480 = vmul.f32 %v2203, %v2347
  %v2481 = vmul.f32 %v2205, %v2349
  %v2482 = vmul.f32 %v2207, %v2351
  %v2483 = vmul.f32 %v2209, %v2353
  %v2484 = vmul.f32 %v2211, %v2355
  %v2485 = vmul.f32 %v2213, %v2357
  %v2486 = vmul.f32 %v2215, %v2359
  %v2487 = vmul.f32 %v2217, %v2361
  %v2488 = vmul.f32 %v2219, %v2363
  %v2489 = vmul.f32 %v2221, %v2365
  %v2490 = vmul.f32 %v2223, %v2367
  %v2491 = vmul.f32 %v2225, %v2369
  %v2492 = vmul.f32 %v2227, %v2371
  %v2493 = vmul.f32 %v2229, %v2373
  %v2494 = vmul.f32 %v2231, %v2375
  %v2495 = vmul.f32 %v2233, %v2377
  %v2496 = vmul.f32 %v2235, %v2379
  %v2497 = vmul.f32 %v2237, %v2381
  %v2498 = vmul.f32 %v2239, %v2383
  %v2499 = vmul.f32 %v2241, %v2385
  %v2500 = vmul.f32 %v2243, %v2387
  %v2501 = vmul.f32 %v2245, %v2389
  %v2502 = vmul.f32 %v2247, %v2391
  %v2503 = vmul.f32 %v2249, %v2393
  %v2504 = vmul.f32 %v2251, %v2395
  %v2505 = vmul.f32 %v2253, %v2397
  %v2506 = vmul.f32 %v2255, %v2399
  %v2507 = vmul.f32 %v2257, %v2401
  %v2508 = vmul.f32 %v2259, %v2403
  %v2509 = vmul.f32 %v2261, %v2405
  %v2510 = vmul.f32 %v2263, %v2407
  %v2511 = vmul.f32 %v2265, %v2409
  %v2512 = vmul.f32 %v2267, %v2411
  %v2513 = vmul.f32 %v2269, %v2413
  %v2514 = vmul.f32 %v2271, %v2415
  %v2515 = vmul.f32 %v2273, %v2417
  %v2516 = vmul.f32 %v2275, %v2419
  %v2517 = vmul.f32 %v2277, %v2421
  %v2518 = vsel %vm2422, %v2327, %v2470
  %v2519 = vsel %vm2423, %v2329, %v2471
  %v2520 = vsel %vm2424, %v2331, %v2472
  %v2521 = vsel %vm2425, %v2333, %v2473
  %v2522 = vsel %vm2426, %v2335, %v2474
  %v2523 = vsel %vm2427, %v2337, %v2475
  %v2524 = vsel %vm2428, %v2339, %v2476
  %v2525 = vsel %vm2429, %v2341, %v2477
  %v2526 = vsel %vm2430, %v2343, %v2478
  %v2527 = vsel %vm2431, %v2345, %v2479
  %v2528 = vsel %vm2432, %v2347, %v2480
  %v2529 = vsel %vm2433, %v2349, %v2481
  %v2530 = vsel %vm2434, %v2351, %v2482
  %v2531 = vsel %vm2435, %v2353, %v2483
  %v2532 = vsel %vm2436, %v2355, %v2484
  %v2533 = vsel %vm2437, %v2357, %v2485
  %v2534 = vsel %vm2438, %v2359, %v2486
  %v2535 = vsel %vm2439, %v2361, %v2487
  %v2536 = vsel %vm2440, %v2363, %v2488
  %v2537 = vsel %vm2441, %v2365, %v2489
  %v2538 = vsel %vm2442, %v2367, %v2490
  %v2539 = vsel %vm2443, %v2369, %v2491
  %v2540 = vsel %vm2444, %v2371, %v2492
  %v2541 = vsel %vm2445, %v2373, %v2493
  %v2542 = vsel %vm2446, %v2375, %v2494
  %v2543 = vsel %vm2447, %v2377, %v2495
  %v2544 = vsel %vm2448, %v2379, %v2496
  %v2545 = vsel %vm2449, %v2381, %v2497
  %v2546 = vsel %vm2450, %v2383, %v2498
  %v2547 = vsel %vm2451, %v2385, %v2499
  %v2548 = vsel %vm2452, %v2387, %v2500
  %v2549 = vsel %vm2453, %v2389, %v2501
  %v2550 = vsel %vm2454, %v2391, %v2502
  %v2551 = vsel %vm2455, %v2393, %v2503
  %v2552 = vsel %vm2456, %v2395, %v2504
  %v2553 = vsel %vm2457, %v2397, %v2505
  %v2554 = vsel %vm2458, %v2399, %v2506
  %v2555 = vsel %vm2459, %v2401, %v2507
  %v2556 = vsel %vm2460, %v2403, %v2508
  %v2557 = vsel %vm2461, %v2405, %v2509
  %v2558 = vsel %vm2462, %v2407, %v2510
  %v2559 = vsel %vm2463, %v2409, %v2511
  %v2560 = vsel %vm2464, %v2411, %v2512
  %v2561 = vsel %vm2465, %v2413, %v2513
  %v2562 = vsel %vm2466, %v2415, %v2514
  %v2563 = vsel %vm2467, %v2417, %v2515
  %v2564 = vsel %vm2468, %v2419, %v2516
  %v2565 = vsel %vm2469, %v2421, %v2517
  %v2566 = vmax.f32 %v2038, 0.0
  %v2567 = vmax.f32 %v2039, 0.0
  %v2568 = vmax.f32 %v2040, 0.0
  %v2569 = vmax.f32 %v2041, 0.0
  %v2570 = vmax.f32 %v2042, 0.0
  %v2571 = vmax.f32 %v2043, 0.0
  %v2572 = vmax.f32 %v2044, 0.0
  %v2573 = vmax.f32 %v2045, 0.0
  %v2574 = vmax.f32 %v2046, 0.0
  %v2575 = vmax.f32 %v2047, 0.0
  %v2576 = vmax.f32 %v2048, 0.0
  %v2577 = vmax.f32 %v2049, 0.0
  %v2578 = vmax.f32 %v2050, 0.0
  %v2579 = vmax.f32 %v2051, 0.0
  %v2580 = vmax.f32 %v2052, 0.0
  %v2581 = vmax.f32 %v2053, 0.0
  %v2582 = vmax.f32 %v2054, 0.0
  %v2583 = vmax.f32 %v2055, 0.0
  %v2584 = vmax.f32 %v2056, 0.0
  %v2585 = vmax.f32 %v2057, 0.0
  %v2586 = vmax.f32 %v2058, 0.0
  %v2587 = vmax.f32 %v2059, 0.0
  %v2588 = vmax.f32 %v2060, 0.0
  %v2589 = vmax.f32 %v2061, 0.0
  %v2590 = vmax.f32 %v2062, 0.0
  %v2591 = vmax.f32 %v2063, 0.0
  %v2592 = vmax.f32 %v2064, 0.0
  %v2593 = vmax.f32 %v2065, 0.0
  %v2594 = vmax.f32 %v2066, 0.0
  %v2595 = vmax.f32 %v2067, 0.0
  %v2596 = vmax.f32 %v2068, 0.0
  %v2597 = vmax.f32 %v2069, 0.0
  %v2598 = vmax.f32 %v2070, 0.0
  %v2599 = vmax.f32 %v2071, 0.0
  %v2600 = vmax.f32 %v2072, 0.0
  %v2601 = vmax.f32 %v2073, 0.0
  %v2602 = vmax.f32 %v2074, 0.0
  %v2603 = vmax.f32 %v2075, 0.0
  %v2604 = vmax.f32 %v2076, 0.0
  %v2605 = vmax.f32 %v2077, 0.0
  %v2606 = vmax.f32 %v2078, 0.0
  %v2607 = vmax.f32 %v2079, 0.0
  %v2608 = vmax.f32 %v2080, 0.0
  %v2609 = vmax.f32 %v2081, 0.0
  %v2610 = vmax.f32 %v2082, 0.0
  %v2611 = vmax.f32 %v2083, 0.0
  %v2612 = vmax.f32 %v2084, 0.0
  %v2613 = vmax.f32 %v2085, 0.0
  %v2614 = vadd.f32 %v2183, 1.0
  %v2615 = vlog2.pop %v2614
  %v2616 = vmul.f32 %v2615, 0.6931472
  %v2617 = vmul.f32 -0.5, %v2183
  %v2618 = vadd.f32 %v2617, 1.0
  %v2619 = vmul.f32 %v2618, %v2183
  %v2620 = vand.u32 2147483647, %v2183
  %vm2621 = vcmp.lt.f32.partialorder %v2620, 0.0004427343
  %v2622 = vsel %vm2621, %v2619, %v2616
  %v2623 = vadd.f32 %v2185, 1.0
  %v2624 = vlog2.pop %v2623
  %v2625 = vmul.f32 %v2624, 0.6931472
  %v2626 = vmul.f32 -0.5, %v2185
  %v2627 = vadd.f32 %v2626, 1.0
  %v2628 = vmul.f32 %v2627, %v2185
  %v2629 = vand.u32 2147483647, %v2185
  %vm2630 = vcmp.lt.f32.partialorder %v2629, 0.0004427343
  %v2631 = vsel %vm2630, %v2628, %v2625
  %v2632 = vadd.f32 %v2187, 1.0
  %v2633 = vlog2.pop %v2632
  %v2634 = vmul.f32 %v2633, 0.6931472
  %v2635 = vmul.f32 -0.5, %v2187
  %v2636 = vadd.f32 %v2635, 1.0
  %v2637 = vmul.f32 %v2636, %v2187
  %v2638 = vand.u32 2147483647, %v2187
  %vm2639 = vcmp.lt.f32.partialorder %v2638, 0.0004427343
  %v2640 = vsel %vm2639, %v2637, %v2634
  %v2641 = vadd.f32 %v2189, 1.0
  %v2642 = vlog2.pop %v2641
  %v2643 = vmul.f32 %v2642, 0.6931472
  %v2644 = vmul.f32 -0.5, %v2189
  %v2645 = vadd.f32 %v2644, 1.0
  %v2646 = vmul.f32 %v2645, %v2189
  %v2647 = vand.u32 2147483647, %v2189
  %vm2648 = vcmp.lt.f32.partialorder %v2647, 0.0004427343
  %v2649 = vsel %vm2648, %v2646, %v2643
  %v2650 = vadd.f32 %v2191, 1.0
  %v2651 = vlog2.pop %v2650
  %v2652 = vmul.f32 %v2651, 0.6931472
  %v2653 = vmul.f32 -0.5, %v2191
  %v2654 = vadd.f32 %v2653, 1.0
  %v2655 = vmul.f32 %v2654, %v2191
  %v2656 = vand.u32 2147483647, %v2191
  %vm2657 = vcmp.lt.f32.partialorder %v2656, 0.0004427343
  %v2658 = vsel %vm2657, %v2655, %v2652
  %v2659 = vadd.f32 %v2193, 1.0
  %v2660 = vlog2.pop %v2659
  %v2661 = vmul.f32 %v2660, 0.6931472
  %v2662 = vmul.f32 -0.5, %v2193
  %v2663 = vadd.f32 %v2662, 1.0
  %v2664 = vmul.f32 %v2663, %v2193
  %v2665 = vand.u32 2147483647, %v2193
  %vm2666 = vcmp.lt.f32.partialorder %v2665, 0.0004427343
  %v2667 = vsel %vm2666, %v2664, %v2661
  %v2668 = vadd.f32 %v2195, 1.0
  %v2669 = vlog2.pop %v2668
  %v2670 = vmul.f32 %v2669, 0.6931472
  %v2671 = vmul.f32 -0.5, %v2195
  %v2672 = vadd.f32 %v2671, 1.0
  %v2673 = vmul.f32 %v2672, %v2195
  %v2674 = vand.u32 2147483647, %v2195
  %vm2675 = vcmp.lt.f32.partialorder %v2674, 0.0004427343
  %v2676 = vsel %vm2675, %v2673, %v2670
  %v2677 = vadd.f32 %v2197, 1.0
  %v2678 = vlog2.pop %v2677
  %v2679 = vmul.f32 %v2678, 0.6931472
  %v2680 = vmul.f32 -0.5, %v2197
  %v2681 = vadd.f32 %v2680, 1.0
  %v2682 = vmul.f32 %v2681, %v2197
  %v2683 = vand.u32 2147483647, %v2197
  %vm2684 = vcmp.lt.f32.partialorder %v2683, 0.0004427343
  %v2685 = vsel %vm2684, %v2682, %v2679
  %v2686 = vadd.f32 %v2199, 1.0
  %v2687 = vlog2.pop %v2686
  %v2688 = vmul.f32 %v2687, 0.6931472
  %v2689 = vmul.f32 -0.5, %v2199
  %v2690 = vadd.f32 %v2689, 1.0
  %v2691 = vmul.f32 %v2690, %v2199
  %v2692 = vand.u32 2147483647, %v2199
  %vm2693 = vcmp.lt.f32.partialorder %v2692, 0.0004427343
  %v2694 = vsel %vm2693, %v2691, %v2688
  %v2695 = vadd.f32 %v2201, 1.0
  %v2696 = vlog2.pop %v2695
  %v2697 = vmul.f32 %v2696, 0.6931472
  %v2698 = vmul.f32 -0.5, %v2201
  %v2699 = vadd.f32 %v2698, 1.0
  %v2700 = vmul.f32 %v2699, %v2201
  %v2701 = vand.u32 2147483647, %v2201
  %vm2702 = vcmp.lt.f32.partialorder %v2701, 0.0004427343
  %v2703 = vsel %vm2702, %v2700, %v2697
  %v2704 = vadd.f32 %v2203, 1.0
  %v2705 = vlog2.pop %v2704
  %v2706 = vmul.f32 %v2705, 0.6931472
  %v2707 = vmul.f32 -0.5, %v2203
  %v2708 = vadd.f32 %v2707, 1.0
  %v2709 = vmul.f32 %v2708, %v2203
  %v2710 = vand.u32 2147483647, %v2203
  %vm2711 = vcmp.lt.f32.partialorder %v2710, 0.0004427343
  %v2712 = vsel %vm2711, %v2709, %v2706
  %v2713 = vadd.f32 %v2205, 1.0
  %v2714 = vlog2.pop %v2713
  %v2715 = vmul.f32 %v2714, 0.6931472
  %v2716 = vmul.f32 -0.5, %v2205
  %v2717 = vadd.f32 %v2716, 1.0
  %v2718 = vmul.f32 %v2717, %v2205
  %v2719 = vand.u32 2147483647, %v2205
  %vm2720 = vcmp.lt.f32.partialorder %v2719, 0.0004427343
  %v2721 = vsel %vm2720, %v2718, %v2715
  %v2722 = vadd.f32 %v2207, 1.0
  %v2723 = vlog2.pop %v2722
  %v2724 = vmul.f32 %v2723, 0.6931472
  %v2725 = vmul.f32 -0.5, %v2207
  %v2726 = vadd.f32 %v2725, 1.0
  %v2727 = vmul.f32 %v2726, %v2207
  %v2728 = vand.u32 2147483647, %v2207
  %vm2729 = vcmp.lt.f32.partialorder %v2728, 0.0004427343
  %v2730 = vsel %vm2729, %v2727, %v2724
  %v2731 = vadd.f32 %v2209, 1.0
  %v2732 = vlog2.pop %v2731
  %v2733 = vmul.f32 %v2732, 0.6931472
  %v2734 = vmul.f32 -0.5, %v2209
  %v2735 = vadd.f32 %v2734, 1.0
  %v2736 = vmul.f32 %v2735, %v2209
  %v2737 = vand.u32 2147483647, %v2209
  %vm2738 = vcmp.lt.f32.partialorder %v2737, 0.0004427343
  %v2739 = vsel %vm2738, %v2736, %v2733
  %v2740 = vadd.f32 %v2211, 1.0
  %v2741 = vlog2.pop %v2740
  %v2742 = vmul.f32 %v2741, 0.6931472
  %v2743 = vmul.f32 -0.5, %v2211
  %v2744 = vadd.f32 %v2743, 1.0
  %v2745 = vmul.f32 %v2744, %v2211
  %v2746 = vand.u32 2147483647, %v2211
  %vm2747 = vcmp.lt.f32.partialorder %v2746, 0.0004427343
  %v2748 = vsel %vm2747, %v2745, %v2742
  %v2749 = vadd.f32 %v2213, 1.0
  %v2750 = vlog2.pop %v2749
  %v2751 = vmul.f32 %v2750, 0.6931472
  %v2752 = vmul.f32 -0.5, %v2213
  %v2753 = vadd.f32 %v2752, 1.0
  %v2754 = vmul.f32 %v2753, %v2213
  %v2755 = vand.u32 2147483647, %v2213
  %vm2756 = vcmp.lt.f32.partialorder %v2755, 0.0004427343
  %v2757 = vsel %vm2756, %v2754, %v2751
  %v2758 = vadd.f32 %v2215, 1.0
  %v2759 = vlog2.pop %v2758
  %v2760 = vmul.f32 %v2759, 0.6931472
  %v2761 = vmul.f32 -0.5, %v2215
  %v2762 = vadd.f32 %v2761, 1.0
  %v2763 = vmul.f32 %v2762, %v2215
  %v2764 = vand.u32 2147483647, %v2215
  %vm2765 = vcmp.lt.f32.partialorder %v2764, 0.0004427343
  %v2766 = vsel %vm2765, %v2763, %v2760
  %v2767 = vadd.f32 %v2217, 1.0
  %v2768 = vlog2.pop %v2767
  %v2769 = vmul.f32 %v2768, 0.6931472
  %v2770 = vmul.f32 -0.5, %v2217
  %v2771 = vadd.f32 %v2770, 1.0
  %v2772 = vmul.f32 %v2771, %v2217
  %v2773 = vand.u32 2147483647, %v2217
  %vm2774 = vcmp.lt.f32.partialorder %v2773, 0.0004427343
  %v2775 = vsel %vm2774, %v2772, %v2769
  %v2776 = vadd.f32 %v2219, 1.0
  %v2777 = vlog2.pop %v2776
  %v2778 = vmul.f32 %v2777, 0.6931472
  %v2779 = vmul.f32 -0.5, %v2219
  %v2780 = vadd.f32 %v2779, 1.0
  %v2781 = vmul.f32 %v2780, %v2219
  %v2782 = vand.u32 2147483647, %v2219
  %vm2783 = vcmp.lt.f32.partialorder %v2782, 0.0004427343
  %v2784 = vsel %vm2783, %v2781, %v2778
  %v2785 = vadd.f32 %v2221, 1.0
  %v2786 = vlog2.pop %v2785
  %v2787 = vmul.f32 %v2786, 0.6931472
  %v2788 = vmul.f32 -0.5, %v2221
  %v2789 = vadd.f32 %v2788, 1.0
  %v2790 = vmul.f32 %v2789, %v2221
  %v2791 = vand.u32 2147483647, %v2221
  %vm2792 = vcmp.lt.f32.partialorder %v2791, 0.0004427343
  %v2793 = vsel %vm2792, %v2790, %v2787
  %v2794 = vadd.f32 %v2223, 1.0
  %v2795 = vlog2.pop %v2794
  %v2796 = vmul.f32 %v2795, 0.6931472
  %v2797 = vmul.f32 -0.5, %v2223
  %v2798 = vadd.f32 %v2797, 1.0
  %v2799 = vmul.f32 %v2798, %v2223
  %v2800 = vand.u32 2147483647, %v2223
  %vm2801 = vcmp.lt.f32.partialorder %v2800, 0.0004427343
  %v2802 = vsel %vm2801, %v2799, %v2796
  %v2803 = vadd.f32 %v2225, 1.0
  %v2804 = vlog2.pop %v2803
  %v2805 = vmul.f32 %v2804, 0.6931472
  %v2806 = vmul.f32 -0.5, %v2225
  %v2807 = vadd.f32 %v2806, 1.0
  %v2808 = vmul.f32 %v2807, %v2225
  %v2809 = vand.u32 2147483647, %v2225
  %vm2810 = vcmp.lt.f32.partialorder %v2809, 0.0004427343
  %v2811 = vsel %vm2810, %v2808, %v2805
  %v2812 = vadd.f32 %v2227, 1.0
  %v2813 = vlog2.pop %v2812
  %v2814 = vmul.f32 %v2813, 0.6931472
  %v2815 = vmul.f32 -0.5, %v2227
  %v2816 = vadd.f32 %v2815, 1.0
  %v2817 = vmul.f32 %v2816, %v2227
  %v2818 = vand.u32 2147483647, %v2227
  %vm2819 = vcmp.lt.f32.partialorder %v2818, 0.0004427343
  %v2820 = vsel %vm2819, %v2817, %v2814
  %v2821 = vadd.f32 %v2229, 1.0
  %v2822 = vlog2.pop %v2821
  %v2823 = vmul.f32 %v2822, 0.6931472
  %v2824 = vmul.f32 -0.5, %v2229
  %v2825 = vadd.f32 %v2824, 1.0
  %v2826 = vmul.f32 %v2825, %v2229
  %v2827 = vand.u32 2147483647, %v2229
  %vm2828 = vcmp.lt.f32.partialorder %v2827, 0.0004427343
  %v2829 = vsel %vm2828, %v2826, %v2823
  %v2830 = vadd.f32 %v2231, 1.0
  %v2831 = vlog2.pop %v2830
  %v2832 = vmul.f32 %v2831, 0.6931472
  %v2833 = vmul.f32 -0.5, %v2231
  %v2834 = vadd.f32 %v2833, 1.0
  %v2835 = vmul.f32 %v2834, %v2231
  %v2836 = vand.u32 2147483647, %v2231
  %vm2837 = vcmp.lt.f32.partialorder %v2836, 0.0004427343
  %v2838 = vsel %vm2837, %v2835, %v2832
  %v2839 = vadd.f32 %v2233, 1.0
  %v2840 = vlog2.pop %v2839
  %v2841 = vmul.f32 %v2840, 0.6931472
  %v2842 = vmul.f32 -0.5, %v2233
  %v2843 = vadd.f32 %v2842, 1.0
  %v2844 = vmul.f32 %v2843, %v2233
  %v2845 = vand.u32 2147483647, %v2233
  %vm2846 = vcmp.lt.f32.partialorder %v2845, 0.0004427343
  %v2847 = vsel %vm2846, %v2844, %v2841
  %v2848 = vadd.f32 %v2235, 1.0
  %v2849 = vlog2.pop %v2848
  %v2850 = vmul.f32 %v2849, 0.6931472
  %v2851 = vmul.f32 -0.5, %v2235
  %v2852 = vadd.f32 %v2851, 1.0
  %v2853 = vmul.f32 %v2852, %v2235
  %v2854 = vand.u32 2147483647, %v2235
  %vm2855 = vcmp.lt.f32.partialorder %v2854, 0.0004427343
  %v2856 = vsel %vm2855, %v2853, %v2850
  %v2857 = vadd.f32 %v2237, 1.0
  %v2858 = vlog2.pop %v2857
  %v2859 = vmul.f32 %v2858, 0.6931472
  %v2860 = vmul.f32 -0.5, %v2237
  %v2861 = vadd.f32 %v2860, 1.0
  %v2862 = vmul.f32 %v2861, %v2237
  %v2863 = vand.u32 2147483647, %v2237
  %vm2864 = vcmp.lt.f32.partialorder %v2863, 0.0004427343
  %v2865 = vsel %vm2864, %v2862, %v2859
  %v2866 = vadd.f32 %v2239, 1.0
  %v2867 = vlog2.pop %v2866
  %v2868 = vmul.f32 %v2867, 0.6931472
  %v2869 = vmul.f32 -0.5, %v2239
  %v2870 = vadd.f32 %v2869, 1.0
  %v2871 = vmul.f32 %v2870, %v2239
  %v2872 = vand.u32 2147483647, %v2239
  %vm2873 = vcmp.lt.f32.partialorder %v2872, 0.0004427343
  %v2874 = vsel %vm2873, %v2871, %v2868
  %v2875 = vadd.f32 %v2241, 1.0
  %v2876 = vlog2.pop %v2875
  %v2877 = vmul.f32 %v2876, 0.6931472
  %v2878 = vmul.f32 -0.5, %v2241
  %v2879 = vadd.f32 %v2878, 1.0
  %v2880 = vmul.f32 %v2879, %v2241
  %v2881 = vand.u32 2147483647, %v2241
  %vm2882 = vcmp.lt.f32.partialorder %v2881, 0.0004427343
  %v2883 = vsel %vm2882, %v2880, %v2877
  %v2884 = vadd.f32 %v2243, 1.0
  %v2885 = vlog2.pop %v2884
  %v2886 = vmul.f32 %v2885, 0.6931472
  %v2887 = vmul.f32 -0.5, %v2243
  %v2888 = vadd.f32 %v2887, 1.0
  %v2889 = vmul.f32 %v2888, %v2243
  %v2890 = vand.u32 2147483647, %v2243
  %vm2891 = vcmp.lt.f32.partialorder %v2890, 0.0004427343
  %v2892 = vsel %vm2891, %v2889, %v2886
  %v2893 = vadd.f32 %v2245, 1.0
  %v2894 = vlog2.pop %v2893
  %v2895 = vmul.f32 %v2894, 0.6931472
  %v2896 = vmul.f32 -0.5, %v2245
  %v2897 = vadd.f32 %v2896, 1.0
  %v2898 = vmul.f32 %v2897, %v2245
  %v2899 = vand.u32 2147483647, %v2245
  %vm2900 = vcmp.lt.f32.partialorder %v2899, 0.0004427343
  %v2901 = vsel %vm2900, %v2898, %v2895
  %v2902 = vadd.f32 %v2247, 1.0
  %v2903 = vlog2.pop %v2902
  %v2904 = vmul.f32 %v2903, 0.6931472
  %v2905 = vmul.f32 -0.5, %v2247
  %v2906 = vadd.f32 %v2905, 1.0
  %v2907 = vmul.f32 %v2906, %v2247
  %v2908 = vand.u32 2147483647, %v2247
  %vm2909 = vcmp.lt.f32.partialorder %v2908, 0.0004427343
  %v2910 = vsel %vm2909, %v2907, %v2904
  %v2911 = vadd.f32 %v2249, 1.0
  %v2912 = vlog2.pop %v2911
  %v2913 = vmul.f32 %v2912, 0.6931472
  %v2914 = vmul.f32 -0.5, %v2249
  %v2915 = vadd.f32 %v2914, 1.0
  %v2916 = vmul.f32 %v2915, %v2249
  %v2917 = vand.u32 2147483647, %v2249
  %vm2918 = vcmp.lt.f32.partialorder %v2917, 0.0004427343
  %v2919 = vsel %vm2918, %v2916, %v2913
  %v2920 = vadd.f32 %v2251, 1.0
  %v2921 = vlog2.pop %v2920
  %v2922 = vmul.f32 %v2921, 0.6931472
  %v2923 = vmul.f32 -0.5, %v2251
  %v2924 = vadd.f32 %v2923, 1.0
  %v2925 = vmul.f32 %v2924, %v2251
  %v2926 = vand.u32 2147483647, %v2251
  %vm2927 = vcmp.lt.f32.partialorder %v2926, 0.0004427343
  %v2928 = vsel %vm2927, %v2925, %v2922
  %v2929 = vadd.f32 %v2253, 1.0
  %v2930 = vlog2.pop %v2929
  %v2931 = vmul.f32 %v2930, 0.6931472
  %v2932 = vmul.f32 -0.5, %v2253
  %v2933 = vadd.f32 %v2932, 1.0
  %v2934 = vmul.f32 %v2933, %v2253
  %v2935 = vand.u32 2147483647, %v2253
  %vm2936 = vcmp.lt.f32.partialorder %v2935, 0.0004427343
  %v2937 = vsel %vm2936, %v2934, %v2931
  %v2938 = vadd.f32 %v2255, 1.0
  %v2939 = vlog2.pop %v2938
  %v2940 = vmul.f32 %v2939, 0.6931472
  %v2941 = vmul.f32 -0.5, %v2255
  %v2942 = vadd.f32 %v2941, 1.0
  %v2943 = vmul.f32 %v2942, %v2255
  %v2944 = vand.u32 2147483647, %v2255
  %vm2945 = vcmp.lt.f32.partialorder %v2944, 0.0004427343
  %v2946 = vsel %vm2945, %v2943, %v2940
  %v2947 = vadd.f32 %v2257, 1.0
  %v2948 = vlog2.pop %v2947
  %v2949 = vmul.f32 %v2948, 0.6931472
  %v2950 = vmul.f32 -0.5, %v2257
  %v2951 = vadd.f32 %v2950, 1.0
  %v2952 = vmul.f32 %v2951, %v2257
  %v2953 = vand.u32 2147483647, %v2257
  %vm2954 = vcmp.lt.f32.partialorder %v2953, 0.0004427343
  %v2955 = vsel %vm2954, %v2952, %v2949
  %v2956 = vadd.f32 %v2259, 1.0
  %v2957 = vlog2.pop %v2956
  %v2958 = vmul.f32 %v2957, 0.6931472
  %v2959 = vmul.f32 -0.5, %v2259
  %v2960 = vadd.f32 %v2959, 1.0
  %v2961 = vmul.f32 %v2960, %v2259
  %v2962 = vand.u32 2147483647, %v2259
  %vm2963 = vcmp.lt.f32.partialorder %v2962, 0.0004427343
  %v2964 = vsel %vm2963, %v2961, %v2958
  %v2965 = vadd.f32 %v2261, 1.0
  %v2966 = vlog2.pop %v2965
  %v2967 = vmul.f32 %v2966, 0.6931472
  %v2968 = vmul.f32 -0.5, %v2261
  %v2969 = vadd.f32 %v2968, 1.0
  %v2970 = vmul.f32 %v2969, %v2261
  %v2971 = vand.u32 2147483647, %v2261
  %vm2972 = vcmp.lt.f32.partialorder %v2971, 0.0004427343
  %v2973 = vsel %vm2972, %v2970, %v2967
  %v2974 = vadd.f32 %v2263, 1.0
  %v2975 = vlog2.pop %v2974
  %v2976 = vmul.f32 %v2975, 0.6931472
  %v2977 = vmul.f32 -0.5, %v2263
  %v2978 = vadd.f32 %v2977, 1.0
  %v2979 = vmul.f32 %v2978, %v2263
  %v2980 = vand.u32 2147483647, %v2263
  %vm2981 = vcmp.lt.f32.partialorder %v2980, 0.0004427343
  %v2982 = vsel %vm2981, %v2979, %v2976
  %v2983 = vadd.f32 %v2265, 1.0
  %v2984 = vlog2.pop %v2983
  %v2985 = vmul.f32 %v2984, 0.6931472
  %v2986 = vmul.f32 -0.5, %v2265
  %v2987 = vadd.f32 %v2986, 1.0
  %v2988 = vmul.f32 %v2987, %v2265
  %v2989 = vand.u32 2147483647, %v2265
  %vm2990 = vcmp.lt.f32.partialorder %v2989, 0.0004427343
  %v2991 = vsel %vm2990, %v2988, %v2985
  %v2992 = vadd.f32 %v2267, 1.0
  %v2993 = vlog2.pop %v2992
  %v2994 = vmul.f32 %v2993, 0.6931472
  %v2995 = vmul.f32 -0.5, %v2267
  %v2996 = vadd.f32 %v2995, 1.0
  %v2997 = vmul.f32 %v2996, %v2267
  %v2998 = vand.u32 2147483647, %v2267
  %vm2999 = vcmp.lt.f32.partialorder %v2998, 0.0004427343
  %v3000 = vsel %vm2999, %v2997, %v2994
  %v3001 = vadd.f32 %v2269, 1.0
  %v3002 = vlog2.pop %v3001
  %v3003 = vmul.f32 %v3002, 0.6931472
  %v3004 = vmul.f32 -0.5, %v2269
  %v3005 = vadd.f32 %v3004, 1.0
  %v3006 = vmul.f32 %v3005, %v2269
  %v3007 = vand.u32 2147483647, %v2269
  %vm3008 = vcmp.lt.f32.partialorder %v3007, 0.0004427343
  %v3009 = vsel %vm3008, %v3006, %v3003
  %v3010 = vadd.f32 %v2271, 1.0
  %v3011 = vlog2.pop %v3010
  %v3012 = vmul.f32 %v3011, 0.6931472
  %v3013 = vmul.f32 -0.5, %v2271
  %v3014 = vadd.f32 %v3013, 1.0
  %v3015 = vmul.f32 %v3014, %v2271
  %v3016 = vand.u32 2147483647, %v2271
  %vm3017 = vcmp.lt.f32.partialorder %v3016, 0.0004427343
  %v3018 = vsel %vm3017, %v3015, %v3012
  %v3019 = vadd.f32 %v2273, 1.0
  %v3020 = vlog2.pop %v3019
  %v3021 = vmul.f32 %v3020, 0.6931472
  %v3022 = vmul.f32 -0.5, %v2273
  %v3023 = vadd.f32 %v3022, 1.0
  %v3024 = vmul.f32 %v3023, %v2273
  %v3025 = vand.u32 2147483647, %v2273
  %vm3026 = vcmp.lt.f32.partialorder %v3025, 0.0004427343
  %v3027 = vsel %vm3026, %v3024, %v3021
  %v3028 = vadd.f32 %v2275, 1.0
  %v3029 = vlog2.pop %v3028
  %v3030 = vmul.f32 %v3029, 0.6931472
  %v3031 = vmul.f32 -0.5, %v2275
  %v3032 = vadd.f32 %v3031, 1.0
  %v3033 = vmul.f32 %v3032, %v2275
  %v3034 = vand.u32 2147483647, %v2275
  %vm3035 = vcmp.lt.f32.partialorder %v3034, 0.0004427343
  %v3036 = vsel %vm3035, %v3033, %v3030
  %v3037 = vadd.f32 %v2277, 1.0
  %v3038 = vlog2.pop %v3037
  %v3039 = vmul.f32 %v3038, 0.6931472
  %v3040 = vmul.f32 -0.5, %v2277
  %v3041 = vadd.f32 %v3040, 1.0
  %v3042 = vmul.f32 %v3041, %v2277
  %v3043 = vand.u32 2147483647, %v2277
  %vm3044 = vcmp.lt.f32.partialorder %v3043, 0.0004427343
  %v3045 = vsel %vm3044, %v3042, %v3039
  %v3046 = vadd.f32 %v2566, %v2622
  %v3047 = vadd.f32 %v2567, %v2631
  %v3048 = vadd.f32 %v2568, %v2640
  %v3049 = vadd.f32 %v2569, %v2649
  %v3050 = vadd.f32 %v2570, %v2658
  %v3051 = vadd.f32 %v2571, %v2667
  %v3052 = vadd.f32 %v2572, %v2676
  %v3053 = vadd.f32 %v2573, %v2685
  %v3054 = vadd.f32 %v2574, %v2694
  %v3055 = vadd.f32 %v2575, %v2703
  %v3056 = vadd.f32 %v2576, %v2712
  %v3057 = vadd.f32 %v2577, %v2721
  %v3058 = vadd.f32 %v2578, %v2730
  %v3059 = vadd.f32 %v2579, %v2739
  %v3060 = vadd.f32 %v2580, %v2748
  %v3061 = vadd.f32 %v2581, %v2757
  %v3062 = vadd.f32 %v2582, %v2766
  %v3063 = vadd.f32 %v2583, %v2775
  %v3064 = vadd.f32 %v2584, %v2784
  %v3065 = vadd.f32 %v2585, %v2793
  %v3066 = vadd.f32 %v2586, %v2802
  %v3067 = vadd.f32 %v2587, %v2811
  %v3068 = vadd.f32 %v2588, %v2820
  %v3069 = vadd.f32 %v2589, %v2829
  %v3070 = vadd.f32 %v2590, %v2838
  %v3071 = vadd.f32 %v2591, %v2847
  %v3072 = vadd.f32 %v2592, %v2856
  %v3073 = vadd.f32 %v2593, %v2865
  %v3074 = vadd.f32 %v2594, %v2874
  %v3075 = vadd.f32 %v2595, %v2883
  %v3076 = vadd.f32 %v2596, %v2892
  %v3077 = vadd.f32 %v2597, %v2901
  %v3078 = vadd.f32 %v2598, %v2910
  %v3079 = vadd.f32 %v2599, %v2919
  %v3080 = vadd.f32 %v2600, %v2928
  %v3081 = vadd.f32 %v2601, %v2937
  %v3082 = vadd.f32 %v2602, %v2946
  %v3083 = vadd.f32 %v2603, %v2955
  %v3084 = vadd.f32 %v2604, %v2964
  %v3085 = vadd.f32 %v2605, %v2973
  %v3086 = vadd.f32 %v2606, %v2982
  %v3087 = vadd.f32 %v2607, %v2991
  %v3088 = vadd.f32 %v2608, %v3000
  %v3089 = vadd.f32 %v2609, %v3009
  %v3090 = vadd.f32 %v2610, %v3018
  %v3091 = vadd.f32 %v2611, %v3027
  %v3092 = vadd.f32 %v2612, %v3036
  %v3093 = vadd.f32 %v2613, %v3045
  %3142 = vrot.lane.b32.xlu0 %v3046, 64
  %v3143 = vpop.permute.xlu0 %3142
  %3144 = vrot.lane.b32.xlu0 %v3047, 64
  %v3145 = vpop.permute.xlu0 %3144
  %3146 = vrot.lane.b32.xlu0 %v3048, 64
  %v3147 = vpop.permute.xlu0 %3146
  %3148 = vrot.lane.b32.xlu0 %v3049, 64
  %v3149 = vpop.permute.xlu0 %3148
  %3150 = vrot.lane.b32.xlu0 %v3050, 64
  %v3151 = vpop.permute.xlu0 %3150
  %3152 = vrot.lane.b32.xlu0 %v3051, 64
  %v3153 = vpop.permute.xlu0 %3152
  %3154 = vrot.lane.b32.xlu0 %v3052, 64
  %v3155 = vpop.permute.xlu0 %3154
  %3156 = vrot.lane.b32.xlu0 %v3053, 64
  %v3157 = vpop.permute.xlu0 %3156
  %3158 = vrot.lane.b32.xlu0 %v3054, 64
  %v3159 = vpop.permute.xlu0 %3158
  %3160 = vrot.lane.b32.xlu0 %v3055, 64
  %v3161 = vpop.permute.xlu0 %3160
  %3162 = vrot.lane.b32.xlu0 %v3056, 64
  %v3163 = vpop.permute.xlu0 %3162
  %3164 = vrot.lane.b32.xlu0 %v3057, 64
  %v3165 = vpop.permute.xlu0 %3164
  %3166 = vrot.lane.b32.xlu0 %v3058, 64
  %v3167 = vpop.permute.xlu0 %3166
  %3168 = vrot.lane.b32.xlu0 %v3059, 64
  %v3169 = vpop.permute.xlu0 %3168
  %3170 = vrot.lane.b32.xlu0 %v3060, 64
  %v3171 = vpop.permute.xlu0 %3170
  %3172 = vrot.lane.b32.xlu0 %v3061, 64
  %v3173 = vpop.permute.xlu0 %3172
  %3174 = vrot.lane.b32.xlu0 %v3062, 64
  %v3175 = vpop.permute.xlu0 %3174
  %3176 = vrot.lane.b32.xlu0 %v3063, 64
  %v3177 = vpop.permute.xlu0 %3176
  %3178 = vrot.lane.b32.xlu0 %v3064, 64
  %v3179 = vpop.permute.xlu0 %3178
  %3180 = vrot.lane.b32.xlu0 %v3065, 64
  %v3181 = vpop.permute.xlu0 %3180
  %3182 = vrot.lane.b32.xlu0 %v3066, 64
  %v3183 = vpop.permute.xlu0 %3182
  %3184 = vrot.lane.b32.xlu0 %v3067, 64
  %v3185 = vpop.permute.xlu0 %3184
  %3186 = vrot.lane.b32.xlu0 %v3068, 64
  %v3187 = vpop.permute.xlu0 %3186
  %3188 = vrot.lane.b32.xlu0 %v3069, 64
  %v3189 = vpop.permute.xlu0 %3188
  %3190 = vrot.lane.b32.xlu0 %v3070, 64
  %v3191 = vpop.permute.xlu0 %3190
  %3192 = vrot.lane.b32.xlu0 %v3071, 64
  %v3193 = vpop.permute.xlu0 %3192
  %3194 = vrot.lane.b32.xlu0 %v3072, 64
  %v3195 = vpop.permute.xlu0 %3194
  %3196 = vrot.lane.b32.xlu0 %v3073, 64
  %v3197 = vpop.permute.xlu0 %3196
  %3198 = vrot.lane.b32.xlu0 %v3074, 64
  %v3199 = vpop.permute.xlu0 %3198
  %3200 = vrot.lane.b32.xlu0 %v3075, 64
  %v3201 = vpop.permute.xlu0 %3200
  %3202 = vrot.lane.b32.xlu0 %v3076, 64
  %v3203 = vpop.permute.xlu0 %3202
  %3204 = vrot.lane.b32.xlu0 %v3077, 64
  %v3205 = vpop.permute.xlu0 %3204
  %3206 = vrot.lane.b32.xlu0 %v3078, 64
  %v3207 = vpop.permute.xlu0 %3206
  %3208 = vrot.lane.b32.xlu0 %v3079, 64
  %v3209 = vpop.permute.xlu0 %3208
  %3210 = vrot.lane.b32.xlu0 %v3080, 64
  %v3211 = vpop.permute.xlu0 %3210
  %3212 = vrot.lane.b32.xlu0 %v3081, 64
  %v3213 = vpop.permute.xlu0 %3212
  %3214 = vrot.lane.b32.xlu0 %v3082, 64
  %v3215 = vpop.permute.xlu0 %3214
  %3216 = vrot.lane.b32.xlu0 %v3083, 64
  %v3217 = vpop.permute.xlu0 %3216
  %3218 = vrot.lane.b32.xlu0 %v3084, 64
  %v3219 = vpop.permute.xlu0 %3218
  %3220 = vrot.lane.b32.xlu0 %v3085, 64
  %v3221 = vpop.permute.xlu0 %3220
  %3222 = vrot.lane.b32.xlu0 %v3086, 64
  %v3223 = vpop.permute.xlu0 %3222
  %3224 = vrot.lane.b32.xlu0 %v3087, 64
  %v3225 = vpop.permute.xlu0 %3224
  %3226 = vrot.lane.b32.xlu0 %v3088, 64
  %v3227 = vpop.permute.xlu0 %3226
  %3228 = vrot.lane.b32.xlu0 %v3089, 64
  %v3229 = vpop.permute.xlu0 %3228
  %3230 = vrot.lane.b32.xlu0 %v3090, 64
  %v3231 = vpop.permute.xlu0 %3230
  %3232 = vrot.lane.b32.xlu0 %v3091, 64
  %v3233 = vpop.permute.xlu0 %3232
  %3234 = vrot.lane.b32.xlu0 %v3092, 64
  %v3235 = vpop.permute.xlu0 %3234
  %3236 = vrot.lane.b32.xlu0 %v3093, 64
  %v3237 = vpop.permute.xlu0 %3236
  %v3286 = vmul.f32 %v2518, %v3143
  %v3287 = vmul.f32 %v2519, %v3145
  %v3288 = vmul.f32 %v2520, %v3147
  %v3289 = vmul.f32 %v2521, %v3149
  %v3290 = vmul.f32 %v2522, %v3151
  %v3291 = vmul.f32 %v2523, %v3153
  %v3292 = vmul.f32 %v2524, %v3155
  %v3293 = vmul.f32 %v2525, %v3157
  %v3294 = vmul.f32 %v2526, %v3159
  %v3295 = vmul.f32 %v2527, %v3161
  %v3296 = vmul.f32 %v2528, %v3163
  %v3297 = vmul.f32 %v2529, %v3165
  %v3298 = vmul.f32 %v2530, %v3167
  %v3299 = vmul.f32 %v2531, %v3169
  %v3300 = vmul.f32 %v2532, %v3171
  %v3301 = vmul.f32 %v2533, %v3173
  %v3302 = vmul.f32 %v2534, %v3175
  %v3303 = vmul.f32 %v2535, %v3177
  %v3304 = vmul.f32 %v2536, %v3179
  %v3305 = vmul.f32 %v2537, %v3181
  %v3306 = vmul.f32 %v2538, %v3183
  %v3307 = vmul.f32 %v2539, %v3185
  %v3308 = vmul.f32 %v2540, %v3187
  %v3309 = vmul.f32 %v2541, %v3189
  %v3310 = vmul.f32 %v2542, %v3191
  %v3311 = vmul.f32 %v2543, %v3193
  %v3312 = vmul.f32 %v2544, %v3195
  %v3313 = vmul.f32 %v2545, %v3197
  %v3314 = vmul.f32 %v2546, %v3199
  %v3315 = vmul.f32 %v2547, %v3201
  %v3316 = vmul.f32 %v2548, %v3203
  %v3317 = vmul.f32 %v2549, %v3205
  %v3318 = vmul.f32 %v2550, %v3207
  %v3319 = vmul.f32 %v2551, %v3209
  %v3320 = vmul.f32 %v2552, %v3211
  %v3321 = vmul.f32 %v2553, %v3213
  %v3322 = vmul.f32 %v2554, %v3215
  %v3323 = vmul.f32 %v2555, %v3217
  %v3324 = vmul.f32 %v2556, %v3219
  %v3325 = vmul.f32 %v2557, %v3221
  %v3326 = vmul.f32 %v2558, %v3223
  %v3327 = vmul.f32 %v2559, %v3225
  %v3328 = vmul.f32 %v2560, %v3227
  %v3329 = vmul.f32 %v2561, %v3229
  %v3330 = vmul.f32 %v2562, %v3231
  %v3331 = vmul.f32 %v2563, %v3233
  %v3332 = vmul.f32 %v2564, %v3235
  %v3333 = vmul.f32 %v2565, %v3237
  %v3334 = vadd.f32 %v3286, %v3290
  %v3335 = vadd.f32 %v3287, %v3291
  %v3336 = vadd.f32 %v3288, %v3292
  %v3337 = vadd.f32 %v3289, %v3293
  %v3338 = vadd.f32 %v3294, %v3298
  %v3339 = vadd.f32 %v3295, %v3299
  %v3340 = vadd.f32 %v3296, %v3300
  %v3341 = vadd.f32 %v3297, %v3301
  %v3342 = vadd.f32 %v3302, %v3306
  %v3343 = vadd.f32 %v3303, %v3307
  %v3344 = vadd.f32 %v3304, %v3308
  %v3345 = vadd.f32 %v3305, %v3309
  %v3346 = vadd.f32 %v3310, %v3314
  %v3347 = vadd.f32 %v3311, %v3315
  %v3348 = vadd.f32 %v3312, %v3316
  %v3349 = vadd.f32 %v3313, %v3317
  %v3350 = vadd.f32 %v3318, %v3322
  %v3351 = vadd.f32 %v3319, %v3323
  %v3352 = vadd.f32 %v3320, %v3324
  %v3353 = vadd.f32 %v3321, %v3325
  %v3354 = vadd.f32 %v3326, %v3330
  %v3355 = vadd.f32 %v3327, %v3331
  %v3356 = vadd.f32 %v3328, %v3332
  %v3357 = vadd.f32 %v3329, %v3333
  %v3358 = vadd.f32 %v3334, %v3338
  %v3359 = vadd.f32 %v3335, %v3339
  %v3360 = vadd.f32 %v3336, %v3340
  %v3361 = vadd.f32 %v3337, %v3341
  %v3362 = vadd.f32 %v3342, %v3346
  %v3363 = vadd.f32 %v3343, %v3347
  %v3364 = vadd.f32 %v3344, %v3348
  %v3365 = vadd.f32 %v3345, %v3349
  %v3366 = vadd.f32 %v3350, %v3354
  %v3367 = vadd.f32 %v3351, %v3355
  %v3368 = vadd.f32 %v3352, %v3356
  %v3369 = vadd.f32 %v3353, %v3357
  %v3370 = vadd.f32 %v3358, %v3362
  %v3371 = vadd.f32 %v3359, %v3363
  %v3372 = vadd.f32 %v3360, %v3364
  %v3373 = vadd.f32 %v3361, %v3365
  %v3374 = vadd.f32 %v3370, %v3366
  %v3375 = vadd.f32 %v3371, %v3367
  %v3376 = vadd.f32 %v3372, %v3368
  %v3377 = vadd.f32 %v3373, %v3369
  %vm3378 = vcmask 261120
  %v3380 = vsel %vm3378, 1.0, 0
  %3382 = vmatprep.subr.mxu0 0.0
  %3383 = vmatpush1.msra.mxu0 %v3374
  %3384 = vmatprep.subr.mxu0 0.0
  %3385 = vmatpush1.msra.mxu0 %v3375
  %3386 = vmatprep.subr.mxu0 0.0
  %3387 = vmatpush1.msra.mxu0 %v3376
  %3388 = vmatprep.subr.mxu0 0.0
  %3389 = vmatpush1.msra.mxu0 %v3377
  %3390 = vmatprep.subr.mxu0 0.0
  %3391 = vmatpush1.msra.mxu0 0.0
  %3392 = vmatprep.subr.mxu0 0.0
  %3393 = vmatpush1.msra.mxu0 0.0
  %3394 = vmatprep.subr.mxu0 0.0
  %3395 = vmatpush1.msra.mxu0 0.0
  %3396 = vmatprep.subr.mxu0 0.0
  %3397 = vmatpush1.msra.mxu0 0.0
  %3398 = vmatprep.subr.mxu0 0.0
  %3399 = vmatpush1.msra.mxu0 0.0
  %3400 = vmatprep.subr.mxu0 0.0
  %3401 = vmatpush1.msra.mxu0 0.0
  %3402 = vmatprep.subr.mxu0 0.0
  %3403 = vmatpush1.msra.mxu0 0.0
  %3404 = vmatprep.subr.mxu0 0.0
  %3405 = vmatpush1.msra.mxu0 0.0
  %3406 = vmatprep.subr.mxu0 0.0
  %3407 = vmatpush1.msra.mxu0 0.0
  %3408 = vmatprep.subr.mxu0 0.0
  %3409 = vmatpush1.msra.mxu0 0.0
  %3410 = vmatprep.subr.mxu0 0.0
  %3411 = vmatpush1.msra.mxu0 0.0
  %3412 = vmatprep.subr.mxu0 0.0
  %3413 = vmatpush1.msra.mxu0 0.0
  %3414 = vmatprep.subr.mxu0 0.0
  %3415 = vmatpush1.msra.mxu0 0.0
  %3416 = vmatprep.subr.mxu0 0.0
  %3417 = vmatpush1.msra.mxu0 0.0
  %3418 = vmatprep.subr.mxu0 0.0
  %3419 = vmatpush1.msra.mxu0 0.0
  %3420 = vmatprep.subr.mxu0 0.0
  %3421 = vmatpush1.msra.mxu0 0.0
  %3422 = vmatprep.subr.mxu0 0.0
  %3423 = vmatpush1.msra.mxu0 0.0
  %3424 = vmatprep.subr.mxu0 0.0
  %3425 = vmatpush1.msra.mxu0 0.0
  %3426 = vmatprep.subr.mxu0 0.0
  %3427 = vmatpush1.msra.mxu0 0.0
  %3428 = vmatprep.subr.mxu0 0.0
  %3429 = vmatpush1.msra.mxu0 0.0
  %3430 = vmatprep.subr.mxu0 0.0
  %3431 = vmatpush1.msra.mxu0 0.0
  %3432 = vmatprep.subr.mxu0 0.0
  %3433 = vmatpush1.msra.mxu0 0.0
  %3434 = vmatprep.subr.mxu0 0.0
  %3435 = vmatpush1.msra.mxu0 0.0
  %3436 = vmatprep.subr.mxu0 0.0
  %3437 = vmatpush1.msra.mxu0 0.0
  %3438 = vmatprep.subr.mxu0 0.0
  %3439 = vmatpush1.msra.mxu0 0.0
  %3440 = vmatprep.subr.mxu0 0.0
  %3441 = vmatpush1.msra.mxu0 0.0
  %3442 = vmatprep.subr.mxu0 0.0
  %3443 = vmatpush1.msra.mxu0 0.0
  %3444 = vmatprep.subr.mxu0 0.0
  %3445 = vmatpush1.msra.mxu0 0.0
  %3446 = vmatprep.mubr.f32.mxu0 0.0
  %3447 = vmatmul.mubr.f32.gmra.mrb[0].mxu0 %v3380
  %v3448 = vpop.f32.mrb[0].mxu0
  %v3449 = vadd.f32 0.0, %v3448
  %v3450 = vpop.f32.mrb[0].mxu0
  %3451 = vdwg.mxu0
  %v3452 = vmul.f32 %v3449, 0.03125
  %v3453 = vmul.f32 %v3374, %v3374
  %v3454 = vmul.f32 %v3375, %v3375
  %v3455 = vmul.f32 %v3376, %v3376
  %v3456 = vmul.f32 %v3377, %v3377
  %3457 = vmatprep.subr.mxu0 0.0
  %3458 = vmatpush1.msra.mxu0 %v3453
  %3459 = vmatprep.subr.mxu0 0.0
  %3460 = vmatpush1.msra.mxu0 %v3454
  %3461 = vmatprep.subr.mxu0 0.0
  %3462 = vmatpush1.msra.mxu0 %v3455
  %3463 = vmatprep.subr.mxu0 0.0
  %3464 = vmatpush1.msra.mxu0 %v3456
  %3465 = vmatprep.subr.mxu0 0.0
  %3466 = vmatpush1.msra.mxu0 0.0
  %3467 = vmatprep.subr.mxu0 0.0
  %3468 = vmatpush1.msra.mxu0 0.0
  %3469 = vmatprep.subr.mxu0 0.0
  %3470 = vmatpush1.msra.mxu0 0.0
  %3471 = vmatprep.subr.mxu0 0.0
  %3472 = vmatpush1.msra.mxu0 0.0
  %3473 = vmatprep.subr.mxu0 0.0
  %3474 = vmatpush1.msra.mxu0 0.0
  %3475 = vmatprep.subr.mxu0 0.0
  %3476 = vmatpush1.msra.mxu0 0.0
  %3477 = vmatprep.subr.mxu0 0.0
  %3478 = vmatpush1.msra.mxu0 0.0
  %3479 = vmatprep.subr.mxu0 0.0
  %3480 = vmatpush1.msra.mxu0 0.0
  %3481 = vmatprep.subr.mxu0 0.0
  %3482 = vmatpush1.msra.mxu0 0.0
  %3483 = vmatprep.subr.mxu0 0.0
  %3484 = vmatpush1.msra.mxu0 0.0
  %3485 = vmatprep.subr.mxu0 0.0
  %3486 = vmatpush1.msra.mxu0 0.0
  %3487 = vmatprep.subr.mxu0 0.0
  %3488 = vmatpush1.msra.mxu0 0.0
  %3489 = vmatprep.subr.mxu0 0.0
  %3490 = vmatpush1.msra.mxu0 0.0
  %3491 = vmatprep.subr.mxu0 0.0
  %3492 = vmatpush1.msra.mxu0 0.0
  %3493 = vmatprep.subr.mxu0 0.0
  %3494 = vmatpush1.msra.mxu0 0.0
  %3495 = vmatprep.subr.mxu0 0.0
  %3496 = vmatpush1.msra.mxu0 0.0
  %3497 = vmatprep.subr.mxu0 0.0
  %3498 = vmatpush1.msra.mxu0 0.0
  %3499 = vmatprep.subr.mxu0 0.0
  %3500 = vmatpush1.msra.mxu0 0.0
  %3501 = vmatprep.subr.mxu0 0.0
  %3502 = vmatpush1.msra.mxu0 0.0
  %3503 = vmatprep.subr.mxu0 0.0
  %3504 = vmatpush1.msra.mxu0 0.0
  %3505 = vmatprep.subr.mxu0 0.0
  %3506 = vmatpush1.msra.mxu0 0.0
  %3507 = vmatprep.subr.mxu0 0.0
  %3508 = vmatpush1.msra.mxu0 0.0
  %3509 = vmatprep.subr.mxu0 0.0
  %3510 = vmatpush1.msra.mxu0 0.0
  %3511 = vmatprep.subr.mxu0 0.0
  %3512 = vmatpush1.msra.mxu0 0.0
  %3513 = vmatprep.subr.mxu0 0.0
  %3514 = vmatpush1.msra.mxu0 0.0
  %3515 = vmatprep.subr.mxu0 0.0
  %3516 = vmatpush1.msra.mxu0 0.0
  %3517 = vmatprep.subr.mxu0 0.0
  %3518 = vmatpush1.msra.mxu0 0.0
  %3519 = vmatprep.subr.mxu0 0.0
  %3520 = vmatpush1.msra.mxu0 0.0
  %3521 = vmatprep.mubr.f32.mxu0 0.0
  %3522 = vmatmul.mubr.f32.gmra.mrb[0].mxu0 %v3380
  %v3523 = vpop.f32.mrb[0].mxu0
  %v3524 = vadd.f32 0.0, %v3523
  %v3525 = vpop.f32.mrb[0].mxu0
  %3526 = vdwg.mxu0
  %v3527 = vmul.f32 %v3524, 0.03125
  %v3528 = vmul.f32 %v3452, %v3452
  %v3529 = vsub.f32 %v3527, %v3528
  %v3530 = vadd.f32 %v3529, 1e-05
  %v3531 = vrsqrt.pop %v3530
  %v3533 = vrot.slane %v3531, 6
  %v3535 = vmul.f32 %v1074, %v3533
  %v3537 = vrot.slane %v3535, 2
  %v3539 = vmul.f32 %v3452, %v3537
  %v3541 = vrot.slane %v3539, 5
  %v3543 = vsub.f32 %v1074, %v3541
  %v3544 = vlaneseq
  %v3545 = vshrl.u32 %v3544, 7
  %v3546 = vsub.s32 2, %v3545
  %v3547 = vrot.slane %v3535, %v3546
  %v3548 = vmul.f32 %v3374, %v3547
  %v3549 = vmul.f32 %v3375, %v3547
  %v3550 = vmul.f32 %v3376, %v3547
  %v3551 = vmul.f32 %v3377, %v3547
  %v3552 = vlaneseq
  %v3553 = vshrl.u32 %v3552, 7
  %v3554 = vsub.s32 3, %v3553
  %v3555 = vrot.slane %v3543, %v3554
  %v3556 = vadd.f32 %v3548, %v3555
  %v3557 = vadd.f32 %v3549, %v3555
  %v3558 = vadd.f32 %v3550, %v3555
  %v3559 = vadd.f32 %v3551, %v3555
  %v3560 = vadd.f32 %v129, %v3556
  %v3561 = vadd.f32 %v134, %v3557
  %v3562 = vadd.f32 %v139, %v3558
  %v3563 = vadd.f32 %v144, %v3559
  %v3564 = vmax.f32 %v3560, 0.0
  %v3565 = vmax.f32 %v3561, 0.0
  %v3566 = vmax.f32 %v3562, 0.0
  %v3567 = vmax.f32 %v3563, 0.0
  %v3568 = vand.u32 2147483647, %v3560
  %v3569 = vand.u32 2147483647, %v3561
  %v3570 = vand.u32 2147483647, %v3562
  %v3571 = vand.u32 2147483647, %v3563
  %v3572 = vsub.f32 0.0, %v3568
  %v3573 = vsub.f32 0.0, %v3569
  %v3574 = vsub.f32 0.0, %v3570
  %v3575 = vsub.f32 0.0, %v3571
  %v3576 = vmul.f32 %v3572, 1.442695
  %v3577 = vpow.pop %v3576
  %v3578 = vmul.f32 %v3573, 1.442695
  %v3579 = vpow.pop %v3578
  %v3580 = vmul.f32 %v3574, 1.442695
  %v3581 = vpow.pop %v3580
  %v3582 = vmul.f32 %v3575, 1.442695
  %v3583 = vpow.pop %v3582
  %v3584 = vadd.f32 %v3577, 1.0
  %v3585 = vlog2.pop %v3584
  %v3586 = vmul.f32 %v3585, 0.6931472
  %v3587 = vmul.f32 -0.5, %v3577
  %v3588 = vadd.f32 %v3587, 1.0
  %v3589 = vmul.f32 %v3588, %v3577
  %v3590 = vand.u32 2147483647, %v3577
  %vm3591 = vcmp.lt.f32.partialorder %v3590, 0.0004427343
  %v3592 = vsel %vm3591, %v3589, %v3586
  %v3593 = vadd.f32 %v3579, 1.0
  %v3594 = vlog2.pop %v3593
  %v3595 = vmul.f32 %v3594, 0.6931472
  %v3596 = vmul.f32 -0.5, %v3579
  %v3597 = vadd.f32 %v3596, 1.0
  %v3598 = vmul.f32 %v3597, %v3579
  %v3599 = vand.u32 2147483647, %v3579
  %vm3600 = vcmp.lt.f32.partialorder %v3599, 0.0004427343
  %v3601 = vsel %vm3600, %v3598, %v3595
  %v3602 = vadd.f32 %v3581, 1.0
  %v3603 = vlog2.pop %v3602
  %v3604 = vmul.f32 %v3603, 0.6931472
  %v3605 = vmul.f32 -0.5, %v3581
  %v3606 = vadd.f32 %v3605, 1.0
  %v3607 = vmul.f32 %v3606, %v3581
  %v3608 = vand.u32 2147483647, %v3581
  %vm3609 = vcmp.lt.f32.partialorder %v3608, 0.0004427343
  %v3610 = vsel %vm3609, %v3607, %v3604
  %v3611 = vadd.f32 %v3583, 1.0
  %v3612 = vlog2.pop %v3611
  %v3613 = vmul.f32 %v3612, 0.6931472
  %v3614 = vmul.f32 -0.5, %v3583
  %v3615 = vadd.f32 %v3614, 1.0
  %v3616 = vmul.f32 %v3615, %v3583
  %v3617 = vand.u32 2147483647, %v3583
  %vm3618 = vcmp.lt.f32.partialorder %v3617, 0.0004427343
  %v3619 = vsel %vm3618, %v3616, %v3613
  %v3620 = vadd.f32 %v3564, %v3592
  %v3621 = vadd.f32 %v3565, %v3601
  %v3622 = vadd.f32 %v3566, %v3610
  %v3623 = vadd.f32 %v3567, %v3619
  %s3624 = scalar_lea.vmem %s7, 4
  %v3625 = vld [vmem:[%s3624] sm:$0xf]
  %s3626 = scalar_lea.vmem %s5, 128
  %v3627 = vld [vmem:[%s3626] sm:$0xff]
  %v3628 = vld [vmem:[%s3626 + $0x8] sm:$0xff]
  %v3629 = vld [vmem:[%s3626 + $0x10] sm:$0xff]
  %v3630 = vld [vmem:[%s3626 + $0x18] sm:$0xff]
  %v3631 = vld [vmem:[%s3626 + $0x20] sm:$0xff]
  %v3632 = vld [vmem:[%s3626 + $0x28] sm:$0xff]
  %v3633 = vld [vmem:[%s3626 + $0x30] sm:$0xff]
  %v3634 = vld [vmem:[%s3626 + $0x38] sm:$0xff]
  %v3635 = vld [vmem:[%s3626 + $0x40] sm:$0xff]
  %v3636 = vld [vmem:[%s3626 + $0x48] sm:$0xff]
  %v3637 = vld [vmem:[%s3626 + $0x50] sm:$0xff]
  %v3638 = vld [vmem:[%s3626 + $0x58] sm:$0xff]
  %v3639 = vld [vmem:[%s3626 + $0x60] sm:$0xff]
  %v3640 = vld [vmem:[%s3626 + $0x68] sm:$0xff]
  %v3641 = vld [vmem:[%s3626 + $0x70] sm:$0xff]
  %v3642 = vld [vmem:[%s3626 + $0x78] sm:$0xff]
  %v3644 = vsel %vm1091, %v3620, 0
  %v3647 = vsel %vm1091, %v3621, 0
  %v3650 = vsel %vm1091, %v3622, 0
  %v3653 = vsel %vm1091, %v3623, 0
  %3655 = vmatprep.subr.mxu0 %v3628
  %3656 = vmatpush1.msra.mxu0 %v3627
  %3657 = vmatprep.subr.mxu0 %v3630
  %3658 = vmatpush1.msra.mxu0 %v3629
  %3659 = vmatprep.subr.mxu0 %v3632
  %3660 = vmatpush1.msra.mxu0 %v3631
  %3661 = vmatprep.subr.mxu0 %v3634
  %3662 = vmatpush1.msra.mxu0 %v3633
  %3663 = vmatprep.subr.mxu0 %v3636
  %3664 = vmatpush1.msra.mxu0 %v3635
  %3665 = vmatprep.subr.mxu0 %v3638
  %3666 = vmatpush1.msra.mxu0 %v3637
  %3667 = vmatprep.subr.mxu0 %v3640
  %3668 = vmatpush1.msra.mxu0 %v3639
  %3669 = vmatprep.subr.mxu0 %v3642
  %3670 = vmatpush1.msra.mxu0 %v3641
  %3671 = vmatprep.subr.mxu0 0.0
  %3672 = vmatpush1.msra.mxu0 0.0
  %3673 = vmatprep.subr.mxu0 0.0
  %3674 = vmatpush1.msra.mxu0 0.0
  %3675 = vmatprep.subr.mxu0 0.0
  %3676 = vmatpush1.msra.mxu0 0.0
  %3677 = vmatprep.subr.mxu0 0.0
  %3678 = vmatpush1.msra.mxu0 0.0
  %3679 = vmatprep.subr.mxu0 0.0
  %3680 = vmatpush1.msra.mxu0 0.0
  %3681 = vmatprep.subr.mxu0 0.0
  %3682 = vmatpush1.msra.mxu0 0.0
  %3683 = vmatprep.subr.mxu0 0.0
  %3684 = vmatpush1.msra.mxu0 0.0
  %3685 = vmatprep.subr.mxu0 0.0
  %3686 = vmatpush1.msra.mxu0 0.0
  %3687 = vmatprep.subr.mxu0 0.0
  %3688 = vmatpush1.msra.mxu0 0.0
  %3689 = vmatprep.subr.mxu0 0.0
  %3690 = vmatpush1.msra.mxu0 0.0
  %3691 = vmatprep.subr.mxu0 0.0
  %3692 = vmatpush1.msra.mxu0 0.0
  %3693 = vmatprep.subr.mxu0 0.0
  %3694 = vmatpush1.msra.mxu0 0.0
  %3695 = vmatprep.subr.mxu0 0.0
  %3696 = vmatpush1.msra.mxu0 0.0
  %3697 = vmatprep.subr.mxu0 0.0
  %3698 = vmatpush1.msra.mxu0 0.0
  %3699 = vmatprep.subr.mxu0 0.0
  %3700 = vmatpush1.msra.mxu0 0.0
  %3701 = vmatprep.subr.mxu0 0.0
  %3702 = vmatpush1.msra.mxu0 0.0
  %3703 = vmatprep.subr.mxu0 0.0
  %3704 = vmatpush1.msra.mxu0 0.0
  %3705 = vmatprep.subr.mxu0 0.0
  %3706 = vmatpush1.msra.mxu0 0.0
  %3707 = vmatprep.subr.mxu0 0.0
  %3708 = vmatpush1.msra.mxu0 0.0
  %3709 = vmatprep.subr.mxu0 0.0
  %3710 = vmatpush1.msra.mxu0 0.0
  %3711 = vmatprep.subr.mxu0 0.0
  %3712 = vmatpush1.msra.mxu0 0.0
  %3713 = vmatprep.subr.mxu0 0.0
  %3714 = vmatpush1.msra.mxu0 0.0
  %3715 = vmatprep.subr.mxu0 0.0
  %3716 = vmatpush1.msra.mxu0 0.0
  %3717 = vmatprep.subr.mxu0 0.0
  %3718 = vmatpush1.msra.mxu0 0.0
  %3719 = vmatprep.mubr.f32.mxu0 0.0
  %3720 = vmatmul.mubr.f32.gmra.mrb[0].mxu0 %v3644
  %v3721 = vpop.f32.mrb[0].mxu0
  %v3722 = vadd.f32 0.0, %v3721
  %v3723 = vpop.f32.mrb[0].mxu0
  %v3724 = vadd.f32 0.0, %v3723
  %3725 = vmatprep.mubr.f32.mxu0 0.0
  %3726 = vmatmul.mubr.f32.gmra.mrb[0].mxu0 %v3647
  %v3727 = vpop.f32.mrb[0].mxu0
  %v3728 = vadd.f32 0.0, %v3727
  %v3729 = vpop.f32.mrb[0].mxu0
  %v3730 = vadd.f32 0.0, %v3729
  %3731 = vmatprep.mubr.f32.mxu0 0.0
  %3732 = vmatmul.mubr.f32.gmra.mrb[0].mxu0 %v3650
  %v3733 = vpop.f32.mrb[0].mxu0
  %v3734 = vadd.f32 0.0, %v3733
  %v3735 = vpop.f32.mrb[0].mxu0
  %v3736 = vadd.f32 0.0, %v3735
  %3737 = vmatprep.mubr.f32.mxu0 0.0
  %3738 = vmatmul.mubr.f32.gmra.mrb[0].mxu0 %v3653
  %v3739 = vpop.f32.mrb[0].mxu0
  %v3740 = vadd.f32 0.0, %v3739
  %v3741 = vpop.f32.mrb[0].mxu0
  %v3742 = vadd.f32 0.0, %v3741
  %3743 = vdwg.mxu0
  %3744 = vmatprep.subr.mxu0 0.0
  %3745 = vmatpush1.msra.mxu0 %v3722
  %3746 = vmatprep.subr.mxu0 0.0
  %3747 = vmatpush1.msra.mxu0 %v3728
  %3748 = vmatprep.subr.mxu0 0.0
  %3749 = vmatpush1.msra.mxu0 %v3734
  %3750 = vmatprep.subr.mxu0 0.0
  %3751 = vmatpush1.msra.mxu0 %v3740
  %3752 = vmatprep.subr.mxu0 0.0
  %3753 = vmatpush1.msra.mxu0 %v3724
  %3754 = vmatprep.subr.mxu0 0.0
  %3755 = vmatpush1.msra.mxu0 %v3730
  %3756 = vmatprep.subr.mxu0 0.0
  %3757 = vmatpush1.msra.mxu0 %v3736
  %3758 = vmatprep.subr.mxu0 0.0
  %3759 = vmatpush1.msra.mxu0 %v3742
  %3760 = vmatprep.subr.mxu0 0.0
  %3761 = vmatpush1.msra.mxu0 0.0
  %3762 = vmatprep.subr.mxu0 0.0
  %3763 = vmatpush1.msra.mxu0 0.0
  %3764 = vmatprep.subr.mxu0 0.0
  %3765 = vmatpush1.msra.mxu0 0.0
  %3766 = vmatprep.subr.mxu0 0.0
  %3767 = vmatpush1.msra.mxu0 0.0
  %3768 = vmatprep.subr.mxu0 0.0
  %3769 = vmatpush1.msra.mxu0 0.0
  %3770 = vmatprep.subr.mxu0 0.0
  %3771 = vmatpush1.msra.mxu0 0.0
  %3772 = vmatprep.subr.mxu0 0.0
  %3773 = vmatpush1.msra.mxu0 0.0
  %3774 = vmatprep.subr.mxu0 0.0
  %3775 = vmatpush1.msra.mxu0 0.0
  %3776 = vmatprep.subr.mxu0 0.0
  %3777 = vmatpush1.msra.mxu0 0.0
  %3778 = vmatprep.subr.mxu0 0.0
  %3779 = vmatpush1.msra.mxu0 0.0
  %3780 = vmatprep.subr.mxu0 0.0
  %3781 = vmatpush1.msra.mxu0 0.0
  %3782 = vmatprep.subr.mxu0 0.0
  %3783 = vmatpush1.msra.mxu0 0.0
  %3784 = vmatprep.subr.mxu0 0.0
  %3785 = vmatpush1.msra.mxu0 0.0
  %3786 = vmatprep.subr.mxu0 0.0
  %3787 = vmatpush1.msra.mxu0 0.0
  %3788 = vmatprep.subr.mxu0 0.0
  %3789 = vmatpush1.msra.mxu0 0.0
  %3790 = vmatprep.subr.mxu0 0.0
  %3791 = vmatpush1.msra.mxu0 0.0
  %3792 = vmatprep.subr.mxu0 0.0
  %3793 = vmatpush1.msra.mxu0 0.0
  %3794 = vmatprep.subr.mxu0 0.0
  %3795 = vmatpush1.msra.mxu0 0.0
  %3796 = vmatprep.subr.mxu0 0.0
  %3797 = vmatpush1.msra.mxu0 0.0
  %3798 = vmatprep.subr.mxu0 0.0
  %3799 = vmatpush1.msra.mxu0 0.0
  %3800 = vmatprep.subr.mxu0 0.0
  %3801 = vmatpush1.msra.mxu0 0.0
  %3802 = vmatprep.subr.mxu0 0.0
  %3803 = vmatpush1.msra.mxu0 0.0
  %3804 = vmatprep.subr.mxu0 0.0
  %3805 = vmatpush1.msra.mxu0 0.0
  %3806 = vmatprep.subr.mxu0 0.0
  %3807 = vmatpush1.msra.mxu0 0.0
  %3808 = vmatprep.mubr.f32.mxu0 0.0
  %3809 = vmatmul.mubr.f32.gmra.mrb[0].mxu0 %v1194
  %v3810 = vpop.f32.mrb[0].mxu0
  %v3811 = vadd.f32 %v485, %v3810
  %v3812 = vpop.f32.mrb[0].mxu0
  %3813 = vmatprep.mubr.f32.mxu0 0.0
  %3814 = vmatmul.mubr.f32.gmra.mrb[0].mxu0 %v1197
  %v3815 = vpop.f32.mrb[0].mxu0
  %v3816 = vadd.f32 %v491, %v3815
  %v3817 = vpop.f32.mrb[0].mxu0
  %3818 = vmatprep.mubr.f32.mxu0 0.0
  %3819 = vmatmul.mubr.f32.gmra.mrb[0].mxu0 %v1200
  %v3820 = vpop.f32.mrb[0].mxu0
  %v3821 = vadd.f32 %v497, %v3820
  %v3822 = vpop.f32.mrb[0].mxu0
  %3823 = vmatprep.mubr.f32.mxu0 0.0
  %3824 = vmatmul.mubr.f32.gmra.mrb[0].mxu0 %v1203
  %v3825 = vpop.f32.mrb[0].mxu0
  %v3826 = vadd.f32 %v503, %v3825
  %v3827 = vpop.f32.mrb[0].mxu0
  %3828 = vmatprep.mubr.f32.mxu0 0.0
  %3829 = vmatmul.mubr.f32.gmra.mrb[0].mxu0 %v1206
  %v3830 = vpop.f32.mrb[0].mxu0
  %v3831 = vadd.f32 %v509, %v3830
  %v3832 = vpop.f32.mrb[0].mxu0
  %3833 = vmatprep.mubr.f32.mxu0 0.0
  %3834 = vmatmul.mubr.f32.gmra.mrb[0].mxu0 %v1209
  %v3835 = vpop.f32.mrb[0].mxu0
  %v3836 = vadd.f32 %v515, %v3835
  %v3837 = vpop.f32.mrb[0].mxu0
  %3838 = vmatprep.mubr.f32.mxu0 0.0
  %3839 = vmatmul.mubr.f32.gmra.mrb[0].mxu0 %v1212
  %v3840 = vpop.f32.mrb[0].mxu0
  %v3841 = vadd.f32 %v521, %v3840
  %v3842 = vpop.f32.mrb[0].mxu0
  %3843 = vmatprep.mubr.f32.mxu0 0.0
  %3844 = vmatmul.mubr.f32.gmra.mrb[0].mxu0 %v1215
  %v3845 = vpop.f32.mrb[0].mxu0
  %v3846 = vadd.f32 %v527, %v3845
  %v3847 = vpop.f32.mrb[0].mxu0
  %3848 = vmatprep.mubr.f32.mxu0 0.0
  %3849 = vmatmul.mubr.f32.gmra.mrb[0].mxu0 %v1218
  %v3850 = vpop.f32.mrb[0].mxu0
  %v3851 = vadd.f32 %v533, %v3850
  %v3852 = vpop.f32.mrb[0].mxu0
  %3853 = vmatprep.mubr.f32.mxu0 0.0
  %3854 = vmatmul.mubr.f32.gmra.mrb[0].mxu0 %v1221
  %v3855 = vpop.f32.mrb[0].mxu0
  %v3856 = vadd.f32 %v539, %v3855
  %v3857 = vpop.f32.mrb[0].mxu0
  %3858 = vmatprep.mubr.f32.mxu0 0.0
  %3859 = vmatmul.mubr.f32.gmra.mrb[0].mxu0 %v1224
  %v3860 = vpop.f32.mrb[0].mxu0
  %v3861 = vadd.f32 %v545, %v3860
  %v3862 = vpop.f32.mrb[0].mxu0
  %3863 = vmatprep.mubr.f32.mxu0 0.0
  %3864 = vmatmul.mubr.f32.gmra.mrb[0].mxu0 %v1227
  %v3865 = vpop.f32.mrb[0].mxu0
  %v3866 = vadd.f32 %v551, %v3865
  %v3867 = vpop.f32.mrb[0].mxu0
  %3868 = vmatprep.mubr.f32.mxu0 0.0
  %3869 = vmatmul.mubr.f32.gmra.mrb[0].mxu0 %v1230
  %v3870 = vpop.f32.mrb[0].mxu0
  %v3871 = vadd.f32 %v557, %v3870
  %v3872 = vpop.f32.mrb[0].mxu0
  %3873 = vmatprep.mubr.f32.mxu0 0.0
  %3874 = vmatmul.mubr.f32.gmra.mrb[0].mxu0 %v1233
  %v3875 = vpop.f32.mrb[0].mxu0
  %v3876 = vadd.f32 %v563, %v3875
  %v3877 = vpop.f32.mrb[0].mxu0
  %3878 = vmatprep.mubr.f32.mxu0 0.0
  %3879 = vmatmul.mubr.f32.gmra.mrb[0].mxu0 %v1236
  %v3880 = vpop.f32.mrb[0].mxu0
  %v3881 = vadd.f32 %v569, %v3880
  %v3882 = vpop.f32.mrb[0].mxu0
  %3883 = vmatprep.mubr.f32.mxu0 0.0
  %3884 = vmatmul.mubr.f32.gmra.mrb[0].mxu0 %v1239
  %v3885 = vpop.f32.mrb[0].mxu0
  %v3886 = vadd.f32 %v575, %v3885
  %v3887 = vpop.f32.mrb[0].mxu0
  %3888 = vmatprep.mubr.f32.mxu0 0.0
  %3889 = vmatmul.mubr.f32.gmra.mrb[0].mxu0 %v1242
  %v3890 = vpop.f32.mrb[0].mxu0
  %v3891 = vadd.f32 %v581, %v3890
  %v3892 = vpop.f32.mrb[0].mxu0
  %3893 = vmatprep.mubr.f32.mxu0 0.0
  %3894 = vmatmul.mubr.f32.gmra.mrb[0].mxu0 %v1245
  %v3895 = vpop.f32.mrb[0].mxu0
  %v3896 = vadd.f32 %v587, %v3895
  %v3897 = vpop.f32.mrb[0].mxu0
  %3898 = vmatprep.mubr.f32.mxu0 0.0
  %3899 = vmatmul.mubr.f32.gmra.mrb[0].mxu0 %v1248
  %v3900 = vpop.f32.mrb[0].mxu0
  %v3901 = vadd.f32 %v593, %v3900
  %v3902 = vpop.f32.mrb[0].mxu0
  %3903 = vmatprep.mubr.f32.mxu0 0.0
  %3904 = vmatmul.mubr.f32.gmra.mrb[0].mxu0 %v1251
  %v3905 = vpop.f32.mrb[0].mxu0
  %v3906 = vadd.f32 %v599, %v3905
  %v3907 = vpop.f32.mrb[0].mxu0
  %3908 = vmatprep.mubr.f32.mxu0 0.0
  %3909 = vmatmul.mubr.f32.gmra.mrb[0].mxu0 %v1254
  %v3910 = vpop.f32.mrb[0].mxu0
  %v3911 = vadd.f32 %v605, %v3910
  %v3912 = vpop.f32.mrb[0].mxu0
  %3913 = vmatprep.mubr.f32.mxu0 0.0
  %3914 = vmatmul.mubr.f32.gmra.mrb[0].mxu0 %v1257
  %v3915 = vpop.f32.mrb[0].mxu0
  %v3916 = vadd.f32 %v611, %v3915
  %v3917 = vpop.f32.mrb[0].mxu0
  %3918 = vmatprep.mubr.f32.mxu0 0.0
  %3919 = vmatmul.mubr.f32.gmra.mrb[0].mxu0 %v1260
  %v3920 = vpop.f32.mrb[0].mxu0
  %v3921 = vadd.f32 %v617, %v3920
  %v3922 = vpop.f32.mrb[0].mxu0
  %3923 = vmatprep.mubr.f32.mxu0 0.0
  %3924 = vmatmul.mubr.f32.gmra.mrb[0].mxu0 %v1263
  %v3925 = vpop.f32.mrb[0].mxu0
  %v3926 = vadd.f32 %v623, %v3925
  %v3927 = vpop.f32.mrb[0].mxu0
  %3928 = vmatprep.mubr.f32.mxu0 0.0
  %3929 = vmatmul.mubr.f32.gmra.mrb[0].mxu0 %v1266
  %v3930 = vpop.f32.mrb[0].mxu0
  %v3931 = vadd.f32 %v629, %v3930
  %v3932 = vpop.f32.mrb[0].mxu0
  %3933 = vmatprep.mubr.f32.mxu0 0.0
  %3934 = vmatmul.mubr.f32.gmra.mrb[0].mxu0 %v1269
  %v3935 = vpop.f32.mrb[0].mxu0
  %v3936 = vadd.f32 %v635, %v3935
  %v3937 = vpop.f32.mrb[0].mxu0
  %3938 = vmatprep.mubr.f32.mxu0 0.0
  %3939 = vmatmul.mubr.f32.gmra.mrb[0].mxu0 %v1272
  %v3940 = vpop.f32.mrb[0].mxu0
  %v3941 = vadd.f32 %v641, %v3940
  %v3942 = vpop.f32.mrb[0].mxu0
  %3943 = vmatprep.mubr.f32.mxu0 0.0
  %3944 = vmatmul.mubr.f32.gmra.mrb[0].mxu0 %v1275
  %v3945 = vpop.f32.mrb[0].mxu0
  %v3946 = vadd.f32 %v647, %v3945
  %v3947 = vpop.f32.mrb[0].mxu0
  %3948 = vmatprep.mubr.f32.mxu0 0.0
  %3949 = vmatmul.mubr.f32.gmra.mrb[0].mxu0 %v1278
  %v3950 = vpop.f32.mrb[0].mxu0
  %v3951 = vadd.f32 %v653, %v3950
  %v3952 = vpop.f32.mrb[0].mxu0
  %3953 = vmatprep.mubr.f32.mxu0 0.0
  %3954 = vmatmul.mubr.f32.gmra.mrb[0].mxu0 %v1281
  %v3955 = vpop.f32.mrb[0].mxu0
  %v3956 = vadd.f32 %v659, %v3955
  %v3957 = vpop.f32.mrb[0].mxu0
  %3958 = vmatprep.mubr.f32.mxu0 0.0
  %3959 = vmatmul.mubr.f32.gmra.mrb[0].mxu0 %v1284
  %v3960 = vpop.f32.mrb[0].mxu0
  %v3961 = vadd.f32 %v665, %v3960
  %v3962 = vpop.f32.mrb[0].mxu0
  %3963 = vmatprep.mubr.f32.mxu0 0.0
  %3964 = vmatmul.mubr.f32.gmra.mrb[0].mxu0 %v1287
  %v3965 = vpop.f32.mrb[0].mxu0
  %v3966 = vadd.f32 %v671, %v3965
  %v3967 = vpop.f32.mrb[0].mxu0
  %3968 = vmatprep.mubr.f32.mxu0 0.0
  %3969 = vmatmul.mubr.f32.gmra.mrb[0].mxu0 %v1290
  %v3970 = vpop.f32.mrb[0].mxu0
  %v3971 = vadd.f32 %v677, %v3970
  %v3972 = vpop.f32.mrb[0].mxu0
  %3973 = vmatprep.mubr.f32.mxu0 0.0
  %3974 = vmatmul.mubr.f32.gmra.mrb[0].mxu0 %v1293
  %v3975 = vpop.f32.mrb[0].mxu0
  %v3976 = vadd.f32 %v683, %v3975
  %v3977 = vpop.f32.mrb[0].mxu0
  %3978 = vmatprep.mubr.f32.mxu0 0.0
  %3979 = vmatmul.mubr.f32.gmra.mrb[0].mxu0 %v1296
  %v3980 = vpop.f32.mrb[0].mxu0
  %v3981 = vadd.f32 %v689, %v3980
  %v3982 = vpop.f32.mrb[0].mxu0
  %3983 = vmatprep.mubr.f32.mxu0 0.0
  %3984 = vmatmul.mubr.f32.gmra.mrb[0].mxu0 %v1299
  %v3985 = vpop.f32.mrb[0].mxu0
  %v3986 = vadd.f32 %v695, %v3985
  %v3987 = vpop.f32.mrb[0].mxu0
  %3988 = vmatprep.mubr.f32.mxu0 0.0
  %3989 = vmatmul.mubr.f32.gmra.mrb[0].mxu0 %v1302
  %v3990 = vpop.f32.mrb[0].mxu0
  %v3991 = vadd.f32 %v701, %v3990
  %v3992 = vpop.f32.mrb[0].mxu0
  %3993 = vmatprep.mubr.f32.mxu0 0.0
  %3994 = vmatmul.mubr.f32.gmra.mrb[0].mxu0 %v1305
  %v3995 = vpop.f32.mrb[0].mxu0
  %v3996 = vadd.f32 %v707, %v3995
  %v3997 = vpop.f32.mrb[0].mxu0
  %3998 = vmatprep.mubr.f32.mxu0 0.0
  %3999 = vmatmul.mubr.f32.gmra.mrb[0].mxu0 %v1308
  %v4000 = vpop.f32.mrb[0].mxu0
  %v4001 = vadd.f32 %v713, %v4000
  %v4002 = vpop.f32.mrb[0].mxu0
  %4003 = vmatprep.mubr.f32.mxu0 0.0
  %4004 = vmatmul.mubr.f32.gmra.mrb[0].mxu0 %v1311
  %v4005 = vpop.f32.mrb[0].mxu0
  %v4006 = vadd.f32 %v719, %v4005
  %v4007 = vpop.f32.mrb[0].mxu0
  %4008 = vmatprep.mubr.f32.mxu0 0.0
  %4009 = vmatmul.mubr.f32.gmra.mrb[0].mxu0 %v1314
  %v4010 = vpop.f32.mrb[0].mxu0
  %v4011 = vadd.f32 %v725, %v4010
  %v4012 = vpop.f32.mrb[0].mxu0
  %4013 = vmatprep.mubr.f32.mxu0 0.0
  %4014 = vmatmul.mubr.f32.gmra.mrb[0].mxu0 %v1317
  %v4015 = vpop.f32.mrb[0].mxu0
  %v4016 = vadd.f32 %v731, %v4015
  %v4017 = vpop.f32.mrb[0].mxu0
  %4018 = vmatprep.mubr.f32.mxu0 0.0
  %4019 = vmatmul.mubr.f32.gmra.mrb[0].mxu0 %v1320
  %v4020 = vpop.f32.mrb[0].mxu0
  %v4021 = vadd.f32 %v737, %v4020
  %v4022 = vpop.f32.mrb[0].mxu0
  %4023 = vmatprep.mubr.f32.mxu0 0.0
  %4024 = vmatmul.mubr.f32.gmra.mrb[0].mxu0 %v1323
  %v4025 = vpop.f32.mrb[0].mxu0
  %v4026 = vadd.f32 %v743, %v4025
  %v4027 = vpop.f32.mrb[0].mxu0
  %4028 = vmatprep.mubr.f32.mxu0 0.0
  %4029 = vmatmul.mubr.f32.gmra.mrb[0].mxu0 %v1326
  %v4030 = vpop.f32.mrb[0].mxu0
  %v4031 = vadd.f32 %v749, %v4030
  %v4032 = vpop.f32.mrb[0].mxu0
  %4033 = vmatprep.mubr.f32.mxu0 0.0
  %4034 = vmatmul.mubr.f32.gmra.mrb[0].mxu0 %v1329
  %v4035 = vpop.f32.mrb[0].mxu0
  %v4036 = vadd.f32 %v755, %v4035
  %v4037 = vpop.f32.mrb[0].mxu0
  %4038 = vmatprep.mubr.f32.mxu0 0.0
  %4039 = vmatmul.mubr.f32.gmra.mrb[0].mxu0 %v1332
  %v4040 = vpop.f32.mrb[0].mxu0
  %v4041 = vadd.f32 %v761, %v4040
  %v4042 = vpop.f32.mrb[0].mxu0
  %4043 = vmatprep.mubr.f32.mxu0 0.0
  %4044 = vmatmul.mubr.f32.gmra.mrb[0].mxu0 %v1335
  %v4045 = vpop.f32.mrb[0].mxu0
  %v4046 = vadd.f32 %v767, %v4045
  %v4047 = vpop.f32.mrb[0].mxu0
  %4048 = vdwg.mxu0
  %4049 = vmatprep.subr.mxu0 0.0
  %4050 = vmatpush1.msra.mxu0 %v3811
  %4051 = vmatprep.subr.mxu0 0.0
  %4052 = vmatpush1.msra.mxu0 %v3816
  %4053 = vmatprep.subr.mxu0 0.0
  %4054 = vmatpush1.msra.mxu0 %v3821
  %4055 = vmatprep.subr.mxu0 0.0
  %4056 = vmatpush1.msra.mxu0 %v3826
  %4057 = vmatprep.subr.mxu0 0.0
  %4058 = vmatpush1.msra.mxu0 %v3831
  %4059 = vmatprep.subr.mxu0 0.0
  %4060 = vmatpush1.msra.mxu0 %v3836
  %4061 = vmatprep.subr.mxu0 0.0
  %4062 = vmatpush1.msra.mxu0 %v3841
  %4063 = vmatprep.subr.mxu0 0.0
  %4064 = vmatpush1.msra.mxu0 %v3846
  %4065 = vmatprep.subr.mxu0 0.0
  %4066 = vmatpush1.msra.mxu0 %v3851
  %4067 = vmatprep.subr.mxu0 0.0
  %4068 = vmatpush1.msra.mxu0 %v3856
  %4069 = vmatprep.subr.mxu0 0.0
  %4070 = vmatpush1.msra.mxu0 %v3861
  %4071 = vmatprep.subr.mxu0 0.0
  %4072 = vmatpush1.msra.mxu0 %v3866
  %4073 = vmatprep.subr.mxu0 0.0
  %4074 = vmatpush1.msra.mxu0 %v3871
  %4075 = vmatprep.subr.mxu0 0.0
  %4076 = vmatpush1.msra.mxu0 %v3876
  %4077 = vmatprep.subr.mxu0 0.0
  %4078 = vmatpush1.msra.mxu0 %v3881
  %4079 = vmatprep.subr.mxu0 0.0
  %4080 = vmatpush1.msra.mxu0 %v3886
  %4081 = vmatprep.subr.mxu0 0.0
  %4082 = vmatpush1.msra.mxu0 %v3891
  %4083 = vmatprep.subr.mxu0 0.0
  %4084 = vmatpush1.msra.mxu0 %v3896
  %4085 = vmatprep.subr.mxu0 0.0
  %4086 = vmatpush1.msra.mxu0 %v3901
  %4087 = vmatprep.subr.mxu0 0.0
  %4088 = vmatpush1.msra.mxu0 %v3906
  %4089 = vmatprep.subr.mxu0 0.0
  %4090 = vmatpush1.msra.mxu0 %v3911
  %4091 = vmatprep.subr.mxu0 0.0
  %4092 = vmatpush1.msra.mxu0 %v3916
  %4093 = vmatprep.subr.mxu0 0.0
  %4094 = vmatpush1.msra.mxu0 %v3921
  %4095 = vmatprep.subr.mxu0 0.0
  %4096 = vmatpush1.msra.mxu0 %v3926
  %4097 = vmatprep.subr.mxu0 0.0
  %4098 = vmatpush1.msra.mxu0 %v3931
  %4099 = vmatprep.subr.mxu0 0.0
  %4100 = vmatpush1.msra.mxu0 %v3936
  %4101 = vmatprep.subr.mxu0 0.0
  %4102 = vmatpush1.msra.mxu0 %v3941
  %4103 = vmatprep.subr.mxu0 0.0
  %4104 = vmatpush1.msra.mxu0 %v3946
  %4105 = vmatprep.subr.mxu0 0.0
  %4106 = vmatpush1.msra.mxu0 %v3951
  %4107 = vmatprep.subr.mxu0 0.0
  %4108 = vmatpush1.msra.mxu0 %v3956
  %4109 = vmatprep.subr.mxu0 0.0
  %4110 = vmatpush1.msra.mxu0 %v3961
  %4111 = vmatprep.subr.mxu0 0.0
  %4112 = vmatpush1.msra.mxu0 %v3966
  %4113 = vmatprep.mubr.f32.mxu0 1.0
  %4114 = vmatmul.mubr.f32.gmra.mrb[0].mxu0 1.0
  %v4115 = vpop.f32.mrb[0].mxu0
  %v4116 = vadd.f32 0.0, %v4115
  %v4117 = vpop.f32.mrb[0].mxu0
  %4118 = vdwg.mxu0
  %4119 = vmatprep.subr.mxu0 0.0
  %4120 = vmatpush1.msra.mxu0 %v3971
  %4121 = vmatprep.subr.mxu0 0.0
  %4122 = vmatpush1.msra.mxu0 %v3976
  %4123 = vmatprep.subr.mxu0 0.0
  %4124 = vmatpush1.msra.mxu0 %v3981
  %4125 = vmatprep.subr.mxu0 0.0
  %4126 = vmatpush1.msra.mxu0 %v3986
  %4127 = vmatprep.subr.mxu0 0.0
  %4128 = vmatpush1.msra.mxu0 %v3991
  %4129 = vmatprep.subr.mxu0 0.0
  %4130 = vmatpush1.msra.mxu0 %v3996
  %4131 = vmatprep.subr.mxu0 0.0
  %4132 = vmatpush1.msra.mxu0 %v4001
  %4133 = vmatprep.subr.mxu0 0.0
  %4134 = vmatpush1.msra.mxu0 %v4006
  %4135 = vmatprep.subr.mxu0 0.0
  %4136 = vmatpush1.msra.mxu0 %v4011
  %4137 = vmatprep.subr.mxu0 0.0
  %4138 = vmatpush1.msra.mxu0 %v4016
  %4139 = vmatprep.subr.mxu0 0.0
  %4140 = vmatpush1.msra.mxu0 %v4021
  %4141 = vmatprep.subr.mxu0 0.0
  %4142 = vmatpush1.msra.mxu0 %v4026
  %4143 = vmatprep.subr.mxu0 0.0
  %4144 = vmatpush1.msra.mxu0 %v4031
  %4145 = vmatprep.subr.mxu0 0.0
  %4146 = vmatpush1.msra.mxu0 %v4036
  %4147 = vmatprep.subr.mxu0 0.0
  %4148 = vmatpush1.msra.mxu0 %v4041
  %4149 = vmatprep.subr.mxu0 0.0
  %4150 = vmatpush1.msra.mxu0 %v4046
  %4151 = vmatprep.subr.mxu0 0.0
  %4152 = vmatpush1.msra.mxu0 0.0
  %4153 = vmatprep.subr.mxu0 0.0
  %4154 = vmatpush1.msra.mxu0 0.0
  %4155 = vmatprep.subr.mxu0 0.0
  %4156 = vmatpush1.msra.mxu0 0.0
  %4157 = vmatprep.subr.mxu0 0.0
  %4158 = vmatpush1.msra.mxu0 0.0
  %4159 = vmatprep.subr.mxu0 0.0
  %4160 = vmatpush1.msra.mxu0 0.0
  %4161 = vmatprep.subr.mxu0 0.0
  %4162 = vmatpush1.msra.mxu0 0.0
  %4163 = vmatprep.subr.mxu0 0.0
  %4164 = vmatpush1.msra.mxu0 0.0
  %4165 = vmatprep.subr.mxu0 0.0
  %4166 = vmatpush1.msra.mxu0 0.0
  %4167 = vmatprep.subr.mxu0 0.0
  %4168 = vmatpush1.msra.mxu0 0.0
  %4169 = vmatprep.subr.mxu0 0.0
  %4170 = vmatpush1.msra.mxu0 0.0
  %4171 = vmatprep.subr.mxu0 0.0
  %4172 = vmatpush1.msra.mxu0 0.0
  %4173 = vmatprep.subr.mxu0 0.0
  %4174 = vmatpush1.msra.mxu0 0.0
  %4175 = vmatprep.subr.mxu0 0.0
  %4176 = vmatpush1.msra.mxu0 0.0
  %4177 = vmatprep.subr.mxu0 0.0
  %4178 = vmatpush1.msra.mxu0 0.0
  %4179 = vmatprep.subr.mxu0 0.0
  %4180 = vmatpush1.msra.mxu0 0.0
  %4181 = vmatprep.subr.mxu0 0.0
  %4182 = vmatpush1.msra.mxu0 0.0
  %4183 = vmatprep.mubr.f32.mxu0 0.0
  %4184 = vmatmul.mubr.f32.gmra.mrb[0].mxu0 1.0
  %v4185 = vpop.f32.mrb[0].mxu0
  %v4186 = vadd.f32 %v4116, %v4185
  %v4187 = vpop.f32.mrb[0].mxu0
  %4188 = vdwg.mxu0
  %v4189 = vmul.f32 %v4186, 0.0026041667
  %v4190 = vmul.f32 %v3811, %v3811
  %v4191 = vmul.f32 %v3816, %v3816
  %v4192 = vmul.f32 %v3821, %v3821
  %v4193 = vmul.f32 %v3826, %v3826
  %v4194 = vmul.f32 %v3831, %v3831
  %v4195 = vmul.f32 %v3836, %v3836
  %v4196 = vmul.f32 %v3841, %v3841
  %v4197 = vmul.f32 %v3846, %v3846
  %v4198 = vmul.f32 %v3851, %v3851
  %v4199 = vmul.f32 %v3856, %v3856
  %v4200 = vmul.f32 %v3861, %v3861
  %v4201 = vmul.f32 %v3866, %v3866
  %v4202 = vmul.f32 %v3871, %v3871
  %v4203 = vmul.f32 %v3876, %v3876
  %v4204 = vmul.f32 %v3881, %v3881
  %v4205 = vmul.f32 %v3886, %v3886
  %v4206 = vmul.f32 %v3891, %v3891
  %v4207 = vmul.f32 %v3896, %v3896
  %v4208 = vmul.f32 %v3901, %v3901
  %v4209 = vmul.f32 %v3906, %v3906
  %v4210 = vmul.f32 %v3911, %v3911
  %v4211 = vmul.f32 %v3916, %v3916
  %v4212 = vmul.f32 %v3921, %v3921
  %v4213 = vmul.f32 %v3926, %v3926
  %v4214 = vmul.f32 %v3931, %v3931
  %v4215 = vmul.f32 %v3936, %v3936
  %v4216 = vmul.f32 %v3941, %v3941
  %v4217 = vmul.f32 %v3946, %v3946
  %v4218 = vmul.f32 %v3951, %v3951
  %v4219 = vmul.f32 %v3956, %v3956
  %v4220 = vmul.f32 %v3961, %v3961
  %v4221 = vmul.f32 %v3966, %v3966
  %v4222 = vmul.f32 %v3971, %v3971
  %v4223 = vmul.f32 %v3976, %v3976
  %v4224 = vmul.f32 %v3981, %v3981
  %v4225 = vmul.f32 %v3986, %v3986
  %v4226 = vmul.f32 %v3991, %v3991
  %v4227 = vmul.f32 %v3996, %v3996
  %v4228 = vmul.f32 %v4001, %v4001
  %v4229 = vmul.f32 %v4006, %v4006
  %v4230 = vmul.f32 %v4011, %v4011
  %v4231 = vmul.f32 %v4016, %v4016
  %v4232 = vmul.f32 %v4021, %v4021
  %v4233 = vmul.f32 %v4026, %v4026
  %v4234 = vmul.f32 %v4031, %v4031
  %v4235 = vmul.f32 %v4036, %v4036
  %v4236 = vmul.f32 %v4041, %v4041
  %v4237 = vmul.f32 %v4046, %v4046
  %4238 = vmatprep.subr.mxu0 0.0
  %4239 = vmatpush1.msra.mxu0 %v4190
  %4240 = vmatprep.subr.mxu0 0.0
  %4241 = vmatpush1.msra.mxu0 %v4191
  %4242 = vmatprep.subr.mxu0 0.0
  %4243 = vmatpush1.msra.mxu0 %v4192
  %4244 = vmatprep.subr.mxu0 0.0
  %4245 = vmatpush1.msra.mxu0 %v4193
  %4246 = vmatprep.subr.mxu0 0.0
  %4247 = vmatpush1.msra.mxu0 %v4194
  %4248 = vmatprep.subr.mxu0 0.0
  %4249 = vmatpush1.msra.mxu0 %v4195
  %4250 = vmatprep.subr.mxu0 0.0
  %4251 = vmatpush1.msra.mxu0 %v4196
  %4252 = vmatprep.subr.mxu0 0.0
  %4253 = vmatpush1.msra.mxu0 %v4197
  %4254 = vmatprep.subr.mxu0 0.0
  %4255 = vmatpush1.msra.mxu0 %v4198
  %4256 = vmatprep.subr.mxu0 0.0
  %4257 = vmatpush1.msra.mxu0 %v4199
  %4258 = vmatprep.subr.mxu0 0.0
  %4259 = vmatpush1.msra.mxu0 %v4200
  %4260 = vmatprep.subr.mxu0 0.0
  %4261 = vmatpush1.msra.mxu0 %v4201
  %4262 = vmatprep.subr.mxu0 0.0
  %4263 = vmatpush1.msra.mxu0 %v4202
  %4264 = vmatprep.subr.mxu0 0.0
  %4265 = vmatpush1.msra.mxu0 %v4203
  %4266 = vmatprep.subr.mxu0 0.0
  %4267 = vmatpush1.msra.mxu0 %v4204
  %4268 = vmatprep.subr.mxu0 0.0
  %4269 = vmatpush1.msra.mxu0 %v4205
  %4270 = vmatprep.subr.mxu0 0.0
  %4271 = vmatpush1.msra.mxu0 %v4206
  %4272 = vmatprep.subr.mxu0 0.0
  %4273 = vmatpush1.msra.mxu0 %v4207
  %4274 = vmatprep.subr.mxu0 0.0
  %4275 = vmatpush1.msra.mxu0 %v4208
  %4276 = vmatprep.subr.mxu0 0.0
  %4277 = vmatpush1.msra.mxu0 %v4209
  %4278 = vmatprep.subr.mxu0 0.0
  %4279 = vmatpush1.msra.mxu0 %v4210
  %4280 = vmatprep.subr.mxu0 0.0
  %4281 = vmatpush1.msra.mxu0 %v4211
  %4282 = vmatprep.subr.mxu0 0.0
  %4283 = vmatpush1.msra.mxu0 %v4212
  %4284 = vmatprep.subr.mxu0 0.0
  %4285 = vmatpush1.msra.mxu0 %v4213
  %4286 = vmatprep.subr.mxu0 0.0
  %4287 = vmatpush1.msra.mxu0 %v4214
  %4288 = vmatprep.subr.mxu0 0.0
  %4289 = vmatpush1.msra.mxu0 %v4215
  %4290 = vmatprep.subr.mxu0 0.0
  %4291 = vmatpush1.msra.mxu0 %v4216
  %4292 = vmatprep.subr.mxu0 0.0
  %4293 = vmatpush1.msra.mxu0 %v4217
  %4294 = vmatprep.subr.mxu0 0.0
  %4295 = vmatpush1.msra.mxu0 %v4218
  %4296 = vmatprep.subr.mxu0 0.0
  %4297 = vmatpush1.msra.mxu0 %v4219
  %4298 = vmatprep.subr.mxu0 0.0
  %4299 = vmatpush1.msra.mxu0 %v4220
  %4300 = vmatprep.subr.mxu0 0.0
  %4301 = vmatpush1.msra.mxu0 %v4221
  %4302 = vmatprep.mubr.f32.mxu0 1.0
  %4303 = vmatmul.mubr.f32.gmra.mrb[0].mxu0 1.0
  %v4304 = vpop.f32.mrb[0].mxu0
  %v4305 = vadd.f32 0.0, %v4304
  %v4306 = vpop.f32.mrb[0].mxu0
  %4307 = vdwg.mxu0
  %4308 = vmatprep.subr.mxu0 0.0
  %4309 = vmatpush1.msra.mxu0 %v4222
  %4310 = vmatprep.subr.mxu0 0.0
  %4311 = vmatpush1.msra.mxu0 %v4223
  %4312 = vmatprep.subr.mxu0 0.0
  %4313 = vmatpush1.msra.mxu0 %v4224
  %4314 = vmatprep.subr.mxu0 0.0
  %4315 = vmatpush1.msra.mxu0 %v4225
  %4316 = vmatprep.subr.mxu0 0.0
  %4317 = vmatpush1.msra.mxu0 %v4226
  %4318 = vmatprep.subr.mxu0 0.0
  %4319 = vmatpush1.msra.mxu0 %v4227
  %4320 = vmatprep.subr.mxu0 0.0
  %4321 = vmatpush1.msra.mxu0 %v4228
  %4322 = vmatprep.subr.mxu0 0.0
  %4323 = vmatpush1.msra.mxu0 %v4229
  %4324 = vmatprep.subr.mxu0 0.0
  %4325 = vmatpush1.msra.mxu0 %v4230
  %4326 = vmatprep.subr.mxu0 0.0
  %4327 = vmatpush1.msra.mxu0 %v4231
  %4328 = vmatprep.subr.mxu0 0.0
  %4329 = vmatpush1.msra.mxu0 %v4232
  %4330 = vmatprep.subr.mxu0 0.0
  %4331 = vmatpush1.msra.mxu0 %v4233
  %4332 = vmatprep.subr.mxu0 0.0
  %4333 = vmatpush1.msra.mxu0 %v4234
  %4334 = vmatprep.subr.mxu0 0.0
  %4335 = vmatpush1.msra.mxu0 %v4235
  %4336 = vmatprep.subr.mxu0 0.0
  %4337 = vmatpush1.msra.mxu0 %v4236
  %4338 = vmatprep.subr.mxu0 0.0
  %4339 = vmatpush1.msra.mxu0 %v4237
  %4340 = vmatprep.subr.mxu0 0.0
  %4341 = vmatpush1.msra.mxu0 0.0
  %4342 = vmatprep.subr.mxu0 0.0
  %4343 = vmatpush1.msra.mxu0 0.0
  %4344 = vmatprep.subr.mxu0 0.0
  %4345 = vmatpush1.msra.mxu0 0.0
  %4346 = vmatprep.subr.mxu0 0.0
  %4347 = vmatpush1.msra.mxu0 0.0
  %4348 = vmatprep.subr.mxu0 0.0
  %4349 = vmatpush1.msra.mxu0 0.0
  %4350 = vmatprep.subr.mxu0 0.0
  %4351 = vmatpush1.msra.mxu0 0.0
  %4352 = vmatprep.subr.mxu0 0.0
  %4353 = vmatpush1.msra.mxu0 0.0
  %4354 = vmatprep.subr.mxu0 0.0
  %4355 = vmatpush1.msra.mxu0 0.0
  %4356 = vmatprep.subr.mxu0 0.0
  %4357 = vmatpush1.msra.mxu0 0.0
  %4358 = vmatprep.subr.mxu0 0.0
  %4359 = vmatpush1.msra.mxu0 0.0
  %4360 = vmatprep.subr.mxu0 0.0
  %4361 = vmatpush1.msra.mxu0 0.0
  %4362 = vmatprep.subr.mxu0 0.0
  %4363 = vmatpush1.msra.mxu0 0.0
  %4364 = vmatprep.subr.mxu0 0.0
  %4365 = vmatpush1.msra.mxu0 0.0
  %4366 = vmatprep.subr.mxu0 0.0
  %4367 = vmatpush1.msra.mxu0 0.0
  %4368 = vmatprep.subr.mxu0 0.0
  %4369 = vmatpush1.msra.mxu0 0.0
  %4370 = vmatprep.subr.mxu0 0.0
  %4371 = vmatpush1.msra.mxu0 0.0
  %4372 = vmatprep.mubr.f32.mxu0 0.0
  %4373 = vmatmul.mubr.f32.gmra.mrb[0].mxu0 1.0
  %v4374 = vpop.f32.mrb[0].mxu0
  %v4375 = vadd.f32 %v4305, %v4374
  %v4376 = vpop.f32.mrb[0].mxu0
  %4377 = vdwg.mxu0
  %v4378 = vmul.f32 %v4375, 0.0026041667
  %v4379 = vmul.f32 %v4189, %v4189
  %v4380 = vsub.f32 %v4378, %v4379
  %v4381 = vadd.f32 %v4380, 1e-05
  %v4382 = vrsqrt.pop %v4381
  %v4383 = vmul.f32 %v3625, %v4382
  %v4384 = vmul.f32 %v4189, %v4383
  %v4386 = vrot.slane %v4384, 7
  %v4388 = vsub.f32 %v3625, %v4386
  %v4389 = vlaneseq
  %v4390 = vshrl.u32 %v4389, 7
  %v4391 = vsub.s32 0, %v4390
  %v4392 = vrot.slane %v4383, %v4391
  %v4393 = vmul.f32 %v3811, %v4392
  %v4394 = vmul.f32 %v3816, %v4392
  %v4395 = vmul.f32 %v3821, %v4392
  %v4396 = vmul.f32 %v3826, %v4392
  %v4397 = vmul.f32 %v3831, %v4392
  %v4398 = vmul.f32 %v3836, %v4392
  %v4399 = vmul.f32 %v3841, %v4392
  %v4400 = vmul.f32 %v3846, %v4392
  %v4401 = vmul.f32 %v3851, %v4392
  %v4402 = vmul.f32 %v3856, %v4392
  %v4403 = vmul.f32 %v3861, %v4392
  %v4404 = vmul.f32 %v3866, %v4392
  %v4405 = vmul.f32 %v3871, %v4392
  %v4406 = vmul.f32 %v3876, %v4392
  %v4407 = vmul.f32 %v3881, %v4392
  %v4408 = vmul.f32 %v3886, %v4392
  %v4409 = vmul.f32 %v3891, %v4392
  %v4410 = vmul.f32 %v3896, %v4392
  %v4411 = vmul.f32 %v3901, %v4392
  %v4412 = vmul.f32 %v3906, %v4392
  %v4413 = vmul.f32 %v3911, %v4392
  %v4414 = vmul.f32 %v3916, %v4392
  %v4415 = vmul.f32 %v3921, %v4392
  %v4416 = vmul.f32 %v3926, %v4392
  %v4417 = vmul.f32 %v3931, %v4392
  %v4418 = vmul.f32 %v3936, %v4392
  %v4419 = vmul.f32 %v3941, %v4392
  %v4420 = vmul.f32 %v3946, %v4392
  %v4421 = vmul.f32 %v3951, %v4392
  %v4422 = vmul.f32 %v3956, %v4392
  %v4423 = vmul.f32 %v3961, %v4392
  %v4424 = vmul.f32 %v3966, %v4392
  %v4425 = vmul.f32 %v3971, %v4392
  %v4426 = vmul.f32 %v3976, %v4392
  %v4427 = vmul.f32 %v3981, %v4392
  %v4428 = vmul.f32 %v3986, %v4392
  %v4429 = vmul.f32 %v3991, %v4392
  %v4430 = vmul.f32 %v3996, %v4392
  %v4431 = vmul.f32 %v4001, %v4392
  %v4432 = vmul.f32 %v4006, %v4392
  %v4433 = vmul.f32 %v4011, %v4392
  %v4434 = vmul.f32 %v4016, %v4392
  %v4435 = vmul.f32 %v4021, %v4392
  %v4436 = vmul.f32 %v4026, %v4392
  %v4437 = vmul.f32 %v4031, %v4392
  %v4438 = vmul.f32 %v4036, %v4392
  %v4439 = vmul.f32 %v4041, %v4392
  %v4440 = vmul.f32 %v4046, %v4392
  %v4441 = vlaneseq
  %v4442 = vshrl.u32 %v4441, 7
  %v4443 = vsub.s32 1, %v4442
  %v4444 = vrot.slane %v4388, %v4443
  %v4445 = vadd.f32 %v4393, %v4444
  %v4446 = vadd.f32 %v4394, %v4444
  %v4447 = vadd.f32 %v4395, %v4444
  %v4448 = vadd.f32 %v4396, %v4444
  %v4449 = vadd.f32 %v4397, %v4444
  %v4450 = vadd.f32 %v4398, %v4444
  %v4451 = vadd.f32 %v4399, %v4444
  %v4452 = vadd.f32 %v4400, %v4444
  %v4453 = vadd.f32 %v4401, %v4444
  %v4454 = vadd.f32 %v4402, %v4444
  %v4455 = vadd.f32 %v4403, %v4444
  %v4456 = vadd.f32 %v4404, %v4444
  %v4457 = vadd.f32 %v4405, %v4444
  %v4458 = vadd.f32 %v4406, %v4444
  %v4459 = vadd.f32 %v4407, %v4444
  %v4460 = vadd.f32 %v4408, %v4444
  %v4461 = vadd.f32 %v4409, %v4444
  %v4462 = vadd.f32 %v4410, %v4444
  %v4463 = vadd.f32 %v4411, %v4444
  %v4464 = vadd.f32 %v4412, %v4444
  %v4465 = vadd.f32 %v4413, %v4444
  %v4466 = vadd.f32 %v4414, %v4444
  %v4467 = vadd.f32 %v4415, %v4444
  %v4468 = vadd.f32 %v4416, %v4444
  %v4469 = vadd.f32 %v4417, %v4444
  %v4470 = vadd.f32 %v4418, %v4444
  %v4471 = vadd.f32 %v4419, %v4444
  %v4472 = vadd.f32 %v4420, %v4444
  %v4473 = vadd.f32 %v4421, %v4444
  %v4474 = vadd.f32 %v4422, %v4444
  %v4475 = vadd.f32 %v4423, %v4444
  %v4476 = vadd.f32 %v4424, %v4444
  %v4477 = vadd.f32 %v4425, %v4444
  %v4478 = vadd.f32 %v4426, %v4444
  %v4479 = vadd.f32 %v4427, %v4444
  %v4480 = vadd.f32 %v4428, %v4444
  %v4481 = vadd.f32 %v4429, %v4444
  %v4482 = vadd.f32 %v4430, %v4444
  %v4483 = vadd.f32 %v4431, %v4444
  %v4484 = vadd.f32 %v4432, %v4444
  %v4485 = vadd.f32 %v4433, %v4444
  %v4486 = vadd.f32 %v4434, %v4444
  %v4487 = vadd.f32 %v4435, %v4444
  %v4488 = vadd.f32 %v4436, %v4444
  %v4489 = vadd.f32 %v4437, %v4444
  %v4490 = vadd.f32 %v4438, %v4444
  %v4491 = vadd.f32 %v4439, %v4444
  %v4492 = vadd.f32 %v4440, %v4444
  %v4493 = vand.u32 2147483647, %v4445
  %v4494 = vand.u32 2147483647, %v4446
  %v4495 = vand.u32 2147483647, %v4447
  %v4496 = vand.u32 2147483647, %v4448
  %v4497 = vand.u32 2147483647, %v4449
  %v4498 = vand.u32 2147483647, %v4450
  %v4499 = vand.u32 2147483647, %v4451
  %v4500 = vand.u32 2147483647, %v4452
  %v4501 = vand.u32 2147483647, %v4453
  %v4502 = vand.u32 2147483647, %v4454
  %v4503 = vand.u32 2147483647, %v4455
  %v4504 = vand.u32 2147483647, %v4456
  %v4505 = vand.u32 2147483647, %v4457
  %v4506 = vand.u32 2147483647, %v4458
  %v4507 = vand.u32 2147483647, %v4459
  %v4508 = vand.u32 2147483647, %v4460
  %v4509 = vand.u32 2147483647, %v4461
  %v4510 = vand.u32 2147483647, %v4462
  %v4511 = vand.u32 2147483647, %v4463
  %v4512 = vand.u32 2147483647, %v4464
  %v4513 = vand.u32 2147483647, %v4465
  %v4514 = vand.u32 2147483647, %v4466
  %v4515 = vand.u32 2147483647, %v4467
  %v4516 = vand.u32 2147483647, %v4468
  %v4517 = vand.u32 2147483647, %v4469
  %v4518 = vand.u32 2147483647, %v4470
  %v4519 = vand.u32 2147483647, %v4471
  %v4520 = vand.u32 2147483647, %v4472
  %v4521 = vand.u32 2147483647, %v4473
  %v4522 = vand.u32 2147483647, %v4474
  %v4523 = vand.u32 2147483647, %v4475
  %v4524 = vand.u32 2147483647, %v4476
  %v4525 = vand.u32 2147483647, %v4477
  %v4526 = vand.u32 2147483647, %v4478
  %v4527 = vand.u32 2147483647, %v4479
  %v4528 = vand.u32 2147483647, %v4480
  %v4529 = vand.u32 2147483647, %v4481
  %v4530 = vand.u32 2147483647, %v4482
  %v4531 = vand.u32 2147483647, %v4483
  %v4532 = vand.u32 2147483647, %v4484
  %v4533 = vand.u32 2147483647, %v4485
  %v4534 = vand.u32 2147483647, %v4486
  %v4535 = vand.u32 2147483647, %v4487
  %v4536 = vand.u32 2147483647, %v4488
  %v4537 = vand.u32 2147483647, %v4489
  %v4538 = vand.u32 2147483647, %v4490
  %v4539 = vand.u32 2147483647, %v4491
  %v4540 = vand.u32 2147483647, %v4492
  %v4541 = vsub.f32 0.0, %v4493
  %v4542 = vsub.f32 0.0, %v4494
  %v4543 = vsub.f32 0.0, %v4495
  %v4544 = vsub.f32 0.0, %v4496
  %v4545 = vsub.f32 0.0, %v4497
  %v4546 = vsub.f32 0.0, %v4498
  %v4547 = vsub.f32 0.0, %v4499
  %v4548 = vsub.f32 0.0, %v4500
  %v4549 = vsub.f32 0.0, %v4501
  %v4550 = vsub.f32 0.0, %v4502
  %v4551 = vsub.f32 0.0, %v4503
  %v4552 = vsub.f32 0.0, %v4504
  %v4553 = vsub.f32 0.0, %v4505
  %v4554 = vsub.f32 0.0, %v4506
  %v4555 = vsub.f32 0.0, %v4507
  %v4556 = vsub.f32 0.0, %v4508
  %v4557 = vsub.f32 0.0, %v4509
  %v4558 = vsub.f32 0.0, %v4510
  %v4559 = vsub.f32 0.0, %v4511
  %v4560 = vsub.f32 0.0, %v4512
  %v4561 = vsub.f32 0.0, %v4513
  %v4562 = vsub.f32 0.0, %v4514
  %v4563 = vsub.f32 0.0, %v4515
  %v4564 = vsub.f32 0.0, %v4516
  %v4565 = vsub.f32 0.0, %v4517
  %v4566 = vsub.f32 0.0, %v4518
  %v4567 = vsub.f32 0.0, %v4519
  %v4568 = vsub.f32 0.0, %v4520
  %v4569 = vsub.f32 0.0, %v4521
  %v4570 = vsub.f32 0.0, %v4522
  %v4571 = vsub.f32 0.0, %v4523
  %v4572 = vsub.f32 0.0, %v4524
  %v4573 = vsub.f32 0.0, %v4525
  %v4574 = vsub.f32 0.0, %v4526
  %v4575 = vsub.f32 0.0, %v4527
  %v4576 = vsub.f32 0.0, %v4528
  %v4577 = vsub.f32 0.0, %v4529
  %v4578 = vsub.f32 0.0, %v4530
  %v4579 = vsub.f32 0.0, %v4531
  %v4580 = vsub.f32 0.0, %v4532
  %v4581 = vsub.f32 0.0, %v4533
  %v4582 = vsub.f32 0.0, %v4534
  %v4583 = vsub.f32 0.0, %v4535
  %v4584 = vsub.f32 0.0, %v4536
  %v4585 = vsub.f32 0.0, %v4537
  %v4586 = vsub.f32 0.0, %v4538
  %v4587 = vsub.f32 0.0, %v4539
  %v4588 = vsub.f32 0.0, %v4540
  %v4589 = vmul.f32 %v4541, 1.442695
  %v4590 = vpow.pop %v4589
  %v4591 = vmul.f32 %v4542, 1.442695
  %v4592 = vpow.pop %v4591
  %v4593 = vmul.f32 %v4543, 1.442695
  %v4594 = vpow.pop %v4593
  %v4595 = vmul.f32 %v4544, 1.442695
  %v4596 = vpow.pop %v4595
  %v4597 = vmul.f32 %v4545, 1.442695
  %v4598 = vpow.pop %v4597
  %v4599 = vmul.f32 %v4546, 1.442695
  %v4600 = vpow.pop %v4599
  %v4601 = vmul.f32 %v4547, 1.442695
  %v4602 = vpow.pop %v4601
  %v4603 = vmul.f32 %v4548, 1.442695
  %v4604 = vpow.pop %v4603
  %v4605 = vmul.f32 %v4549, 1.442695
  %v4606 = vpow.pop %v4605
  %v4607 = vmul.f32 %v4550, 1.442695
  %v4608 = vpow.pop %v4607
  %v4609 = vmul.f32 %v4551, 1.442695
  %v4610 = vpow.pop %v4609
  %v4611 = vmul.f32 %v4552, 1.442695
  %v4612 = vpow.pop %v4611
  %v4613 = vmul.f32 %v4553, 1.442695
  %v4614 = vpow.pop %v4613
  %v4615 = vmul.f32 %v4554, 1.442695
  %v4616 = vpow.pop %v4615
  %v4617 = vmul.f32 %v4555, 1.442695
  %v4618 = vpow.pop %v4617
  %v4619 = vmul.f32 %v4556, 1.442695
  %v4620 = vpow.pop %v4619
  %v4621 = vmul.f32 %v4557, 1.442695
  %v4622 = vpow.pop %v4621
  %v4623 = vmul.f32 %v4558, 1.442695
  %v4624 = vpow.pop %v4623
  %v4625 = vmul.f32 %v4559, 1.442695
  %v4626 = vpow.pop %v4625
  %v4627 = vmul.f32 %v4560, 1.442695
  %v4628 = vpow.pop %v4627
  %v4629 = vmul.f32 %v4561, 1.442695
  %v4630 = vpow.pop %v4629
  %v4631 = vmul.f32 %v4562, 1.442695
  %v4632 = vpow.pop %v4631
  %v4633 = vmul.f32 %v4563, 1.442695
  %v4634 = vpow.pop %v4633
  %v4635 = vmul.f32 %v4564, 1.442695
  %v4636 = vpow.pop %v4635
  %v4637 = vmul.f32 %v4565, 1.442695
  %v4638 = vpow.pop %v4637
  %v4639 = vmul.f32 %v4566, 1.442695
  %v4640 = vpow.pop %v4639
  %v4641 = vmul.f32 %v4567, 1.442695
  %v4642 = vpow.pop %v4641
  %v4643 = vmul.f32 %v4568, 1.442695
  %v4644 = vpow.pop %v4643
  %v4645 = vmul.f32 %v4569, 1.442695
  %v4646 = vpow.pop %v4645
  %v4647 = vmul.f32 %v4570, 1.442695
  %v4648 = vpow.pop %v4647
  %v4649 = vmul.f32 %v4571, 1.442695
  %v4650 = vpow.pop %v4649
  %v4651 = vmul.f32 %v4572, 1.442695
  %v4652 = vpow.pop %v4651
  %v4653 = vmul.f32 %v4573, 1.442695
  %v4654 = vpow.pop %v4653
  %v4655 = vmul.f32 %v4574, 1.442695
  %v4656 = vpow.pop %v4655
  %v4657 = vmul.f32 %v4575, 1.442695
  %v4658 = vpow.pop %v4657
  %v4659 = vmul.f32 %v4576, 1.442695
  %v4660 = vpow.pop %v4659
  %v4661 = vmul.f32 %v4577, 1.442695
  %v4662 = vpow.pop %v4661
  %v4663 = vmul.f32 %v4578, 1.442695
  %v4664 = vpow.pop %v4663
  %v4665 = vmul.f32 %v4579, 1.442695
  %v4666 = vpow.pop %v4665
  %v4667 = vmul.f32 %v4580, 1.442695
  %v4668 = vpow.pop %v4667
  %v4669 = vmul.f32 %v4581, 1.442695
  %v4670 = vpow.pop %v4669
  %v4671 = vmul.f32 %v4582, 1.442695
  %v4672 = vpow.pop %v4671
  %v4673 = vmul.f32 %v4583, 1.442695
  %v4674 = vpow.pop %v4673
  %v4675 = vmul.f32 %v4584, 1.442695
  %v4676 = vpow.pop %v4675
  %v4677 = vmul.f32 %v4585, 1.442695
  %v4678 = vpow.pop %v4677
  %v4679 = vmul.f32 %v4586, 1.442695
  %v4680 = vpow.pop %v4679
  %v4681 = vmul.f32 %v4587, 1.442695
  %v4682 = vpow.pop %v4681
  %v4683 = vmul.f32 %v4588, 1.442695
  %v4684 = vpow.pop %v4683
  %v4685 = vadd.f32 %v4590, 1.0
  %v4686 = vadd.f32 %v4592, 1.0
  %v4687 = vadd.f32 %v4594, 1.0
  %v4688 = vadd.f32 %v4596, 1.0
  %v4689 = vadd.f32 %v4598, 1.0
  %v4690 = vadd.f32 %v4600, 1.0
  %v4691 = vadd.f32 %v4602, 1.0
  %v4692 = vadd.f32 %v4604, 1.0
  %v4693 = vadd.f32 %v4606, 1.0
  %v4694 = vadd.f32 %v4608, 1.0
  %v4695 = vadd.f32 %v4610, 1.0
  %v4696 = vadd.f32 %v4612, 1.0
  %v4697 = vadd.f32 %v4614, 1.0
  %v4698 = vadd.f32 %v4616, 1.0
  %v4699 = vadd.f32 %v4618, 1.0
  %v4700 = vadd.f32 %v4620, 1.0
  %v4701 = vadd.f32 %v4622, 1.0
  %v4702 = vadd.f32 %v4624, 1.0
  %v4703 = vadd.f32 %v4626, 1.0
  %v4704 = vadd.f32 %v4628, 1.0
  %v4705 = vadd.f32 %v4630, 1.0
  %v4706 = vadd.f32 %v4632, 1.0
  %v4707 = vadd.f32 %v4634, 1.0
  %v4708 = vadd.f32 %v4636, 1.0
  %v4709 = vadd.f32 %v4638, 1.0
  %v4710 = vadd.f32 %v4640, 1.0
  %v4711 = vadd.f32 %v4642, 1.0
  %v4712 = vadd.f32 %v4644, 1.0
  %v4713 = vadd.f32 %v4646, 1.0
  %v4714 = vadd.f32 %v4648, 1.0
  %v4715 = vadd.f32 %v4650, 1.0
  %v4716 = vadd.f32 %v4652, 1.0
  %v4717 = vadd.f32 %v4654, 1.0
  %v4718 = vadd.f32 %v4656, 1.0
  %v4719 = vadd.f32 %v4658, 1.0
  %v4720 = vadd.f32 %v4660, 1.0
  %v4721 = vadd.f32 %v4662, 1.0
  %v4722 = vadd.f32 %v4664, 1.0
  %v4723 = vadd.f32 %v4666, 1.0
  %v4724 = vadd.f32 %v4668, 1.0
  %v4725 = vadd.f32 %v4670, 1.0
  %v4726 = vadd.f32 %v4672, 1.0
  %v4727 = vadd.f32 %v4674, 1.0
  %v4728 = vadd.f32 %v4676, 1.0
  %v4729 = vadd.f32 %v4678, 1.0
  %v4730 = vadd.f32 %v4680, 1.0
  %v4731 = vadd.f32 %v4682, 1.0
  %v4732 = vadd.f32 %v4684, 1.0
  %v4733 = vrcp.pop %v4685
  %v4734 = vmul.f32 1.0, %v4733
  %v4735 = vrcp.pop %v4686
  %v4736 = vmul.f32 1.0, %v4735
  %v4737 = vrcp.pop %v4687
  %v4738 = vmul.f32 1.0, %v4737
  %v4739 = vrcp.pop %v4688
  %v4740 = vmul.f32 1.0, %v4739
  %v4741 = vrcp.pop %v4689
  %v4742 = vmul.f32 1.0, %v4741
  %v4743 = vrcp.pop %v4690
  %v4744 = vmul.f32 1.0, %v4743
  %v4745 = vrcp.pop %v4691
  %v4746 = vmul.f32 1.0, %v4745
  %v4747 = vrcp.pop %v4692
  %v4748 = vmul.f32 1.0, %v4747
  %v4749 = vrcp.pop %v4693
  %v4750 = vmul.f32 1.0, %v4749
  %v4751 = vrcp.pop %v4694
  %v4752 = vmul.f32 1.0, %v4751
  %v4753 = vrcp.pop %v4695
  %v4754 = vmul.f32 1.0, %v4753
  %v4755 = vrcp.pop %v4696
  %v4756 = vmul.f32 1.0, %v4755
  %v4757 = vrcp.pop %v4697
  %v4758 = vmul.f32 1.0, %v4757
  %v4759 = vrcp.pop %v4698
  %v4760 = vmul.f32 1.0, %v4759
  %v4761 = vrcp.pop %v4699
  %v4762 = vmul.f32 1.0, %v4761
  %v4763 = vrcp.pop %v4700
  %v4764 = vmul.f32 1.0, %v4763
  %v4765 = vrcp.pop %v4701
  %v4766 = vmul.f32 1.0, %v4765
  %v4767 = vrcp.pop %v4702
  %v4768 = vmul.f32 1.0, %v4767
  %v4769 = vrcp.pop %v4703
  %v4770 = vmul.f32 1.0, %v4769
  %v4771 = vrcp.pop %v4704
  %v4772 = vmul.f32 1.0, %v4771
  %v4773 = vrcp.pop %v4705
  %v4774 = vmul.f32 1.0, %v4773
  %v4775 = vrcp.pop %v4706
  %v4776 = vmul.f32 1.0, %v4775
  %v4777 = vrcp.pop %v4707
  %v4778 = vmul.f32 1.0, %v4777
  %v4779 = vrcp.pop %v4708
  %v4780 = vmul.f32 1.0, %v4779
  %v4781 = vrcp.pop %v4709
  %v4782 = vmul.f32 1.0, %v4781
  %v4783 = vrcp.pop %v4710
  %v4784 = vmul.f32 1.0, %v4783
  %v4785 = vrcp.pop %v4711
  %v4786 = vmul.f32 1.0, %v4785
  %v4787 = vrcp.pop %v4712
  %v4788 = vmul.f32 1.0, %v4787
  %v4789 = vrcp.pop %v4713
  %v4790 = vmul.f32 1.0, %v4789
  %v4791 = vrcp.pop %v4714
  %v4792 = vmul.f32 1.0, %v4791
  %v4793 = vrcp.pop %v4715
  %v4794 = vmul.f32 1.0, %v4793
  %v4795 = vrcp.pop %v4716
  %v4796 = vmul.f32 1.0, %v4795
  %v4797 = vrcp.pop %v4717
  %v4798 = vmul.f32 1.0, %v4797
  %v4799 = vrcp.pop %v4718
  %v4800 = vmul.f32 1.0, %v4799
  %v4801 = vrcp.pop %v4719
  %v4802 = vmul.f32 1.0, %v4801
  %v4803 = vrcp.pop %v4720
  %v4804 = vmul.f32 1.0, %v4803
  %v4805 = vrcp.pop %v4721
  %v4806 = vmul.f32 1.0, %v4805
  %v4807 = vrcp.pop %v4722
  %v4808 = vmul.f32 1.0, %v4807
  %v4809 = vrcp.pop %v4723
  %v4810 = vmul.f32 1.0, %v4809
  %v4811 = vrcp.pop %v4724
  %v4812 = vmul.f32 1.0, %v4811
  %v4813 = vrcp.pop %v4725
  %v4814 = vmul.f32 1.0, %v4813
  %v4815 = vrcp.pop %v4726
  %v4816 = vmul.f32 1.0, %v4815
  %v4817 = vrcp.pop %v4727
  %v4818 = vmul.f32 1.0, %v4817
  %v4819 = vrcp.pop %v4728
  %v4820 = vmul.f32 1.0, %v4819
  %v4821 = vrcp.pop %v4729
  %v4822 = vmul.f32 1.0, %v4821
  %v4823 = vrcp.pop %v4730
  %v4824 = vmul.f32 1.0, %v4823
  %v4825 = vrcp.pop %v4731
  %v4826 = vmul.f32 1.0, %v4825
  %v4827 = vrcp.pop %v4732
  %v4828 = vmul.f32 1.0, %v4827
  %vm4829 = vcmp.ge.f32.partialorder %v4445, 0.0
  %vm4830 = vcmp.ge.f32.partialorder %v4446, 0.0
  %vm4831 = vcmp.ge.f32.partialorder %v4447, 0.0
  %vm4832 = vcmp.ge.f32.partialorder %v4448, 0.0
  %vm4833 = vcmp.ge.f32.partialorder %v4449, 0.0
  %vm4834 = vcmp.ge.f32.partialorder %v4450, 0.0
  %vm4835 = vcmp.ge.f32.partialorder %v4451, 0.0
  %vm4836 = vcmp.ge.f32.partialorder %v4452, 0.0
  %vm4837 = vcmp.ge.f32.partialorder %v4453, 0.0
  %vm4838 = vcmp.ge.f32.partialorder %v4454, 0.0
  %vm4839 = vcmp.ge.f32.partialorder %v4455, 0.0
  %vm4840 = vcmp.ge.f32.partialorder %v4456, 0.0
  %vm4841 = vcmp.ge.f32.partialorder %v4457, 0.0
  %vm4842 = vcmp.ge.f32.partialorder %v4458, 0.0
  %vm4843 = vcmp.ge.f32.partialorder %v4459, 0.0
  %vm4844 = vcmp.ge.f32.partialorder %v4460, 0.0
  %vm4845 = vcmp.ge.f32.partialorder %v4461, 0.0
  %vm4846 = vcmp.ge.f32.partialorder %v4462, 0.0
  %vm4847 = vcmp.ge.f32.partialorder %v4463, 0.0
  %vm4848 = vcmp.ge.f32.partialorder %v4464, 0.0
  %vm4849 = vcmp.ge.f32.partialorder %v4465, 0.0
  %vm4850 = vcmp.ge.f32.partialorder %v4466, 0.0
  %vm4851 = vcmp.ge.f32.partialorder %v4467, 0.0
  %vm4852 = vcmp.ge.f32.partialorder %v4468, 0.0
  %vm4853 = vcmp.ge.f32.partialorder %v4469, 0.0
  %vm4854 = vcmp.ge.f32.partialorder %v4470, 0.0
  %vm4855 = vcmp.ge.f32.partialorder %v4471, 0.0
  %vm4856 = vcmp.ge.f32.partialorder %v4472, 0.0
  %vm4857 = vcmp.ge.f32.partialorder %v4473, 0.0
  %vm4858 = vcmp.ge.f32.partialorder %v4474, 0.0
  %vm4859 = vcmp.ge.f32.partialorder %v4475, 0.0
  %vm4860 = vcmp.ge.f32.partialorder %v4476, 0.0
  %vm4861 = vcmp.ge.f32.partialorder %v4477, 0.0
  %vm4862 = vcmp.ge.f32.partialorder %v4478, 0.0
  %vm4863 = vcmp.ge.f32.partialorder %v4479, 0.0
  %vm4864 = vcmp.ge.f32.partialorder %v4480, 0.0
  %vm4865 = vcmp.ge.f32.partialorder %v4481, 0.0
  %vm4866 = vcmp.ge.f32.partialorder %v4482, 0.0
  %vm4867 = vcmp.ge.f32.partialorder %v4483, 0.0
  %vm4868 = vcmp.ge.f32.partialorder %v4484, 0.0
  %vm4869 = vcmp.ge.f32.partialorder %v4485, 0.0
  %vm4870 = vcmp.ge.f32.partialorder %v4486, 0.0
  %vm4871 = vcmp.ge.f32.partialorder %v4487, 0.0
  %vm4872 = vcmp.ge.f32.partialorder %v4488, 0.0
  %vm4873 = vcmp.ge.f32.partialorder %v4489, 0.0
  %vm4874 = vcmp.ge.f32.partialorder %v4490, 0.0
  %vm4875 = vcmp.ge.f32.partialorder %v4491, 0.0
  %vm4876 = vcmp.ge.f32.partialorder %v4492, 0.0
  %v4877 = vmul.f32 %v4590, %v4734
  %v4878 = vmul.f32 %v4592, %v4736
  %v4879 = vmul.f32 %v4594, %v4738
  %v4880 = vmul.f32 %v4596, %v4740
  %v4881 = vmul.f32 %v4598, %v4742
  %v4882 = vmul.f32 %v4600, %v4744
  %v4883 = vmul.f32 %v4602, %v4746
  %v4884 = vmul.f32 %v4604, %v4748
  %v4885 = vmul.f32 %v4606, %v4750
  %v4886 = vmul.f32 %v4608, %v4752
  %v4887 = vmul.f32 %v4610, %v4754
  %v4888 = vmul.f32 %v4612, %v4756
  %v4889 = vmul.f32 %v4614, %v4758
  %v4890 = vmul.f32 %v4616, %v4760
  %v4891 = vmul.f32 %v4618, %v4762
  %v4892 = vmul.f32 %v4620, %v4764
  %v4893 = vmul.f32 %v4622, %v4766
  %v4894 = vmul.f32 %v4624, %v4768
  %v4895 = vmul.f32 %v4626, %v4770
  %v4896 = vmul.f32 %v4628, %v4772
  %v4897 = vmul.f32 %v4630, %v4774
  %v4898 = vmul.f32 %v4632, %v4776
  %v4899 = vmul.f32 %v4634, %v4778
  %v4900 = vmul.f32 %v4636, %v4780
  %v4901 = vmul.f32 %v4638, %v4782
  %v4902 = vmul.f32 %v4640, %v4784
  %v4903 = vmul.f32 %v4642, %v4786
  %v4904 = vmul.f32 %v4644, %v4788
  %v4905 = vmul.f32 %v4646, %v4790
  %v4906 = vmul.f32 %v4648, %v4792
  %v4907 = vmul.f32 %v4650, %v4794
  %v4908 = vmul.f32 %v4652, %v4796
  %v4909 = vmul.f32 %v4654, %v4798
  %v4910 = vmul.f32 %v4656, %v4800
  %v4911 = vmul.f32 %v4658, %v4802
  %v4912 = vmul.f32 %v4660, %v4804
  %v4913 = vmul.f32 %v4662, %v4806
  %v4914 = vmul.f32 %v4664, %v4808
  %v4915 = vmul.f32 %v4666, %v4810
  %v4916 = vmul.f32 %v4668, %v4812
  %v4917 = vmul.f32 %v4670, %v4814
  %v4918 = vmul.f32 %v4672, %v4816
  %v4919 = vmul.f32 %v4674, %v4818
  %v4920 = vmul.f32 %v4676, %v4820
  %v4921 = vmul.f32 %v4678, %v4822
  %v4922 = vmul.f32 %v4680, %v4824
  %v4923 = vmul.f32 %v4682, %v4826
  %v4924 = vmul.f32 %v4684, %v4828
  %v4925 = vsel %vm4829, %v4734, %v4877
  %v4926 = vsel %vm4830, %v4736, %v4878
  %v4927 = vsel %vm4831, %v4738, %v4879
  %v4928 = vsel %vm4832, %v4740, %v4880
  %v4929 = vsel %vm4833, %v4742, %v4881
  %v4930 = vsel %vm4834, %v4744, %v4882
  %v4931 = vsel %vm4835, %v4746, %v4883
  %v4932 = vsel %vm4836, %v4748, %v4884
  %v4933 = vsel %vm4837, %v4750, %v4885
  %v4934 = vsel %vm4838, %v4752, %v4886
  %v4935 = vsel %vm4839, %v4754, %v4887
  %v4936 = vsel %vm4840, %v4756, %v4888
  %v4937 = vsel %vm4841, %v4758, %v4889
  %v4938 = vsel %vm4842, %v4760, %v4890
  %v4939 = vsel %vm4843, %v4762, %v4891
  %v4940 = vsel %vm4844, %v4764, %v4892
  %v4941 = vsel %vm4845, %v4766, %v4893
  %v4942 = vsel %vm4846, %v4768, %v4894
  %v4943 = vsel %vm4847, %v4770, %v4895
  %v4944 = vsel %vm4848, %v4772, %v4896
  %v4945 = vsel %vm4849, %v4774, %v4897
  %v4946 = vsel %vm4850, %v4776, %v4898
  %v4947 = vsel %vm4851, %v4778, %v4899
  %v4948 = vsel %vm4852, %v4780, %v4900
  %v4949 = vsel %vm4853, %v4782, %v4901
  %v4950 = vsel %vm4854, %v4784, %v4902
  %v4951 = vsel %vm4855, %v4786, %v4903
  %v4952 = vsel %vm4856, %v4788, %v4904
  %v4953 = vsel %vm4857, %v4790, %v4905
  %v4954 = vsel %vm4858, %v4792, %v4906
  %v4955 = vsel %vm4859, %v4794, %v4907
  %v4956 = vsel %vm4860, %v4796, %v4908
  %v4957 = vsel %vm4861, %v4798, %v4909
  %v4958 = vsel %vm4862, %v4800, %v4910
  %v4959 = vsel %vm4863, %v4802, %v4911
  %v4960 = vsel %vm4864, %v4804, %v4912
  %v4961 = vsel %vm4865, %v4806, %v4913
  %v4962 = vsel %vm4866, %v4808, %v4914
  %v4963 = vsel %vm4867, %v4810, %v4915
  %v4964 = vsel %vm4868, %v4812, %v4916
  %v4965 = vsel %vm4869, %v4814, %v4917
  %v4966 = vsel %vm4870, %v4816, %v4918
  %v4967 = vsel %vm4871, %v4818, %v4919
  %v4968 = vsel %vm4872, %v4820, %v4920
  %v4969 = vsel %vm4873, %v4822, %v4921
  %v4970 = vsel %vm4874, %v4824, %v4922
  %v4971 = vsel %vm4875, %v4826, %v4923
  %v4972 = vsel %vm4876, %v4828, %v4924
  %v4973 = vmax.f32 %v4445, 0.0
  %v4974 = vmax.f32 %v4446, 0.0
  %v4975 = vmax.f32 %v4447, 0.0
  %v4976 = vmax.f32 %v4448, 0.0
  %v4977 = vmax.f32 %v4449, 0.0
  %v4978 = vmax.f32 %v4450, 0.0
  %v4979 = vmax.f32 %v4451, 0.0
  %v4980 = vmax.f32 %v4452, 0.0
  %v4981 = vmax.f32 %v4453, 0.0
  %v4982 = vmax.f32 %v4454, 0.0
  %v4983 = vmax.f32 %v4455, 0.0
  %v4984 = vmax.f32 %v4456, 0.0
  %v4985 = vmax.f32 %v4457, 0.0
  %v4986 = vmax.f32 %v4458, 0.0
  %v4987 = vmax.f32 %v4459, 0.0
  %v4988 = vmax.f32 %v4460, 0.0
  %v4989 = vmax.f32 %v4461, 0.0
  %v4990 = vmax.f32 %v4462, 0.0
  %v4991 = vmax.f32 %v4463, 0.0
  %v4992 = vmax.f32 %v4464, 0.0
  %v4993 = vmax.f32 %v4465, 0.0
  %v4994 = vmax.f32 %v4466, 0.0
  %v4995 = vmax.f32 %v4467, 0.0
  %v4996 = vmax.f32 %v4468, 0.0
  %v4997 = vmax.f32 %v4469, 0.0
  %v4998 = vmax.f32 %v4470, 0.0
  %v4999 = vmax.f32 %v4471, 0.0
  %v5000 = vmax.f32 %v4472, 0.0
  %v5001 = vmax.f32 %v4473, 0.0
  %v5002 = vmax.f32 %v4474, 0.0
  %v5003 = vmax.f32 %v4475, 0.0
  %v5004 = vmax.f32 %v4476, 0.0
  %v5005 = vmax.f32 %v4477, 0.0
  %v5006 = vmax.f32 %v4478, 0.0
  %v5007 = vmax.f32 %v4479, 0.0
  %v5008 = vmax.f32 %v4480, 0.0
  %v5009 = vmax.f32 %v4481, 0.0
  %v5010 = vmax.f32 %v4482, 0.0
  %v5011 = vmax.f32 %v4483, 0.0
  %v5012 = vmax.f32 %v4484, 0.0
  %v5013 = vmax.f32 %v4485, 0.0
  %v5014 = vmax.f32 %v4486, 0.0
  %v5015 = vmax.f32 %v4487, 0.0
  %v5016 = vmax.f32 %v4488, 0.0
  %v5017 = vmax.f32 %v4489, 0.0
  %v5018 = vmax.f32 %v4490, 0.0
  %v5019 = vmax.f32 %v4491, 0.0
  %v5020 = vmax.f32 %v4492, 0.0
  %v5021 = vadd.f32 %v4590, 1.0
  %v5022 = vlog2.pop %v5021
  %v5023 = vmul.f32 %v5022, 0.6931472
  %v5024 = vmul.f32 -0.5, %v4590
  %v5025 = vadd.f32 %v5024, 1.0
  %v5026 = vmul.f32 %v5025, %v4590
  %v5027 = vand.u32 2147483647, %v4590
  %vm5028 = vcmp.lt.f32.partialorder %v5027, 0.0004427343
  %v5029 = vsel %vm5028, %v5026, %v5023
  %v5030 = vadd.f32 %v4592, 1.0
  %v5031 = vlog2.pop %v5030
  %v5032 = vmul.f32 %v5031, 0.6931472
  %v5033 = vmul.f32 -0.5, %v4592
  %v5034 = vadd.f32 %v5033, 1.0
  %v5035 = vmul.f32 %v5034, %v4592
  %v5036 = vand.u32 2147483647, %v4592
  %vm5037 = vcmp.lt.f32.partialorder %v5036, 0.0004427343
  %v5038 = vsel %vm5037, %v5035, %v5032
  %v5039 = vadd.f32 %v4594, 1.0
  %v5040 = vlog2.pop %v5039
  %v5041 = vmul.f32 %v5040, 0.6931472
  %v5042 = vmul.f32 -0.5, %v4594
  %v5043 = vadd.f32 %v5042, 1.0
  %v5044 = vmul.f32 %v5043, %v4594
  %v5045 = vand.u32 2147483647, %v4594
  %vm5046 = vcmp.lt.f32.partialorder %v5045, 0.0004427343
  %v5047 = vsel %vm5046, %v5044, %v5041
  %v5048 = vadd.f32 %v4596, 1.0
  %v5049 = vlog2.pop %v5048
  %v5050 = vmul.f32 %v5049, 0.6931472
  %v5051 = vmul.f32 -0.5, %v4596
  %v5052 = vadd.f32 %v5051, 1.0
  %v5053 = vmul.f32 %v5052, %v4596
  %v5054 = vand.u32 2147483647, %v4596
  %vm5055 = vcmp.lt.f32.partialorder %v5054, 0.0004427343
  %v5056 = vsel %vm5055, %v5053, %v5050
  %v5057 = vadd.f32 %v4598, 1.0
  %v5058 = vlog2.pop %v5057
  %v5059 = vmul.f32 %v5058, 0.6931472
  %v5060 = vmul.f32 -0.5, %v4598
  %v5061 = vadd.f32 %v5060, 1.0
  %v5062 = vmul.f32 %v5061, %v4598
  %v5063 = vand.u32 2147483647, %v4598
  %vm5064 = vcmp.lt.f32.partialorder %v5063, 0.0004427343
  %v5065 = vsel %vm5064, %v5062, %v5059
  %v5066 = vadd.f32 %v4600, 1.0
  %v5067 = vlog2.pop %v5066
  %v5068 = vmul.f32 %v5067, 0.6931472
  %v5069 = vmul.f32 -0.5, %v4600
  %v5070 = vadd.f32 %v5069, 1.0
  %v5071 = vmul.f32 %v5070, %v4600
  %v5072 = vand.u32 2147483647, %v4600
  %vm5073 = vcmp.lt.f32.partialorder %v5072, 0.0004427343
  %v5074 = vsel %vm5073, %v5071, %v5068
  %v5075 = vadd.f32 %v4602, 1.0
  %v5076 = vlog2.pop %v5075
  %v5077 = vmul.f32 %v5076, 0.6931472
  %v5078 = vmul.f32 -0.5, %v4602
  %v5079 = vadd.f32 %v5078, 1.0
  %v5080 = vmul.f32 %v5079, %v4602
  %v5081 = vand.u32 2147483647, %v4602
  %vm5082 = vcmp.lt.f32.partialorder %v5081, 0.0004427343
  %v5083 = vsel %vm5082, %v5080, %v5077
  %v5084 = vadd.f32 %v4604, 1.0
  %v5085 = vlog2.pop %v5084
  %v5086 = vmul.f32 %v5085, 0.6931472
  %v5087 = vmul.f32 -0.5, %v4604
  %v5088 = vadd.f32 %v5087, 1.0
  %v5089 = vmul.f32 %v5088, %v4604
  %v5090 = vand.u32 2147483647, %v4604
  %vm5091 = vcmp.lt.f32.partialorder %v5090, 0.0004427343
  %v5092 = vsel %vm5091, %v5089, %v5086
  %v5093 = vadd.f32 %v4606, 1.0
  %v5094 = vlog2.pop %v5093
  %v5095 = vmul.f32 %v5094, 0.6931472
  %v5096 = vmul.f32 -0.5, %v4606
  %v5097 = vadd.f32 %v5096, 1.0
  %v5098 = vmul.f32 %v5097, %v4606
  %v5099 = vand.u32 2147483647, %v4606
  %vm5100 = vcmp.lt.f32.partialorder %v5099, 0.0004427343
  %v5101 = vsel %vm5100, %v5098, %v5095
  %v5102 = vadd.f32 %v4608, 1.0
  %v5103 = vlog2.pop %v5102
  %v5104 = vmul.f32 %v5103, 0.6931472
  %v5105 = vmul.f32 -0.5, %v4608
  %v5106 = vadd.f32 %v5105, 1.0
  %v5107 = vmul.f32 %v5106, %v4608
  %v5108 = vand.u32 2147483647, %v4608
  %vm5109 = vcmp.lt.f32.partialorder %v5108, 0.0004427343
  %v5110 = vsel %vm5109, %v5107, %v5104
  %v5111 = vadd.f32 %v4610, 1.0
  %v5112 = vlog2.pop %v5111
  %v5113 = vmul.f32 %v5112, 0.6931472
  %v5114 = vmul.f32 -0.5, %v4610
  %v5115 = vadd.f32 %v5114, 1.0
  %v5116 = vmul.f32 %v5115, %v4610
  %v5117 = vand.u32 2147483647, %v4610
  %vm5118 = vcmp.lt.f32.partialorder %v5117, 0.0004427343
  %v5119 = vsel %vm5118, %v5116, %v5113
  %v5120 = vadd.f32 %v4612, 1.0
  %v5121 = vlog2.pop %v5120
  %v5122 = vmul.f32 %v5121, 0.6931472
  %v5123 = vmul.f32 -0.5, %v4612
  %v5124 = vadd.f32 %v5123, 1.0
  %v5125 = vmul.f32 %v5124, %v4612
  %v5126 = vand.u32 2147483647, %v4612
  %vm5127 = vcmp.lt.f32.partialorder %v5126, 0.0004427343
  %v5128 = vsel %vm5127, %v5125, %v5122
  %v5129 = vadd.f32 %v4614, 1.0
  %v5130 = vlog2.pop %v5129
  %v5131 = vmul.f32 %v5130, 0.6931472
  %v5132 = vmul.f32 -0.5, %v4614
  %v5133 = vadd.f32 %v5132, 1.0
  %v5134 = vmul.f32 %v5133, %v4614
  %v5135 = vand.u32 2147483647, %v4614
  %vm5136 = vcmp.lt.f32.partialorder %v5135, 0.0004427343
  %v5137 = vsel %vm5136, %v5134, %v5131
  %v5138 = vadd.f32 %v4616, 1.0
  %v5139 = vlog2.pop %v5138
  %v5140 = vmul.f32 %v5139, 0.6931472
  %v5141 = vmul.f32 -0.5, %v4616
  %v5142 = vadd.f32 %v5141, 1.0
  %v5143 = vmul.f32 %v5142, %v4616
  %v5144 = vand.u32 2147483647, %v4616
  %vm5145 = vcmp.lt.f32.partialorder %v5144, 0.0004427343
  %v5146 = vsel %vm5145, %v5143, %v5140
  %v5147 = vadd.f32 %v4618, 1.0
  %v5148 = vlog2.pop %v5147
  %v5149 = vmul.f32 %v5148, 0.6931472
  %v5150 = vmul.f32 -0.5, %v4618
  %v5151 = vadd.f32 %v5150, 1.0
  %v5152 = vmul.f32 %v5151, %v4618
  %v5153 = vand.u32 2147483647, %v4618
  %vm5154 = vcmp.lt.f32.partialorder %v5153, 0.0004427343
  %v5155 = vsel %vm5154, %v5152, %v5149
  %v5156 = vadd.f32 %v4620, 1.0
  %v5157 = vlog2.pop %v5156
  %v5158 = vmul.f32 %v5157, 0.6931472
  %v5159 = vmul.f32 -0.5, %v4620
  %v5160 = vadd.f32 %v5159, 1.0
  %v5161 = vmul.f32 %v5160, %v4620
  %v5162 = vand.u32 2147483647, %v4620
  %vm5163 = vcmp.lt.f32.partialorder %v5162, 0.0004427343
  %v5164 = vsel %vm5163, %v5161, %v5158
  %v5165 = vadd.f32 %v4622, 1.0
  %v5166 = vlog2.pop %v5165
  %v5167 = vmul.f32 %v5166, 0.6931472
  %v5168 = vmul.f32 -0.5, %v4622
  %v5169 = vadd.f32 %v5168, 1.0
  %v5170 = vmul.f32 %v5169, %v4622
  %v5171 = vand.u32 2147483647, %v4622
  %vm5172 = vcmp.lt.f32.partialorder %v5171, 0.0004427343
  %v5173 = vsel %vm5172, %v5170, %v5167
  %v5174 = vadd.f32 %v4624, 1.0
  %v5175 = vlog2.pop %v5174
  %v5176 = vmul.f32 %v5175, 0.6931472
  %v5177 = vmul.f32 -0.5, %v4624
  %v5178 = vadd.f32 %v5177, 1.0
  %v5179 = vmul.f32 %v5178, %v4624
  %v5180 = vand.u32 2147483647, %v4624
  %vm5181 = vcmp.lt.f32.partialorder %v5180, 0.0004427343
  %v5182 = vsel %vm5181, %v5179, %v5176
  %v5183 = vadd.f32 %v4626, 1.0
  %v5184 = vlog2.pop %v5183
  %v5185 = vmul.f32 %v5184, 0.6931472
  %v5186 = vmul.f32 -0.5, %v4626
  %v5187 = vadd.f32 %v5186, 1.0
  %v5188 = vmul.f32 %v5187, %v4626
  %v5189 = vand.u32 2147483647, %v4626
  %vm5190 = vcmp.lt.f32.partialorder %v5189, 0.0004427343
  %v5191 = vsel %vm5190, %v5188, %v5185
  %v5192 = vadd.f32 %v4628, 1.0
  %v5193 = vlog2.pop %v5192
  %v5194 = vmul.f32 %v5193, 0.6931472
  %v5195 = vmul.f32 -0.5, %v4628
  %v5196 = vadd.f32 %v5195, 1.0
  %v5197 = vmul.f32 %v5196, %v4628
  %v5198 = vand.u32 2147483647, %v4628
  %vm5199 = vcmp.lt.f32.partialorder %v5198, 0.0004427343
  %v5200 = vsel %vm5199, %v5197, %v5194
  %v5201 = vadd.f32 %v4630, 1.0
  %v5202 = vlog2.pop %v5201
  %v5203 = vmul.f32 %v5202, 0.6931472
  %v5204 = vmul.f32 -0.5, %v4630
  %v5205 = vadd.f32 %v5204, 1.0
  %v5206 = vmul.f32 %v5205, %v4630
  %v5207 = vand.u32 2147483647, %v4630
  %vm5208 = vcmp.lt.f32.partialorder %v5207, 0.0004427343
  %v5209 = vsel %vm5208, %v5206, %v5203
  %v5210 = vadd.f32 %v4632, 1.0
  %v5211 = vlog2.pop %v5210
  %v5212 = vmul.f32 %v5211, 0.6931472
  %v5213 = vmul.f32 -0.5, %v4632
  %v5214 = vadd.f32 %v5213, 1.0
  %v5215 = vmul.f32 %v5214, %v4632
  %v5216 = vand.u32 2147483647, %v4632
  %vm5217 = vcmp.lt.f32.partialorder %v5216, 0.0004427343
  %v5218 = vsel %vm5217, %v5215, %v5212
  %v5219 = vadd.f32 %v4634, 1.0
  %v5220 = vlog2.pop %v5219
  %v5221 = vmul.f32 %v5220, 0.6931472
  %v5222 = vmul.f32 -0.5, %v4634
  %v5223 = vadd.f32 %v5222, 1.0
  %v5224 = vmul.f32 %v5223, %v4634
  %v5225 = vand.u32 2147483647, %v4634
  %vm5226 = vcmp.lt.f32.partialorder %v5225, 0.0004427343
  %v5227 = vsel %vm5226, %v5224, %v5221
  %v5228 = vadd.f32 %v4636, 1.0
  %v5229 = vlog2.pop %v5228
  %v5230 = vmul.f32 %v5229, 0.6931472
  %v5231 = vmul.f32 -0.5, %v4636
  %v5232 = vadd.f32 %v5231, 1.0
  %v5233 = vmul.f32 %v5232, %v4636
  %v5234 = vand.u32 2147483647, %v4636
  %vm5235 = vcmp.lt.f32.partialorder %v5234, 0.0004427343
  %v5236 = vsel %vm5235, %v5233, %v5230
  %v5237 = vadd.f32 %v4638, 1.0
  %v5238 = vlog2.pop %v5237
  %v5239 = vmul.f32 %v5238, 0.6931472
  %v5240 = vmul.f32 -0.5, %v4638
  %v5241 = vadd.f32 %v5240, 1.0
  %v5242 = vmul.f32 %v5241, %v4638
  %v5243 = vand.u32 2147483647, %v4638
  %vm5244 = vcmp.lt.f32.partialorder %v5243, 0.0004427343
  %v5245 = vsel %vm5244, %v5242, %v5239
  %v5246 = vadd.f32 %v4640, 1.0
  %v5247 = vlog2.pop %v5246
  %v5248 = vmul.f32 %v5247, 0.6931472
  %v5249 = vmul.f32 -0.5, %v4640
  %v5250 = vadd.f32 %v5249, 1.0
  %v5251 = vmul.f32 %v5250, %v4640
  %v5252 = vand.u32 2147483647, %v4640
  %vm5253 = vcmp.lt.f32.partialorder %v5252, 0.0004427343
  %v5254 = vsel %vm5253, %v5251, %v5248
  %v5255 = vadd.f32 %v4642, 1.0
  %v5256 = vlog2.pop %v5255
  %v5257 = vmul.f32 %v5256, 0.6931472
  %v5258 = vmul.f32 -0.5, %v4642
  %v5259 = vadd.f32 %v5258, 1.0
  %v5260 = vmul.f32 %v5259, %v4642
  %v5261 = vand.u32 2147483647, %v4642
  %vm5262 = vcmp.lt.f32.partialorder %v5261, 0.0004427343
  %v5263 = vsel %vm5262, %v5260, %v5257
  %v5264 = vadd.f32 %v4644, 1.0
  %v5265 = vlog2.pop %v5264
  %v5266 = vmul.f32 %v5265, 0.6931472
  %v5267 = vmul.f32 -0.5, %v4644
  %v5268 = vadd.f32 %v5267, 1.0
  %v5269 = vmul.f32 %v5268, %v4644
  %v5270 = vand.u32 2147483647, %v4644
  %vm5271 = vcmp.lt.f32.partialorder %v5270, 0.0004427343
  %v5272 = vsel %vm5271, %v5269, %v5266
  %v5273 = vadd.f32 %v4646, 1.0
  %v5274 = vlog2.pop %v5273
  %v5275 = vmul.f32 %v5274, 0.6931472
  %v5276 = vmul.f32 -0.5, %v4646
  %v5277 = vadd.f32 %v5276, 1.0
  %v5278 = vmul.f32 %v5277, %v4646
  %v5279 = vand.u32 2147483647, %v4646
  %vm5280 = vcmp.lt.f32.partialorder %v5279, 0.0004427343
  %v5281 = vsel %vm5280, %v5278, %v5275
  %v5282 = vadd.f32 %v4648, 1.0
  %v5283 = vlog2.pop %v5282
  %v5284 = vmul.f32 %v5283, 0.6931472
  %v5285 = vmul.f32 -0.5, %v4648
  %v5286 = vadd.f32 %v5285, 1.0
  %v5287 = vmul.f32 %v5286, %v4648
  %v5288 = vand.u32 2147483647, %v4648
  %vm5289 = vcmp.lt.f32.partialorder %v5288, 0.0004427343
  %v5290 = vsel %vm5289, %v5287, %v5284
  %v5291 = vadd.f32 %v4650, 1.0
  %v5292 = vlog2.pop %v5291
  %v5293 = vmul.f32 %v5292, 0.6931472
  %v5294 = vmul.f32 -0.5, %v4650
  %v5295 = vadd.f32 %v5294, 1.0
  %v5296 = vmul.f32 %v5295, %v4650
  %v5297 = vand.u32 2147483647, %v4650
  %vm5298 = vcmp.lt.f32.partialorder %v5297, 0.0004427343
  %v5299 = vsel %vm5298, %v5296, %v5293
  %v5300 = vadd.f32 %v4652, 1.0
  %v5301 = vlog2.pop %v5300
  %v5302 = vmul.f32 %v5301, 0.6931472
  %v5303 = vmul.f32 -0.5, %v4652
  %v5304 = vadd.f32 %v5303, 1.0
  %v5305 = vmul.f32 %v5304, %v4652
  %v5306 = vand.u32 2147483647, %v4652
  %vm5307 = vcmp.lt.f32.partialorder %v5306, 0.0004427343
  %v5308 = vsel %vm5307, %v5305, %v5302
  %v5309 = vadd.f32 %v4654, 1.0
  %v5310 = vlog2.pop %v5309
  %v5311 = vmul.f32 %v5310, 0.6931472
  %v5312 = vmul.f32 -0.5, %v4654
  %v5313 = vadd.f32 %v5312, 1.0
  %v5314 = vmul.f32 %v5313, %v4654
  %v5315 = vand.u32 2147483647, %v4654
  %vm5316 = vcmp.lt.f32.partialorder %v5315, 0.0004427343
  %v5317 = vsel %vm5316, %v5314, %v5311
  %v5318 = vadd.f32 %v4656, 1.0
  %v5319 = vlog2.pop %v5318
  %v5320 = vmul.f32 %v5319, 0.6931472
  %v5321 = vmul.f32 -0.5, %v4656
  %v5322 = vadd.f32 %v5321, 1.0
  %v5323 = vmul.f32 %v5322, %v4656
  %v5324 = vand.u32 2147483647, %v4656
  %vm5325 = vcmp.lt.f32.partialorder %v5324, 0.0004427343
  %v5326 = vsel %vm5325, %v5323, %v5320
  %v5327 = vadd.f32 %v4658, 1.0
  %v5328 = vlog2.pop %v5327
  %v5329 = vmul.f32 %v5328, 0.6931472
  %v5330 = vmul.f32 -0.5, %v4658
  %v5331 = vadd.f32 %v5330, 1.0
  %v5332 = vmul.f32 %v5331, %v4658
  %v5333 = vand.u32 2147483647, %v4658
  %vm5334 = vcmp.lt.f32.partialorder %v5333, 0.0004427343
  %v5335 = vsel %vm5334, %v5332, %v5329
  %v5336 = vadd.f32 %v4660, 1.0
  %v5337 = vlog2.pop %v5336
  %v5338 = vmul.f32 %v5337, 0.6931472
  %v5339 = vmul.f32 -0.5, %v4660
  %v5340 = vadd.f32 %v5339, 1.0
  %v5341 = vmul.f32 %v5340, %v4660
  %v5342 = vand.u32 2147483647, %v4660
  %vm5343 = vcmp.lt.f32.partialorder %v5342, 0.0004427343
  %v5344 = vsel %vm5343, %v5341, %v5338
  %v5345 = vadd.f32 %v4662, 1.0
  %v5346 = vlog2.pop %v5345
  %v5347 = vmul.f32 %v5346, 0.6931472
  %v5348 = vmul.f32 -0.5, %v4662
  %v5349 = vadd.f32 %v5348, 1.0
  %v5350 = vmul.f32 %v5349, %v4662
  %v5351 = vand.u32 2147483647, %v4662
  %vm5352 = vcmp.lt.f32.partialorder %v5351, 0.0004427343
  %v5353 = vsel %vm5352, %v5350, %v5347
  %v5354 = vadd.f32 %v4664, 1.0
  %v5355 = vlog2.pop %v5354
  %v5356 = vmul.f32 %v5355, 0.6931472
  %v5357 = vmul.f32 -0.5, %v4664
  %v5358 = vadd.f32 %v5357, 1.0
  %v5359 = vmul.f32 %v5358, %v4664
  %v5360 = vand.u32 2147483647, %v4664
  %vm5361 = vcmp.lt.f32.partialorder %v5360, 0.0004427343
  %v5362 = vsel %vm5361, %v5359, %v5356
  %v5363 = vadd.f32 %v4666, 1.0
  %v5364 = vlog2.pop %v5363
  %v5365 = vmul.f32 %v5364, 0.6931472
  %v5366 = vmul.f32 -0.5, %v4666
  %v5367 = vadd.f32 %v5366, 1.0
  %v5368 = vmul.f32 %v5367, %v4666
  %v5369 = vand.u32 2147483647, %v4666
  %vm5370 = vcmp.lt.f32.partialorder %v5369, 0.0004427343
  %v5371 = vsel %vm5370, %v5368, %v5365
  %v5372 = vadd.f32 %v4668, 1.0
  %v5373 = vlog2.pop %v5372
  %v5374 = vmul.f32 %v5373, 0.6931472
  %v5375 = vmul.f32 -0.5, %v4668
  %v5376 = vadd.f32 %v5375, 1.0
  %v5377 = vmul.f32 %v5376, %v4668
  %v5378 = vand.u32 2147483647, %v4668
  %vm5379 = vcmp.lt.f32.partialorder %v5378, 0.0004427343
  %v5380 = vsel %vm5379, %v5377, %v5374
  %v5381 = vadd.f32 %v4670, 1.0
  %v5382 = vlog2.pop %v5381
  %v5383 = vmul.f32 %v5382, 0.6931472
  %v5384 = vmul.f32 -0.5, %v4670
  %v5385 = vadd.f32 %v5384, 1.0
  %v5386 = vmul.f32 %v5385, %v4670
  %v5387 = vand.u32 2147483647, %v4670
  %vm5388 = vcmp.lt.f32.partialorder %v5387, 0.0004427343
  %v5389 = vsel %vm5388, %v5386, %v5383
  %v5390 = vadd.f32 %v4672, 1.0
  %v5391 = vlog2.pop %v5390
  %v5392 = vmul.f32 %v5391, 0.6931472
  %v5393 = vmul.f32 -0.5, %v4672
  %v5394 = vadd.f32 %v5393, 1.0
  %v5395 = vmul.f32 %v5394, %v4672
  %v5396 = vand.u32 2147483647, %v4672
  %vm5397 = vcmp.lt.f32.partialorder %v5396, 0.0004427343
  %v5398 = vsel %vm5397, %v5395, %v5392
  %v5399 = vadd.f32 %v4674, 1.0
  %v5400 = vlog2.pop %v5399
  %v5401 = vmul.f32 %v5400, 0.6931472
  %v5402 = vmul.f32 -0.5, %v4674
  %v5403 = vadd.f32 %v5402, 1.0
  %v5404 = vmul.f32 %v5403, %v4674
  %v5405 = vand.u32 2147483647, %v4674
  %vm5406 = vcmp.lt.f32.partialorder %v5405, 0.0004427343
  %v5407 = vsel %vm5406, %v5404, %v5401
  %v5408 = vadd.f32 %v4676, 1.0
  %v5409 = vlog2.pop %v5408
  %v5410 = vmul.f32 %v5409, 0.6931472
  %v5411 = vmul.f32 -0.5, %v4676
  %v5412 = vadd.f32 %v5411, 1.0
  %v5413 = vmul.f32 %v5412, %v4676
  %v5414 = vand.u32 2147483647, %v4676
  %vm5415 = vcmp.lt.f32.partialorder %v5414, 0.0004427343
  %v5416 = vsel %vm5415, %v5413, %v5410
  %v5417 = vadd.f32 %v4678, 1.0
  %v5418 = vlog2.pop %v5417
  %v5419 = vmul.f32 %v5418, 0.6931472
  %v5420 = vmul.f32 -0.5, %v4678
  %v5421 = vadd.f32 %v5420, 1.0
  %v5422 = vmul.f32 %v5421, %v4678
  %v5423 = vand.u32 2147483647, %v4678
  %vm5424 = vcmp.lt.f32.partialorder %v5423, 0.0004427343
  %v5425 = vsel %vm5424, %v5422, %v5419
  %v5426 = vadd.f32 %v4680, 1.0
  %v5427 = vlog2.pop %v5426
  %v5428 = vmul.f32 %v5427, 0.6931472
  %v5429 = vmul.f32 -0.5, %v4680
  %v5430 = vadd.f32 %v5429, 1.0
  %v5431 = vmul.f32 %v5430, %v4680
  %v5432 = vand.u32 2147483647, %v4680
  %vm5433 = vcmp.lt.f32.partialorder %v5432, 0.0004427343
  %v5434 = vsel %vm5433, %v5431, %v5428
  %v5435 = vadd.f32 %v4682, 1.0
  %v5436 = vlog2.pop %v5435
  %v5437 = vmul.f32 %v5436, 0.6931472
  %v5438 = vmul.f32 -0.5, %v4682
  %v5439 = vadd.f32 %v5438, 1.0
  %v5440 = vmul.f32 %v5439, %v4682
  %v5441 = vand.u32 2147483647, %v4682
  %vm5442 = vcmp.lt.f32.partialorder %v5441, 0.0004427343
  %v5443 = vsel %vm5442, %v5440, %v5437
  %v5444 = vadd.f32 %v4684, 1.0
  %v5445 = vlog2.pop %v5444
  %v5446 = vmul.f32 %v5445, 0.6931472
  %v5447 = vmul.f32 -0.5, %v4684
  %v5448 = vadd.f32 %v5447, 1.0
  %v5449 = vmul.f32 %v5448, %v4684
  %v5450 = vand.u32 2147483647, %v4684
  %vm5451 = vcmp.lt.f32.partialorder %v5450, 0.0004427343
  %v5452 = vsel %vm5451, %v5449, %v5446
  %v5453 = vadd.f32 %v4973, %v5029
  %v5454 = vadd.f32 %v4974, %v5038
  %v5455 = vadd.f32 %v4975, %v5047
  %v5456 = vadd.f32 %v4976, %v5056
  %v5457 = vadd.f32 %v4977, %v5065
  %v5458 = vadd.f32 %v4978, %v5074
  %v5459 = vadd.f32 %v4979, %v5083
  %v5460 = vadd.f32 %v4980, %v5092
  %v5461 = vadd.f32 %v4981, %v5101
  %v5462 = vadd.f32 %v4982, %v5110
  %v5463 = vadd.f32 %v4983, %v5119
  %v5464 = vadd.f32 %v4984, %v5128
  %v5465 = vadd.f32 %v4985, %v5137
  %v5466 = vadd.f32 %v4986, %v5146
  %v5467 = vadd.f32 %v4987, %v5155
  %v5468 = vadd.f32 %v4988, %v5164
  %v5469 = vadd.f32 %v4989, %v5173
  %v5470 = vadd.f32 %v4990, %v5182
  %v5471 = vadd.f32 %v4991, %v5191
  %v5472 = vadd.f32 %v4992, %v5200
  %v5473 = vadd.f32 %v4993, %v5209
  %v5474 = vadd.f32 %v4994, %v5218
  %v5475 = vadd.f32 %v4995, %v5227
  %v5476 = vadd.f32 %v4996, %v5236
  %v5477 = vadd.f32 %v4997, %v5245
  %v5478 = vadd.f32 %v4998, %v5254
  %v5479 = vadd.f32 %v4999, %v5263
  %v5480 = vadd.f32 %v5000, %v5272
  %v5481 = vadd.f32 %v5001, %v5281
  %v5482 = vadd.f32 %v5002, %v5290
  %v5483 = vadd.f32 %v5003, %v5299
  %v5484 = vadd.f32 %v5004, %v5308
  %v5485 = vadd.f32 %v5005, %v5317
  %v5486 = vadd.f32 %v5006, %v5326
  %v5487 = vadd.f32 %v5007, %v5335
  %v5488 = vadd.f32 %v5008, %v5344
  %v5489 = vadd.f32 %v5009, %v5353
  %v5490 = vadd.f32 %v5010, %v5362
  %v5491 = vadd.f32 %v5011, %v5371
  %v5492 = vadd.f32 %v5012, %v5380
  %v5493 = vadd.f32 %v5013, %v5389
  %v5494 = vadd.f32 %v5014, %v5398
  %v5495 = vadd.f32 %v5015, %v5407
  %v5496 = vadd.f32 %v5016, %v5416
  %v5497 = vadd.f32 %v5017, %v5425
  %v5498 = vadd.f32 %v5018, %v5434
  %v5499 = vadd.f32 %v5019, %v5443
  %v5500 = vadd.f32 %v5020, %v5452
  %5549 = vrot.lane.b32.xlu0 %v5453, 64
  %v5550 = vpop.permute.xlu0 %5549
  %5551 = vrot.lane.b32.xlu0 %v5454, 64
  %v5552 = vpop.permute.xlu0 %5551
  %5553 = vrot.lane.b32.xlu0 %v5455, 64
  %v5554 = vpop.permute.xlu0 %5553
  %5555 = vrot.lane.b32.xlu0 %v5456, 64
  %v5556 = vpop.permute.xlu0 %5555
  %5557 = vrot.lane.b32.xlu0 %v5457, 64
  %v5558 = vpop.permute.xlu0 %5557
  %5559 = vrot.lane.b32.xlu0 %v5458, 64
  %v5560 = vpop.permute.xlu0 %5559
  %5561 = vrot.lane.b32.xlu0 %v5459, 64
  %v5562 = vpop.permute.xlu0 %5561
  %5563 = vrot.lane.b32.xlu0 %v5460, 64
  %v5564 = vpop.permute.xlu0 %5563
  %5565 = vrot.lane.b32.xlu0 %v5461, 64
  %v5566 = vpop.permute.xlu0 %5565
  %5567 = vrot.lane.b32.xlu0 %v5462, 64
  %v5568 = vpop.permute.xlu0 %5567
  %5569 = vrot.lane.b32.xlu0 %v5463, 64
  %v5570 = vpop.permute.xlu0 %5569
  %5571 = vrot.lane.b32.xlu0 %v5464, 64
  %v5572 = vpop.permute.xlu0 %5571
  %5573 = vrot.lane.b32.xlu0 %v5465, 64
  %v5574 = vpop.permute.xlu0 %5573
  %5575 = vrot.lane.b32.xlu0 %v5466, 64
  %v5576 = vpop.permute.xlu0 %5575
  %5577 = vrot.lane.b32.xlu0 %v5467, 64
  %v5578 = vpop.permute.xlu0 %5577
  %5579 = vrot.lane.b32.xlu0 %v5468, 64
  %v5580 = vpop.permute.xlu0 %5579
  %5581 = vrot.lane.b32.xlu0 %v5469, 64
  %v5582 = vpop.permute.xlu0 %5581
  %5583 = vrot.lane.b32.xlu0 %v5470, 64
  %v5584 = vpop.permute.xlu0 %5583
  %5585 = vrot.lane.b32.xlu0 %v5471, 64
  %v5586 = vpop.permute.xlu0 %5585
  %5587 = vrot.lane.b32.xlu0 %v5472, 64
  %v5588 = vpop.permute.xlu0 %5587
  %5589 = vrot.lane.b32.xlu0 %v5473, 64
  %v5590 = vpop.permute.xlu0 %5589
  %5591 = vrot.lane.b32.xlu0 %v5474, 64
  %v5592 = vpop.permute.xlu0 %5591
  %5593 = vrot.lane.b32.xlu0 %v5475, 64
  %v5594 = vpop.permute.xlu0 %5593
  %5595 = vrot.lane.b32.xlu0 %v5476, 64
  %v5596 = vpop.permute.xlu0 %5595
  %5597 = vrot.lane.b32.xlu0 %v5477, 64
  %v5598 = vpop.permute.xlu0 %5597
  %5599 = vrot.lane.b32.xlu0 %v5478, 64
  %v5600 = vpop.permute.xlu0 %5599
  %5601 = vrot.lane.b32.xlu0 %v5479, 64
  %v5602 = vpop.permute.xlu0 %5601
  %5603 = vrot.lane.b32.xlu0 %v5480, 64
  %v5604 = vpop.permute.xlu0 %5603
  %5605 = vrot.lane.b32.xlu0 %v5481, 64
  %v5606 = vpop.permute.xlu0 %5605
  %5607 = vrot.lane.b32.xlu0 %v5482, 64
  %v5608 = vpop.permute.xlu0 %5607
  %5609 = vrot.lane.b32.xlu0 %v5483, 64
  %v5610 = vpop.permute.xlu0 %5609
  %5611 = vrot.lane.b32.xlu0 %v5484, 64
  %v5612 = vpop.permute.xlu0 %5611
  %5613 = vrot.lane.b32.xlu0 %v5485, 64
  %v5614 = vpop.permute.xlu0 %5613
  %5615 = vrot.lane.b32.xlu0 %v5486, 64
  %v5616 = vpop.permute.xlu0 %5615
  %5617 = vrot.lane.b32.xlu0 %v5487, 64
  %v5618 = vpop.permute.xlu0 %5617
  %5619 = vrot.lane.b32.xlu0 %v5488, 64
  %v5620 = vpop.permute.xlu0 %5619
  %5621 = vrot.lane.b32.xlu0 %v5489, 64
  %v5622 = vpop.permute.xlu0 %5621
  %5623 = vrot.lane.b32.xlu0 %v5490, 64
  %v5624 = vpop.permute.xlu0 %5623
  %5625 = vrot.lane.b32.xlu0 %v5491, 64
  %v5626 = vpop.permute.xlu0 %5625
  %5627 = vrot.lane.b32.xlu0 %v5492, 64
  %v5628 = vpop.permute.xlu0 %5627
  %5629 = vrot.lane.b32.xlu0 %v5493, 64
  %v5630 = vpop.permute.xlu0 %5629
  %5631 = vrot.lane.b32.xlu0 %v5494, 64
  %v5632 = vpop.permute.xlu0 %5631
  %5633 = vrot.lane.b32.xlu0 %v5495, 64
  %v5634 = vpop.permute.xlu0 %5633
  %5635 = vrot.lane.b32.xlu0 %v5496, 64
  %v5636 = vpop.permute.xlu0 %5635
  %5637 = vrot.lane.b32.xlu0 %v5497, 64
  %v5638 = vpop.permute.xlu0 %5637
  %5639 = vrot.lane.b32.xlu0 %v5498, 64
  %v5640 = vpop.permute.xlu0 %5639
  %5641 = vrot.lane.b32.xlu0 %v5499, 64
  %v5642 = vpop.permute.xlu0 %5641
  %5643 = vrot.lane.b32.xlu0 %v5500, 64
  %v5644 = vpop.permute.xlu0 %5643
  %v5693 = vmul.f32 %v4925, %v5550
  %v5694 = vmul.f32 %v4926, %v5552
  %v5695 = vmul.f32 %v4927, %v5554
  %v5696 = vmul.f32 %v4928, %v5556
  %v5697 = vmul.f32 %v4929, %v5558
  %v5698 = vmul.f32 %v4930, %v5560
  %v5699 = vmul.f32 %v4931, %v5562
  %v5700 = vmul.f32 %v4932, %v5564
  %v5701 = vmul.f32 %v4933, %v5566
  %v5702 = vmul.f32 %v4934, %v5568
  %v5703 = vmul.f32 %v4935, %v5570
  %v5704 = vmul.f32 %v4936, %v5572
  %v5705 = vmul.f32 %v4937, %v5574
  %v5706 = vmul.f32 %v4938, %v5576
  %v5707 = vmul.f32 %v4939, %v5578
  %v5708 = vmul.f32 %v4940, %v5580
  %v5709 = vmul.f32 %v4941, %v5582
  %v5710 = vmul.f32 %v4942, %v5584
  %v5711 = vmul.f32 %v4943, %v5586
  %v5712 = vmul.f32 %v4944, %v5588
  %v5713 = vmul.f32 %v4945, %v5590
  %v5714 = vmul.f32 %v4946, %v5592
  %v5715 = vmul.f32 %v4947, %v5594
  %v5716 = vmul.f32 %v4948, %v5596
  %v5717 = vmul.f32 %v4949, %v5598
  %v5718 = vmul.f32 %v4950, %v5600
  %v5719 = vmul.f32 %v4951, %v5602
  %v5720 = vmul.f32 %v4952, %v5604
  %v5721 = vmul.f32 %v4953, %v5606
  %v5722 = vmul.f32 %v4954, %v5608
  %v5723 = vmul.f32 %v4955, %v5610
  %v5724 = vmul.f32 %v4956, %v5612
  %v5725 = vmul.f32 %v4957, %v5614
  %v5726 = vmul.f32 %v4958, %v5616
  %v5727 = vmul.f32 %v4959, %v5618
  %v5728 = vmul.f32 %v4960, %v5620
  %v5729 = vmul.f32 %v4961, %v5622
  %v5730 = vmul.f32 %v4962, %v5624
  %v5731 = vmul.f32 %v4963, %v5626
  %v5732 = vmul.f32 %v4964, %v5628
  %v5733 = vmul.f32 %v4965, %v5630
  %v5734 = vmul.f32 %v4966, %v5632
  %v5735 = vmul.f32 %v4967, %v5634
  %v5736 = vmul.f32 %v4968, %v5636
  %v5737 = vmul.f32 %v4969, %v5638
  %v5738 = vmul.f32 %v4970, %v5640
  %v5739 = vmul.f32 %v4971, %v5642
  %v5740 = vmul.f32 %v4972, %v5644
  %v5741 = vadd.f32 %v5693, %v5697
  %v5742 = vadd.f32 %v5694, %v5698
  %v5743 = vadd.f32 %v5695, %v5699
  %v5744 = vadd.f32 %v5696, %v5700
  %v5745 = vadd.f32 %v5701, %v5705
  %v5746 = vadd.f32 %v5702, %v5706
  %v5747 = vadd.f32 %v5703, %v5707
  %v5748 = vadd.f32 %v5704, %v5708
  %v5749 = vadd.f32 %v5709, %v5713
  %v5750 = vadd.f32 %v5710, %v5714
  %v5751 = vadd.f32 %v5711, %v5715
  %v5752 = vadd.f32 %v5712, %v5716
  %v5753 = vadd.f32 %v5717, %v5721
  %v5754 = vadd.f32 %v5718, %v5722
  %v5755 = vadd.f32 %v5719, %v5723
  %v5756 = vadd.f32 %v5720, %v5724
  %v5757 = vadd.f32 %v5725, %v5729
  %v5758 = vadd.f32 %v5726, %v5730
  %v5759 = vadd.f32 %v5727, %v5731
  %v5760 = vadd.f32 %v5728, %v5732
  %v5761 = vadd.f32 %v5733, %v5737
  %v5762 = vadd.f32 %v5734, %v5738
  %v5763 = vadd.f32 %v5735, %v5739
  %v5764 = vadd.f32 %v5736, %v5740
  %v5765 = vadd.f32 %v5741, %v5745
  %v5766 = vadd.f32 %v5742, %v5746
  %v5767 = vadd.f32 %v5743, %v5747
  %v5768 = vadd.f32 %v5744, %v5748
  %v5769 = vadd.f32 %v5749, %v5753
  %v5770 = vadd.f32 %v5750, %v5754
  %v5771 = vadd.f32 %v5751, %v5755
  %v5772 = vadd.f32 %v5752, %v5756
  %v5773 = vadd.f32 %v5757, %v5761
  %v5774 = vadd.f32 %v5758, %v5762
  %v5775 = vadd.f32 %v5759, %v5763
  %v5776 = vadd.f32 %v5760, %v5764
  %v5777 = vadd.f32 %v5765, %v5769
  %v5778 = vadd.f32 %v5766, %v5770
  %v5779 = vadd.f32 %v5767, %v5771
  %v5780 = vadd.f32 %v5768, %v5772
  %v5781 = vadd.f32 %v5777, %v5773
  %v5782 = vadd.f32 %v5778, %v5774
  %v5783 = vadd.f32 %v5779, %v5775
  %v5784 = vadd.f32 %v5780, %v5776
  %5785 = vmatprep.subr.mxu0 0.0
  %5786 = vmatpush1.msra.mxu0 %v5781
  %5787 = vmatprep.subr.mxu0 0.0
  %5788 = vmatpush1.msra.mxu0 %v5782
  %5789 = vmatprep.subr.mxu0 0.0
  %5790 = vmatpush1.msra.mxu0 %v5783
  %5791 = vmatprep.subr.mxu0 0.0
  %5792 = vmatpush1.msra.mxu0 %v5784
  %5793 = vmatprep.subr.mxu0 0.0
  %5794 = vmatpush1.msra.mxu0 0.0
  %5795 = vmatprep.subr.mxu0 0.0
  %5796 = vmatpush1.msra.mxu0 0.0
  %5797 = vmatprep.subr.mxu0 0.0
  %5798 = vmatpush1.msra.mxu0 0.0
  %5799 = vmatprep.subr.mxu0 0.0
  %5800 = vmatpush1.msra.mxu0 0.0
  %5801 = vmatprep.subr.mxu0 0.0
  %5802 = vmatpush1.msra.mxu0 0.0
  %5803 = vmatprep.subr.mxu0 0.0
  %5804 = vmatpush1.msra.mxu0 0.0
  %5805 = vmatprep.subr.mxu0 0.0
  %5806 = vmatpush1.msra.mxu0 0.0
  %5807 = vmatprep.subr.mxu0 0.0
  %5808 = vmatpush1.msra.mxu0 0.0
  %5809 = vmatprep.subr.mxu0 0.0
  %5810 = vmatpush1.msra.mxu0 0.0
  %5811 = vmatprep.subr.mxu0 0.0
  %5812 = vmatpush1.msra.mxu0 0.0
  %5813 = vmatprep.subr.mxu0 0.0
  %5814 = vmatpush1.msra.mxu0 0.0
  %5815 = vmatprep.subr.mxu0 0.0
  %5816 = vmatpush1.msra.mxu0 0.0
  %5817 = vmatprep.subr.mxu0 0.0
  %5818 = vmatpush1.msra.mxu0 0.0
  %5819 = vmatprep.subr.mxu0 0.0
  %5820 = vmatpush1.msra.mxu0 0.0
  %5821 = vmatprep.subr.mxu0 0.0
  %5822 = vmatpush1.msra.mxu0 0.0
  %5823 = vmatprep.subr.mxu0 0.0
  %5824 = vmatpush1.msra.mxu0 0.0
  %5825 = vmatprep.subr.mxu0 0.0
  %5826 = vmatpush1.msra.mxu0 0.0
  %5827 = vmatprep.subr.mxu0 0.0
  %5828 = vmatpush1.msra.mxu0 0.0
  %5829 = vmatprep.subr.mxu0 0.0
  %5830 = vmatpush1.msra.mxu0 0.0
  %5831 = vmatprep.subr.mxu0 0.0
  %5832 = vmatpush1.msra.mxu0 0.0
  %5833 = vmatprep.subr.mxu0 0.0
  %5834 = vmatpush1.msra.mxu0 0.0
  %5835 = vmatprep.subr.mxu0 0.0
  %5836 = vmatpush1.msra.mxu0 0.0
  %5837 = vmatprep.subr.mxu0 0.0
  %5838 = vmatpush1.msra.mxu0 0.0
  %5839 = vmatprep.subr.mxu0 0.0
  %5840 = vmatpush1.msra.mxu0 0.0
  %5841 = vmatprep.subr.mxu0 0.0
  %5842 = vmatpush1.msra.mxu0 0.0
  %5843 = vmatprep.subr.mxu0 0.0
  %5844 = vmatpush1.msra.mxu0 0.0
  %5845 = vmatprep.subr.mxu0 0.0
  %5846 = vmatpush1.msra.mxu0 0.0
  %5847 = vmatprep.subr.mxu0 0.0
  %5848 = vmatpush1.msra.mxu0 0.0
  %5849 = vmatprep.mubr.f32.mxu0 0.0
  %5850 = vmatmul.mubr.f32.gmra.mrb[0].mxu0 %v3380
  %v5851 = vpop.f32.mrb[0].mxu0
  %v5852 = vadd.f32 0.0, %v5851
  %v5853 = vpop.f32.mrb[0].mxu0
  %5854 = vdwg.mxu0
  %v5855 = vmul.f32 %v5852, 0.03125
  %v5856 = vmul.f32 %v5781, %v5781
  %v5857 = vmul.f32 %v5782, %v5782
  %v5858 = vmul.f32 %v5783, %v5783
  %v5859 = vmul.f32 %v5784, %v5784
  %5860 = vmatprep.subr.mxu0 0.0
  %5861 = vmatpush1.msra.mxu0 %v5856
  %5862 = vmatprep.subr.mxu0 0.0
  %5863 = vmatpush1.msra.mxu0 %v5857
  %5864 = vmatprep.subr.mxu0 0.0
  %5865 = vmatpush1.msra.mxu0 %v5858
  %5866 = vmatprep.subr.mxu0 0.0
  %5867 = vmatpush1.msra.mxu0 %v5859
  %5868 = vmatprep.subr.mxu0 0.0
  %5869 = vmatpush1.msra.mxu0 0.0
  %5870 = vmatprep.subr.mxu0 0.0
  %5871 = vmatpush1.msra.mxu0 0.0
  %5872 = vmatprep.subr.mxu0 0.0
  %5873 = vmatpush1.msra.mxu0 0.0
  %5874 = vmatprep.subr.mxu0 0.0
  %5875 = vmatpush1.msra.mxu0 0.0
  %5876 = vmatprep.subr.mxu0 0.0
  %5877 = vmatpush1.msra.mxu0 0.0
  %5878 = vmatprep.subr.mxu0 0.0
  %5879 = vmatpush1.msra.mxu0 0.0
  %5880 = vmatprep.subr.mxu0 0.0
  %5881 = vmatpush1.msra.mxu0 0.0
  %5882 = vmatprep.subr.mxu0 0.0
  %5883 = vmatpush1.msra.mxu0 0.0
  %5884 = vmatprep.subr.mxu0 0.0
  %5885 = vmatpush1.msra.mxu0 0.0
  %5886 = vmatprep.subr.mxu0 0.0
  %5887 = vmatpush1.msra.mxu0 0.0
  %5888 = vmatprep.subr.mxu0 0.0
  %5889 = vmatpush1.msra.mxu0 0.0
  %5890 = vmatprep.subr.mxu0 0.0
  %5891 = vmatpush1.msra.mxu0 0.0
  %5892 = vmatprep.subr.mxu0 0.0
  %5893 = vmatpush1.msra.mxu0 0.0
  %5894 = vmatprep.subr.mxu0 0.0
  %5895 = vmatpush1.msra.mxu0 0.0
  %5896 = vmatprep.subr.mxu0 0.0
  %5897 = vmatpush1.msra.mxu0 0.0
  %5898 = vmatprep.subr.mxu0 0.0
  %5899 = vmatpush1.msra.mxu0 0.0
  %5900 = vmatprep.subr.mxu0 0.0
  %5901 = vmatpush1.msra.mxu0 0.0
  %5902 = vmatprep.subr.mxu0 0.0
  %5903 = vmatpush1.msra.mxu0 0.0
  %5904 = vmatprep.subr.mxu0 0.0
  %5905 = vmatpush1.msra.mxu0 0.0
  %5906 = vmatprep.subr.mxu0 0.0
  %5907 = vmatpush1.msra.mxu0 0.0
  %5908 = vmatprep.subr.mxu0 0.0
  %5909 = vmatpush1.msra.mxu0 0.0
  %5910 = vmatprep.subr.mxu0 0.0
  %5911 = vmatpush1.msra.mxu0 0.0
  %5912 = vmatprep.subr.mxu0 0.0
  %5913 = vmatpush1.msra.mxu0 0.0
  %5914 = vmatprep.subr.mxu0 0.0
  %5915 = vmatpush1.msra.mxu0 0.0
  %5916 = vmatprep.subr.mxu0 0.0
  %5917 = vmatpush1.msra.mxu0 0.0
  %5918 = vmatprep.subr.mxu0 0.0
  %5919 = vmatpush1.msra.mxu0 0.0
  %5920 = vmatprep.subr.mxu0 0.0
  %5921 = vmatpush1.msra.mxu0 0.0
  %5922 = vmatprep.subr.mxu0 0.0
  %5923 = vmatpush1.msra.mxu0 0.0
  %5924 = vmatprep.mubr.f32.mxu0 0.0
  %5925 = vmatmul.mubr.f32.gmra.mrb[0].mxu0 %v3380
  %v5926 = vpop.f32.mrb[0].mxu0
  %v5927 = vadd.f32 0.0, %v5926
  %v5928 = vpop.f32.mrb[0].mxu0
  %5929 = vdwg.mxu0
  %v5930 = vmul.f32 %v5927, 0.03125
  %v5931 = vmul.f32 %v5855, %v5855
  %v5932 = vsub.f32 %v5930, %v5931
  %v5933 = vadd.f32 %v5932, 1e-05
  %v5934 = vrsqrt.pop %v5933
  %v5936 = vrot.slane %v5934, 6
  %v5938 = vmul.f32 %v3625, %v5936
  %v5940 = vrot.slane %v5938, 2
  %v5942 = vmul.f32 %v5855, %v5940
  %v5944 = vrot.slane %v5942, 5
  %v5946 = vsub.f32 %v3625, %v5944
  %v5947 = vlaneseq
  %v5948 = vshrl.u32 %v5947, 7
  %v5949 = vsub.s32 2, %v5948
  %v5950 = vrot.slane %v5938, %v5949
  %v5951 = vmul.f32 %v5781, %v5950
  %v5952 = vmul.f32 %v5782, %v5950
  %v5953 = vmul.f32 %v5783, %v5950
  %v5954 = vmul.f32 %v5784, %v5950
  %v5955 = vlaneseq
  %v5956 = vshrl.u32 %v5955, 7
  %v5957 = vsub.s32 3, %v5956
  %v5958 = vrot.slane %v5946, %v5957
  %v5959 = vadd.f32 %v5951, %v5958
  %v5960 = vadd.f32 %v5952, %v5958
  %v5961 = vadd.f32 %v5953, %v5958
  %v5962 = vadd.f32 %v5954, %v5958
  %v5963 = vadd.f32 %v3620, %v5959
  %v5964 = vadd.f32 %v3621, %v5960
  %v5965 = vadd.f32 %v3622, %v5961
  %v5966 = vadd.f32 %v3623, %v5962
  %v5967 = vmax.f32 %v5963, 0.0
  %v5968 = vmax.f32 %v5964, 0.0
  %v5969 = vmax.f32 %v5965, 0.0
  %v5970 = vmax.f32 %v5966, 0.0
  %v5971 = vand.u32 2147483647, %v5963
  %v5972 = vand.u32 2147483647, %v5964
  %v5973 = vand.u32 2147483647, %v5965
  %v5974 = vand.u32 2147483647, %v5966
  %v5975 = vsub.f32 0.0, %v5971
  %v5976 = vsub.f32 0.0, %v5972
  %v5977 = vsub.f32 0.0, %v5973
  %v5978 = vsub.f32 0.0, %v5974
  %v5979 = vmul.f32 %v5975, 1.442695
  %v5980 = vpow.pop %v5979
  %v5981 = vmul.f32 %v5976, 1.442695
  %v5982 = vpow.pop %v5981
  %v5983 = vmul.f32 %v5977, 1.442695
  %v5984 = vpow.pop %v5983
  %v5985 = vmul.f32 %v5978, 1.442695
  %v5986 = vpow.pop %v5985
  %v5987 = vadd.f32 %v5980, 1.0
  %v5988 = vlog2.pop %v5987
  %v5989 = vmul.f32 %v5988, 0.6931472
  %v5990 = vmul.f32 -0.5, %v5980
  %v5991 = vadd.f32 %v5990, 1.0
  %v5992 = vmul.f32 %v5991, %v5980
  %v5993 = vand.u32 2147483647, %v5980
  %vm5994 = vcmp.lt.f32.partialorder %v5993, 0.0004427343
  %v5995 = vsel %vm5994, %v5992, %v5989
  %v5996 = vadd.f32 %v5982, 1.0
  %v5997 = vlog2.pop %v5996
  %v5998 = vmul.f32 %v5997, 0.6931472
  %v5999 = vmul.f32 -0.5, %v5982
  %v6000 = vadd.f32 %v5999, 1.0
  %v6001 = vmul.f32 %v6000, %v5982
  %v6002 = vand.u32 2147483647, %v5982
  %vm6003 = vcmp.lt.f32.partialorder %v6002, 0.0004427343
  %v6004 = vsel %vm6003, %v6001, %v5998
  %v6005 = vadd.f32 %v5984, 1.0
  %v6006 = vlog2.pop %v6005
  %v6007 = vmul.f32 %v6006, 0.6931472
  %v6008 = vmul.f32 -0.5, %v5984
  %v6009 = vadd.f32 %v6008, 1.0
  %v6010 = vmul.f32 %v6009, %v5984
  %v6011 = vand.u32 2147483647, %v5984
  %vm6012 = vcmp.lt.f32.partialorder %v6011, 0.0004427343
  %v6013 = vsel %vm6012, %v6010, %v6007
  %v6014 = vadd.f32 %v5986, 1.0
  %v6015 = vlog2.pop %v6014
  %v6016 = vmul.f32 %v6015, 0.6931472
  %v6017 = vmul.f32 -0.5, %v5986
  %v6018 = vadd.f32 %v6017, 1.0
  %v6019 = vmul.f32 %v6018, %v5986
  %v6020 = vand.u32 2147483647, %v5986
  %vm6021 = vcmp.lt.f32.partialorder %v6020, 0.0004427343
  %v6022 = vsel %vm6021, %v6019, %v6016
  %v6023 = vadd.f32 %v5967, %v5995
  %v6024 = vadd.f32 %v5968, %v6004
  %v6025 = vadd.f32 %v5969, %v6013
  %v6026 = vadd.f32 %v5970, %v6022
  %s6027 = scalar_lea.vmem %s7, 8
  %v6028 = vld [vmem:[%s6027] sm:$0xf]
  %s6029 = scalar_lea.vmem %s5, 256
  %v6030 = vld [vmem:[%s6029] sm:$0xff]
  %v6031 = vld [vmem:[%s6029 + $0x8] sm:$0xff]
  %v6032 = vld [vmem:[%s6029 + $0x10] sm:$0xff]
  %v6033 = vld [vmem:[%s6029 + $0x18] sm:$0xff]
  %v6034 = vld [vmem:[%s6029 + $0x20] sm:$0xff]
  %v6035 = vld [vmem:[%s6029 + $0x28] sm:$0xff]
  %v6036 = vld [vmem:[%s6029 + $0x30] sm:$0xff]
  %v6037 = vld [vmem:[%s6029 + $0x38] sm:$0xff]
  %v6038 = vld [vmem:[%s6029 + $0x40] sm:$0xff]
  %v6039 = vld [vmem:[%s6029 + $0x48] sm:$0xff]
  %v6040 = vld [vmem:[%s6029 + $0x50] sm:$0xff]
  %v6041 = vld [vmem:[%s6029 + $0x58] sm:$0xff]
  %v6042 = vld [vmem:[%s6029 + $0x60] sm:$0xff]
  %v6043 = vld [vmem:[%s6029 + $0x68] sm:$0xff]
  %v6044 = vld [vmem:[%s6029 + $0x70] sm:$0xff]
  %v6045 = vld [vmem:[%s6029 + $0x78] sm:$0xff]
  %v6047 = vsel %vm1091, %v6023, 0
  %v6050 = vsel %vm1091, %v6024, 0
  %v6053 = vsel %vm1091, %v6025, 0
  %v6056 = vsel %vm1091, %v6026, 0
  %6058 = vmatprep.subr.mxu0 %v6031
  %6059 = vmatpush1.msra.mxu0 %v6030
  %6060 = vmatprep.subr.mxu0 %v6033
  %6061 = vmatpush1.msra.mxu0 %v6032
  %6062 = vmatprep.subr.mxu0 %v6035
  %6063 = vmatpush1.msra.mxu0 %v6034
  %6064 = vmatprep.subr.mxu0 %v6037
  %6065 = vmatpush1.msra.mxu0 %v6036
  %6066 = vmatprep.subr.mxu0 %v6039
  %6067 = vmatpush1.msra.mxu0 %v6038
  %6068 = vmatprep.subr.mxu0 %v6041
  %6069 = vmatpush1.msra.mxu0 %v6040
  %6070 = vmatprep.subr.mxu0 %v6043
  %6071 = vmatpush1.msra.mxu0 %v6042
  %6072 = vmatprep.subr.mxu0 %v6045
  %6073 = vmatpush1.msra.mxu0 %v6044
  %6074 = vmatprep.subr.mxu0 0.0
  %6075 = vmatpush1.msra.mxu0 0.0
  %6076 = vmatprep.subr.mxu0 0.0
  %6077 = vmatpush1.msra.mxu0 0.0
  %6078 = vmatprep.subr.mxu0 0.0
  %6079 = vmatpush1.msra.mxu0 0.0
  %6080 = vmatprep.subr.mxu0 0.0
  %6081 = vmatpush1.msra.mxu0 0.0
  %6082 = vmatprep.subr.mxu0 0.0
  %6083 = vmatpush1.msra.mxu0 0.0
  %6084 = vmatprep.subr.mxu0 0.0
  %6085 = vmatpush1.msra.mxu0 0.0
  %6086 = vmatprep.subr.mxu0 0.0
  %6087 = vmatpush1.msra.mxu0 0.0
  %6088 = vmatprep.subr.mxu0 0.0
  %6089 = vmatpush1.msra.mxu0 0.0
  %6090 = vmatprep.subr.mxu0 0.0
  %6091 = vmatpush1.msra.mxu0 0.0
  %6092 = vmatprep.subr.mxu0 0.0
  %6093 = vmatpush1.msra.mxu0 0.0
  %6094 = vmatprep.subr.mxu0 0.0
  %6095 = vmatpush1.msra.mxu0 0.0
  %6096 = vmatprep.subr.mxu0 0.0
  %6097 = vmatpush1.msra.mxu0 0.0
  %6098 = vmatprep.subr.mxu0 0.0
  %6099 = vmatpush1.msra.mxu0 0.0
  %6100 = vmatprep.subr.mxu0 0.0
  %6101 = vmatpush1.msra.mxu0 0.0
  %6102 = vmatprep.subr.mxu0 0.0
  %6103 = vmatpush1.msra.mxu0 0.0
  %6104 = vmatprep.subr.mxu0 0.0
  %6105 = vmatpush1.msra.mxu0 0.0
  %6106 = vmatprep.subr.mxu0 0.0
  %6107 = vmatpush1.msra.mxu0 0.0
  %6108 = vmatprep.subr.mxu0 0.0
  %6109 = vmatpush1.msra.mxu0 0.0
  %6110 = vmatprep.subr.mxu0 0.0
  %6111 = vmatpush1.msra.mxu0 0.0
  %6112 = vmatprep.subr.mxu0 0.0
  %6113 = vmatpush1.msra.mxu0 0.0
  %6114 = vmatprep.subr.mxu0 0.0
  %6115 = vmatpush1.msra.mxu0 0.0
  %6116 = vmatprep.subr.mxu0 0.0
  %6117 = vmatpush1.msra.mxu0 0.0
  %6118 = vmatprep.subr.mxu0 0.0
  %6119 = vmatpush1.msra.mxu0 0.0
  %6120 = vmatprep.subr.mxu0 0.0
  %6121 = vmatpush1.msra.mxu0 0.0
  %6122 = vmatprep.mubr.f32.mxu0 0.0
  %6123 = vmatmul.mubr.f32.gmra.mrb[0].mxu0 %v6047
  %v6124 = vpop.f32.mrb[0].mxu0
  %v6125 = vadd.f32 0.0, %v6124
  %v6126 = vpop.f32.mrb[0].mxu0
  %v6127 = vadd.f32 0.0, %v6126
  %6128 = vmatprep.mubr.f32.mxu0 0.0
  %6129 = vmatmul.mubr.f32.gmra.mrb[0].mxu0 %v6050
  %v6130 = vpop.f32.mrb[0].mxu0
  %v6131 = vadd.f32 0.0, %v6130
  %v6132 = vpop.f32.mrb[0].mxu0
  %v6133 = vadd.f32 0.0, %v6132
  %6134 = vmatprep.mubr.f32.mxu0 0.0
  %6135 = vmatmul.mubr.f32.gmra.mrb[0].mxu0 %v6053
  %v6136 = vpop.f32.mrb[0].mxu0
  %v6137 = vadd.f32 0.0, %v6136
  %v6138 = vpop.f32.mrb[0].mxu0
  %v6139 = vadd.f32 0.0, %v6138
  %6140 = vmatprep.mubr.f32.mxu0 0.0
  %6141 = vmatmul.mubr.f32.gmra.mrb[0].mxu0 %v6056
  %v6142 = vpop.f32.mrb[0].mxu0
  %v6143 = vadd.f32 0.0, %v6142
  %v6144 = vpop.f32.mrb[0].mxu0
  %v6145 = vadd.f32 0.0, %v6144
  %6146 = vdwg.mxu0
  %6147 = vmatprep.subr.mxu0 0.0
  %6148 = vmatpush1.msra.mxu0 %v6125
  %6149 = vmatprep.subr.mxu0 0.0
  %6150 = vmatpush1.msra.mxu0 %v6131
  %6151 = vmatprep.subr.mxu0 0.0
  %6152 = vmatpush1.msra.mxu0 %v6137
  %6153 = vmatprep.subr.mxu0 0.0
  %6154 = vmatpush1.msra.mxu0 %v6143
  %6155 = vmatprep.subr.mxu0 0.0
  %6156 = vmatpush1.msra.mxu0 %v6127
  %6157 = vmatprep.subr.mxu0 0.0
  %6158 = vmatpush1.msra.mxu0 %v6133
  %6159 = vmatprep.subr.mxu0 0.0
  %6160 = vmatpush1.msra.mxu0 %v6139
  %6161 = vmatprep.subr.mxu0 0.0
  %6162 = vmatpush1.msra.mxu0 %v6145
  %6163 = vmatprep.subr.mxu0 0.0
  %6164 = vmatpush1.msra.mxu0 0.0
  %6165 = vmatprep.subr.mxu0 0.0
  %6166 = vmatpush1.msra.mxu0 0.0
  %6167 = vmatprep.subr.mxu0 0.0
  %6168 = vmatpush1.msra.mxu0 0.0
  %6169 = vmatprep.subr.mxu0 0.0
  %6170 = vmatpush1.msra.mxu0 0.0
  %6171 = vmatprep.subr.mxu0 0.0
  %6172 = vmatpush1.msra.mxu0 0.0
  %6173 = vmatprep.subr.mxu0 0.0
  %6174 = vmatpush1.msra.mxu0 0.0
  %6175 = vmatprep.subr.mxu0 0.0
  %6176 = vmatpush1.msra.mxu0 0.0
  %6177 = vmatprep.subr.mxu0 0.0
  %6178 = vmatpush1.msra.mxu0 0.0
  %6179 = vmatprep.subr.mxu0 0.0
  %6180 = vmatpush1.msra.mxu0 0.0
  %6181 = vmatprep.subr.mxu0 0.0
  %6182 = vmatpush1.msra.mxu0 0.0
  %6183 = vmatprep.subr.mxu0 0.0
  %6184 = vmatpush1.msra.mxu0 0.0
  %6185 = vmatprep.subr.mxu0 0.0
  %6186 = vmatpush1.msra.mxu0 0.0
  %6187 = vmatprep.subr.mxu0 0.0
  %6188 = vmatpush1.msra.mxu0 0.0
  %6189 = vmatprep.subr.mxu0 0.0
  %6190 = vmatpush1.msra.mxu0 0.0
  %6191 = vmatprep.subr.mxu0 0.0
  %6192 = vmatpush1.msra.mxu0 0.0
  %6193 = vmatprep.subr.mxu0 0.0
  %6194 = vmatpush1.msra.mxu0 0.0
  %6195 = vmatprep.subr.mxu0 0.0
  %6196 = vmatpush1.msra.mxu0 0.0
  %6197 = vmatprep.subr.mxu0 0.0
  %6198 = vmatpush1.msra.mxu0 0.0
  %6199 = vmatprep.subr.mxu0 0.0
  %6200 = vmatpush1.msra.mxu0 0.0
  %6201 = vmatprep.subr.mxu0 0.0
  %6202 = vmatpush1.msra.mxu0 0.0
  %6203 = vmatprep.subr.mxu0 0.0
  %6204 = vmatpush1.msra.mxu0 0.0
  %6205 = vmatprep.subr.mxu0 0.0
  %6206 = vmatpush1.msra.mxu0 0.0
  %6207 = vmatprep.subr.mxu0 0.0
  %6208 = vmatpush1.msra.mxu0 0.0
  %6209 = vmatprep.subr.mxu0 0.0
  %6210 = vmatpush1.msra.mxu0 0.0
  %6211 = vmatprep.mubr.f32.mxu0 0.0
  %6212 = vmatmul.mubr.f32.gmra.mrb[0].mxu0 %v1194
  %v6213 = vpop.f32.mrb[0].mxu0
  %v6214 = vadd.f32 %v836, %v6213
  %v6215 = vpop.f32.mrb[0].mxu0
  %6216 = vmatprep.mubr.f32.mxu0 0.0
  %6217 = vmatmul.mubr.f32.gmra.mrb[0].mxu0 %v1197
  %v6218 = vpop.f32.mrb[0].mxu0
  %v6219 = vadd.f32 %v841, %v6218
  %v6220 = vpop.f32.mrb[0].mxu0
  %6221 = vmatprep.mubr.f32.mxu0 0.0
  %6222 = vmatmul.mubr.f32.gmra.mrb[0].mxu0 %v1200
  %v6223 = vpop.f32.mrb[0].mxu0
  %v6224 = vadd.f32 %v846, %v6223
  %v6225 = vpop.f32.mrb[0].mxu0
  %6226 = vmatprep.mubr.f32.mxu0 0.0
  %6227 = vmatmul.mubr.f32.gmra.mrb[0].mxu0 %v1203
  %v6228 = vpop.f32.mrb[0].mxu0
  %v6229 = vadd.f32 %v851, %v6228
  %v6230 = vpop.f32.mrb[0].mxu0
  %6231 = vmatprep.mubr.f32.mxu0 0.0
  %6232 = vmatmul.mubr.f32.gmra.mrb[0].mxu0 %v1206
  %v6233 = vpop.f32.mrb[0].mxu0
  %v6234 = vadd.f32 %v856, %v6233
  %v6235 = vpop.f32.mrb[0].mxu0
  %6236 = vmatprep.mubr.f32.mxu0 0.0
  %6237 = vmatmul.mubr.f32.gmra.mrb[0].mxu0 %v1209
  %v6238 = vpop.f32.mrb[0].mxu0
  %v6239 = vadd.f32 %v861, %v6238
  %v6240 = vpop.f32.mrb[0].mxu0
  %6241 = vmatprep.mubr.f32.mxu0 0.0
  %6242 = vmatmul.mubr.f32.gmra.mrb[0].mxu0 %v1212
  %v6243 = vpop.f32.mrb[0].mxu0
  %v6244 = vadd.f32 %v866, %v6243
  %v6245 = vpop.f32.mrb[0].mxu0
  %6246 = vmatprep.mubr.f32.mxu0 0.0
  %6247 = vmatmul.mubr.f32.gmra.mrb[0].mxu0 %v1215
  %v6248 = vpop.f32.mrb[0].mxu0
  %v6249 = vadd.f32 %v871, %v6248
  %v6250 = vpop.f32.mrb[0].mxu0
  %6251 = vmatprep.mubr.f32.mxu0 0.0
  %6252 = vmatmul.mubr.f32.gmra.mrb[0].mxu0 %v1218
  %v6253 = vpop.f32.mrb[0].mxu0
  %v6254 = vadd.f32 %v876, %v6253
  %v6255 = vpop.f32.mrb[0].mxu0
  %6256 = vmatprep.mubr.f32.mxu0 0.0
  %6257 = vmatmul.mubr.f32.gmra.mrb[0].mxu0 %v1221
  %v6258 = vpop.f32.mrb[0].mxu0
  %v6259 = vadd.f32 %v881, %v6258
  %v6260 = vpop.f32.mrb[0].mxu0
  %6261 = vmatprep.mubr.f32.mxu0 0.0
  %6262 = vmatmul.mubr.f32.gmra.mrb[0].mxu0 %v1224
  %v6263 = vpop.f32.mrb[0].mxu0
  %v6264 = vadd.f32 %v886, %v6263
  %v6265 = vpop.f32.mrb[0].mxu0
  %6266 = vmatprep.mubr.f32.mxu0 0.0
  %6267 = vmatmul.mubr.f32.gmra.mrb[0].mxu0 %v1227
  %v6268 = vpop.f32.mrb[0].mxu0
  %v6269 = vadd.f32 %v891, %v6268
  %v6270 = vpop.f32.mrb[0].mxu0
  %6271 = vmatprep.mubr.f32.mxu0 0.0
  %6272 = vmatmul.mubr.f32.gmra.mrb[0].mxu0 %v1230
  %v6273 = vpop.f32.mrb[0].mxu0
  %v6274 = vadd.f32 %v896, %v6273
  %v6275 = vpop.f32.mrb[0].mxu0
  %6276 = vmatprep.mubr.f32.mxu0 0.0
  %6277 = vmatmul.mubr.f32.gmra.mrb[0].mxu0 %v1233
  %v6278 = vpop.f32.mrb[0].mxu0
  %v6279 = vadd.f32 %v901, %v6278
  %v6280 = vpop.f32.mrb[0].mxu0
  %6281 = vmatprep.mubr.f32.mxu0 0.0
  %6282 = vmatmul.mubr.f32.gmra.mrb[0].mxu0 %v1236
  %v6283 = vpop.f32.mrb[0].mxu0
  %v6284 = vadd.f32 %v906, %v6283
  %v6285 = vpop.f32.mrb[0].mxu0
  %6286 = vmatprep.mubr.f32.mxu0 0.0
  %6287 = vmatmul.mubr.f32.gmra.mrb[0].mxu0 %v1239
  %v6288 = vpop.f32.mrb[0].mxu0
  %v6289 = vadd.f32 %v911, %v6288
  %v6290 = vpop.f32.mrb[0].mxu0
  %6291 = vmatprep.mubr.f32.mxu0 0.0
  %6292 = vmatmul.mubr.f32.gmra.mrb[0].mxu0 %v1242
  %v6293 = vpop.f32.mrb[0].mxu0
  %v6294 = vadd.f32 %v916, %v6293
  %v6295 = vpop.f32.mrb[0].mxu0
  %6296 = vmatprep.mubr.f32.mxu0 0.0
  %6297 = vmatmul.mubr.f32.gmra.mrb[0].mxu0 %v1245
  %v6298 = vpop.f32.mrb[0].mxu0
  %v6299 = vadd.f32 %v921, %v6298
  %v6300 = vpop.f32.mrb[0].mxu0
  %6301 = vmatprep.mubr.f32.mxu0 0.0
  %6302 = vmatmul.mubr.f32.gmra.mrb[0].mxu0 %v1248
  %v6303 = vpop.f32.mrb[0].mxu0
  %v6304 = vadd.f32 %v926, %v6303
  %v6305 = vpop.f32.mrb[0].mxu0
  %6306 = vmatprep.mubr.f32.mxu0 0.0
  %6307 = vmatmul.mubr.f32.gmra.mrb[0].mxu0 %v1251
  %v6308 = vpop.f32.mrb[0].mxu0
  %v6309 = vadd.f32 %v931, %v6308
  %v6310 = vpop.f32.mrb[0].mxu0
  %6311 = vmatprep.mubr.f32.mxu0 0.0
  %6312 = vmatmul.mubr.f32.gmra.mrb[0].mxu0 %v1254
  %v6313 = vpop.f32.mrb[0].mxu0
  %v6314 = vadd.f32 %v936, %v6313
  %v6315 = vpop.f32.mrb[0].mxu0
  %6316 = vmatprep.mubr.f32.mxu0 0.0
  %6317 = vmatmul.mubr.f32.gmra.mrb[0].mxu0 %v1257
  %v6318 = vpop.f32.mrb[0].mxu0
  %v6319 = vadd.f32 %v941, %v6318
  %v6320 = vpop.f32.mrb[0].mxu0
  %6321 = vmatprep.mubr.f32.mxu0 0.0
  %6322 = vmatmul.mubr.f32.gmra.mrb[0].mxu0 %v1260
  %v6323 = vpop.f32.mrb[0].mxu0
  %v6324 = vadd.f32 %v946, %v6323
  %v6325 = vpop.f32.mrb[0].mxu0
  %6326 = vmatprep.mubr.f32.mxu0 0.0
  %6327 = vmatmul.mubr.f32.gmra.mrb[0].mxu0 %v1263
  %v6328 = vpop.f32.mrb[0].mxu0
  %v6329 = vadd.f32 %v951, %v6328
  %v6330 = vpop.f32.mrb[0].mxu0
  %6331 = vmatprep.mubr.f32.mxu0 0.0
  %6332 = vmatmul.mubr.f32.gmra.mrb[0].mxu0 %v1266
  %v6333 = vpop.f32.mrb[0].mxu0
  %v6334 = vadd.f32 %v956, %v6333
  %v6335 = vpop.f32.mrb[0].mxu0
  %6336 = vmatprep.mubr.f32.mxu0 0.0
  %6337 = vmatmul.mubr.f32.gmra.mrb[0].mxu0 %v1269
  %v6338 = vpop.f32.mrb[0].mxu0
  %v6339 = vadd.f32 %v961, %v6338
  %v6340 = vpop.f32.mrb[0].mxu0
  %6341 = vmatprep.mubr.f32.mxu0 0.0
  %6342 = vmatmul.mubr.f32.gmra.mrb[0].mxu0 %v1272
  %v6343 = vpop.f32.mrb[0].mxu0
  %v6344 = vadd.f32 %v966, %v6343
  %v6345 = vpop.f32.mrb[0].mxu0
  %6346 = vmatprep.mubr.f32.mxu0 0.0
  %6347 = vmatmul.mubr.f32.gmra.mrb[0].mxu0 %v1275
  %v6348 = vpop.f32.mrb[0].mxu0
  %v6349 = vadd.f32 %v971, %v6348
  %v6350 = vpop.f32.mrb[0].mxu0
  %6351 = vmatprep.mubr.f32.mxu0 0.0
  %6352 = vmatmul.mubr.f32.gmra.mrb[0].mxu0 %v1278
  %v6353 = vpop.f32.mrb[0].mxu0
  %v6354 = vadd.f32 %v976, %v6353
  %v6355 = vpop.f32.mrb[0].mxu0
  %6356 = vmatprep.mubr.f32.mxu0 0.0
  %6357 = vmatmul.mubr.f32.gmra.mrb[0].mxu0 %v1281
  %v6358 = vpop.f32.mrb[0].mxu0
  %v6359 = vadd.f32 %v981, %v6358
  %v6360 = vpop.f32.mrb[0].mxu0
  %6361 = vmatprep.mubr.f32.mxu0 0.0
  %6362 = vmatmul.mubr.f32.gmra.mrb[0].mxu0 %v1284
  %v6363 = vpop.f32.mrb[0].mxu0
  %v6364 = vadd.f32 %v986, %v6363
  %v6365 = vpop.f32.mrb[0].mxu0
  %6366 = vmatprep.mubr.f32.mxu0 0.0
  %6367 = vmatmul.mubr.f32.gmra.mrb[0].mxu0 %v1287
  %v6368 = vpop.f32.mrb[0].mxu0
  %v6369 = vadd.f32 %v991, %v6368
  %v6370 = vpop.f32.mrb[0].mxu0
  %6371 = vmatprep.mubr.f32.mxu0 0.0
  %6372 = vmatmul.mubr.f32.gmra.mrb[0].mxu0 %v1290
  %v6373 = vpop.f32.mrb[0].mxu0
  %v6374 = vadd.f32 %v996, %v6373
  %v6375 = vpop.f32.mrb[0].mxu0
  %6376 = vmatprep.mubr.f32.mxu0 0.0
  %6377 = vmatmul.mubr.f32.gmra.mrb[0].mxu0 %v1293
  %v6378 = vpop.f32.mrb[0].mxu0
  %v6379 = vadd.f32 %v1001, %v6378
  %v6380 = vpop.f32.mrb[0].mxu0
  %6381 = vmatprep.mubr.f32.mxu0 0.0
  %6382 = vmatmul.mubr.f32.gmra.mrb[0].mxu0 %v1296
  %v6383 = vpop.f32.mrb[0].mxu0
  %v6384 = vadd.f32 %v1006, %v6383
  %v6385 = vpop.f32.mrb[0].mxu0
  %6386 = vmatprep.mubr.f32.mxu0 0.0
  %6387 = vmatmul.mubr.f32.gmra.mrb[0].mxu0 %v1299
  %v6388 = vpop.f32.mrb[0].mxu0
  %v6389 = vadd.f32 %v1011, %v6388
  %v6390 = vpop.f32.mrb[0].mxu0
  %6391 = vmatprep.mubr.f32.mxu0 0.0
  %6392 = vmatmul.mubr.f32.gmra.mrb[0].mxu0 %v1302
  %v6393 = vpop.f32.mrb[0].mxu0
  %v6394 = vadd.f32 %v1016, %v6393
  %v6395 = vpop.f32.mrb[0].mxu0
  %6396 = vmatprep.mubr.f32.mxu0 0.0
  %6397 = vmatmul.mubr.f32.gmra.mrb[0].mxu0 %v1305
  %v6398 = vpop.f32.mrb[0].mxu0
  %v6399 = vadd.f32 %v1021, %v6398
  %v6400 = vpop.f32.mrb[0].mxu0
  %6401 = vmatprep.mubr.f32.mxu0 0.0
  %6402 = vmatmul.mubr.f32.gmra.mrb[0].mxu0 %v1308
  %v6403 = vpop.f32.mrb[0].mxu0
  %v6404 = vadd.f32 %v1026, %v6403
  %v6405 = vpop.f32.mrb[0].mxu0
  %6406 = vmatprep.mubr.f32.mxu0 0.0
  %6407 = vmatmul.mubr.f32.gmra.mrb[0].mxu0 %v1311
  %v6408 = vpop.f32.mrb[0].mxu0
  %v6409 = vadd.f32 %v1031, %v6408
  %v6410 = vpop.f32.mrb[0].mxu0
  %6411 = vmatprep.mubr.f32.mxu0 0.0
  %6412 = vmatmul.mubr.f32.gmra.mrb[0].mxu0 %v1314
  %v6413 = vpop.f32.mrb[0].mxu0
  %v6414 = vadd.f32 %v1036, %v6413
  %v6415 = vpop.f32.mrb[0].mxu0
  %6416 = vmatprep.mubr.f32.mxu0 0.0
  %6417 = vmatmul.mubr.f32.gmra.mrb[0].mxu0 %v1317
  %v6418 = vpop.f32.mrb[0].mxu0
  %v6419 = vadd.f32 %v1041, %v6418
  %v6420 = vpop.f32.mrb[0].mxu0
  %6421 = vmatprep.mubr.f32.mxu0 0.0
  %6422 = vmatmul.mubr.f32.gmra.mrb[0].mxu0 %v1320
  %v6423 = vpop.f32.mrb[0].mxu0
  %v6424 = vadd.f32 %v1046, %v6423
  %v6425 = vpop.f32.mrb[0].mxu0
  %6426 = vmatprep.mubr.f32.mxu0 0.0
  %6427 = vmatmul.mubr.f32.gmra.mrb[0].mxu0 %v1323
  %v6428 = vpop.f32.mrb[0].mxu0
  %v6429 = vadd.f32 %v1051, %v6428
  %v6430 = vpop.f32.mrb[0].mxu0
  %6431 = vmatprep.mubr.f32.mxu0 0.0
  %6432 = vmatmul.mubr.f32.gmra.mrb[0].mxu0 %v1326
  %v6433 = vpop.f32.mrb[0].mxu0
  %v6434 = vadd.f32 %v1056, %v6433
  %v6435 = vpop.f32.mrb[0].mxu0
  %6436 = vmatprep.mubr.f32.mxu0 0.0
  %6437 = vmatmul.mubr.f32.gmra.mrb[0].mxu0 %v1329
  %v6438 = vpop.f32.mrb[0].mxu0
  %v6439 = vadd.f32 %v1061, %v6438
  %v6440 = vpop.f32.mrb[0].mxu0
  %6441 = vmatprep.mubr.f32.mxu0 0.0
  %6442 = vmatmul.mubr.f32.gmra.mrb[0].mxu0 %v1332
  %v6443 = vpop.f32.mrb[0].mxu0
  %v6444 = vadd.f32 %v1066, %v6443
  %v6445 = vpop.f32.mrb[0].mxu0
  %6446 = vmatprep.mubr.f32.mxu0 0.0
  %6447 = vmatmul.mubr.f32.gmra.mrb[0].mxu0 %v1335
  %v6448 = vpop.f32.mrb[0].mxu0
  %v6449 = vadd.f32 %v1071, %v6448
  %v6450 = vpop.f32.mrb[0].mxu0
  %6451 = vdwg.mxu0
  %6452 = vmatprep.subr.mxu0 0.0
  %6453 = vmatpush1.msra.mxu0 %v6214
  %6454 = vmatprep.subr.mxu0 0.0
  %6455 = vmatpush1.msra.mxu0 %v6219
  %6456 = vmatprep.subr.mxu0 0.0
  %6457 = vmatpush1.msra.mxu0 %v6224
  %6458 = vmatprep.subr.mxu0 0.0
  %6459 = vmatpush1.msra.mxu0 %v6229
  %6460 = vmatprep.subr.mxu0 0.0
  %6461 = vmatpush1.msra.mxu0 %v6234
  %6462 = vmatprep.subr.mxu0 0.0
  %6463 = vmatpush1.msra.mxu0 %v6239
  %6464 = vmatprep.subr.mxu0 0.0
  %6465 = vmatpush1.msra.mxu0 %v6244
  %6466 = vmatprep.subr.mxu0 0.0
  %6467 = vmatpush1.msra.mxu0 %v6249
  %6468 = vmatprep.subr.mxu0 0.0
  %6469 = vmatpush1.msra.mxu0 %v6254
  %6470 = vmatprep.subr.mxu0 0.0
  %6471 = vmatpush1.msra.mxu0 %v6259
  %6472 = vmatprep.subr.mxu0 0.0
  %6473 = vmatpush1.msra.mxu0 %v6264
  %6474 = vmatprep.subr.mxu0 0.0
  %6475 = vmatpush1.msra.mxu0 %v6269
  %6476 = vmatprep.subr.mxu0 0.0
  %6477 = vmatpush1.msra.mxu0 %v6274
  %6478 = vmatprep.subr.mxu0 0.0
  %6479 = vmatpush1.msra.mxu0 %v6279
  %6480 = vmatprep.subr.mxu0 0.0
  %6481 = vmatpush1.msra.mxu0 %v6284
  %6482 = vmatprep.subr.mxu0 0.0
  %6483 = vmatpush1.msra.mxu0 %v6289
  %6484 = vmatprep.subr.mxu0 0.0
  %6485 = vmatpush1.msra.mxu0 %v6294
  %6486 = vmatprep.subr.mxu0 0.0
  %6487 = vmatpush1.msra.mxu0 %v6299
  %6488 = vmatprep.subr.mxu0 0.0
  %6489 = vmatpush1.msra.mxu0 %v6304
  %6490 = vmatprep.subr.mxu0 0.0
  %6491 = vmatpush1.msra.mxu0 %v6309
  %6492 = vmatprep.subr.mxu0 0.0
  %6493 = vmatpush1.msra.mxu0 %v6314
  %6494 = vmatprep.subr.mxu0 0.0
  %6495 = vmatpush1.msra.mxu0 %v6319
  %6496 = vmatprep.subr.mxu0 0.0
  %6497 = vmatpush1.msra.mxu0 %v6324
  %6498 = vmatprep.subr.mxu0 0.0
  %6499 = vmatpush1.msra.mxu0 %v6329
  %6500 = vmatprep.subr.mxu0 0.0
  %6501 = vmatpush1.msra.mxu0 %v6334
  %6502 = vmatprep.subr.mxu0 0.0
  %6503 = vmatpush1.msra.mxu0 %v6339
  %6504 = vmatprep.subr.mxu0 0.0
  %6505 = vmatpush1.msra.mxu0 %v6344
  %6506 = vmatprep.subr.mxu0 0.0
  %6507 = vmatpush1.msra.mxu0 %v6349
  %6508 = vmatprep.subr.mxu0 0.0
  %6509 = vmatpush1.msra.mxu0 %v6354
  %6510 = vmatprep.subr.mxu0 0.0
  %6511 = vmatpush1.msra.mxu0 %v6359
  %6512 = vmatprep.subr.mxu0 0.0
  %6513 = vmatpush1.msra.mxu0 %v6364
  %6514 = vmatprep.subr.mxu0 0.0
  %6515 = vmatpush1.msra.mxu0 %v6369
  %6516 = vmatprep.mubr.f32.mxu0 1.0
  %6517 = vmatmul.mubr.f32.gmra.mrb[0].mxu0 1.0
  %v6518 = vpop.f32.mrb[0].mxu0
  %v6519 = vadd.f32 0.0, %v6518
  %v6520 = vpop.f32.mrb[0].mxu0
  %6521 = vdwg.mxu0
  %6522 = vmatprep.subr.mxu0 0.0
  %6523 = vmatpush1.msra.mxu0 %v6374
  %6524 = vmatprep.subr.mxu0 0.0
  %6525 = vmatpush1.msra.mxu0 %v6379
  %6526 = vmatprep.subr.mxu0 0.0
  %6527 = vmatpush1.msra.mxu0 %v6384
  %6528 = vmatprep.subr.mxu0 0.0
  %6529 = vmatpush1.msra.mxu0 %v6389
  %6530 = vmatprep.subr.mxu0 0.0
  %6531 = vmatpush1.msra.mxu0 %v6394
  %6532 = vmatprep.subr.mxu0 0.0
  %6533 = vmatpush1.msra.mxu0 %v6399
  %6534 = vmatprep.subr.mxu0 0.0
  %6535 = vmatpush1.msra.mxu0 %v6404
  %6536 = vmatprep.subr.mxu0 0.0
  %6537 = vmatpush1.msra.mxu0 %v6409
  %6538 = vmatprep.subr.mxu0 0.0
  %6539 = vmatpush1.msra.mxu0 %v6414
  %6540 = vmatprep.subr.mxu0 0.0
  %6541 = vmatpush1.msra.mxu0 %v6419
  %6542 = vmatprep.subr.mxu0 0.0
  %6543 = vmatpush1.msra.mxu0 %v6424
  %6544 = vmatprep.subr.mxu0 0.0
  %6545 = vmatpush1.msra.mxu0 %v6429
  %6546 = vmatprep.subr.mxu0 0.0
  %6547 = vmatpush1.msra.mxu0 %v6434
  %6548 = vmatprep.subr.mxu0 0.0
  %6549 = vmatpush1.msra.mxu0 %v6439
  %6550 = vmatprep.subr.mxu0 0.0
  %6551 = vmatpush1.msra.mxu0 %v6444
  %6552 = vmatprep.subr.mxu0 0.0
  %6553 = vmatpush1.msra.mxu0 %v6449
  %6554 = vmatprep.subr.mxu0 0.0
  %6555 = vmatpush1.msra.mxu0 0.0
  %6556 = vmatprep.subr.mxu0 0.0
  %6557 = vmatpush1.msra.mxu0 0.0
  %6558 = vmatprep.subr.mxu0 0.0
  %6559 = vmatpush1.msra.mxu0 0.0
  %6560 = vmatprep.subr.mxu0 0.0
  %6561 = vmatpush1.msra.mxu0 0.0
  %6562 = vmatprep.subr.mxu0 0.0
  %6563 = vmatpush1.msra.mxu0 0.0
  %6564 = vmatprep.subr.mxu0 0.0
  %6565 = vmatpush1.msra.mxu0 0.0
  %6566 = vmatprep.subr.mxu0 0.0
  %6567 = vmatpush1.msra.mxu0 0.0
  %6568 = vmatprep.subr.mxu0 0.0
  %6569 = vmatpush1.msra.mxu0 0.0
  %6570 = vmatprep.subr.mxu0 0.0
  %6571 = vmatpush1.msra.mxu0 0.0
  %6572 = vmatprep.subr.mxu0 0.0
  %6573 = vmatpush1.msra.mxu0 0.0
  %6574 = vmatprep.subr.mxu0 0.0
  %6575 = vmatpush1.msra.mxu0 0.0
  %6576 = vmatprep.subr.mxu0 0.0
  %6577 = vmatpush1.msra.mxu0 0.0
  %6578 = vmatprep.subr.mxu0 0.0
  %6579 = vmatpush1.msra.mxu0 0.0
  %6580 = vmatprep.subr.mxu0 0.0
  %6581 = vmatpush1.msra.mxu0 0.0
  %6582 = vmatprep.subr.mxu0 0.0
  %6583 = vmatpush1.msra.mxu0 0.0
  %6584 = vmatprep.subr.mxu0 0.0
  %6585 = vmatpush1.msra.mxu0 0.0
  %6586 = vmatprep.mubr.f32.mxu0 0.0
  %6587 = vmatmul.mubr.f32.gmra.mrb[0].mxu0 1.0
  %v6588 = vpop.f32.mrb[0].mxu0
  %v6589 = vadd.f32 %v6519, %v6588
  %v6590 = vpop.f32.mrb[0].mxu0
  %6591 = vdwg.mxu0
  %v6592 = vmul.f32 %v6589, 0.0026041667
  %v6593 = vmul.f32 %v6214, %v6214
  %v6594 = vmul.f32 %v6219, %v6219
  %v6595 = vmul.f32 %v6224, %v6224
  %v6596 = vmul.f32 %v6229, %v6229
  %v6597 = vmul.f32 %v6234, %v6234
  %v6598 = vmul.f32 %v6239, %v6239
  %v6599 = vmul.f32 %v6244, %v6244
  %v6600 = vmul.f32 %v6249, %v6249
  %v6601 = vmul.f32 %v6254, %v6254
  %v6602 = vmul.f32 %v6259, %v6259
  %v6603 = vmul.f32 %v6264, %v6264
  %v6604 = vmul.f32 %v6269, %v6269
  %v6605 = vmul.f32 %v6274, %v6274
  %v6606 = vmul.f32 %v6279, %v6279
  %v6607 = vmul.f32 %v6284, %v6284
  %v6608 = vmul.f32 %v6289, %v6289
  %v6609 = vmul.f32 %v6294, %v6294
  %v6610 = vmul.f32 %v6299, %v6299
  %v6611 = vmul.f32 %v6304, %v6304
  %v6612 = vmul.f32 %v6309, %v6309
  %v6613 = vmul.f32 %v6314, %v6314
  %v6614 = vmul.f32 %v6319, %v6319
  %v6615 = vmul.f32 %v6324, %v6324
  %v6616 = vmul.f32 %v6329, %v6329
  %v6617 = vmul.f32 %v6334, %v6334
  %v6618 = vmul.f32 %v6339, %v6339
  %v6619 = vmul.f32 %v6344, %v6344
  %v6620 = vmul.f32 %v6349, %v6349
  %v6621 = vmul.f32 %v6354, %v6354
  %v6622 = vmul.f32 %v6359, %v6359
  %v6623 = vmul.f32 %v6364, %v6364
  %v6624 = vmul.f32 %v6369, %v6369
  %v6625 = vmul.f32 %v6374, %v6374
  %v6626 = vmul.f32 %v6379, %v6379
  %v6627 = vmul.f32 %v6384, %v6384
  %v6628 = vmul.f32 %v6389, %v6389
  %v6629 = vmul.f32 %v6394, %v6394
  %v6630 = vmul.f32 %v6399, %v6399
  %v6631 = vmul.f32 %v6404, %v6404
  %v6632 = vmul.f32 %v6409, %v6409
  %v6633 = vmul.f32 %v6414, %v6414
  %v6634 = vmul.f32 %v6419, %v6419
  %v6635 = vmul.f32 %v6424, %v6424
  %v6636 = vmul.f32 %v6429, %v6429
  %v6637 = vmul.f32 %v6434, %v6434
  %v6638 = vmul.f32 %v6439, %v6439
  %v6639 = vmul.f32 %v6444, %v6444
  %v6640 = vmul.f32 %v6449, %v6449
  %6641 = vmatprep.subr.mxu0 0.0
  %6642 = vmatpush1.msra.mxu0 %v6593
  %6643 = vmatprep.subr.mxu0 0.0
  %6644 = vmatpush1.msra.mxu0 %v6594
  %6645 = vmatprep.subr.mxu0 0.0
  %6646 = vmatpush1.msra.mxu0 %v6595
  %6647 = vmatprep.subr.mxu0 0.0
  %6648 = vmatpush1.msra.mxu0 %v6596
  %6649 = vmatprep.subr.mxu0 0.0
  %6650 = vmatpush1.msra.mxu0 %v6597
  %6651 = vmatprep.subr.mxu0 0.0
  %6652 = vmatpush1.msra.mxu0 %v6598
  %6653 = vmatprep.subr.mxu0 0.0
  %6654 = vmatpush1.msra.mxu0 %v6599
  %6655 = vmatprep.subr.mxu0 0.0
  %6656 = vmatpush1.msra.mxu0 %v6600
  %6657 = vmatprep.subr.mxu0 0.0
  %6658 = vmatpush1.msra.mxu0 %v6601
  %6659 = vmatprep.subr.mxu0 0.0
  %6660 = vmatpush1.msra.mxu0 %v6602
  %6661 = vmatprep.subr.mxu0 0.0
  %6662 = vmatpush1.msra.mxu0 %v6603
  %6663 = vmatprep.subr.mxu0 0.0
  %6664 = vmatpush1.msra.mxu0 %v6604
  %6665 = vmatprep.subr.mxu0 0.0
  %6666 = vmatpush1.msra.mxu0 %v6605
  %6667 = vmatprep.subr.mxu0 0.0
  %6668 = vmatpush1.msra.mxu0 %v6606
  %6669 = vmatprep.subr.mxu0 0.0
  %6670 = vmatpush1.msra.mxu0 %v6607
  %6671 = vmatprep.subr.mxu0 0.0
  %6672 = vmatpush1.msra.mxu0 %v6608
  %6673 = vmatprep.subr.mxu0 0.0
  %6674 = vmatpush1.msra.mxu0 %v6609
  %6675 = vmatprep.subr.mxu0 0.0
  %6676 = vmatpush1.msra.mxu0 %v6610
  %6677 = vmatprep.subr.mxu0 0.0
  %6678 = vmatpush1.msra.mxu0 %v6611
  %6679 = vmatprep.subr.mxu0 0.0
  %6680 = vmatpush1.msra.mxu0 %v6612
  %6681 = vmatprep.subr.mxu0 0.0
  %6682 = vmatpush1.msra.mxu0 %v6613
  %6683 = vmatprep.subr.mxu0 0.0
  %6684 = vmatpush1.msra.mxu0 %v6614
  %6685 = vmatprep.subr.mxu0 0.0
  %6686 = vmatpush1.msra.mxu0 %v6615
  %6687 = vmatprep.subr.mxu0 0.0
  %6688 = vmatpush1.msra.mxu0 %v6616
  %6689 = vmatprep.subr.mxu0 0.0
  %6690 = vmatpush1.msra.mxu0 %v6617
  %6691 = vmatprep.subr.mxu0 0.0
  %6692 = vmatpush1.msra.mxu0 %v6618
  %6693 = vmatprep.subr.mxu0 0.0
  %6694 = vmatpush1.msra.mxu0 %v6619
  %6695 = vmatprep.subr.mxu0 0.0
  %6696 = vmatpush1.msra.mxu0 %v6620
  %6697 = vmatprep.subr.mxu0 0.0
  %6698 = vmatpush1.msra.mxu0 %v6621
  %6699 = vmatprep.subr.mxu0 0.0
  %6700 = vmatpush1.msra.mxu0 %v6622
  %6701 = vmatprep.subr.mxu0 0.0
  %6702 = vmatpush1.msra.mxu0 %v6623
  %6703 = vmatprep.subr.mxu0 0.0
  %6704 = vmatpush1.msra.mxu0 %v6624
  %6705 = vmatprep.mubr.f32.mxu0 1.0
  %6706 = vmatmul.mubr.f32.gmra.mrb[0].mxu0 1.0
  %v6707 = vpop.f32.mrb[0].mxu0
  %v6708 = vadd.f32 0.0, %v6707
  %v6709 = vpop.f32.mrb[0].mxu0
  %6710 = vdwg.mxu0
  %6711 = vmatprep.subr.mxu0 0.0
  %6712 = vmatpush1.msra.mxu0 %v6625
  %6713 = vmatprep.subr.mxu0 0.0
  %6714 = vmatpush1.msra.mxu0 %v6626
  %6715 = vmatprep.subr.mxu0 0.0
  %6716 = vmatpush1.msra.mxu0 %v6627
  %6717 = vmatprep.subr.mxu0 0.0
  %6718 = vmatpush1.msra.mxu0 %v6628
  %6719 = vmatprep.subr.mxu0 0.0
  %6720 = vmatpush1.msra.mxu0 %v6629
  %6721 = vmatprep.subr.mxu0 0.0
  %6722 = vmatpush1.msra.mxu0 %v6630
  %6723 = vmatprep.subr.mxu0 0.0
  %6724 = vmatpush1.msra.mxu0 %v6631
  %6725 = vmatprep.subr.mxu0 0.0
  %6726 = vmatpush1.msra.mxu0 %v6632
  %6727 = vmatprep.subr.mxu0 0.0
  %6728 = vmatpush1.msra.mxu0 %v6633
  %6729 = vmatprep.subr.mxu0 0.0
  %6730 = vmatpush1.msra.mxu0 %v6634
  %6731 = vmatprep.subr.mxu0 0.0
  %6732 = vmatpush1.msra.mxu0 %v6635
  %6733 = vmatprep.subr.mxu0 0.0
  %6734 = vmatpush1.msra.mxu0 %v6636
  %6735 = vmatprep.subr.mxu0 0.0
  %6736 = vmatpush1.msra.mxu0 %v6637
  %6737 = vmatprep.subr.mxu0 0.0
  %6738 = vmatpush1.msra.mxu0 %v6638
  %6739 = vmatprep.subr.mxu0 0.0
  %6740 = vmatpush1.msra.mxu0 %v6639
  %6741 = vmatprep.subr.mxu0 0.0
  %6742 = vmatpush1.msra.mxu0 %v6640
  %6743 = vmatprep.subr.mxu0 0.0
  %6744 = vmatpush1.msra.mxu0 0.0
  %6745 = vmatprep.subr.mxu0 0.0
  %6746 = vmatpush1.msra.mxu0 0.0
  %6747 = vmatprep.subr.mxu0 0.0
  %6748 = vmatpush1.msra.mxu0 0.0
  %6749 = vmatprep.subr.mxu0 0.0
  %6750 = vmatpush1.msra.mxu0 0.0
  %6751 = vmatprep.subr.mxu0 0.0
  %6752 = vmatpush1.msra.mxu0 0.0
  %6753 = vmatprep.subr.mxu0 0.0
  %6754 = vmatpush1.msra.mxu0 0.0
  %6755 = vmatprep.subr.mxu0 0.0
  %6756 = vmatpush1.msra.mxu0 0.0
  %6757 = vmatprep.subr.mxu0 0.0
  %6758 = vmatpush1.msra.mxu0 0.0
  %6759 = vmatprep.subr.mxu0 0.0
  %6760 = vmatpush1.msra.mxu0 0.0
  %6761 = vmatprep.subr.mxu0 0.0
  %6762 = vmatpush1.msra.mxu0 0.0
  %6763 = vmatprep.subr.mxu0 0.0
  %6764 = vmatpush1.msra.mxu0 0.0
  %6765 = vmatprep.subr.mxu0 0.0
  %6766 = vmatpush1.msra.mxu0 0.0
  %6767 = vmatprep.subr.mxu0 0.0
  %6768 = vmatpush1.msra.mxu0 0.0
  %6769 = vmatprep.subr.mxu0 0.0
  %6770 = vmatpush1.msra.mxu0 0.0
  %6771 = vmatprep.subr.mxu0 0.0
  %6772 = vmatpush1.msra.mxu0 0.0
  %6773 = vmatprep.subr.mxu0 0.0
  %6774 = vmatpush1.msra.mxu0 0.0
  %6775 = vmatprep.mubr.f32.mxu0 0.0
  %6776 = vmatmul.mubr.f32.gmra.mrb[0].mxu0 1.0
  %v6777 = vpop.f32.mrb[0].mxu0
  %v6778 = vadd.f32 %v6708, %v6777
  %v6779 = vpop.f32.mrb[0].mxu0
  %6780 = vdwg.mxu0
  %v6781 = vmul.f32 %v6778, 0.0026041667
  %v6782 = vmul.f32 %v6592, %v6592
  %v6783 = vsub.f32 %v6781, %v6782
  %v6784 = vadd.f32 %v6783, 1e-05
  %v6785 = vrsqrt.pop %v6784
  %v6786 = vmul.f32 %v6028, %v6785
  %v6787 = vmul.f32 %v6592, %v6786
  %v6789 = vrot.slane %v6787, 7
  %v6791 = vsub.f32 %v6028, %v6789
  %v6792 = vlaneseq
  %v6793 = vshrl.u32 %v6792, 7
  %v6794 = vsub.s32 0, %v6793
  %v6795 = vrot.slane %v6786, %v6794
  %v6796 = vmul.f32 %v6214, %v6795
  %v6797 = vmul.f32 %v6219, %v6795
  %v6798 = vmul.f32 %v6224, %v6795
  %v6799 = vmul.f32 %v6229, %v6795
  %v6800 = vmul.f32 %v6234, %v6795
  %v6801 = vmul.f32 %v6239, %v6795
  %v6802 = vmul.f32 %v6244, %v6795
  %v6803 = vmul.f32 %v6249, %v6795
  %v6804 = vmul.f32 %v6254, %v6795
  %v6805 = vmul.f32 %v6259, %v6795
  %v6806 = vmul.f32 %v6264, %v6795
  %v6807 = vmul.f32 %v6269, %v6795
  %v6808 = vmul.f32 %v6274, %v6795
  %v6809 = vmul.f32 %v6279, %v6795
  %v6810 = vmul.f32 %v6284, %v6795
  %v6811 = vmul.f32 %v6289, %v6795
  %v6812 = vmul.f32 %v6294, %v6795
  %v6813 = vmul.f32 %v6299, %v6795
  %v6814 = vmul.f32 %v6304, %v6795
  %v6815 = vmul.f32 %v6309, %v6795
  %v6816 = vmul.f32 %v6314, %v6795
  %v6817 = vmul.f32 %v6319, %v6795
  %v6818 = vmul.f32 %v6324, %v6795
  %v6819 = vmul.f32 %v6329, %v6795
  %v6820 = vmul.f32 %v6334, %v6795
  %v6821 = vmul.f32 %v6339, %v6795
  %v6822 = vmul.f32 %v6344, %v6795
  %v6823 = vmul.f32 %v6349, %v6795
  %v6824 = vmul.f32 %v6354, %v6795
  %v6825 = vmul.f32 %v6359, %v6795
  %v6826 = vmul.f32 %v6364, %v6795
  %v6827 = vmul.f32 %v6369, %v6795
  %v6828 = vmul.f32 %v6374, %v6795
  %v6829 = vmul.f32 %v6379, %v6795
  %v6830 = vmul.f32 %v6384, %v6795
  %v6831 = vmul.f32 %v6389, %v6795
  %v6832 = vmul.f32 %v6394, %v6795
  %v6833 = vmul.f32 %v6399, %v6795
  %v6834 = vmul.f32 %v6404, %v6795
  %v6835 = vmul.f32 %v6409, %v6795
  %v6836 = vmul.f32 %v6414, %v6795
  %v6837 = vmul.f32 %v6419, %v6795
  %v6838 = vmul.f32 %v6424, %v6795
  %v6839 = vmul.f32 %v6429, %v6795
  %v6840 = vmul.f32 %v6434, %v6795
  %v6841 = vmul.f32 %v6439, %v6795
  %v6842 = vmul.f32 %v6444, %v6795
  %v6843 = vmul.f32 %v6449, %v6795
  %v6844 = vlaneseq
  %v6845 = vshrl.u32 %v6844, 7
  %v6846 = vsub.s32 1, %v6845
  %v6847 = vrot.slane %v6791, %v6846
  %v6848 = vadd.f32 %v6796, %v6847
  %v6849 = vadd.f32 %v6797, %v6847
  %v6850 = vadd.f32 %v6798, %v6847
  %v6851 = vadd.f32 %v6799, %v6847
  %v6852 = vadd.f32 %v6800, %v6847
  %v6853 = vadd.f32 %v6801, %v6847
  %v6854 = vadd.f32 %v6802, %v6847
  %v6855 = vadd.f32 %v6803, %v6847
  %v6856 = vadd.f32 %v6804, %v6847
  %v6857 = vadd.f32 %v6805, %v6847
  %v6858 = vadd.f32 %v6806, %v6847
  %v6859 = vadd.f32 %v6807, %v6847
  %v6860 = vadd.f32 %v6808, %v6847
  %v6861 = vadd.f32 %v6809, %v6847
  %v6862 = vadd.f32 %v6810, %v6847
  %v6863 = vadd.f32 %v6811, %v6847
  %v6864 = vadd.f32 %v6812, %v6847
  %v6865 = vadd.f32 %v6813, %v6847
  %v6866 = vadd.f32 %v6814, %v6847
  %v6867 = vadd.f32 %v6815, %v6847
  %v6868 = vadd.f32 %v6816, %v6847
  %v6869 = vadd.f32 %v6817, %v6847
  %v6870 = vadd.f32 %v6818, %v6847
  %v6871 = vadd.f32 %v6819, %v6847
  %v6872 = vadd.f32 %v6820, %v6847
  %v6873 = vadd.f32 %v6821, %v6847
  %v6874 = vadd.f32 %v6822, %v6847
  %v6875 = vadd.f32 %v6823, %v6847
  %v6876 = vadd.f32 %v6824, %v6847
  %v6877 = vadd.f32 %v6825, %v6847
  %v6878 = vadd.f32 %v6826, %v6847
  %v6879 = vadd.f32 %v6827, %v6847
  %v6880 = vadd.f32 %v6828, %v6847
  %v6881 = vadd.f32 %v6829, %v6847
  %v6882 = vadd.f32 %v6830, %v6847
  %v6883 = vadd.f32 %v6831, %v6847
  %v6884 = vadd.f32 %v6832, %v6847
  %v6885 = vadd.f32 %v6833, %v6847
  %v6886 = vadd.f32 %v6834, %v6847
  %v6887 = vadd.f32 %v6835, %v6847
  %v6888 = vadd.f32 %v6836, %v6847
  %v6889 = vadd.f32 %v6837, %v6847
  %v6890 = vadd.f32 %v6838, %v6847
  %v6891 = vadd.f32 %v6839, %v6847
  %v6892 = vadd.f32 %v6840, %v6847
  %v6893 = vadd.f32 %v6841, %v6847
  %v6894 = vadd.f32 %v6842, %v6847
  %v6895 = vadd.f32 %v6843, %v6847
  %v6896 = vand.u32 2147483647, %v6848
  %v6897 = vand.u32 2147483647, %v6849
  %v6898 = vand.u32 2147483647, %v6850
  %v6899 = vand.u32 2147483647, %v6851
  %v6900 = vand.u32 2147483647, %v6852
  %v6901 = vand.u32 2147483647, %v6853
  %v6902 = vand.u32 2147483647, %v6854
  %v6903 = vand.u32 2147483647, %v6855
  %v6904 = vand.u32 2147483647, %v6856
  %v6905 = vand.u32 2147483647, %v6857
  %v6906 = vand.u32 2147483647, %v6858
  %v6907 = vand.u32 2147483647, %v6859
  %v6908 = vand.u32 2147483647, %v6860
  %v6909 = vand.u32 2147483647, %v6861
  %v6910 = vand.u32 2147483647, %v6862
  %v6911 = vand.u32 2147483647, %v6863
  %v6912 = vand.u32 2147483647, %v6864
  %v6913 = vand.u32 2147483647, %v6865
  %v6914 = vand.u32 2147483647, %v6866
  %v6915 = vand.u32 2147483647, %v6867
  %v6916 = vand.u32 2147483647, %v6868
  %v6917 = vand.u32 2147483647, %v6869
  %v6918 = vand.u32 2147483647, %v6870
  %v6919 = vand.u32 2147483647, %v6871
  %v6920 = vand.u32 2147483647, %v6872
  %v6921 = vand.u32 2147483647, %v6873
  %v6922 = vand.u32 2147483647, %v6874
  %v6923 = vand.u32 2147483647, %v6875
  %v6924 = vand.u32 2147483647, %v6876
  %v6925 = vand.u32 2147483647, %v6877
  %v6926 = vand.u32 2147483647, %v6878
  %v6927 = vand.u32 2147483647, %v6879
  %v6928 = vand.u32 2147483647, %v6880
  %v6929 = vand.u32 2147483647, %v6881
  %v6930 = vand.u32 2147483647, %v6882
  %v6931 = vand.u32 2147483647, %v6883
  %v6932 = vand.u32 2147483647, %v6884
  %v6933 = vand.u32 2147483647, %v6885
  %v6934 = vand.u32 2147483647, %v6886
  %v6935 = vand.u32 2147483647, %v6887
  %v6936 = vand.u32 2147483647, %v6888
  %v6937 = vand.u32 2147483647, %v6889
  %v6938 = vand.u32 2147483647, %v6890
  %v6939 = vand.u32 2147483647, %v6891
  %v6940 = vand.u32 2147483647, %v6892
  %v6941 = vand.u32 2147483647, %v6893
  %v6942 = vand.u32 2147483647, %v6894
  %v6943 = vand.u32 2147483647, %v6895
  %v6944 = vsub.f32 0.0, %v6896
  %v6945 = vsub.f32 0.0, %v6897
  %v6946 = vsub.f32 0.0, %v6898
  %v6947 = vsub.f32 0.0, %v6899
  %v6948 = vsub.f32 0.0, %v6900
  %v6949 = vsub.f32 0.0, %v6901
  %v6950 = vsub.f32 0.0, %v6902
  %v6951 = vsub.f32 0.0, %v6903
  %v6952 = vsub.f32 0.0, %v6904
  %v6953 = vsub.f32 0.0, %v6905
  %v6954 = vsub.f32 0.0, %v6906
  %v6955 = vsub.f32 0.0, %v6907
  %v6956 = vsub.f32 0.0, %v6908
  %v6957 = vsub.f32 0.0, %v6909
  %v6958 = vsub.f32 0.0, %v6910
  %v6959 = vsub.f32 0.0, %v6911
  %v6960 = vsub.f32 0.0, %v6912
  %v6961 = vsub.f32 0.0, %v6913
  %v6962 = vsub.f32 0.0, %v6914
  %v6963 = vsub.f32 0.0, %v6915
  %v6964 = vsub.f32 0.0, %v6916
  %v6965 = vsub.f32 0.0, %v6917
  %v6966 = vsub.f32 0.0, %v6918
  %v6967 = vsub.f32 0.0, %v6919
  %v6968 = vsub.f32 0.0, %v6920
  %v6969 = vsub.f32 0.0, %v6921
  %v6970 = vsub.f32 0.0, %v6922
  %v6971 = vsub.f32 0.0, %v6923
  %v6972 = vsub.f32 0.0, %v6924
  %v6973 = vsub.f32 0.0, %v6925
  %v6974 = vsub.f32 0.0, %v6926
  %v6975 = vsub.f32 0.0, %v6927
  %v6976 = vsub.f32 0.0, %v6928
  %v6977 = vsub.f32 0.0, %v6929
  %v6978 = vsub.f32 0.0, %v6930
  %v6979 = vsub.f32 0.0, %v6931
  %v6980 = vsub.f32 0.0, %v6932
  %v6981 = vsub.f32 0.0, %v6933
  %v6982 = vsub.f32 0.0, %v6934
  %v6983 = vsub.f32 0.0, %v6935
  %v6984 = vsub.f32 0.0, %v6936
  %v6985 = vsub.f32 0.0, %v6937
  %v6986 = vsub.f32 0.0, %v6938
  %v6987 = vsub.f32 0.0, %v6939
  %v6988 = vsub.f32 0.0, %v6940
  %v6989 = vsub.f32 0.0, %v6941
  %v6990 = vsub.f32 0.0, %v6942
  %v6991 = vsub.f32 0.0, %v6943
  %v6992 = vmul.f32 %v6944, 1.442695
  %v6993 = vpow.pop %v6992
  %v6994 = vmul.f32 %v6945, 1.442695
  %v6995 = vpow.pop %v6994
  %v6996 = vmul.f32 %v6946, 1.442695
  %v6997 = vpow.pop %v6996
  %v6998 = vmul.f32 %v6947, 1.442695
  %v6999 = vpow.pop %v6998
  %v7000 = vmul.f32 %v6948, 1.442695
  %v7001 = vpow.pop %v7000
  %v7002 = vmul.f32 %v6949, 1.442695
  %v7003 = vpow.pop %v7002
  %v7004 = vmul.f32 %v6950, 1.442695
  %v7005 = vpow.pop %v7004
  %v7006 = vmul.f32 %v6951, 1.442695
  %v7007 = vpow.pop %v7006
  %v7008 = vmul.f32 %v6952, 1.442695
  %v7009 = vpow.pop %v7008
  %v7010 = vmul.f32 %v6953, 1.442695
  %v7011 = vpow.pop %v7010
  %v7012 = vmul.f32 %v6954, 1.442695
  %v7013 = vpow.pop %v7012
  %v7014 = vmul.f32 %v6955, 1.442695
  %v7015 = vpow.pop %v7014
  %v7016 = vmul.f32 %v6956, 1.442695
  %v7017 = vpow.pop %v7016
  %v7018 = vmul.f32 %v6957, 1.442695
  %v7019 = vpow.pop %v7018
  %v7020 = vmul.f32 %v6958, 1.442695
  %v7021 = vpow.pop %v7020
  %v7022 = vmul.f32 %v6959, 1.442695
  %v7023 = vpow.pop %v7022
  %v7024 = vmul.f32 %v6960, 1.442695
  %v7025 = vpow.pop %v7024
  %v7026 = vmul.f32 %v6961, 1.442695
  %v7027 = vpow.pop %v7026
  %v7028 = vmul.f32 %v6962, 1.442695
  %v7029 = vpow.pop %v7028
  %v7030 = vmul.f32 %v6963, 1.442695
  %v7031 = vpow.pop %v7030
  %v7032 = vmul.f32 %v6964, 1.442695
  %v7033 = vpow.pop %v7032
  %v7034 = vmul.f32 %v6965, 1.442695
  %v7035 = vpow.pop %v7034
  %v7036 = vmul.f32 %v6966, 1.442695
  %v7037 = vpow.pop %v7036
  %v7038 = vmul.f32 %v6967, 1.442695
  %v7039 = vpow.pop %v7038
  %v7040 = vmul.f32 %v6968, 1.442695
  %v7041 = vpow.pop %v7040
  %v7042 = vmul.f32 %v6969, 1.442695
  %v7043 = vpow.pop %v7042
  %v7044 = vmul.f32 %v6970, 1.442695
  %v7045 = vpow.pop %v7044
  %v7046 = vmul.f32 %v6971, 1.442695
  %v7047 = vpow.pop %v7046
  %v7048 = vmul.f32 %v6972, 1.442695
  %v7049 = vpow.pop %v7048
  %v7050 = vmul.f32 %v6973, 1.442695
  %v7051 = vpow.pop %v7050
  %v7052 = vmul.f32 %v6974, 1.442695
  %v7053 = vpow.pop %v7052
  %v7054 = vmul.f32 %v6975, 1.442695
  %v7055 = vpow.pop %v7054
  %v7056 = vmul.f32 %v6976, 1.442695
  %v7057 = vpow.pop %v7056
  %v7058 = vmul.f32 %v6977, 1.442695
  %v7059 = vpow.pop %v7058
  %v7060 = vmul.f32 %v6978, 1.442695
  %v7061 = vpow.pop %v7060
  %v7062 = vmul.f32 %v6979, 1.442695
  %v7063 = vpow.pop %v7062
  %v7064 = vmul.f32 %v6980, 1.442695
  %v7065 = vpow.pop %v7064
  %v7066 = vmul.f32 %v6981, 1.442695
  %v7067 = vpow.pop %v7066
  %v7068 = vmul.f32 %v6982, 1.442695
  %v7069 = vpow.pop %v7068
  %v7070 = vmul.f32 %v6983, 1.442695
  %v7071 = vpow.pop %v7070
  %v7072 = vmul.f32 %v6984, 1.442695
  %v7073 = vpow.pop %v7072
  %v7074 = vmul.f32 %v6985, 1.442695
  %v7075 = vpow.pop %v7074
  %v7076 = vmul.f32 %v6986, 1.442695
  %v7077 = vpow.pop %v7076
  %v7078 = vmul.f32 %v6987, 1.442695
  %v7079 = vpow.pop %v7078
  %v7080 = vmul.f32 %v6988, 1.442695
  %v7081 = vpow.pop %v7080
  %v7082 = vmul.f32 %v6989, 1.442695
  %v7083 = vpow.pop %v7082
  %v7084 = vmul.f32 %v6990, 1.442695
  %v7085 = vpow.pop %v7084
  %v7086 = vmul.f32 %v6991, 1.442695
  %v7087 = vpow.pop %v7086
  %v7088 = vadd.f32 %v6993, 1.0
  %v7089 = vadd.f32 %v6995, 1.0
  %v7090 = vadd.f32 %v6997, 1.0
  %v7091 = vadd.f32 %v6999, 1.0
  %v7092 = vadd.f32 %v7001, 1.0
  %v7093 = vadd.f32 %v7003, 1.0
  %v7094 = vadd.f32 %v7005, 1.0
  %v7095 = vadd.f32 %v7007, 1.0
  %v7096 = vadd.f32 %v7009, 1.0
  %v7097 = vadd.f32 %v7011, 1.0
  %v7098 = vadd.f32 %v7013, 1.0
  %v7099 = vadd.f32 %v7015, 1.0
  %v7100 = vadd.f32 %v7017, 1.0
  %v7101 = vadd.f32 %v7019, 1.0
  %v7102 = vadd.f32 %v7021, 1.0
  %v7103 = vadd.f32 %v7023, 1.0
  %v7104 = vadd.f32 %v7025, 1.0
  %v7105 = vadd.f32 %v7027, 1.0
  %v7106 = vadd.f32 %v7029, 1.0
  %v7107 = vadd.f32 %v7031, 1.0
  %v7108 = vadd.f32 %v7033, 1.0
  %v7109 = vadd.f32 %v7035, 1.0
  %v7110 = vadd.f32 %v7037, 1.0
  %v7111 = vadd.f32 %v7039, 1.0
  %v7112 = vadd.f32 %v7041, 1.0
  %v7113 = vadd.f32 %v7043, 1.0
  %v7114 = vadd.f32 %v7045, 1.0
  %v7115 = vadd.f32 %v7047, 1.0
  %v7116 = vadd.f32 %v7049, 1.0
  %v7117 = vadd.f32 %v7051, 1.0
  %v7118 = vadd.f32 %v7053, 1.0
  %v7119 = vadd.f32 %v7055, 1.0
  %v7120 = vadd.f32 %v7057, 1.0
  %v7121 = vadd.f32 %v7059, 1.0
  %v7122 = vadd.f32 %v7061, 1.0
  %v7123 = vadd.f32 %v7063, 1.0
  %v7124 = vadd.f32 %v7065, 1.0
  %v7125 = vadd.f32 %v7067, 1.0
  %v7126 = vadd.f32 %v7069, 1.0
  %v7127 = vadd.f32 %v7071, 1.0
  %v7128 = vadd.f32 %v7073, 1.0
  %v7129 = vadd.f32 %v7075, 1.0
  %v7130 = vadd.f32 %v7077, 1.0
  %v7131 = vadd.f32 %v7079, 1.0
  %v7132 = vadd.f32 %v7081, 1.0
  %v7133 = vadd.f32 %v7083, 1.0
  %v7134 = vadd.f32 %v7085, 1.0
  %v7135 = vadd.f32 %v7087, 1.0
  %v7136 = vrcp.pop %v7088
  %v7137 = vmul.f32 1.0, %v7136
  %v7138 = vrcp.pop %v7089
  %v7139 = vmul.f32 1.0, %v7138
  %v7140 = vrcp.pop %v7090
  %v7141 = vmul.f32 1.0, %v7140
  %v7142 = vrcp.pop %v7091
  %v7143 = vmul.f32 1.0, %v7142
  %v7144 = vrcp.pop %v7092
  %v7145 = vmul.f32 1.0, %v7144
  %v7146 = vrcp.pop %v7093
  %v7147 = vmul.f32 1.0, %v7146
  %v7148 = vrcp.pop %v7094
  %v7149 = vmul.f32 1.0, %v7148
  %v7150 = vrcp.pop %v7095
  %v7151 = vmul.f32 1.0, %v7150
  %v7152 = vrcp.pop %v7096
  %v7153 = vmul.f32 1.0, %v7152
  %v7154 = vrcp.pop %v7097
  %v7155 = vmul.f32 1.0, %v7154
  %v7156 = vrcp.pop %v7098
  %v7157 = vmul.f32 1.0, %v7156
  %v7158 = vrcp.pop %v7099
  %v7159 = vmul.f32 1.0, %v7158
  %v7160 = vrcp.pop %v7100
  %v7161 = vmul.f32 1.0, %v7160
  %v7162 = vrcp.pop %v7101
  %v7163 = vmul.f32 1.0, %v7162
  %v7164 = vrcp.pop %v7102
  %v7165 = vmul.f32 1.0, %v7164
  %v7166 = vrcp.pop %v7103
  %v7167 = vmul.f32 1.0, %v7166
  %v7168 = vrcp.pop %v7104
  %v7169 = vmul.f32 1.0, %v7168
  %v7170 = vrcp.pop %v7105
  %v7171 = vmul.f32 1.0, %v7170
  %v7172 = vrcp.pop %v7106
  %v7173 = vmul.f32 1.0, %v7172
  %v7174 = vrcp.pop %v7107
  %v7175 = vmul.f32 1.0, %v7174
  %v7176 = vrcp.pop %v7108
  %v7177 = vmul.f32 1.0, %v7176
  %v7178 = vrcp.pop %v7109
  %v7179 = vmul.f32 1.0, %v7178
  %v7180 = vrcp.pop %v7110
  %v7181 = vmul.f32 1.0, %v7180
  %v7182 = vrcp.pop %v7111
  %v7183 = vmul.f32 1.0, %v7182
  %v7184 = vrcp.pop %v7112
  %v7185 = vmul.f32 1.0, %v7184
  %v7186 = vrcp.pop %v7113
  %v7187 = vmul.f32 1.0, %v7186
  %v7188 = vrcp.pop %v7114
  %v7189 = vmul.f32 1.0, %v7188
  %v7190 = vrcp.pop %v7115
  %v7191 = vmul.f32 1.0, %v7190
  %v7192 = vrcp.pop %v7116
  %v7193 = vmul.f32 1.0, %v7192
  %v7194 = vrcp.pop %v7117
  %v7195 = vmul.f32 1.0, %v7194
  %v7196 = vrcp.pop %v7118
  %v7197 = vmul.f32 1.0, %v7196
  %v7198 = vrcp.pop %v7119
  %v7199 = vmul.f32 1.0, %v7198
  %v7200 = vrcp.pop %v7120
  %v7201 = vmul.f32 1.0, %v7200
  %v7202 = vrcp.pop %v7121
  %v7203 = vmul.f32 1.0, %v7202
  %v7204 = vrcp.pop %v7122
  %v7205 = vmul.f32 1.0, %v7204
  %v7206 = vrcp.pop %v7123
  %v7207 = vmul.f32 1.0, %v7206
  %v7208 = vrcp.pop %v7124
  %v7209 = vmul.f32 1.0, %v7208
  %v7210 = vrcp.pop %v7125
  %v7211 = vmul.f32 1.0, %v7210
  %v7212 = vrcp.pop %v7126
  %v7213 = vmul.f32 1.0, %v7212
  %v7214 = vrcp.pop %v7127
  %v7215 = vmul.f32 1.0, %v7214
  %v7216 = vrcp.pop %v7128
  %v7217 = vmul.f32 1.0, %v7216
  %v7218 = vrcp.pop %v7129
  %v7219 = vmul.f32 1.0, %v7218
  %v7220 = vrcp.pop %v7130
  %v7221 = vmul.f32 1.0, %v7220
  %v7222 = vrcp.pop %v7131
  %v7223 = vmul.f32 1.0, %v7222
  %v7224 = vrcp.pop %v7132
  %v7225 = vmul.f32 1.0, %v7224
  %v7226 = vrcp.pop %v7133
  %v7227 = vmul.f32 1.0, %v7226
  %v7228 = vrcp.pop %v7134
  %v7229 = vmul.f32 1.0, %v7228
  %v7230 = vrcp.pop %v7135
  %v7231 = vmul.f32 1.0, %v7230
  %vm7232 = vcmp.ge.f32.partialorder %v6848, 0.0
  %vm7233 = vcmp.ge.f32.partialorder %v6849, 0.0
  %vm7234 = vcmp.ge.f32.partialorder %v6850, 0.0
  %vm7235 = vcmp.ge.f32.partialorder %v6851, 0.0
  %vm7236 = vcmp.ge.f32.partialorder %v6852, 0.0
  %vm7237 = vcmp.ge.f32.partialorder %v6853, 0.0
  %vm7238 = vcmp.ge.f32.partialorder %v6854, 0.0
  %vm7239 = vcmp.ge.f32.partialorder %v6855, 0.0
  %vm7240 = vcmp.ge.f32.partialorder %v6856, 0.0
  %vm7241 = vcmp.ge.f32.partialorder %v6857, 0.0
  %vm7242 = vcmp.ge.f32.partialorder %v6858, 0.0
  %vm7243 = vcmp.ge.f32.partialorder %v6859, 0.0
  %vm7244 = vcmp.ge.f32.partialorder %v6860, 0.0
  %vm7245 = vcmp.ge.f32.partialorder %v6861, 0.0
  %vm7246 = vcmp.ge.f32.partialorder %v6862, 0.0
  %vm7247 = vcmp.ge.f32.partialorder %v6863, 0.0
  %vm7248 = vcmp.ge.f32.partialorder %v6864, 0.0
  %vm7249 = vcmp.ge.f32.partialorder %v6865, 0.0
  %vm7250 = vcmp.ge.f32.partialorder %v6866, 0.0
  %vm7251 = vcmp.ge.f32.partialorder %v6867, 0.0
  %vm7252 = vcmp.ge.f32.partialorder %v6868, 0.0
  %vm7253 = vcmp.ge.f32.partialorder %v6869, 0.0
  %vm7254 = vcmp.ge.f32.partialorder %v6870, 0.0
  %vm7255 = vcmp.ge.f32.partialorder %v6871, 0.0
  %vm7256 = vcmp.ge.f32.partialorder %v6872, 0.0
  %vm7257 = vcmp.ge.f32.partialorder %v6873, 0.0
  %vm7258 = vcmp.ge.f32.partialorder %v6874, 0.0
  %vm7259 = vcmp.ge.f32.partialorder %v6875, 0.0
  %vm7260 = vcmp.ge.f32.partialorder %v6876, 0.0
  %vm7261 = vcmp.ge.f32.partialorder %v6877, 0.0
  %vm7262 = vcmp.ge.f32.partialorder %v6878, 0.0
  %vm7263 = vcmp.ge.f32.partialorder %v6879, 0.0
  %vm7264 = vcmp.ge.f32.partialorder %v6880, 0.0
  %vm7265 = vcmp.ge.f32.partialorder %v6881, 0.0
  %vm7266 = vcmp.ge.f32.partialorder %v6882, 0.0
  %vm7267 = vcmp.ge.f32.partialorder %v6883, 0.0
  %vm7268 = vcmp.ge.f32.partialorder %v6884, 0.0
  %vm7269 = vcmp.ge.f32.partialorder %v6885, 0.0
  %vm7270 = vcmp.ge.f32.partialorder %v6886, 0.0
  %vm7271 = vcmp.ge.f32.partialorder %v6887, 0.0
  %vm7272 = vcmp.ge.f32.partialorder %v6888, 0.0
  %vm7273 = vcmp.ge.f32.partialorder %v6889, 0.0
  %vm7274 = vcmp.ge.f32.partialorder %v6890, 0.0
  %vm7275 = vcmp.ge.f32.partialorder %v6891, 0.0
  %vm7276 = vcmp.ge.f32.partialorder %v6892, 0.0
  %vm7277 = vcmp.ge.f32.partialorder %v6893, 0.0
  %vm7278 = vcmp.ge.f32.partialorder %v6894, 0.0
  %vm7279 = vcmp.ge.f32.partialorder %v6895, 0.0
  %v7280 = vmul.f32 %v6993, %v7137
  %v7281 = vmul.f32 %v6995, %v7139
  %v7282 = vmul.f32 %v6997, %v7141
  %v7283 = vmul.f32 %v6999, %v7143
  %v7284 = vmul.f32 %v7001, %v7145
  %v7285 = vmul.f32 %v7003, %v7147
  %v7286 = vmul.f32 %v7005, %v7149
  %v7287 = vmul.f32 %v7007, %v7151
  %v7288 = vmul.f32 %v7009, %v7153
  %v7289 = vmul.f32 %v7011, %v7155
  %v7290 = vmul.f32 %v7013, %v7157
  %v7291 = vmul.f32 %v7015, %v7159
  %v7292 = vmul.f32 %v7017, %v7161
  %v7293 = vmul.f32 %v7019, %v7163
  %v7294 = vmul.f32 %v7021, %v7165
  %v7295 = vmul.f32 %v7023, %v7167
  %v7296 = vmul.f32 %v7025, %v7169
  %v7297 = vmul.f32 %v7027, %v7171
  %v7298 = vmul.f32 %v7029, %v7173
  %v7299 = vmul.f32 %v7031, %v7175
  %v7300 = vmul.f32 %v7033, %v7177
  %v7301 = vmul.f32 %v7035, %v7179
  %v7302 = vmul.f32 %v7037, %v7181
  %v7303 = vmul.f32 %v7039, %v7183
  %v7304 = vmul.f32 %v7041, %v7185
  %v7305 = vmul.f32 %v7043, %v7187
  %v7306 = vmul.f32 %v7045, %v7189
  %v7307 = vmul.f32 %v7047, %v7191
  %v7308 = vmul.f32 %v7049, %v7193
  %v7309 = vmul.f32 %v7051, %v7195
  %v7310 = vmul.f32 %v7053, %v7197
  %v7311 = vmul.f32 %v7055, %v7199
  %v7312 = vmul.f32 %v7057, %v7201
  %v7313 = vmul.f32 %v7059, %v7203
  %v7314 = vmul.f32 %v7061, %v7205
  %v7315 = vmul.f32 %v7063, %v7207
  %v7316 = vmul.f32 %v7065, %v7209
  %v7317 = vmul.f32 %v7067, %v7211
  %v7318 = vmul.f32 %v7069, %v7213
  %v7319 = vmul.f32 %v7071, %v7215
  %v7320 = vmul.f32 %v7073, %v7217
  %v7321 = vmul.f32 %v7075, %v7219
  %v7322 = vmul.f32 %v7077, %v7221
  %v7323 = vmul.f32 %v7079, %v7223
  %v7324 = vmul.f32 %v7081, %v7225
  %v7325 = vmul.f32 %v7083, %v7227
  %v7326 = vmul.f32 %v7085, %v7229
  %v7327 = vmul.f32 %v7087, %v7231
  %v7328 = vsel %vm7232, %v7137, %v7280
  %v7329 = vsel %vm7233, %v7139, %v7281
  %v7330 = vsel %vm7234, %v7141, %v7282
  %v7331 = vsel %vm7235, %v7143, %v7283
  %v7332 = vsel %vm7236, %v7145, %v7284
  %v7333 = vsel %vm7237, %v7147, %v7285
  %v7334 = vsel %vm7238, %v7149, %v7286
  %v7335 = vsel %vm7239, %v7151, %v7287
  %v7336 = vsel %vm7240, %v7153, %v7288
  %v7337 = vsel %vm7241, %v7155, %v7289
  %v7338 = vsel %vm7242, %v7157, %v7290
  %v7339 = vsel %vm7243, %v7159, %v7291
  %v7340 = vsel %vm7244, %v7161, %v7292
  %v7341 = vsel %vm7245, %v7163, %v7293
  %v7342 = vsel %vm7246, %v7165, %v7294
  %v7343 = vsel %vm7247, %v7167, %v7295
  %v7344 = vsel %vm7248, %v7169, %v7296
  %v7345 = vsel %vm7249, %v7171, %v7297
  %v7346 = vsel %vm7250, %v7173, %v7298
  %v7347 = vsel %vm7251, %v7175, %v7299
  %v7348 = vsel %vm7252, %v7177, %v7300
  %v7349 = vsel %vm7253, %v7179, %v7301
  %v7350 = vsel %vm7254, %v7181, %v7302
  %v7351 = vsel %vm7255, %v7183, %v7303
  %v7352 = vsel %vm7256, %v7185, %v7304
  %v7353 = vsel %vm7257, %v7187, %v7305
  %v7354 = vsel %vm7258, %v7189, %v7306
  %v7355 = vsel %vm7259, %v7191, %v7307
  %v7356 = vsel %vm7260, %v7193, %v7308
  %v7357 = vsel %vm7261, %v7195, %v7309
  %v7358 = vsel %vm7262, %v7197, %v7310
  %v7359 = vsel %vm7263, %v7199, %v7311
  %v7360 = vsel %vm7264, %v7201, %v7312
  %v7361 = vsel %vm7265, %v7203, %v7313
  %v7362 = vsel %vm7266, %v7205, %v7314
  %v7363 = vsel %vm7267, %v7207, %v7315
  %v7364 = vsel %vm7268, %v7209, %v7316
  %v7365 = vsel %vm7269, %v7211, %v7317
  %v7366 = vsel %vm7270, %v7213, %v7318
  %v7367 = vsel %vm7271, %v7215, %v7319
  %v7368 = vsel %vm7272, %v7217, %v7320
  %v7369 = vsel %vm7273, %v7219, %v7321
  %v7370 = vsel %vm7274, %v7221, %v7322
  %v7371 = vsel %vm7275, %v7223, %v7323
  %v7372 = vsel %vm7276, %v7225, %v7324
  %v7373 = vsel %vm7277, %v7227, %v7325
  %v7374 = vsel %vm7278, %v7229, %v7326
  %v7375 = vsel %vm7279, %v7231, %v7327
  %v7376 = vmax.f32 %v6848, 0.0
  %v7377 = vmax.f32 %v6849, 0.0
  %v7378 = vmax.f32 %v6850, 0.0
  %v7379 = vmax.f32 %v6851, 0.0
  %v7380 = vmax.f32 %v6852, 0.0
  %v7381 = vmax.f32 %v6853, 0.0
  %v7382 = vmax.f32 %v6854, 0.0
  %v7383 = vmax.f32 %v6855, 0.0
  %v7384 = vmax.f32 %v6856, 0.0
  %v7385 = vmax.f32 %v6857, 0.0
  %v7386 = vmax.f32 %v6858, 0.0
  %v7387 = vmax.f32 %v6859, 0.0
  %v7388 = vmax.f32 %v6860, 0.0
  %v7389 = vmax.f32 %v6861, 0.0
  %v7390 = vmax.f32 %v6862, 0.0
  %v7391 = vmax.f32 %v6863, 0.0
  %v7392 = vmax.f32 %v6864, 0.0
  %v7393 = vmax.f32 %v6865, 0.0
  %v7394 = vmax.f32 %v6866, 0.0
  %v7395 = vmax.f32 %v6867, 0.0
  %v7396 = vmax.f32 %v6868, 0.0
  %v7397 = vmax.f32 %v6869, 0.0
  %v7398 = vmax.f32 %v6870, 0.0
  %v7399 = vmax.f32 %v6871, 0.0
  %v7400 = vmax.f32 %v6872, 0.0
  %v7401 = vmax.f32 %v6873, 0.0
  %v7402 = vmax.f32 %v6874, 0.0
  %v7403 = vmax.f32 %v6875, 0.0
  %v7404 = vmax.f32 %v6876, 0.0
  %v7405 = vmax.f32 %v6877, 0.0
  %v7406 = vmax.f32 %v6878, 0.0
  %v7407 = vmax.f32 %v6879, 0.0
  %v7408 = vmax.f32 %v6880, 0.0
  %v7409 = vmax.f32 %v6881, 0.0
  %v7410 = vmax.f32 %v6882, 0.0
  %v7411 = vmax.f32 %v6883, 0.0
  %v7412 = vmax.f32 %v6884, 0.0
  %v7413 = vmax.f32 %v6885, 0.0
  %v7414 = vmax.f32 %v6886, 0.0
  %v7415 = vmax.f32 %v6887, 0.0
  %v7416 = vmax.f32 %v6888, 0.0
  %v7417 = vmax.f32 %v6889, 0.0
  %v7418 = vmax.f32 %v6890, 0.0
  %v7419 = vmax.f32 %v6891, 0.0
  %v7420 = vmax.f32 %v6892, 0.0
  %v7421 = vmax.f32 %v6893, 0.0
  %v7422 = vmax.f32 %v6894, 0.0
  %v7423 = vmax.f32 %v6895, 0.0
  %v7424 = vadd.f32 %v6993, 1.0
  %v7425 = vlog2.pop %v7424
  %v7426 = vmul.f32 %v7425, 0.6931472
  %v7427 = vmul.f32 -0.5, %v6993
  %v7428 = vadd.f32 %v7427, 1.0
  %v7429 = vmul.f32 %v7428, %v6993
  %v7430 = vand.u32 2147483647, %v6993
  %vm7431 = vcmp.lt.f32.partialorder %v7430, 0.0004427343
  %v7432 = vsel %vm7431, %v7429, %v7426
  %v7433 = vadd.f32 %v6995, 1.0
  %v7434 = vlog2.pop %v7433
  %v7435 = vmul.f32 %v7434, 0.6931472
  %v7436 = vmul.f32 -0.5, %v6995
  %v7437 = vadd.f32 %v7436, 1.0
  %v7438 = vmul.f32 %v7437, %v6995
  %v7439 = vand.u32 2147483647, %v6995
  %vm7440 = vcmp.lt.f32.partialorder %v7439, 0.0004427343
  %v7441 = vsel %vm7440, %v7438, %v7435
  %v7442 = vadd.f32 %v6997, 1.0
  %v7443 = vlog2.pop %v7442
  %v7444 = vmul.f32 %v7443, 0.6931472
  %v7445 = vmul.f32 -0.5, %v6997
  %v7446 = vadd.f32 %v7445, 1.0
  %v7447 = vmul.f32 %v7446, %v6997
  %v7448 = vand.u32 2147483647, %v6997
  %vm7449 = vcmp.lt.f32.partialorder %v7448, 0.0004427343
  %v7450 = vsel %vm7449, %v7447, %v7444
  %v7451 = vadd.f32 %v6999, 1.0
  %v7452 = vlog2.pop %v7451
  %v7453 = vmul.f32 %v7452, 0.6931472
  %v7454 = vmul.f32 -0.5, %v6999
  %v7455 = vadd.f32 %v7454, 1.0
  %v7456 = vmul.f32 %v7455, %v6999
  %v7457 = vand.u32 2147483647, %v6999
  %vm7458 = vcmp.lt.f32.partialorder %v7457, 0.0004427343
  %v7459 = vsel %vm7458, %v7456, %v7453
  %v7460 = vadd.f32 %v7001, 1.0
  %v7461 = vlog2.pop %v7460
  %v7462 = vmul.f32 %v7461, 0.6931472
  %v7463 = vmul.f32 -0.5, %v7001
  %v7464 = vadd.f32 %v7463, 1.0
  %v7465 = vmul.f32 %v7464, %v7001
  %v7466 = vand.u32 2147483647, %v7001
  %vm7467 = vcmp.lt.f32.partialorder %v7466, 0.0004427343
  %v7468 = vsel %vm7467, %v7465, %v7462
  %v7469 = vadd.f32 %v7003, 1.0
  %v7470 = vlog2.pop %v7469
  %v7471 = vmul.f32 %v7470, 0.6931472
  %v7472 = vmul.f32 -0.5, %v7003
  %v7473 = vadd.f32 %v7472, 1.0
  %v7474 = vmul.f32 %v7473, %v7003
  %v7475 = vand.u32 2147483647, %v7003
  %vm7476 = vcmp.lt.f32.partialorder %v7475, 0.0004427343
  %v7477 = vsel %vm7476, %v7474, %v7471
  %v7478 = vadd.f32 %v7005, 1.0
  %v7479 = vlog2.pop %v7478
  %v7480 = vmul.f32 %v7479, 0.6931472
  %v7481 = vmul.f32 -0.5, %v7005
  %v7482 = vadd.f32 %v7481, 1.0
  %v7483 = vmul.f32 %v7482, %v7005
  %v7484 = vand.u32 2147483647, %v7005
  %vm7485 = vcmp.lt.f32.partialorder %v7484, 0.0004427343
  %v7486 = vsel %vm7485, %v7483, %v7480
  %v7487 = vadd.f32 %v7007, 1.0
  %v7488 = vlog2.pop %v7487
  %v7489 = vmul.f32 %v7488, 0.6931472
  %v7490 = vmul.f32 -0.5, %v7007
  %v7491 = vadd.f32 %v7490, 1.0
  %v7492 = vmul.f32 %v7491, %v7007
  %v7493 = vand.u32 2147483647, %v7007
  %vm7494 = vcmp.lt.f32.partialorder %v7493, 0.0004427343
  %v7495 = vsel %vm7494, %v7492, %v7489
  %v7496 = vadd.f32 %v7009, 1.0
  %v7497 = vlog2.pop %v7496
  %v7498 = vmul.f32 %v7497, 0.6931472
  %v7499 = vmul.f32 -0.5, %v7009
  %v7500 = vadd.f32 %v7499, 1.0
  %v7501 = vmul.f32 %v7500, %v7009
  %v7502 = vand.u32 2147483647, %v7009
  %vm7503 = vcmp.lt.f32.partialorder %v7502, 0.0004427343
  %v7504 = vsel %vm7503, %v7501, %v7498
  %v7505 = vadd.f32 %v7011, 1.0
  %v7506 = vlog2.pop %v7505
  %v7507 = vmul.f32 %v7506, 0.6931472
  %v7508 = vmul.f32 -0.5, %v7011
  %v7509 = vadd.f32 %v7508, 1.0
  %v7510 = vmul.f32 %v7509, %v7011
  %v7511 = vand.u32 2147483647, %v7011
  %vm7512 = vcmp.lt.f32.partialorder %v7511, 0.0004427343
  %v7513 = vsel %vm7512, %v7510, %v7507
  %v7514 = vadd.f32 %v7013, 1.0
  %v7515 = vlog2.pop %v7514
  %v7516 = vmul.f32 %v7515, 0.6931472
  %v7517 = vmul.f32 -0.5, %v7013
  %v7518 = vadd.f32 %v7517, 1.0
  %v7519 = vmul.f32 %v7518, %v7013
  %v7520 = vand.u32 2147483647, %v7013
  %vm7521 = vcmp.lt.f32.partialorder %v7520, 0.0004427343
  %v7522 = vsel %vm7521, %v7519, %v7516
  %v7523 = vadd.f32 %v7015, 1.0
  %v7524 = vlog2.pop %v7523
  %v7525 = vmul.f32 %v7524, 0.6931472
  %v7526 = vmul.f32 -0.5, %v7015
  %v7527 = vadd.f32 %v7526, 1.0
  %v7528 = vmul.f32 %v7527, %v7015
  %v7529 = vand.u32 2147483647, %v7015
  %vm7530 = vcmp.lt.f32.partialorder %v7529, 0.0004427343
  %v7531 = vsel %vm7530, %v7528, %v7525
  %v7532 = vadd.f32 %v7017, 1.0
  %v7533 = vlog2.pop %v7532
  %v7534 = vmul.f32 %v7533, 0.6931472
  %v7535 = vmul.f32 -0.5, %v7017
  %v7536 = vadd.f32 %v7535, 1.0
  %v7537 = vmul.f32 %v7536, %v7017
  %v7538 = vand.u32 2147483647, %v7017
  %vm7539 = vcmp.lt.f32.partialorder %v7538, 0.0004427343
  %v7540 = vsel %vm7539, %v7537, %v7534
  %v7541 = vadd.f32 %v7019, 1.0
  %v7542 = vlog2.pop %v7541
  %v7543 = vmul.f32 %v7542, 0.6931472
  %v7544 = vmul.f32 -0.5, %v7019
  %v7545 = vadd.f32 %v7544, 1.0
  %v7546 = vmul.f32 %v7545, %v7019
  %v7547 = vand.u32 2147483647, %v7019
  %vm7548 = vcmp.lt.f32.partialorder %v7547, 0.0004427343
  %v7549 = vsel %vm7548, %v7546, %v7543
  %v7550 = vadd.f32 %v7021, 1.0
  %v7551 = vlog2.pop %v7550
  %v7552 = vmul.f32 %v7551, 0.6931472
  %v7553 = vmul.f32 -0.5, %v7021
  %v7554 = vadd.f32 %v7553, 1.0
  %v7555 = vmul.f32 %v7554, %v7021
  %v7556 = vand.u32 2147483647, %v7021
  %vm7557 = vcmp.lt.f32.partialorder %v7556, 0.0004427343
  %v7558 = vsel %vm7557, %v7555, %v7552
  %v7559 = vadd.f32 %v7023, 1.0
  %v7560 = vlog2.pop %v7559
  %v7561 = vmul.f32 %v7560, 0.6931472
  %v7562 = vmul.f32 -0.5, %v7023
  %v7563 = vadd.f32 %v7562, 1.0
  %v7564 = vmul.f32 %v7563, %v7023
  %v7565 = vand.u32 2147483647, %v7023
  %vm7566 = vcmp.lt.f32.partialorder %v7565, 0.0004427343
  %v7567 = vsel %vm7566, %v7564, %v7561
  %v7568 = vadd.f32 %v7025, 1.0
  %v7569 = vlog2.pop %v7568
  %v7570 = vmul.f32 %v7569, 0.6931472
  %v7571 = vmul.f32 -0.5, %v7025
  %v7572 = vadd.f32 %v7571, 1.0
  %v7573 = vmul.f32 %v7572, %v7025
  %v7574 = vand.u32 2147483647, %v7025
  %vm7575 = vcmp.lt.f32.partialorder %v7574, 0.0004427343
  %v7576 = vsel %vm7575, %v7573, %v7570
  %v7577 = vadd.f32 %v7027, 1.0
  %v7578 = vlog2.pop %v7577
  %v7579 = vmul.f32 %v7578, 0.6931472
  %v7580 = vmul.f32 -0.5, %v7027
  %v7581 = vadd.f32 %v7580, 1.0
  %v7582 = vmul.f32 %v7581, %v7027
  %v7583 = vand.u32 2147483647, %v7027
  %vm7584 = vcmp.lt.f32.partialorder %v7583, 0.0004427343
  %v7585 = vsel %vm7584, %v7582, %v7579
  %v7586 = vadd.f32 %v7029, 1.0
  %v7587 = vlog2.pop %v7586
  %v7588 = vmul.f32 %v7587, 0.6931472
  %v7589 = vmul.f32 -0.5, %v7029
  %v7590 = vadd.f32 %v7589, 1.0
  %v7591 = vmul.f32 %v7590, %v7029
  %v7592 = vand.u32 2147483647, %v7029
  %vm7593 = vcmp.lt.f32.partialorder %v7592, 0.0004427343
  %v7594 = vsel %vm7593, %v7591, %v7588
  %v7595 = vadd.f32 %v7031, 1.0
  %v7596 = vlog2.pop %v7595
  %v7597 = vmul.f32 %v7596, 0.6931472
  %v7598 = vmul.f32 -0.5, %v7031
  %v7599 = vadd.f32 %v7598, 1.0
  %v7600 = vmul.f32 %v7599, %v7031
  %v7601 = vand.u32 2147483647, %v7031
  %vm7602 = vcmp.lt.f32.partialorder %v7601, 0.0004427343
  %v7603 = vsel %vm7602, %v7600, %v7597
  %v7604 = vadd.f32 %v7033, 1.0
  %v7605 = vlog2.pop %v7604
  %v7606 = vmul.f32 %v7605, 0.6931472
  %v7607 = vmul.f32 -0.5, %v7033
  %v7608 = vadd.f32 %v7607, 1.0
  %v7609 = vmul.f32 %v7608, %v7033
  %v7610 = vand.u32 2147483647, %v7033
  %vm7611 = vcmp.lt.f32.partialorder %v7610, 0.0004427343
  %v7612 = vsel %vm7611, %v7609, %v7606
  %v7613 = vadd.f32 %v7035, 1.0
  %v7614 = vlog2.pop %v7613
  %v7615 = vmul.f32 %v7614, 0.6931472
  %v7616 = vmul.f32 -0.5, %v7035
  %v7617 = vadd.f32 %v7616, 1.0
  %v7618 = vmul.f32 %v7617, %v7035
  %v7619 = vand.u32 2147483647, %v7035
  %vm7620 = vcmp.lt.f32.partialorder %v7619, 0.0004427343
  %v7621 = vsel %vm7620, %v7618, %v7615
  %v7622 = vadd.f32 %v7037, 1.0
  %v7623 = vlog2.pop %v7622
  %v7624 = vmul.f32 %v7623, 0.6931472
  %v7625 = vmul.f32 -0.5, %v7037
  %v7626 = vadd.f32 %v7625, 1.0
  %v7627 = vmul.f32 %v7626, %v7037
  %v7628 = vand.u32 2147483647, %v7037
  %vm7629 = vcmp.lt.f32.partialorder %v7628, 0.0004427343
  %v7630 = vsel %vm7629, %v7627, %v7624
  %v7631 = vadd.f32 %v7039, 1.0
  %v7632 = vlog2.pop %v7631
  %v7633 = vmul.f32 %v7632, 0.6931472
  %v7634 = vmul.f32 -0.5, %v7039
  %v7635 = vadd.f32 %v7634, 1.0
  %v7636 = vmul.f32 %v7635, %v7039
  %v7637 = vand.u32 2147483647, %v7039
  %vm7638 = vcmp.lt.f32.partialorder %v7637, 0.0004427343
  %v7639 = vsel %vm7638, %v7636, %v7633
  %v7640 = vadd.f32 %v7041, 1.0
  %v7641 = vlog2.pop %v7640
  %v7642 = vmul.f32 %v7641, 0.6931472
  %v7643 = vmul.f32 -0.5, %v7041
  %v7644 = vadd.f32 %v7643, 1.0
  %v7645 = vmul.f32 %v7644, %v7041
  %v7646 = vand.u32 2147483647, %v7041
  %vm7647 = vcmp.lt.f32.partialorder %v7646, 0.0004427343
  %v7648 = vsel %vm7647, %v7645, %v7642
  %v7649 = vadd.f32 %v7043, 1.0
  %v7650 = vlog2.pop %v7649
  %v7651 = vmul.f32 %v7650, 0.6931472
  %v7652 = vmul.f32 -0.5, %v7043
  %v7653 = vadd.f32 %v7652, 1.0
  %v7654 = vmul.f32 %v7653, %v7043
  %v7655 = vand.u32 2147483647, %v7043
  %vm7656 = vcmp.lt.f32.partialorder %v7655, 0.0004427343
  %v7657 = vsel %vm7656, %v7654, %v7651
  %v7658 = vadd.f32 %v7045, 1.0
  %v7659 = vlog2.pop %v7658
  %v7660 = vmul.f32 %v7659, 0.6931472
  %v7661 = vmul.f32 -0.5, %v7045
  %v7662 = vadd.f32 %v7661, 1.0
  %v7663 = vmul.f32 %v7662, %v7045
  %v7664 = vand.u32 2147483647, %v7045
  %vm7665 = vcmp.lt.f32.partialorder %v7664, 0.0004427343
  %v7666 = vsel %vm7665, %v7663, %v7660
  %v7667 = vadd.f32 %v7047, 1.0
  %v7668 = vlog2.pop %v7667
  %v7669 = vmul.f32 %v7668, 0.6931472
  %v7670 = vmul.f32 -0.5, %v7047
  %v7671 = vadd.f32 %v7670, 1.0
  %v7672 = vmul.f32 %v7671, %v7047
  %v7673 = vand.u32 2147483647, %v7047
  %vm7674 = vcmp.lt.f32.partialorder %v7673, 0.0004427343
  %v7675 = vsel %vm7674, %v7672, %v7669
  %v7676 = vadd.f32 %v7049, 1.0
  %v7677 = vlog2.pop %v7676
  %v7678 = vmul.f32 %v7677, 0.6931472
  %v7679 = vmul.f32 -0.5, %v7049
  %v7680 = vadd.f32 %v7679, 1.0
  %v7681 = vmul.f32 %v7680, %v7049
  %v7682 = vand.u32 2147483647, %v7049
  %vm7683 = vcmp.lt.f32.partialorder %v7682, 0.0004427343
  %v7684 = vsel %vm7683, %v7681, %v7678
  %v7685 = vadd.f32 %v7051, 1.0
  %v7686 = vlog2.pop %v7685
  %v7687 = vmul.f32 %v7686, 0.6931472
  %v7688 = vmul.f32 -0.5, %v7051
  %v7689 = vadd.f32 %v7688, 1.0
  %v7690 = vmul.f32 %v7689, %v7051
  %v7691 = vand.u32 2147483647, %v7051
  %vm7692 = vcmp.lt.f32.partialorder %v7691, 0.0004427343
  %v7693 = vsel %vm7692, %v7690, %v7687
  %v7694 = vadd.f32 %v7053, 1.0
  %v7695 = vlog2.pop %v7694
  %v7696 = vmul.f32 %v7695, 0.6931472
  %v7697 = vmul.f32 -0.5, %v7053
  %v7698 = vadd.f32 %v7697, 1.0
  %v7699 = vmul.f32 %v7698, %v7053
  %v7700 = vand.u32 2147483647, %v7053
  %vm7701 = vcmp.lt.f32.partialorder %v7700, 0.0004427343
  %v7702 = vsel %vm7701, %v7699, %v7696
  %v7703 = vadd.f32 %v7055, 1.0
  %v7704 = vlog2.pop %v7703
  %v7705 = vmul.f32 %v7704, 0.6931472
  %v7706 = vmul.f32 -0.5, %v7055
  %v7707 = vadd.f32 %v7706, 1.0
  %v7708 = vmul.f32 %v7707, %v7055
  %v7709 = vand.u32 2147483647, %v7055
  %vm7710 = vcmp.lt.f32.partialorder %v7709, 0.0004427343
  %v7711 = vsel %vm7710, %v7708, %v7705
  %v7712 = vadd.f32 %v7057, 1.0
  %v7713 = vlog2.pop %v7712
  %v7714 = vmul.f32 %v7713, 0.6931472
  %v7715 = vmul.f32 -0.5, %v7057
  %v7716 = vadd.f32 %v7715, 1.0
  %v7717 = vmul.f32 %v7716, %v7057
  %v7718 = vand.u32 2147483647, %v7057
  %vm7719 = vcmp.lt.f32.partialorder %v7718, 0.0004427343
  %v7720 = vsel %vm7719, %v7717, %v7714
  %v7721 = vadd.f32 %v7059, 1.0
  %v7722 = vlog2.pop %v7721
  %v7723 = vmul.f32 %v7722, 0.6931472
  %v7724 = vmul.f32 -0.5, %v7059
  %v7725 = vadd.f32 %v7724, 1.0
  %v7726 = vmul.f32 %v7725, %v7059
  %v7727 = vand.u32 2147483647, %v7059
  %vm7728 = vcmp.lt.f32.partialorder %v7727, 0.0004427343
  %v7729 = vsel %vm7728, %v7726, %v7723
  %v7730 = vadd.f32 %v7061, 1.0
  %v7731 = vlog2.pop %v7730
  %v7732 = vmul.f32 %v7731, 0.6931472
  %v7733 = vmul.f32 -0.5, %v7061
  %v7734 = vadd.f32 %v7733, 1.0
  %v7735 = vmul.f32 %v7734, %v7061
  %v7736 = vand.u32 2147483647, %v7061
  %vm7737 = vcmp.lt.f32.partialorder %v7736, 0.0004427343
  %v7738 = vsel %vm7737, %v7735, %v7732
  %v7739 = vadd.f32 %v7063, 1.0
  %v7740 = vlog2.pop %v7739
  %v7741 = vmul.f32 %v7740, 0.6931472
  %v7742 = vmul.f32 -0.5, %v7063
  %v7743 = vadd.f32 %v7742, 1.0
  %v7744 = vmul.f32 %v7743, %v7063
  %v7745 = vand.u32 2147483647, %v7063
  %vm7746 = vcmp.lt.f32.partialorder %v7745, 0.0004427343
  %v7747 = vsel %vm7746, %v7744, %v7741
  %v7748 = vadd.f32 %v7065, 1.0
  %v7749 = vlog2.pop %v7748
  %v7750 = vmul.f32 %v7749, 0.6931472
  %v7751 = vmul.f32 -0.5, %v7065
  %v7752 = vadd.f32 %v7751, 1.0
  %v7753 = vmul.f32 %v7752, %v7065
  %v7754 = vand.u32 2147483647, %v7065
  %vm7755 = vcmp.lt.f32.partialorder %v7754, 0.0004427343
  %v7756 = vsel %vm7755, %v7753, %v7750
  %v7757 = vadd.f32 %v7067, 1.0
  %v7758 = vlog2.pop %v7757
  %v7759 = vmul.f32 %v7758, 0.6931472
  %v7760 = vmul.f32 -0.5, %v7067
  %v7761 = vadd.f32 %v7760, 1.0
  %v7762 = vmul.f32 %v7761, %v7067
  %v7763 = vand.u32 2147483647, %v7067
  %vm7764 = vcmp.lt.f32.partialorder %v7763, 0.0004427343
  %v7765 = vsel %vm7764, %v7762, %v7759
  %v7766 = vadd.f32 %v7069, 1.0
  %v7767 = vlog2.pop %v7766
  %v7768 = vmul.f32 %v7767, 0.6931472
  %v7769 = vmul.f32 -0.5, %v7069
  %v7770 = vadd.f32 %v7769, 1.0
  %v7771 = vmul.f32 %v7770, %v7069
  %v7772 = vand.u32 2147483647, %v7069
  %vm7773 = vcmp.lt.f32.partialorder %v7772, 0.0004427343
  %v7774 = vsel %vm7773, %v7771, %v7768
  %v7775 = vadd.f32 %v7071, 1.0
  %v7776 = vlog2.pop %v7775
  %v7777 = vmul.f32 %v7776, 0.6931472
  %v7778 = vmul.f32 -0.5, %v7071
  %v7779 = vadd.f32 %v7778, 1.0
  %v7780 = vmul.f32 %v7779, %v7071
  %v7781 = vand.u32 2147483647, %v7071
  %vm7782 = vcmp.lt.f32.partialorder %v7781, 0.0004427343
  %v7783 = vsel %vm7782, %v7780, %v7777
  %v7784 = vadd.f32 %v7073, 1.0
  %v7785 = vlog2.pop %v7784
  %v7786 = vmul.f32 %v7785, 0.6931472
  %v7787 = vmul.f32 -0.5, %v7073
  %v7788 = vadd.f32 %v7787, 1.0
  %v7789 = vmul.f32 %v7788, %v7073
  %v7790 = vand.u32 2147483647, %v7073
  %vm7791 = vcmp.lt.f32.partialorder %v7790, 0.0004427343
  %v7792 = vsel %vm7791, %v7789, %v7786
  %v7793 = vadd.f32 %v7075, 1.0
  %v7794 = vlog2.pop %v7793
  %v7795 = vmul.f32 %v7794, 0.6931472
  %v7796 = vmul.f32 -0.5, %v7075
  %v7797 = vadd.f32 %v7796, 1.0
  %v7798 = vmul.f32 %v7797, %v7075
  %v7799 = vand.u32 2147483647, %v7075
  %vm7800 = vcmp.lt.f32.partialorder %v7799, 0.0004427343
  %v7801 = vsel %vm7800, %v7798, %v7795
  %v7802 = vadd.f32 %v7077, 1.0
  %v7803 = vlog2.pop %v7802
  %v7804 = vmul.f32 %v7803, 0.6931472
  %v7805 = vmul.f32 -0.5, %v7077
  %v7806 = vadd.f32 %v7805, 1.0
  %v7807 = vmul.f32 %v7806, %v7077
  %v7808 = vand.u32 2147483647, %v7077
  %vm7809 = vcmp.lt.f32.partialorder %v7808, 0.0004427343
  %v7810 = vsel %vm7809, %v7807, %v7804
  %v7811 = vadd.f32 %v7079, 1.0
  %v7812 = vlog2.pop %v7811
  %v7813 = vmul.f32 %v7812, 0.6931472
  %v7814 = vmul.f32 -0.5, %v7079
  %v7815 = vadd.f32 %v7814, 1.0
  %v7816 = vmul.f32 %v7815, %v7079
  %v7817 = vand.u32 2147483647, %v7079
  %vm7818 = vcmp.lt.f32.partialorder %v7817, 0.0004427343
  %v7819 = vsel %vm7818, %v7816, %v7813
  %v7820 = vadd.f32 %v7081, 1.0
  %v7821 = vlog2.pop %v7820
  %v7822 = vmul.f32 %v7821, 0.6931472
  %v7823 = vmul.f32 -0.5, %v7081
  %v7824 = vadd.f32 %v7823, 1.0
  %v7825 = vmul.f32 %v7824, %v7081
  %v7826 = vand.u32 2147483647, %v7081
  %vm7827 = vcmp.lt.f32.partialorder %v7826, 0.0004427343
  %v7828 = vsel %vm7827, %v7825, %v7822
  %v7829 = vadd.f32 %v7083, 1.0
  %v7830 = vlog2.pop %v7829
  %v7831 = vmul.f32 %v7830, 0.6931472
  %v7832 = vmul.f32 -0.5, %v7083
  %v7833 = vadd.f32 %v7832, 1.0
  %v7834 = vmul.f32 %v7833, %v7083
  %v7835 = vand.u32 2147483647, %v7083
  %vm7836 = vcmp.lt.f32.partialorder %v7835, 0.0004427343
  %v7837 = vsel %vm7836, %v7834, %v7831
  %v7838 = vadd.f32 %v7085, 1.0
  %v7839 = vlog2.pop %v7838
  %v7840 = vmul.f32 %v7839, 0.6931472
  %v7841 = vmul.f32 -0.5, %v7085
  %v7842 = vadd.f32 %v7841, 1.0
  %v7843 = vmul.f32 %v7842, %v7085
  %v7844 = vand.u32 2147483647, %v7085
  %vm7845 = vcmp.lt.f32.partialorder %v7844, 0.0004427343
  %v7846 = vsel %vm7845, %v7843, %v7840
  %v7847 = vadd.f32 %v7087, 1.0
  %v7848 = vlog2.pop %v7847
  %v7849 = vmul.f32 %v7848, 0.6931472
  %v7850 = vmul.f32 -0.5, %v7087
  %v7851 = vadd.f32 %v7850, 1.0
  %v7852 = vmul.f32 %v7851, %v7087
  %v7853 = vand.u32 2147483647, %v7087
  %vm7854 = vcmp.lt.f32.partialorder %v7853, 0.0004427343
  %v7855 = vsel %vm7854, %v7852, %v7849
  %v7856 = vadd.f32 %v7376, %v7432
  %v7857 = vadd.f32 %v7377, %v7441
  %v7858 = vadd.f32 %v7378, %v7450
  %v7859 = vadd.f32 %v7379, %v7459
  %v7860 = vadd.f32 %v7380, %v7468
  %v7861 = vadd.f32 %v7381, %v7477
  %v7862 = vadd.f32 %v7382, %v7486
  %v7863 = vadd.f32 %v7383, %v7495
  %v7864 = vadd.f32 %v7384, %v7504
  %v7865 = vadd.f32 %v7385, %v7513
  %v7866 = vadd.f32 %v7386, %v7522
  %v7867 = vadd.f32 %v7387, %v7531
  %v7868 = vadd.f32 %v7388, %v7540
  %v7869 = vadd.f32 %v7389, %v7549
  %v7870 = vadd.f32 %v7390, %v7558
  %v7871 = vadd.f32 %v7391, %v7567
  %v7872 = vadd.f32 %v7392, %v7576
  %v7873 = vadd.f32 %v7393, %v7585
  %v7874 = vadd.f32 %v7394, %v7594
  %v7875 = vadd.f32 %v7395, %v7603
  %v7876 = vadd.f32 %v7396, %v7612
  %v7877 = vadd.f32 %v7397, %v7621
  %v7878 = vadd.f32 %v7398, %v7630
  %v7879 = vadd.f32 %v7399, %v7639
  %v7880 = vadd.f32 %v7400, %v7648
  %v7881 = vadd.f32 %v7401, %v7657
  %v7882 = vadd.f32 %v7402, %v7666
  %v7883 = vadd.f32 %v7403, %v7675
  %v7884 = vadd.f32 %v7404, %v7684
  %v7885 = vadd.f32 %v7405, %v7693
  %v7886 = vadd.f32 %v7406, %v7702
  %v7887 = vadd.f32 %v7407, %v7711
  %v7888 = vadd.f32 %v7408, %v7720
  %v7889 = vadd.f32 %v7409, %v7729
  %v7890 = vadd.f32 %v7410, %v7738
  %v7891 = vadd.f32 %v7411, %v7747
  %v7892 = vadd.f32 %v7412, %v7756
  %v7893 = vadd.f32 %v7413, %v7765
  %v7894 = vadd.f32 %v7414, %v7774
  %v7895 = vadd.f32 %v7415, %v7783
  %v7896 = vadd.f32 %v7416, %v7792
  %v7897 = vadd.f32 %v7417, %v7801
  %v7898 = vadd.f32 %v7418, %v7810
  %v7899 = vadd.f32 %v7419, %v7819
  %v7900 = vadd.f32 %v7420, %v7828
  %v7901 = vadd.f32 %v7421, %v7837
  %v7902 = vadd.f32 %v7422, %v7846
  %v7903 = vadd.f32 %v7423, %v7855
  %7952 = vrot.lane.b32.xlu0 %v7856, 64
  %v7953 = vpop.permute.xlu0 %7952
  %7954 = vrot.lane.b32.xlu0 %v7857, 64
  %v7955 = vpop.permute.xlu0 %7954
  %7956 = vrot.lane.b32.xlu0 %v7858, 64
  %v7957 = vpop.permute.xlu0 %7956
  %7958 = vrot.lane.b32.xlu0 %v7859, 64
  %v7959 = vpop.permute.xlu0 %7958
  %7960 = vrot.lane.b32.xlu0 %v7860, 64
  %v7961 = vpop.permute.xlu0 %7960
  %7962 = vrot.lane.b32.xlu0 %v7861, 64
  %v7963 = vpop.permute.xlu0 %7962
  %7964 = vrot.lane.b32.xlu0 %v7862, 64
  %v7965 = vpop.permute.xlu0 %7964
  %7966 = vrot.lane.b32.xlu0 %v7863, 64
  %v7967 = vpop.permute.xlu0 %7966
  %7968 = vrot.lane.b32.xlu0 %v7864, 64
  %v7969 = vpop.permute.xlu0 %7968
  %7970 = vrot.lane.b32.xlu0 %v7865, 64
  %v7971 = vpop.permute.xlu0 %7970
  %7972 = vrot.lane.b32.xlu0 %v7866, 64
  %v7973 = vpop.permute.xlu0 %7972
  %7974 = vrot.lane.b32.xlu0 %v7867, 64
  %v7975 = vpop.permute.xlu0 %7974
  %7976 = vrot.lane.b32.xlu0 %v7868, 64
  %v7977 = vpop.permute.xlu0 %7976
  %7978 = vrot.lane.b32.xlu0 %v7869, 64
  %v7979 = vpop.permute.xlu0 %7978
  %7980 = vrot.lane.b32.xlu0 %v7870, 64
  %v7981 = vpop.permute.xlu0 %7980
  %7982 = vrot.lane.b32.xlu0 %v7871, 64
  %v7983 = vpop.permute.xlu0 %7982
  %7984 = vrot.lane.b32.xlu0 %v7872, 64
  %v7985 = vpop.permute.xlu0 %7984
  %7986 = vrot.lane.b32.xlu0 %v7873, 64
  %v7987 = vpop.permute.xlu0 %7986
  %7988 = vrot.lane.b32.xlu0 %v7874, 64
  %v7989 = vpop.permute.xlu0 %7988
  %7990 = vrot.lane.b32.xlu0 %v7875, 64
  %v7991 = vpop.permute.xlu0 %7990
  %7992 = vrot.lane.b32.xlu0 %v7876, 64
  %v7993 = vpop.permute.xlu0 %7992
  %7994 = vrot.lane.b32.xlu0 %v7877, 64
  %v7995 = vpop.permute.xlu0 %7994
  %7996 = vrot.lane.b32.xlu0 %v7878, 64
  %v7997 = vpop.permute.xlu0 %7996
  %7998 = vrot.lane.b32.xlu0 %v7879, 64
  %v7999 = vpop.permute.xlu0 %7998
  %8000 = vrot.lane.b32.xlu0 %v7880, 64
  %v8001 = vpop.permute.xlu0 %8000
  %8002 = vrot.lane.b32.xlu0 %v7881, 64
  %v8003 = vpop.permute.xlu0 %8002
  %8004 = vrot.lane.b32.xlu0 %v7882, 64
  %v8005 = vpop.permute.xlu0 %8004
  %8006 = vrot.lane.b32.xlu0 %v7883, 64
  %v8007 = vpop.permute.xlu0 %8006
  %8008 = vrot.lane.b32.xlu0 %v7884, 64
  %v8009 = vpop.permute.xlu0 %8008
  %8010 = vrot.lane.b32.xlu0 %v7885, 64
  %v8011 = vpop.permute.xlu0 %8010
  %8012 = vrot.lane.b32.xlu0 %v7886, 64
  %v8013 = vpop.permute.xlu0 %8012
  %8014 = vrot.lane.b32.xlu0 %v7887, 64
  %v8015 = vpop.permute.xlu0 %8014
  %8016 = vrot.lane.b32.xlu0 %v7888, 64
  %v8017 = vpop.permute.xlu0 %8016
  %8018 = vrot.lane.b32.xlu0 %v7889, 64
  %v8019 = vpop.permute.xlu0 %8018
  %8020 = vrot.lane.b32.xlu0 %v7890, 64
  %v8021 = vpop.permute.xlu0 %8020
  %8022 = vrot.lane.b32.xlu0 %v7891, 64
  %v8023 = vpop.permute.xlu0 %8022
  %8024 = vrot.lane.b32.xlu0 %v7892, 64
  %v8025 = vpop.permute.xlu0 %8024
  %8026 = vrot.lane.b32.xlu0 %v7893, 64
  %v8027 = vpop.permute.xlu0 %8026
  %8028 = vrot.lane.b32.xlu0 %v7894, 64
  %v8029 = vpop.permute.xlu0 %8028
  %8030 = vrot.lane.b32.xlu0 %v7895, 64
  %v8031 = vpop.permute.xlu0 %8030
  %8032 = vrot.lane.b32.xlu0 %v7896, 64
  %v8033 = vpop.permute.xlu0 %8032
  %8034 = vrot.lane.b32.xlu0 %v7897, 64
  %v8035 = vpop.permute.xlu0 %8034
  %8036 = vrot.lane.b32.xlu0 %v7898, 64
  %v8037 = vpop.permute.xlu0 %8036
  %8038 = vrot.lane.b32.xlu0 %v7899, 64
  %v8039 = vpop.permute.xlu0 %8038
  %8040 = vrot.lane.b32.xlu0 %v7900, 64
  %v8041 = vpop.permute.xlu0 %8040
  %8042 = vrot.lane.b32.xlu0 %v7901, 64
  %v8043 = vpop.permute.xlu0 %8042
  %8044 = vrot.lane.b32.xlu0 %v7902, 64
  %v8045 = vpop.permute.xlu0 %8044
  %8046 = vrot.lane.b32.xlu0 %v7903, 64
  %v8047 = vpop.permute.xlu0 %8046
  %v8096 = vmul.f32 %v7328, %v7953
  %v8097 = vmul.f32 %v7329, %v7955
  %v8098 = vmul.f32 %v7330, %v7957
  %v8099 = vmul.f32 %v7331, %v7959
  %v8100 = vmul.f32 %v7332, %v7961
  %v8101 = vmul.f32 %v7333, %v7963
  %v8102 = vmul.f32 %v7334, %v7965
  %v8103 = vmul.f32 %v7335, %v7967
  %v8104 = vmul.f32 %v7336, %v7969
  %v8105 = vmul.f32 %v7337, %v7971
  %v8106 = vmul.f32 %v7338, %v7973
  %v8107 = vmul.f32 %v7339, %v7975
  %v8108 = vmul.f32 %v7340, %v7977
  %v8109 = vmul.f32 %v7341, %v7979
  %v8110 = vmul.f32 %v7342, %v7981
  %v8111 = vmul.f32 %v7343, %v7983
  %v8112 = vmul.f32 %v7344, %v7985
  %v8113 = vmul.f32 %v7345, %v7987
  %v8114 = vmul.f32 %v7346, %v7989
  %v8115 = vmul.f32 %v7347, %v7991
  %v8116 = vmul.f32 %v7348, %v7993
  %v8117 = vmul.f32 %v7349, %v7995
  %v8118 = vmul.f32 %v7350, %v7997
  %v8119 = vmul.f32 %v7351, %v7999
  %v8120 = vmul.f32 %v7352, %v8001
  %v8121 = vmul.f32 %v7353, %v8003
  %v8122 = vmul.f32 %v7354, %v8005
  %v8123 = vmul.f32 %v7355, %v8007
  %v8124 = vmul.f32 %v7356, %v8009
  %v8125 = vmul.f32 %v7357, %v8011
  %v8126 = vmul.f32 %v7358, %v8013
  %v8127 = vmul.f32 %v7359, %v8015
  %v8128 = vmul.f32 %v7360, %v8017
  %v8129 = vmul.f32 %v7361, %v8019
  %v8130 = vmul.f32 %v7362, %v8021
  %v8131 = vmul.f32 %v7363, %v8023
  %v8132 = vmul.f32 %v7364, %v8025
  %v8133 = vmul.f32 %v7365, %v8027
  %v8134 = vmul.f32 %v7366, %v8029
  %v8135 = vmul.f32 %v7367, %v8031
  %v8136 = vmul.f32 %v7368, %v8033
  %v8137 = vmul.f32 %v7369, %v8035
  %v8138 = vmul.f32 %v7370, %v8037
  %v8139 = vmul.f32 %v7371, %v8039
  %v8140 = vmul.f32 %v7372, %v8041
  %v8141 = vmul.f32 %v7373, %v8043
  %v8142 = vmul.f32 %v7374, %v8045
  %v8143 = vmul.f32 %v7375, %v8047
  %v8144 = vadd.f32 %v8096, %v8100
  %v8145 = vadd.f32 %v8097, %v8101
  %v8146 = vadd.f32 %v8098, %v8102
  %v8147 = vadd.f32 %v8099, %v8103
  %v8148 = vadd.f32 %v8104, %v8108
  %v8149 = vadd.f32 %v8105, %v8109
  %v8150 = vadd.f32 %v8106, %v8110
  %v8151 = vadd.f32 %v8107, %v8111
  %v8152 = vadd.f32 %v8112, %v8116
  %v8153 = vadd.f32 %v8113, %v8117
  %v8154 = vadd.f32 %v8114, %v8118
  %v8155 = vadd.f32 %v8115, %v8119
  %v8156 = vadd.f32 %v8120, %v8124
  %v8157 = vadd.f32 %v8121, %v8125
  %v8158 = vadd.f32 %v8122, %v8126
  %v8159 = vadd.f32 %v8123, %v8127
  %v8160 = vadd.f32 %v8128, %v8132
  %v8161 = vadd.f32 %v8129, %v8133
  %v8162 = vadd.f32 %v8130, %v8134
  %v8163 = vadd.f32 %v8131, %v8135
  %v8164 = vadd.f32 %v8136, %v8140
  %v8165 = vadd.f32 %v8137, %v8141
  %v8166 = vadd.f32 %v8138, %v8142
  %v8167 = vadd.f32 %v8139, %v8143
  %v8168 = vadd.f32 %v8144, %v8148
  %v8169 = vadd.f32 %v8145, %v8149
  %v8170 = vadd.f32 %v8146, %v8150
  %v8171 = vadd.f32 %v8147, %v8151
  %v8172 = vadd.f32 %v8152, %v8156
  %v8173 = vadd.f32 %v8153, %v8157
  %v8174 = vadd.f32 %v8154, %v8158
  %v8175 = vadd.f32 %v8155, %v8159
  %v8176 = vadd.f32 %v8160, %v8164
  %v8177 = vadd.f32 %v8161, %v8165
  %v8178 = vadd.f32 %v8162, %v8166
  %v8179 = vadd.f32 %v8163, %v8167
  %v8180 = vadd.f32 %v8168, %v8172
  %v8181 = vadd.f32 %v8169, %v8173
  %v8182 = vadd.f32 %v8170, %v8174
  %v8183 = vadd.f32 %v8171, %v8175
  %v8184 = vadd.f32 %v8180, %v8176
  %v8185 = vadd.f32 %v8181, %v8177
  %v8186 = vadd.f32 %v8182, %v8178
  %v8187 = vadd.f32 %v8183, %v8179
  %8188 = vmatprep.subr.mxu0 0.0
  %8189 = vmatpush1.msra.mxu0 %v8184
  %8190 = vmatprep.subr.mxu0 0.0
  %8191 = vmatpush1.msra.mxu0 %v8185
  %8192 = vmatprep.subr.mxu0 0.0
  %8193 = vmatpush1.msra.mxu0 %v8186
  %8194 = vmatprep.subr.mxu0 0.0
  %8195 = vmatpush1.msra.mxu0 %v8187
  %8196 = vmatprep.subr.mxu0 0.0
  %8197 = vmatpush1.msra.mxu0 0.0
  %8198 = vmatprep.subr.mxu0 0.0
  %8199 = vmatpush1.msra.mxu0 0.0
  %8200 = vmatprep.subr.mxu0 0.0
  %8201 = vmatpush1.msra.mxu0 0.0
  %8202 = vmatprep.subr.mxu0 0.0
  %8203 = vmatpush1.msra.mxu0 0.0
  %8204 = vmatprep.subr.mxu0 0.0
  %8205 = vmatpush1.msra.mxu0 0.0
  %8206 = vmatprep.subr.mxu0 0.0
  %8207 = vmatpush1.msra.mxu0 0.0
  %8208 = vmatprep.subr.mxu0 0.0
  %8209 = vmatpush1.msra.mxu0 0.0
  %8210 = vmatprep.subr.mxu0 0.0
  %8211 = vmatpush1.msra.mxu0 0.0
  %8212 = vmatprep.subr.mxu0 0.0
  %8213 = vmatpush1.msra.mxu0 0.0
  %8214 = vmatprep.subr.mxu0 0.0
  %8215 = vmatpush1.msra.mxu0 0.0
  %8216 = vmatprep.subr.mxu0 0.0
  %8217 = vmatpush1.msra.mxu0 0.0
  %8218 = vmatprep.subr.mxu0 0.0
  %8219 = vmatpush1.msra.mxu0 0.0
  %8220 = vmatprep.subr.mxu0 0.0
  %8221 = vmatpush1.msra.mxu0 0.0
  %8222 = vmatprep.subr.mxu0 0.0
  %8223 = vmatpush1.msra.mxu0 0.0
  %8224 = vmatprep.subr.mxu0 0.0
  %8225 = vmatpush1.msra.mxu0 0.0
  %8226 = vmatprep.subr.mxu0 0.0
  %8227 = vmatpush1.msra.mxu0 0.0
  %8228 = vmatprep.subr.mxu0 0.0
  %8229 = vmatpush1.msra.mxu0 0.0
  %8230 = vmatprep.subr.mxu0 0.0
  %8231 = vmatpush1.msra.mxu0 0.0
  %8232 = vmatprep.subr.mxu0 0.0
  %8233 = vmatpush1.msra.mxu0 0.0
  %8234 = vmatprep.subr.mxu0 0.0
  %8235 = vmatpush1.msra.mxu0 0.0
  %8236 = vmatprep.subr.mxu0 0.0
  %8237 = vmatpush1.msra.mxu0 0.0
  %8238 = vmatprep.subr.mxu0 0.0
  %8239 = vmatpush1.msra.mxu0 0.0
  %8240 = vmatprep.subr.mxu0 0.0
  %8241 = vmatpush1.msra.mxu0 0.0
  %8242 = vmatprep.subr.mxu0 0.0
  %8243 = vmatpush1.msra.mxu0 0.0
  %8244 = vmatprep.subr.mxu0 0.0
  %8245 = vmatpush1.msra.mxu0 0.0
  %8246 = vmatprep.subr.mxu0 0.0
  %8247 = vmatpush1.msra.mxu0 0.0
  %8248 = vmatprep.subr.mxu0 0.0
  %8249 = vmatpush1.msra.mxu0 0.0
  %8250 = vmatprep.subr.mxu0 0.0
  %8251 = vmatpush1.msra.mxu0 0.0
  %8252 = vmatprep.mubr.f32.mxu0 0.0
  %8253 = vmatmul.mubr.f32.gmra.mrb[0].mxu0 %v3380
  %v8254 = vpop.f32.mrb[0].mxu0
  %v8255 = vadd.f32 0.0, %v8254
  %v8256 = vpop.f32.mrb[0].mxu0
  %8257 = vdwg.mxu0
  %v8258 = vmul.f32 %v8255, 0.03125
  %v8259 = vmul.f32 %v8184, %v8184
  %v8260 = vmul.f32 %v8185, %v8185
  %v8261 = vmul.f32 %v8186, %v8186
  %v8262 = vmul.f32 %v8187, %v8187
  %8263 = vmatprep.subr.mxu0 0.0
  %8264 = vmatpush1.msra.mxu0 %v8259
  %8265 = vmatprep.subr.mxu0 0.0
  %8266 = vmatpush1.msra.mxu0 %v8260
  %8267 = vmatprep.subr.mxu0 0.0
  %8268 = vmatpush1.msra.mxu0 %v8261
  %8269 = vmatprep.subr.mxu0 0.0
  %8270 = vmatpush1.msra.mxu0 %v8262
  %8271 = vmatprep.subr.mxu0 0.0
  %8272 = vmatpush1.msra.mxu0 0.0
  %8273 = vmatprep.subr.mxu0 0.0
  %8274 = vmatpush1.msra.mxu0 0.0
  %8275 = vmatprep.subr.mxu0 0.0
  %8276 = vmatpush1.msra.mxu0 0.0
  %8277 = vmatprep.subr.mxu0 0.0
  %8278 = vmatpush1.msra.mxu0 0.0
  %8279 = vmatprep.subr.mxu0 0.0
  %8280 = vmatpush1.msra.mxu0 0.0
  %8281 = vmatprep.subr.mxu0 0.0
  %8282 = vmatpush1.msra.mxu0 0.0
  %8283 = vmatprep.subr.mxu0 0.0
  %8284 = vmatpush1.msra.mxu0 0.0
  %8285 = vmatprep.subr.mxu0 0.0
  %8286 = vmatpush1.msra.mxu0 0.0
  %8287 = vmatprep.subr.mxu0 0.0
  %8288 = vmatpush1.msra.mxu0 0.0
  %8289 = vmatprep.subr.mxu0 0.0
  %8290 = vmatpush1.msra.mxu0 0.0
  %8291 = vmatprep.subr.mxu0 0.0
  %8292 = vmatpush1.msra.mxu0 0.0
  %8293 = vmatprep.subr.mxu0 0.0
  %8294 = vmatpush1.msra.mxu0 0.0
  %8295 = vmatprep.subr.mxu0 0.0
  %8296 = vmatpush1.msra.mxu0 0.0
  %8297 = vmatprep.subr.mxu0 0.0
  %8298 = vmatpush1.msra.mxu0 0.0
  %8299 = vmatprep.subr.mxu0 0.0
  %8300 = vmatpush1.msra.mxu0 0.0
  %8301 = vmatprep.subr.mxu0 0.0
  %8302 = vmatpush1.msra.mxu0 0.0
  %8303 = vmatprep.subr.mxu0 0.0
  %8304 = vmatpush1.msra.mxu0 0.0
  %8305 = vmatprep.subr.mxu0 0.0
  %8306 = vmatpush1.msra.mxu0 0.0
  %8307 = vmatprep.subr.mxu0 0.0
  %8308 = vmatpush1.msra.mxu0 0.0
  %8309 = vmatprep.subr.mxu0 0.0
  %8310 = vmatpush1.msra.mxu0 0.0
  %8311 = vmatprep.subr.mxu0 0.0
  %8312 = vmatpush1.msra.mxu0 0.0
  %8313 = vmatprep.subr.mxu0 0.0
  %8314 = vmatpush1.msra.mxu0 0.0
  %8315 = vmatprep.subr.mxu0 0.0
  %8316 = vmatpush1.msra.mxu0 0.0
  %8317 = vmatprep.subr.mxu0 0.0
  %8318 = vmatpush1.msra.mxu0 0.0
  %8319 = vmatprep.subr.mxu0 0.0
  %8320 = vmatpush1.msra.mxu0 0.0
  %8321 = vmatprep.subr.mxu0 0.0
  %8322 = vmatpush1.msra.mxu0 0.0
  %8323 = vmatprep.subr.mxu0 0.0
  %8324 = vmatpush1.msra.mxu0 0.0
  %8325 = vmatprep.subr.mxu0 0.0
  %8326 = vmatpush1.msra.mxu0 0.0
  %8327 = vmatprep.mubr.f32.mxu0 0.0
  %8328 = vmatmul.mubr.f32.gmra.mrb[0].mxu0 %v3380
  %v8329 = vpop.f32.mrb[0].mxu0
  %v8330 = vadd.f32 0.0, %v8329
  %v8331 = vpop.f32.mrb[0].mxu0
  %8332 = vdwg.mxu0
  %v8333 = vmul.f32 %v8330, 0.03125
  %v8334 = vmul.f32 %v8258, %v8258
  %v8335 = vsub.f32 %v8333, %v8334
  %v8336 = vadd.f32 %v8335, 1e-05
  %v8337 = vrsqrt.pop %v8336
  %v8339 = vrot.slane %v8337, 6
  %v8341 = vmul.f32 %v6028, %v8339
  %v8343 = vrot.slane %v8341, 2
  %v8345 = vmul.f32 %v8258, %v8343
  %v8347 = vrot.slane %v8345, 5
  %v8349 = vsub.f32 %v6028, %v8347
  %v8350 = vlaneseq
  %v8351 = vshrl.u32 %v8350, 7
  %v8352 = vsub.s32 2, %v8351
  %v8353 = vrot.slane %v8341, %v8352
  %v8354 = vmul.f32 %v8184, %v8353
  %v8355 = vmul.f32 %v8185, %v8353
  %v8356 = vmul.f32 %v8186, %v8353
  %v8357 = vmul.f32 %v8187, %v8353
  %v8358 = vlaneseq
  %v8359 = vshrl.u32 %v8358, 7
  %v8360 = vsub.s32 3, %v8359
  %v8361 = vrot.slane %v8349, %v8360
  %v8362 = vadd.f32 %v8354, %v8361
  %v8363 = vadd.f32 %v8355, %v8361
  %v8364 = vadd.f32 %v8356, %v8361
  %v8365 = vadd.f32 %v8357, %v8361
  %v8366 = vadd.f32 %v6023, %v8362
  %v8367 = vadd.f32 %v6024, %v8363
  %v8368 = vadd.f32 %v6025, %v8364
  %v8369 = vadd.f32 %v6026, %v8365
  %v8370 = vmax.f32 %v8366, 0.0
  %v8371 = vmax.f32 %v8367, 0.0
  %v8372 = vmax.f32 %v8368, 0.0
  %v8373 = vmax.f32 %v8369, 0.0
  %v8374 = vand.u32 2147483647, %v8366
  %v8375 = vand.u32 2147483647, %v8367
  %v8376 = vand.u32 2147483647, %v8368
  %v8377 = vand.u32 2147483647, %v8369
  %v8378 = vsub.f32 0.0, %v8374
  %v8379 = vsub.f32 0.0, %v8375
  %v8380 = vsub.f32 0.0, %v8376
  %v8381 = vsub.f32 0.0, %v8377
  %v8382 = vmul.f32 %v8378, 1.442695
  %v8383 = vpow.pop %v8382
  %v8384 = vmul.f32 %v8379, 1.442695
  %v8385 = vpow.pop %v8384
  %v8386 = vmul.f32 %v8380, 1.442695
  %v8387 = vpow.pop %v8386
  %v8388 = vmul.f32 %v8381, 1.442695
  %v8389 = vpow.pop %v8388
  %v8390 = vadd.f32 %v8383, 1.0
  %v8391 = vlog2.pop %v8390
  %v8392 = vmul.f32 %v8391, 0.6931472
  %v8393 = vmul.f32 -0.5, %v8383
  %v8394 = vadd.f32 %v8393, 1.0
  %v8395 = vmul.f32 %v8394, %v8383
  %v8396 = vand.u32 2147483647, %v8383
  %vm8397 = vcmp.lt.f32.partialorder %v8396, 0.0004427343
  %v8398 = vsel %vm8397, %v8395, %v8392
  %v8399 = vadd.f32 %v8385, 1.0
  %v8400 = vlog2.pop %v8399
  %v8401 = vmul.f32 %v8400, 0.6931472
  %v8402 = vmul.f32 -0.5, %v8385
  %v8403 = vadd.f32 %v8402, 1.0
  %v8404 = vmul.f32 %v8403, %v8385
  %v8405 = vand.u32 2147483647, %v8385
  %vm8406 = vcmp.lt.f32.partialorder %v8405, 0.0004427343
  %v8407 = vsel %vm8406, %v8404, %v8401
  %v8408 = vadd.f32 %v8387, 1.0
  %v8409 = vlog2.pop %v8408
  %v8410 = vmul.f32 %v8409, 0.6931472
  %v8411 = vmul.f32 -0.5, %v8387
  %v8412 = vadd.f32 %v8411, 1.0
  %v8413 = vmul.f32 %v8412, %v8387
  %v8414 = vand.u32 2147483647, %v8387
  %vm8415 = vcmp.lt.f32.partialorder %v8414, 0.0004427343
  %v8416 = vsel %vm8415, %v8413, %v8410
  %v8417 = vadd.f32 %v8389, 1.0
  %v8418 = vlog2.pop %v8417
  %v8419 = vmul.f32 %v8418, 0.6931472
  %v8420 = vmul.f32 -0.5, %v8389
  %v8421 = vadd.f32 %v8420, 1.0
  %v8422 = vmul.f32 %v8421, %v8389
  %v8423 = vand.u32 2147483647, %v8389
  %vm8424 = vcmp.lt.f32.partialorder %v8423, 0.0004427343
  %v8425 = vsel %vm8424, %v8422, %v8419
  %v8426 = vadd.f32 %v8370, %v8398
  %v8427 = vadd.f32 %v8371, %v8407
  %v8428 = vadd.f32 %v8372, %v8416
  %v8429 = vadd.f32 %v8373, %v8425
  %v8430 = vld [vmem:[%s3] sm:$0x3]
  %v8432 = vsel %vm3378, %v8430, 0
  %8434 = vmatprep.subr.mxu0 0.0
  %8435 = vmatpush1.msra.mxu0 %v8426
  %8436 = vmatprep.subr.mxu0 0.0
  %8437 = vmatpush1.msra.mxu0 %v8427
  %8438 = vmatprep.subr.mxu0 0.0
  %8439 = vmatpush1.msra.mxu0 %v8428
  %8440 = vmatprep.subr.mxu0 0.0
  %8441 = vmatpush1.msra.mxu0 %v8429
  %8442 = vmatprep.subr.mxu0 0.0
  %8443 = vmatpush1.msra.mxu0 0.0
  %8444 = vmatprep.subr.mxu0 0.0
  %8445 = vmatpush1.msra.mxu0 0.0
  %8446 = vmatprep.subr.mxu0 0.0
  %8447 = vmatpush1.msra.mxu0 0.0
  %8448 = vmatprep.subr.mxu0 0.0
  %8449 = vmatpush1.msra.mxu0 0.0
  %8450 = vmatprep.subr.mxu0 0.0
  %8451 = vmatpush1.msra.mxu0 0.0
  %8452 = vmatprep.subr.mxu0 0.0
  %8453 = vmatpush1.msra.mxu0 0.0
  %8454 = vmatprep.subr.mxu0 0.0
  %8455 = vmatpush1.msra.mxu0 0.0
  %8456 = vmatprep.subr.mxu0 0.0
  %8457 = vmatpush1.msra.mxu0 0.0
  %8458 = vmatprep.subr.mxu0 0.0
  %8459 = vmatpush1.msra.mxu0 0.0
  %8460 = vmatprep.subr.mxu0 0.0
  %8461 = vmatpush1.msra.mxu0 0.0
  %8462 = vmatprep.subr.mxu0 0.0
  %8463 = vmatpush1.msra.mxu0 0.0
  %8464 = vmatprep.subr.mxu0 0.0
  %8465 = vmatpush1.msra.mxu0 0.0
  %8466 = vmatprep.subr.mxu0 0.0
  %8467 = vmatpush1.msra.mxu0 0.0
  %8468 = vmatprep.subr.mxu0 0.0
  %8469 = vmatpush1.msra.mxu0 0.0
  %8470 = vmatprep.subr.mxu0 0.0
  %8471 = vmatpush1.msra.mxu0 0.0
  %8472 = vmatprep.subr.mxu0 0.0
  %8473 = vmatpush1.msra.mxu0 0.0
  %8474 = vmatprep.subr.mxu0 0.0
  %8475 = vmatpush1.msra.mxu0 0.0
  %8476 = vmatprep.subr.mxu0 0.0
  %8477 = vmatpush1.msra.mxu0 0.0
  %8478 = vmatprep.subr.mxu0 0.0
  %8479 = vmatpush1.msra.mxu0 0.0
  %8480 = vmatprep.subr.mxu0 0.0
  %8481 = vmatpush1.msra.mxu0 0.0
  %8482 = vmatprep.subr.mxu0 0.0
  %8483 = vmatpush1.msra.mxu0 0.0
  %8484 = vmatprep.subr.mxu0 0.0
  %8485 = vmatpush1.msra.mxu0 0.0
  %8486 = vmatprep.subr.mxu0 0.0
  %8487 = vmatpush1.msra.mxu0 0.0
  %8488 = vmatprep.subr.mxu0 0.0
  %8489 = vmatpush1.msra.mxu0 0.0
  %8490 = vmatprep.subr.mxu0 0.0
  %8491 = vmatpush1.msra.mxu0 0.0
  %8492 = vmatprep.subr.mxu0 0.0
  %8493 = vmatpush1.msra.mxu0 0.0
  %8494 = vmatprep.subr.mxu0 0.0
  %8495 = vmatpush1.msra.mxu0 0.0
  %8496 = vmatprep.subr.mxu0 0.0
  %8497 = vmatpush1.msra.mxu0 0.0
  %8498 = vmatprep.mubr.f32.mxu0 0.0
  %8499 = vmatmul.mubr.f32.gmra.mrb[0].mxu0 %v8432
  %v8500 = vpop.f32.mrb[0].mxu0
  %v8501 = vadd.f32 0.0, %v8500
  %v8502 = vpop.f32.mrb[0].mxu0
  %8503 = vdwg.mxu0
  %v8504 = vmax.f32 %v8501, 0.0
  %v8505 = vand.u32 2147483647, %v8501
  %v8506 = vsub.f32 0.0, %v8505
  %v8507 = vmul.f32 %v8506, 1.442695
  %v8508 = vpow.pop %v8507
  %v8509 = vadd.f32 %v8508, 1.0
  %v8510 = vlog2.pop %v8509
  %v8511 = vmul.f32 %v8510, 0.6931472
  %v8512 = vmul.f32 -0.5, %v8508
  %v8513 = vadd.f32 %v8512, 1.0
  %v8514 = vmul.f32 %v8513, %v8508
  %v8515 = vand.u32 2147483647, %v8508
  %vm8516 = vcmp.lt.f32.partialorder %v8515, 0.0004427343
  %v8517 = vsel %vm8516, %v8514, %v8511
  %v8518 = vadd.f32 %v8504, %v8517
  %v8519 = vld [vmem:[%s8] sm:$0xff]
  %v8520 = vld [vmem:[%s8 + $0x8] sm:$0xff]
  %v8521 = vld [vmem:[%s8 + $0x10] sm:$0xff]
  %v8522 = vld [vmem:[%s8 + $0x18] sm:$0xff]
  %v8523 = vld [vmem:[%s8 + $0x20] sm:$0xff]
  %v8524 = vld [vmem:[%s8 + $0x28] sm:$0xff]
  %v8525 = vld [vmem:[%s8 + $0x30] sm:$0xff]
  %v8526 = vld [vmem:[%s8 + $0x38] sm:$0xff]
  %v8527 = vld [vmem:[%s10 + $0x1] sm:$0x1]
  %v8528 = vlaneseq
  %v8529 = vshrl.u32 %v8528, 7
  %v8530 = vsub.s32 0, %v8529
  %v8531 = vrot.slane %v8527, %v8530
  %v8533 = vsel %vm1091, %v8518, 0
  %8535 = vmatprep.subr.mxu0 0.0
  %8536 = vmatpush1.msra.mxu0 %v8519
  %8537 = vmatprep.subr.mxu0 0.0
  %8538 = vmatpush1.msra.mxu0 %v8520
  %8539 = vmatprep.subr.mxu0 0.0
  %8540 = vmatpush1.msra.mxu0 %v8521
  %8541 = vmatprep.subr.mxu0 0.0
  %8542 = vmatpush1.msra.mxu0 %v8522
  %8543 = vmatprep.subr.mxu0 0.0
  %8544 = vmatpush1.msra.mxu0 %v8523
  %8545 = vmatprep.subr.mxu0 0.0
  %8546 = vmatpush1.msra.mxu0 %v8524
  %8547 = vmatprep.subr.mxu0 0.0
  %8548 = vmatpush1.msra.mxu0 %v8525
  %8549 = vmatprep.subr.mxu0 0.0
  %8550 = vmatpush1.msra.mxu0 %v8526
  %8551 = vmatprep.subr.mxu0 0.0
  %8552 = vmatpush1.msra.mxu0 0.0
  %8553 = vmatprep.subr.mxu0 0.0
  %8554 = vmatpush1.msra.mxu0 0.0
  %8555 = vmatprep.subr.mxu0 0.0
  %8556 = vmatpush1.msra.mxu0 0.0
  %8557 = vmatprep.subr.mxu0 0.0
  %8558 = vmatpush1.msra.mxu0 0.0
  %8559 = vmatprep.subr.mxu0 0.0
  %8560 = vmatpush1.msra.mxu0 0.0
  %8561 = vmatprep.subr.mxu0 0.0
  %8562 = vmatpush1.msra.mxu0 0.0
  %8563 = vmatprep.subr.mxu0 0.0
  %8564 = vmatpush1.msra.mxu0 0.0
  %8565 = vmatprep.subr.mxu0 0.0
  %8566 = vmatpush1.msra.mxu0 0.0
  %8567 = vmatprep.subr.mxu0 0.0
  %8568 = vmatpush1.msra.mxu0 0.0
  %8569 = vmatprep.subr.mxu0 0.0
  %8570 = vmatpush1.msra.mxu0 0.0
  %8571 = vmatprep.subr.mxu0 0.0
  %8572 = vmatpush1.msra.mxu0 0.0
  %8573 = vmatprep.subr.mxu0 0.0
  %8574 = vmatpush1.msra.mxu0 0.0
  %8575 = vmatprep.subr.mxu0 0.0
  %8576 = vmatpush1.msra.mxu0 0.0
  %8577 = vmatprep.subr.mxu0 0.0
  %8578 = vmatpush1.msra.mxu0 0.0
  %8579 = vmatprep.subr.mxu0 0.0
  %8580 = vmatpush1.msra.mxu0 0.0
  %8581 = vmatprep.subr.mxu0 0.0
  %8582 = vmatpush1.msra.mxu0 0.0
  %8583 = vmatprep.subr.mxu0 0.0
  %8584 = vmatpush1.msra.mxu0 0.0
  %8585 = vmatprep.subr.mxu0 0.0
  %8586 = vmatpush1.msra.mxu0 0.0
  %8587 = vmatprep.subr.mxu0 0.0
  %8588 = vmatpush1.msra.mxu0 0.0
  %8589 = vmatprep.subr.mxu0 0.0
  %8590 = vmatpush1.msra.mxu0 0.0
  %8591 = vmatprep.subr.mxu0 0.0
  %8592 = vmatpush1.msra.mxu0 0.0
  %8593 = vmatprep.subr.mxu0 0.0
  %8594 = vmatpush1.msra.mxu0 0.0
  %8595 = vmatprep.subr.mxu0 0.0
  %8596 = vmatpush1.msra.mxu0 0.0
  %8597 = vmatprep.subr.mxu0 0.0
  %8598 = vmatpush1.msra.mxu0 0.0
  %8599 = vmatprep.mubr.f32.mxu0 0.0
  %8600 = vmatmul.mubr.f32.gmra.mrb[0].mxu0 %v8533
  %v8601 = vpop.f32.mrb[0].mxu0
  %v8602 = vadd.f32 %v8531, %v8601
  %v8603 = vpop.f32.mrb[0].mxu0
  %8604 = vdwg.mxu0
  %v8605 = vmax.f32 %v8602, 0.0
  %v8606 = vand.u32 2147483647, %v8602
  %v8607 = vsub.f32 0.0, %v8606
  %v8608 = vmul.f32 %v8607, 1.442695
  %v8609 = vpow.pop %v8608
  %v8610 = vadd.f32 %v8609, 1.0
  %v8611 = vlog2.pop %v8610
  %v8612 = vmul.f32 %v8611, 0.6931472
  %v8613 = vmul.f32 -0.5, %v8609
  %v8614 = vadd.f32 %v8613, 1.0
  %v8615 = vmul.f32 %v8614, %v8609
  %v8616 = vand.u32 2147483647, %v8609
  %vm8617 = vcmp.lt.f32.partialorder %v8616, 0.0004427343
  %v8618 = vsel %vm8617, %v8615, %v8612
  %v8619 = vadd.f32 %v8605, %v8618
  %v8620 = vld [vmem:[%s9] sm:$0xff]
  %v8621 = vld [vmem:[%s9 + $0x8] sm:$0xff]
  %v8622 = vld [vmem:[%s9 + $0x10] sm:$0xff]
  %v8623 = vld [vmem:[%s9 + $0x18] sm:$0xff]
  %v8624 = vld [vmem:[%s9 + $0x20] sm:$0xff]
  %v8625 = vld [vmem:[%s9 + $0x28] sm:$0xff]
  %v8626 = vld [vmem:[%s9 + $0x30] sm:$0xff]
  %v8627 = vld [vmem:[%s9 + $0x38] sm:$0xff]
  %v8628 = vld [vmem:[%s9 + $0x40] sm:$0xff]
  %v8629 = vld [vmem:[%s9 + $0x48] sm:$0xff]
  %v8630 = vld [vmem:[%s9 + $0x50] sm:$0xff]
  %v8631 = vld [vmem:[%s9 + $0x58] sm:$0xff]
  %v8632 = vld [vmem:[%s9 + $0x60] sm:$0xff]
  %v8633 = vld [vmem:[%s9 + $0x68] sm:$0xff]
  %v8634 = vld [vmem:[%s9 + $0x70] sm:$0xff]
  %v8635 = vld [vmem:[%s9 + $0x78] sm:$0xff]
  %v8636 = vld [vmem:[%s10 + $0x2] sm:$0x1]
  %v8637 = vlaneseq
  %v8638 = vshrl.u32 %v8637, 7
  %v8639 = vsub.s32 0, %v8638
  %v8640 = vrot.slane %v8636, %v8639
  %8641 = vmatprep.subr.mxu0 0.0
  %8642 = vmatpush1.msra.mxu0 %v8620
  %8643 = vmatprep.subr.mxu0 0.0
  %8644 = vmatpush1.msra.mxu0 %v8621
  %8645 = vmatprep.subr.mxu0 0.0
  %8646 = vmatpush1.msra.mxu0 %v8622
  %8647 = vmatprep.subr.mxu0 0.0
  %8648 = vmatpush1.msra.mxu0 %v8623
  %8649 = vmatprep.subr.mxu0 0.0
  %8650 = vmatpush1.msra.mxu0 %v8624
  %8651 = vmatprep.subr.mxu0 0.0
  %8652 = vmatpush1.msra.mxu0 %v8625
  %8653 = vmatprep.subr.mxu0 0.0
  %8654 = vmatpush1.msra.mxu0 %v8626
  %8655 = vmatprep.subr.mxu0 0.0
  %8656 = vmatpush1.msra.mxu0 %v8627
  %8657 = vmatprep.subr.mxu0 0.0
  %8658 = vmatpush1.msra.mxu0 %v8628
  %8659 = vmatprep.subr.mxu0 0.0
  %8660 = vmatpush1.msra.mxu0 %v8629
  %8661 = vmatprep.subr.mxu0 0.0
  %8662 = vmatpush1.msra.mxu0 %v8630
  %8663 = vmatprep.subr.mxu0 0.0
  %8664 = vmatpush1.msra.mxu0 %v8631
  %8665 = vmatprep.subr.mxu0 0.0
  %8666 = vmatpush1.msra.mxu0 %v8632
  %8667 = vmatprep.subr.mxu0 0.0
  %8668 = vmatpush1.msra.mxu0 %v8633
  %8669 = vmatprep.subr.mxu0 0.0
  %8670 = vmatpush1.msra.mxu0 %v8634
  %8671 = vmatprep.subr.mxu0 0.0
  %8672 = vmatpush1.msra.mxu0 %v8635
  %8673 = vmatprep.subr.mxu0 0.0
  %8674 = vmatpush1.msra.mxu0 0.0
  %8675 = vmatprep.subr.mxu0 0.0
  %8676 = vmatpush1.msra.mxu0 0.0
  %8677 = vmatprep.subr.mxu0 0.0
  %8678 = vmatpush1.msra.mxu0 0.0
  %8679 = vmatprep.subr.mxu0 0.0
  %8680 = vmatpush1.msra.mxu0 0.0
  %8681 = vmatprep.subr.mxu0 0.0
  %8682 = vmatpush1.msra.mxu0 0.0
  %8683 = vmatprep.subr.mxu0 0.0
  %8684 = vmatpush1.msra.mxu0 0.0
  %8685 = vmatprep.subr.mxu0 0.0
  %8686 = vmatpush1.msra.mxu0 0.0
  %8687 = vmatprep.subr.mxu0 0.0
  %8688 = vmatpush1.msra.mxu0 0.0
  %8689 = vmatprep.subr.mxu0 0.0
  %8690 = vmatpush1.msra.mxu0 0.0
  %8691 = vmatprep.subr.mxu0 0.0
  %8692 = vmatpush1.msra.mxu0 0.0
  %8693 = vmatprep.subr.mxu0 0.0
  %8694 = vmatpush1.msra.mxu0 0.0
  %8695 = vmatprep.subr.mxu0 0.0
  %8696 = vmatpush1.msra.mxu0 0.0
  %8697 = vmatprep.subr.mxu0 0.0
  %8698 = vmatpush1.msra.mxu0 0.0
  %8699 = vmatprep.subr.mxu0 0.0
  %8700 = vmatpush1.msra.mxu0 0.0
  %8701 = vmatprep.subr.mxu0 0.0
  %8702 = vmatpush1.msra.mxu0 0.0
  %8703 = vmatprep.subr.mxu0 0.0
  %8704 = vmatpush1.msra.mxu0 0.0
  %8705 = vmatprep.mubr.f32.mxu0 0.0
  %8706 = vmatmul.mubr.f32.gmra.mrb[0].mxu0 %v8619
  %v8707 = vpop.f32.mrb[0].mxu0
  %v8708 = vadd.f32 %v8640, %v8707
  %v8709 = vpop.f32.mrb[0].mxu0
  %8710 = vdwg.mxu0
  %vm8711 = vcmask 1024
  %8712 = vst.msk [vmem:[%s11] sm:$0x3] %vm8711, %v8708
  // Predicated region
  $region46: #{crystal_graph_conv_net.1} parent=0 // pred_check
    _
  $region47: #{crystal_graph_conv_net.1} parent=0 // pred_check_branch
    %8714 = sbr.rel (0) target = $region49
  $region48: #{crystal_graph_conv_net.1} parent=0 // pred_region
    _
  $region49: #{crystal_graph_conv_net.1} parent=0 // pred_fallthru
    _
  // Predicated region
  $region50: #{crystal_graph_conv_net.1} parent=0 // pred_check
    _
  $region51: #{crystal_graph_conv_net.1} parent=0 // pred_check_branch
    %8716 = sbr.rel (0) target = $region53
  $region52: #{crystal_graph_conv_net.1} parent=0 // pred_region
    _
  $region53: #{crystal_graph_conv_net.1} parent=0 // pred_fallthru
    _

</llo_original>
